<compile_context>
chip_gen: v5e
topology: v5e:2x2
jax: 0.10.0
libtpu: 0.0.40
codegen_flags: <defaults>
</compile_context>

<pallas_src>
import jax
import jax.numpy as jnp
from jax.experimental import pallas as pl

F32 = jnp.float32
BF16 = jnp.bfloat16

# ------------------------- scaled-down configuration -------------------------
B = 2              # batch
CIN = 3            # image channels
IMG = 32           # input spatial (H == W); generated output is also (B, 3, 32, 32)
C1 = 32            # encoder stem channels
C2 = 64            # encoder head channels (EfficientNet-B1 real: 1280)
LAT = 32           # latent_dim              (module default: 1024)
C0 = 64            # generator init_channels (module: 512)
GH = 4             # generator fc spatial (4x4, as in the module)
DC = (32, 16)      # channels after deconv1 / deconv2 (module: 256, 128, 64)
OUTC = 3           # generated image channels
NUM_DOMAINS = 3
DOM_BATCH = 4      # domain_latents per-domain capacity (module: batch_size=32)
BN_EPS = 1e-5      # PyTorch BatchNorm2d default eps
OH1 = IMG // 2     # conv1 output spatial (16)


# ------------------------------ in-kernel helpers ----------------------------
def _mm(a, b):
    """MXU matmul: bf16 operands, f32 accumulation."""
    return jnp.dot(a.astype(BF16), b.astype(BF16), preferred_element_type=F32)


def _bn(h, gb):
    """Training-mode BatchNorm: rows = B*H*W, channels on the lane axis.
    gb is a packed (2, C) array: row 0 = gamma, row 1 = beta."""
    mu = jnp.mean(h, axis=0, keepdims=True)
    var = jnp.mean((h - mu) ** 2, axis=0, keepdims=True)
    return (h - mu) * jax.lax.rsqrt(var + BN_EPS) * gb[0:1, :] + gb[1:2, :]


def _silu(h):
    # x * sigmoid(x); reciprocal goes to the EUP slot.
    return h * pl.reciprocal(1.0 + jnp.exp(-h), approx=True)


# --------------------------------- kernels -----------------------------------
def encoder_reparam_genfc_kernel(p_ref, pool_ref, eps_ref,
                                 w1_ref, bn1_ref, w2_ref, bn2_ref,
                                 wml_ref, bml_ref, wg_ref, bg_ref,
                                 z_ref, g_ref):
    # conv1 (3x3, stride 2, pad 1) as a whole-batch matmul over im2col patches.
    h = _mm(p_ref[...], w1_ref[...])                       # (B*OH1*OH1, C1)
    h = _silu(_bn(h, bn1_ref[...]))
    # conv2 (1x1) -> pure channel matmul.
    h = _mm(h, w2_ref[...])                                # (B*OH1*OH1, C2)
    h = _silu(_bn(h, bn2_ref[...]))
    # Global average pool expressed as a matmul with a (B, B*OH1*OH1) pooling matrix.
    feat = _mm(pool_ref[...], h)                           # (B, C2)
    # Fused [fc_mu | fc_logvar] projection.
    ml = _mm(feat, wml_ref[...]) + bml_ref[...]            # (B, 2*LAT)
    mu = ml[:, :LAT]
    logvar = ml[:, LAT:]
    # Reparameterisation: z = mu + eps * exp(0.5 * logvar).
    z = mu + eps_ref[...] * jnp.exp(0.5 * logvar)
    z_ref[...] = z
    # Generator fc -> (B, GH*GH*C0); reshaped to (B, GH, GH, C0) channels-last in the wrapper.
    g_ref[...] = _mm(z, wg_ref[...]) + bg_ref[...]


def deconv_bn_relu_kernel(p_ref, w_ref, b_ref, bn_ref, o_ref):
    # ConvTranspose2d(k4, s2, p1) as matmul over wrapper-built patches, + bias + BN + ReLU.
    h = _mm(p_ref[...], w_ref[...]) + b_ref[...]
    o_ref[...] = jnp.maximum(_bn(h, bn_ref[...]), 0.0)


def deconv_tanh_kernel(p_ref, w_ref, b_ref, o_ref):
    o_ref[...] = jnp.tanh(_mm(p_ref[...], w_ref[...]) + b_ref[...])


# ------------------------------ pallas_call wrappers --------------------------
def run_encoder(patches, pool, eps, p):
    return pl.pallas_call(
        encoder_reparam_genfc_kernel,
        out_shape=(jax.ShapeDtypeStruct((B, LAT), F32),
                   jax.ShapeDtypeStruct((B, GH * GH * C0), F32)),
    )(patches, pool, eps, p["w1"], p["bn1"], p["w2"], p["bn2"],
      p["wml"], p["bml"], p["wg"], p["bg"])


def run_deconv_bn_relu(patches, w, b, bn, n_rows, cout):
    return pl.pallas_call(
        deconv_bn_relu_kernel,
        out_shape=jax.ShapeDtypeStruct((n_rows, cout), F32),
    )(patches, w, b, bn)


def run_deconv_tanh(patches, w, b, n_rows, cout):
    return pl.pallas_call(
        deconv_tanh_kernel,
        out_shape=jax.ShapeDtypeStruct((n_rows, cout), F32),
    )(patches, w, b)


# ------------------------- wrapper-side layout plumbing -----------------------
def _conv3x3_s2_patches(x):
    """NCHW x -> im2col patches (B*OH*OW, CIN*9) for a 3x3 / stride-2 / pad-1 conv."""
    bb, ci, h, w = x.shape
    oh, ow = h // 2, w // 2
    xp = jnp.pad(x, ((0, 0), (0, 0), (1, 1), (1, 1)))
    cols = []
    for ky in range(3):
        for kx in range(3):
            cols.append(xp[:, :, ky:ky + 2 * oh:2, kx:kx + 2 * ow:2])   # (B,Ci,OH,OW)
    p = jnp.stack(cols, axis=-1)                                        # (B,Ci,OH,OW,9)
    return p.transpose(0, 2, 3, 1, 4).reshape(bb * oh * ow, ci * 9)


def _convt4x4_s2_patches(h):
    """Channels-last (B,Hi,Wi,Ci) -> patches (B*2Hi*2Wi, Ci*16).
    ConvTranspose2d(k=4, s=2, p=1) == zero-insertion (stride 2) + pad 2 + 4x4 stride-1 conv."""
    bb, hi, wi, ci = h.shape
    ho, wo = 2 * hi, 2 * wi
    u = jnp.zeros((bb, 2 * hi - 1, 2 * wi - 1, ci), h.dtype).at[:, ::2, ::2, :].set(h)
    u = jnp.pad(u, ((0, 0), (2, 2), (2, 2), (0, 0)))
    cols = []
    for ky in range(4):
        for kx in range(4):
            cols.append(u[:, ky:ky + ho, kx:kx + wo, :])                # (B,Ho,Wo,Ci)
    p = jnp.stack(cols, axis=-1)                                        # (B,Ho,Wo,Ci,16)
    return p.reshape(bb * ho * wo, ci * 16)


# ---------------------------------- forward -----------------------------------
@jax.jit
def glo_forward(x, eps, domain_latents, params, domain_idx):
    """x: (B, CIN, IMG, IMG) NCHW -> (generated NCHW, z, new_domain_latents)."""
    # ---- Encoder + reparameterisation + generator fc: ONE fused Pallas call ----
    patches1 = _conv3x3_s2_patches(x)                                   # (B*256, 27)
    npix = OH1 * OH1
    row_owner = jnp.arange(B * npix, dtype=jnp.int32) // npix
    pool = (row_owner[None, :] == jnp.arange(B, dtype=jnp.int32)[:, None]).astype(F32) / npix
    z, g = run_encoder(patches1, pool, eps, params)
    h = g.reshape(B, GH, GH, C0)                                        # channels-last

    # ---- Generator decoder: 3x ConvTranspose2d(k4, s2, p1) ----
    p1 = _convt4x4_s2_patches(h)                                        # (B*64, 1024)
    h = run_deconv_bn_relu(p1, params["wd1"], params["bd1"], params["bnd1"], B * 64, DC[0])
    h = h.reshape(B, 2 * GH, 2 * GH, DC[0])

    p2 = _convt4x4_s2_patches(h)                                        # (B*256, 512)
    h = run_deconv_bn_relu(p2, params["wd2"], params["bd2"], params["bnd2"], B * 256, DC[1])
    h = h.reshape(B, 4 * GH, 4 * GH, DC[1])

    p3 = _convt4x4_s2_patches(h)                                        # (B*1024, 256)
    img = run_deconv_tanh(p3, params["wd3"], params["bd3"], B * 1024, OUTC)
    generated = img.reshape(B, 8 * GH, 8 * GH, OUTC).transpose(0, 3, 1, 2)   # NCHW

    # Functional version of the in-place domain_latents parameter update.
    new_domain_latents = jax.lax.dynamic_update_slice(
        domain_latents, z[None, :, :], (domain_idx, 0, 0))
    return generated, z, new_domain_latents


# ----------------------------- deterministic init ------------------------------
def init_params(key):
    def nrm(k, shape, std=0.02):
        return (std * jax.random.normal(k, shape, F32)).astype(F32)

    def bn_init(c):
        return jnp.concatenate([jnp.ones((1, c), F32), jnp.zeros((1, c), F32)], axis=0)

    ks = iter(jax.random.split(key, 8))
    return {
        # encoder stand-in (conv weights have no bias; BN follows)
        "w1":  nrm(next(ks), (CIN * 9, C1)),   "bn1": bn_init(C1),
        "w2":  nrm(next(ks), (C1, C2)),        "bn2": bn_init(C2),
        # fused [fc_mu | fc_logvar]
        "wml": nrm(next(ks), (C2, 2 * LAT)),   "bml": jnp.zeros((1, 2 * LAT), F32),
        # generator fc (columns laid out channels-last for the (GH,GH,C0) feature map)
        "wg":  nrm(next(ks), (LAT, GH * GH * C0)), "bg": jnp.zeros((1, GH * GH * C0), F32),
        # generator transposed convs (as (Cin*16, Cout) matmul weights)
        "wd1": nrm(next(ks), (C0 * 16, DC[0])),   "bd1": jnp.zeros((1, DC[0]), F32), "bnd1": bn_init(DC[0]),
        "wd2": nrm(next(ks), (DC[0] * 16, DC[1])),"bd2": jnp.zeros((1, DC[1]), F32), "bnd2": bn_init(DC[1]),
        "wd3": nrm(next(ks), (DC[1] * 16, OUTC)), "bd3": jnp.zeros((1, OUTC), F32),
    }


if __name__ == "__main__":
    key = jax.random.PRNGKey(0)
    k_x, k_eps, k_lat, k_p = jax.random.split(key, 4)
    x = jax.random.normal(k_x, (B, CIN, IMG, IMG), F32)              # NCHW like PyTorch
    eps = jax.random.normal(k_eps, (B, LAT), F32)                    # torch.randn_like(mu)
    domain_latents = 0.02 * jax.random.normal(k_lat, (NUM_DOMAINS, DOM_BATCH, LAT), F32)
    params = init_params(k_p)
    domain_idx = 1

    generated, z, new_latents = glo_forward(x, eps, domain_latents, params, domain_idx)
    generated, z, new_latents = jax.block_until_ready((generated, z, new_latents))

    assert generated.shape == (B, OUTC, IMG, IMG) and generated.dtype == F32
    assert z.shape == (B, LAT) and z.dtype == F32
    assert new_latents.shape == (NUM_DOMAINS, DOM_BATCH, LAT)
    assert bool(jnp.all(jnp.isfinite(generated))) and bool(jnp.all(jnp.isfinite(z)))
    assert bool(jnp.all(jnp.abs(generated) <= 1.0))                  # Tanh output range
    print("KERNEL_OK")
</pallas_src>

<mosaic_0001>
module attributes {stable_mosaic.version = 11 : i64} {
  func.func @encoder_reparam_genfc_kernel(%arg0: memref<512x27xf32, #tpu.memory_space<vmem>>, %arg1: memref<2x512xf32, #tpu.memory_space<vmem>>, %arg2: memref<2x32xf32, #tpu.memory_space<vmem>>, %arg3: memref<27x32xf32, #tpu.memory_space<vmem>>, %arg4: memref<2x32xf32, #tpu.memory_space<vmem>>, %arg5: memref<32x64xf32, #tpu.memory_space<vmem>>, %arg6: memref<2x64xf32, #tpu.memory_space<vmem>>, %arg7: memref<64x64xf32, #tpu.memory_space<vmem>>, %arg8: memref<1x64xf32, #tpu.memory_space<vmem>>, %arg9: memref<32x1024xf32, #tpu.memory_space<vmem>>, %arg10: memref<1x1024xf32, #tpu.memory_space<vmem>>, %arg11: memref<2x32xf32, #tpu.memory_space<vmem>>, %arg12: memref<2x1024xf32, #tpu.memory_space<vmem>>) attributes {dimension_semantics = [], scalar_prefetch = 0 : i64, scratch_operands = 0 : i64, tpu.core_type = #tpu.core_type<tc>} {
    %c0 = arith.constant 0 : index
    %c0_0 = arith.constant 0 : index
    %0 = vector.load %arg0[%c0, %c0_0] : memref<512x27xf32, #tpu.memory_space<vmem>>, vector<512x27xf32>
    %c0_1 = arith.constant 0 : index
    %c0_2 = arith.constant 0 : index
    %1 = vector.load %arg3[%c0_1, %c0_2] : memref<27x32xf32, #tpu.memory_space<vmem>>, vector<27x32xf32>
    %2 = arith.truncf %0 : vector<512x27xf32> to vector<512x27xbf16>
    %3 = arith.truncf %1 : vector<27x32xf32> to vector<27x32xbf16>
    %cst = arith.constant dense<0.000000e+00> : vector<512x32xf32>
    %4 = tpu.matmul %2, %3, %cst {dimension_numbers = #tpu.dot_dimension_numbers<[1], [0], [0], [1], [0, 0, 1, 1], [], []>} : vector<512x27xbf16>, vector<27x32xbf16>, vector<512x32xf32> -> vector<512x32xf32>
    %c0_3 = arith.constant 0 : index
    %c0_4 = arith.constant 0 : index
    %5 = vector.load %arg4[%c0_3, %c0_4] : memref<2x32xf32, #tpu.memory_space<vmem>>, vector<2x32xf32>
    %cst_5 = arith.constant dense<0.000000e+00> : vector<32xf32>
    %6 = vector.multi_reduction <add>, %4, %cst_5 [0] : vector<512x32xf32> to vector<32xf32>
    %7 = vector.shape_cast %6 : vector<32xf32> to vector<1x32xf32>
    %cst_6 = arith.constant 5.120000e+02 : f32
    %8 = vector.broadcast %cst_6 : f32 to vector<1x32xf32>
    %9 = arith.divf %7, %8 : vector<1x32xf32>
    %10 = vector.broadcast %9 : vector<1x32xf32> to vector<512x32xf32>
    %11 = arith.subf %4, %10 : vector<512x32xf32>
    %12 = arith.mulf %11, %11 : vector<512x32xf32>
    %cst_7 = arith.constant dense<0.000000e+00> : vector<32xf32>
    %13 = vector.multi_reduction <add>, %12, %cst_7 [0] : vector<512x32xf32> to vector<32xf32>
    %14 = vector.shape_cast %13 : vector<32xf32> to vector<1x32xf32>
    %cst_8 = arith.constant 5.120000e+02 : f32
    %15 = vector.broadcast %cst_8 : f32 to vector<1x32xf32>
    %16 = arith.divf %14, %15 : vector<1x32xf32>
    %17 = vector.broadcast %9 : vector<1x32xf32> to vector<512x32xf32>
    %18 = arith.subf %4, %17 : vector<512x32xf32>
    %cst_9 = arith.constant 9.99999974E-6 : f32
    %19 = vector.broadcast %cst_9 : f32 to vector<1x32xf32>
    %20 = arith.addf %16, %19 : vector<1x32xf32>
    %21 = math.rsqrt %20 : vector<1x32xf32>
    %22 = vector.broadcast %21 : vector<1x32xf32> to vector<512x32xf32>
    %23 = arith.mulf %18, %22 : vector<512x32xf32>
    %24 = vector.extract_strided_slice %5 {offsets = [0, 0], sizes = [1, 32], strides = [1, 1]} : vector<2x32xf32> to vector<1x32xf32>
    %25 = vector.broadcast %24 : vector<1x32xf32> to vector<512x32xf32>
    %26 = arith.mulf %23, %25 : vector<512x32xf32>
    %27 = vector.extract_strided_slice %5 {offsets = [1, 0], sizes = [1, 32], strides = [1, 1]} : vector<2x32xf32> to vector<1x32xf32>
    %28 = vector.broadcast %27 : vector<1x32xf32> to vector<512x32xf32>
    %29 = arith.addf %26, %28 : vector<512x32xf32>
    %cst_10 = arith.constant 0.000000e+00 : f32
    %30 = vector.broadcast %cst_10 : f32 to vector<512x32xf32>
    %31 = arith.subf %30, %29 : vector<512x32xf32>
    %32 = math.exp %31 : vector<512x32xf32>
    %cst_11 = arith.constant 1.000000e+00 : f32
    %33 = vector.broadcast %cst_11 : f32 to vector<512x32xf32>
    %34 = arith.addf %33, %32 : vector<512x32xf32>
    %35 = tpu.reciprocal %34 {approx = true} : vector<512x32xf32> -> vector<512x32xf32>
    %36 = arith.mulf %29, %35 : vector<512x32xf32>
    %c0_12 = arith.constant 0 : index
    %c0_13 = arith.constant 0 : index
    %37 = vector.load %arg5[%c0_12, %c0_13] : memref<32x64xf32, #tpu.memory_space<vmem>>, vector<32x64xf32>
    %38 = arith.truncf %36 : vector<512x32xf32> to vector<512x32xbf16>
    %39 = arith.truncf %37 : vector<32x64xf32> to vector<32x64xbf16>
    %cst_14 = arith.constant dense<0.000000e+00> : vector<512x64xf32>
    %40 = tpu.matmul %38, %39, %cst_14 {dimension_numbers = #tpu.dot_dimension_numbers<[1], [0], [0], [1], [0, 0, 1, 1], [], []>} : vector<512x32xbf16>, vector<32x64xbf16>, vector<512x64xf32> -> vector<512x64xf32>
    %c0_15 = arith.constant 0 : index
    %c0_16 = arith.constant 0 : index
    %41 = vector.load %arg6[%c0_15, %c0_16] : memref<2x64xf32, #tpu.memory_space<vmem>>, vector<2x64xf32>
    %cst_17 = arith.constant dense<0.000000e+00> : vector<64xf32>
    %42 = vector.multi_reduction <add>, %40, %cst_17 [0] : vector<512x64xf32> to vector<64xf32>
    %43 = vector.shape_cast %42 : vector<64xf32> to vector<1x64xf32>
    %cst_18 = arith.constant 5.120000e+02 : f32
    %44 = vector.broadcast %cst_18 : f32 to vector<1x64xf32>
    %45 = arith.divf %43, %44 : vector<1x64xf32>
    %46 = vector.broadcast %45 : vector<1x64xf32> to vector<512x64xf32>
    %47 = arith.subf %40, %46 : vector<512x64xf32>
    %48 = arith.mulf %47, %47 : vector<512x64xf32>
    %cst_19 = arith.constant dense<0.000000e+00> : vector<64xf32>
    %49 = vector.multi_reduction <add>, %48, %cst_19 [0] : vector<512x64xf32> to vector<64xf32>
    %50 = vector.shape_cast %49 : vector<64xf32> to vector<1x64xf32>
    %cst_20 = arith.constant 5.120000e+02 : f32
    %51 = vector.broadcast %cst_20 : f32 to vector<1x64xf32>
    %52 = arith.divf %50, %51 : vector<1x64xf32>
    %53 = vector.broadcast %45 : vector<1x64xf32> to vector<512x64xf32>
    %54 = arith.subf %40, %53 : vector<512x64xf32>
    %cst_21 = arith.constant 9.99999974E-6 : f32
    %55 = vector.broadcast %cst_21 : f32 to vector<1x64xf32>
    %56 = arith.addf %52, %55 : vector<1x64xf32>
    %57 = math.rsqrt %56 : vector<1x64xf32>
    %58 = vector.broadcast %57 : vector<1x64xf32> to vector<512x64xf32>
    %59 = arith.mulf %54, %58 : vector<512x64xf32>
    %60 = vector.extract_strided_slice %41 {offsets = [0, 0], sizes = [1, 64], strides = [1, 1]} : vector<2x64xf32> to vector<1x64xf32>
    %61 = vector.broadcast %60 : vector<1x64xf32> to vector<512x64xf32>
    %62 = arith.mulf %59, %61 : vector<512x64xf32>
    %63 = vector.extract_strided_slice %41 {offsets = [1, 0], sizes = [1, 64], strides = [1, 1]} : vector<2x64xf32> to vector<1x64xf32>
    %64 = vector.broadcast %63 : vector<1x64xf32> to vector<512x64xf32>
    %65 = arith.addf %62, %64 : vector<512x64xf32>
    %cst_22 = arith.constant 0.000000e+00 : f32
    %66 = vector.broadcast %cst_22 : f32 to vector<512x64xf32>
    %67 = arith.subf %66, %65 : vector<512x64xf32>
    %68 = math.exp %67 : vector<512x64xf32>
    %cst_23 = arith.constant 1.000000e+00 : f32
    %69 = vector.broadcast %cst_23 : f32 to vector<512x64xf32>
    %70 = arith.addf %69, %68 : vector<512x64xf32>
    %71 = tpu.reciprocal %70 {approx = true} : vector<512x64xf32> -> vector<512x64xf32>
    %72 = arith.mulf %65, %71 : vector<512x64xf32>
    %c0_24 = arith.constant 0 : index
    %c0_25 = arith.constant 0 : index
    %73 = vector.load %arg1[%c0_24, %c0_25] : memref<2x512xf32, #tpu.memory_space<vmem>>, vector<2x512xf32>
    %74 = arith.truncf %73 : vector<2x512xf32> to vector<2x512xbf16>
    %75 = arith.truncf %72 : vector<512x64xf32> to vector<512x64xbf16>
    %cst_26 = arith.constant dense<0.000000e+00> : vector<2x64xf32>
    %76 = tpu.matmul %74, %75, %cst_26 {dimension_numbers = #tpu.dot_dimension_numbers<[1], [0], [0], [1], [0, 0, 1, 1], [], []>} : vector<2x512xbf16>, vector<512x64xbf16>, vector<2x64xf32> -> vector<2x64xf32>
    %c0_27 = arith.constant 0 : index
    %c0_28 = arith.constant 0 : index
    %77 = vector.load %arg7[%c0_27, %c0_28] : memref<64x64xf32, #tpu.memory_space<vmem>>, vector<64x64xf32>
    %78 = arith.truncf %76 : vector<2x64xf32> to vector<2x64xbf16>
    %79 = arith.truncf %77 : vector<64x64xf32> to vector<64x64xbf16>
    %cst_29 = arith.constant dense<0.000000e+00> : vector<2x64xf32>
    %80 = tpu.matmul %78, %79, %cst_29 {dimension_numbers = #tpu.dot_dimension_numbers<[1], [0], [0], [1], [0, 0, 1, 1], [], []>} : vector<2x64xbf16>, vector<64x64xbf16>, vector<2x64xf32> -> vector<2x64xf32>
    %c0_30 = arith.constant 0 : index
    %c0_31 = arith.constant 0 : index
    %81 = vector.load %arg8[%c0_30, %c0_31] : memref<1x64xf32, #tpu.memory_space<vmem>>, vector<1x64xf32>
    %82 = vector.broadcast %81 : vector<1x64xf32> to vector<2x64xf32>
    %83 = arith.addf %80, %82 : vector<2x64xf32>
    %84 = vector.extract_strided_slice %83 {offsets = [0, 0], sizes = [2, 32], strides = [1, 1]} : vector<2x64xf32> to vector<2x32xf32>
    %85 = vector.extract_strided_slice %83 {offsets = [0, 32], sizes = [2, 32], strides = [1, 1]} : vector<2x64xf32> to vector<2x32xf32>
    %c0_32 = arith.constant 0 : index
    %c0_33 = arith.constant 0 : index
    %86 = vector.load %arg2[%c0_32, %c0_33] : memref<2x32xf32, #tpu.memory_space<vmem>>, vector<2x32xf32>
    %cst_34 = arith.constant 5.000000e-01 : f32
    %87 = vector.broadcast %cst_34 : f32 to vector<2x32xf32>
    %88 = arith.mulf %87, %85 : vector<2x32xf32>
    %89 = math.exp %88 : vector<2x32xf32>
    %90 = arith.mulf %86, %89 : vector<2x32xf32>
    %91 = arith.addf %84, %90 : vector<2x32xf32>
    %c0_35 = arith.constant 0 : index
    %c0_36 = arith.constant 0 : index
    %92 = vector.load %arg11[%c0_35, %c0_36] : memref<2x32xf32, #tpu.memory_space<vmem>>, vector<2x32xf32>
    tpu.vector_store %arg11[%c0_35, %c0_36], %91 {strides = array<i32>} : memref<2x32xf32, #tpu.memory_space<vmem>>, vector<2x32xf32>,
    %c0_37 = arith.constant 0 : index
    %c0_38 = arith.constant 0 : index
    %93 = vector.load %arg9[%c0_37, %c0_38] : memref<32x1024xf32, #tpu.memory_space<vmem>>, vector<32x1024xf32>
    %94 = arith.truncf %91 : vector<2x32xf32> to vector<2x32xbf16>
    %95 = arith.truncf %93 : vector<32x1024xf32> to vector<32x1024xbf16>
    %cst_39 = arith.constant dense<0.000000e+00> : vector<2x1024xf32>
    %96 = tpu.matmul %94, %95, %cst_39 {dimension_numbers = #tpu.dot_dimension_numbers<[1], [0], [0], [1], [0, 0, 1, 1], [], []>} : vector<2x32xbf16>, vector<32x1024xbf16>, vector<2x1024xf32> -> vector<2x1024xf32>
    %c0_40 = arith.constant 0 : index
    %c0_41 = arith.constant 0 : index
    %97 = vector.load %arg10[%c0_40, %c0_41] : memref<1x1024xf32, #tpu.memory_space<vmem>>, vector<1x1024xf32>
    %98 = vector.broadcast %97 : vector<1x1024xf32> to vector<2x1024xf32>
    %99 = arith.addf %96, %98 : vector<2x1024xf32>
    %c0_42 = arith.constant 0 : index
    %c0_43 = arith.constant 0 : index
    %100 = vector.load %arg12[%c0_42, %c0_43] : memref<2x1024xf32, #tpu.memory_space<vmem>>, vector<2x1024xf32>
    tpu.vector_store %arg12[%c0_42, %c0_43], %99 {strides = array<i32>} : memref<2x1024xf32, #tpu.memory_space<vmem>>, vector<2x1024xf32>,
    return
  }
}

module attributes {stable_mosaic.version = 11 : i64} {
  func.func @deconv_bn_relu_kernel(%arg0: memref<128x1024xf32, #tpu.memory_space<vmem>>, %arg1: memref<1024x32xf32, #tpu.memory_space<vmem>>, %arg2: memref<1x32xf32, #tpu.memory_space<vmem>>, %arg3: memref<2x32xf32, #tpu.memory_space<vmem>>, %arg4: memref<128x32xf32, #tpu.memory_space<vmem>>) attributes {dimension_semantics = [], scalar_prefetch = 0 : i64, scratch_operands = 0 : i64, tpu.core_type = #tpu.core_type<tc>} {
    %c0 = arith.constant 0 : index
    %c0_0 = arith.constant 0 : index
    %0 = vector.load %arg0[%c0, %c0_0] : memref<128x1024xf32, #tpu.memory_space<vmem>>, vector<128x1024xf32>
    %c0_1 = arith.constant 0 : index
    %c0_2 = arith.constant 0 : index
    %1 = vector.load %arg1[%c0_1, %c0_2] : memref<1024x32xf32, #tpu.memory_space<vmem>>, vector<1024x32xf32>
    %2 = arith.truncf %0 : vector<128x1024xf32> to vector<128x1024xbf16>
    %3 = arith.truncf %1 : vector<1024x32xf32> to vector<1024x32xbf16>
    %cst = arith.constant dense<0.000000e+00> : vector<128x32xf32>
    %4 = tpu.matmul %2, %3, %cst {dimension_numbers = #tpu.dot_dimension_numbers<[1], [0], [0], [1], [0, 0, 1, 1], [], []>} : vector<128x1024xbf16>, vector<1024x32xbf16>, vector<128x32xf32> -> vector<128x32xf32>
    %c0_3 = arith.constant 0 : index
    %c0_4 = arith.constant 0 : index
    %5 = vector.load %arg2[%c0_3, %c0_4] : memref<1x32xf32, #tpu.memory_space<vmem>>, vector<1x32xf32>
    %6 = vector.broadcast %5 : vector<1x32xf32> to vector<128x32xf32>
    %7 = arith.addf %4, %6 : vector<128x32xf32>
    %c0_5 = arith.constant 0 : index
    %c0_6 = arith.constant 0 : index
    %8 = vector.load %arg3[%c0_5, %c0_6] : memref<2x32xf32, #tpu.memory_space<vmem>>, vector<2x32xf32>
    %cst_7 = arith.constant dense<0.000000e+00> : vector<32xf32>
    %9 = vector.multi_reduction <add>, %7, %cst_7 [0] : vector<128x32xf32> to vector<32xf32>
    %10 = vector.shape_cast %9 : vector<32xf32> to vector<1x32xf32>
    %cst_8 = arith.constant 1.280000e+02 : f32
    %11 = vector.broadcast %cst_8 : f32 to vector<1x32xf32>
    %12 = arith.divf %10, %11 : vector<1x32xf32>
    %13 = vector.broadcast %12 : vector<1x32xf32> to vector<128x32xf32>
    %14 = arith.subf %7, %13 : vector<128x32xf32>
    %15 = arith.mulf %14, %14 : vector<128x32xf32>
    %cst_9 = arith.constant dense<0.000000e+00> : vector<32xf32>
    %16 = vector.multi_reduction <add>, %15, %cst_9 [0] : vector<128x32xf32> to vector<32xf32>
    %17 = vector.shape_cast %16 : vector<32xf32> to vector<1x32xf32>
    %cst_10 = arith.constant 1.280000e+02 : f32
    %18 = vector.broadcast %cst_10 : f32 to vector<1x32xf32>
    %19 = arith.divf %17, %18 : vector<1x32xf32>
    %20 = vector.broadcast %12 : vector<1x32xf32> to vector<128x32xf32>
    %21 = arith.subf %7, %20 : vector<128x32xf32>
    %cst_11 = arith.constant 9.99999974E-6 : f32
    %22 = vector.broadcast %cst_11 : f32 to vector<1x32xf32>
    %23 = arith.addf %19, %22 : vector<1x32xf32>
    %24 = math.rsqrt %23 : vector<1x32xf32>
    %25 = vector.broadcast %24 : vector<1x32xf32> to vector<128x32xf32>
    %26 = arith.mulf %21, %25 : vector<128x32xf32>
    %27 = vector.extract_strided_slice %8 {offsets = [0, 0], sizes = [1, 32], strides = [1, 1]} : vector<2x32xf32> to vector<1x32xf32>
    %28 = vector.broadcast %27 : vector<1x32xf32> to vector<128x32xf32>
    %29 = arith.mulf %26, %28 : vector<128x32xf32>
    %30 = vector.extract_strided_slice %8 {offsets = [1, 0], sizes = [1, 32], strides = [1, 1]} : vector<2x32xf32> to vector<1x32xf32>
    %31 = vector.broadcast %30 : vector<1x32xf32> to vector<128x32xf32>
    %32 = arith.addf %29, %31 : vector<128x32xf32>
    %cst_12 = arith.constant 0.000000e+00 : f32
    %33 = vector.broadcast %cst_12 : f32 to vector<128x32xf32>
    %34 = arith.maximumf %32, %33 : vector<128x32xf32>
    %c0_13 = arith.constant 0 : index
    %c0_14 = arith.constant 0 : index
    %35 = vector.load %arg4[%c0_13, %c0_14] : memref<128x32xf32, #tpu.memory_space<vmem>>, vector<128x32xf32>
    tpu.vector_store %arg4[%c0_13, %c0_14], %34 {strides = array<i32>} : memref<128x32xf32, #tpu.memory_space<vmem>>, vector<128x32xf32>,
    return
  }
}

module attributes {stable_mosaic.version = 11 : i64} {
  func.func @deconv_bn_relu_kernel(%arg0: memref<512x512xf32, #tpu.memory_space<vmem>>, %arg1: memref<512x16xf32, #tpu.memory_space<vmem>>, %arg2: memref<1x16xf32, #tpu.memory_space<vmem>>, %arg3: memref<2x16xf32, #tpu.memory_space<vmem>>, %arg4: memref<512x16xf32, #tpu.memory_space<vmem>>) attributes {dimension_semantics = [], scalar_prefetch = 0 : i64, scratch_operands = 0 : i64, tpu.core_type = #tpu.core_type<tc>} {
    %c0 = arith.constant 0 : index
    %c0_0 = arith.constant 0 : index
    %0 = vector.load %arg0[%c0, %c0_0] : memref<512x512xf32, #tpu.memory_space<vmem>>, vector<512x512xf32>
    %c0_1 = arith.constant 0 : index
    %c0_2 = arith.constant 0 : index
    %1 = vector.load %arg1[%c0_1, %c0_2] : memref<512x16xf32, #tpu.memory_space<vmem>>, vector<512x16xf32>
    %2 = arith.truncf %0 : vector<512x512xf32> to vector<512x512xbf16>
    %3 = arith.truncf %1 : vector<512x16xf32> to vector<512x16xbf16>
    %cst = arith.constant dense<0.000000e+00> : vector<512x16xf32>
    %4 = tpu.matmul %2, %3, %cst {dimension_numbers = #tpu.dot_dimension_numbers<[1], [0], [0], [1], [0, 0, 1, 1], [], []>} : vector<512x512xbf16>, vector<512x16xbf16>, vector<512x16xf32> -> vector<512x16xf32>
    %c0_3 = arith.constant 0 : index
    %c0_4 = arith.constant 0 : index
    %5 = vector.load %arg2[%c0_3, %c0_4] : memref<1x16xf32, #tpu.memory_space<vmem>>, vector<1x16xf32>
    %6 = vector.broadcast %5 : vector<1x16xf32> to vector<512x16xf32>
    %7 = arith.addf %4, %6 : vector<512x16xf32>
    %c0_5 = arith.constant 0 : index
    %c0_6 = arith.constant 0 : index
    %8 = vector.load %arg3[%c0_5, %c0_6] : memref<2x16xf32, #tpu.memory_space<vmem>>, vector<2x16xf32>
    %cst_7 = arith.constant dense<0.000000e+00> : vector<16xf32>
    %9 = vector.multi_reduction <add>, %7, %cst_7 [0] : vector<512x16xf32> to vector<16xf32>
    %10 = vector.shape_cast %9 : vector<16xf32> to vector<1x16xf32>
    %cst_8 = arith.constant 5.120000e+02 : f32
    %11 = vector.broadcast %cst_8 : f32 to vector<1x16xf32>
    %12 = arith.divf %10, %11 : vector<1x16xf32>
    %13 = vector.broadcast %12 : vector<1x16xf32> to vector<512x16xf32>
    %14 = arith.subf %7, %13 : vector<512x16xf32>
    %15 = arith.mulf %14, %14 : vector<512x16xf32>
    %cst_9 = arith.constant dense<0.000000e+00> : vector<16xf32>
    %16 = vector.multi_reduction <add>, %15, %cst_9 [0] : vector<512x16xf32> to vector<16xf32>
    %17 = vector.shape_cast %16 : vector<16xf32> to vector<1x16xf32>
    %cst_10 = arith.constant 5.120000e+02 : f32
    %18 = vector.broadcast %cst_10 : f32 to vector<1x16xf32>
    %19 = arith.divf %17, %18 : vector<1x16xf32>
    %20 = vector.broadcast %12 : vector<1x16xf32> to vector<512x16xf32>
    %21 = arith.subf %7, %20 : vector<512x16xf32>
    %cst_11 = arith.constant 9.99999974E-6 : f32
    %22 = vector.broadcast %cst_11 : f32 to vector<1x16xf32>
    %23 = arith.addf %19, %22 : vector<1x16xf32>
    %24 = math.rsqrt %23 : vector<1x16xf32>
    %25 = vector.broadcast %24 : vector<1x16xf32> to vector<512x16xf32>
    %26 = arith.mulf %21, %25 : vector<512x16xf32>
    %27 = vector.extract_strided_slice %8 {offsets = [0, 0], sizes = [1, 16], strides = [1, 1]} : vector<2x16xf32> to vector<1x16xf32>
    %28 = vector.broadcast %27 : vector<1x16xf32> to vector<512x16xf32>
    %29 = arith.mulf %26, %28 : vector<512x16xf32>
    %30 = vector.extract_strided_slice %8 {offsets = [1, 0], sizes = [1, 16], strides = [1, 1]} : vector<2x16xf32> to vector<1x16xf32>
    %31 = vector.broadcast %30 : vector<1x16xf32> to vector<512x16xf32>
    %32 = arith.addf %29, %31 : vector<512x16xf32>
    %cst_12 = arith.constant 0.000000e+00 : f32
    %33 = vector.broadcast %cst_12 : f32 to vector<512x16xf32>
    %34 = arith.maximumf %32, %33 : vector<512x16xf32>
    %c0_13 = arith.constant 0 : index
    %c0_14 = arith.constant 0 : index
    %35 = vector.load %arg4[%c0_13, %c0_14] : memref<512x16xf32, #tpu.memory_space<vmem>>, vector<512x16xf32>
    tpu.vector_store %arg4[%c0_13, %c0_14], %34 {strides = array<i32>} : memref<512x16xf32, #tpu.memory_space<vmem>>, vector<512x16xf32>,
    return
  }
}

module attributes {stable_mosaic.version = 11 : i64} {
  func.func @deconv_tanh_kernel(%arg0: memref<2048x256xf32, #tpu.memory_space<vmem>>, %arg1: memref<256x3xf32, #tpu.memory_space<vmem>>, %arg2: memref<1x3xf32, #tpu.memory_space<vmem>>, %arg3: memref<2048x3xf32, #tpu.memory_space<vmem>>) attributes {dimension_semantics = [], scalar_prefetch = 0 : i64, scratch_operands = 0 : i64, tpu.core_type = #tpu.core_type<tc>} {
    %c0 = arith.constant 0 : index
    %c0_0 = arith.constant 0 : index
    %0 = vector.load %arg0[%c0, %c0_0] : memref<2048x256xf32, #tpu.memory_space<vmem>>, vector<2048x256xf32>
    %c0_1 = arith.constant 0 : index
    %c0_2 = arith.constant 0 : index
    %1 = vector.load %arg1[%c0_1, %c0_2] : memref<256x3xf32, #tpu.memory_space<vmem>>, vector<256x3xf32>
    %2 = arith.truncf %0 : vector<2048x256xf32> to vector<2048x256xbf16>
    %3 = arith.truncf %1 : vector<256x3xf32> to vector<256x3xbf16>
    %cst = arith.constant dense<0.000000e+00> : vector<2048x3xf32>
    %4 = tpu.matmul %2, %3, %cst {dimension_numbers = #tpu.dot_dimension_numbers<[1], [0], [0], [1], [0, 0, 1, 1], [], []>} : vector<2048x256xbf16>, vector<256x3xbf16>, vector<2048x3xf32> -> vector<2048x3xf32>
    %c0_3 = arith.constant 0 : index
    %c0_4 = arith.constant 0 : index
    %5 = vector.load %arg2[%c0_3, %c0_4] : memref<1x3xf32, #tpu.memory_space<vmem>>, vector<1x3xf32>
    %6 = vector.broadcast %5 : vector<1x3xf32> to vector<2048x3xf32>
    %7 = arith.addf %4, %6 : vector<2048x3xf32>
    %8 = math.tanh %7 : vector<2048x3xf32>
    %c0_5 = arith.constant 0 : index
    %c0_6 = arith.constant 0 : index
    %9 = vector.load %arg3[%c0_5, %c0_6] : memref<2048x3xf32, #tpu.memory_space<vmem>>, vector<2048x3xf32>
    tpu.vector_store %arg3[%c0_5, %c0_6], %8 {strides = array<i32>} : memref<2048x3xf32, #tpu.memory_space<vmem>>, vector<2048x3xf32>,
    return
  }
}

</mosaic_0001>

<llo_original>
// kernel: glo_forward.4
$region0: #{glo_forward.4}
  #allocation0 [shape = 'u32[]', space=smem, size = 0x4, offset = 0x4, fixed_abs, tag = 'smem constant byte address 0x4 - core index']
  #allocation1 [shape = 'u32[72,128]{1,0:T(1,128)}', space=vmem, size = 0x9000, scoped, tag = 'internal scratch']
  %s0 = inlined_call_operand.vmem [shape: f32[512,27], index: 0, kind: input, shape index: {}]
  %s1 = inlined_call_operand.vmem [shape: f32[2,512], index: 1, kind: input, shape index: {}]
  %s2 = inlined_call_operand.hbm [shape: f32[2,32], index: 2, kind: input, shape index: {}]
  %s3 = inlined_call_operand.hbm [shape: f32[27,32], index: 3, kind: input, shape index: {}]
  %s4 = inlined_call_operand.hbm [shape: f32[2,32], index: 4, kind: input, shape index: {}]
  %s5 = inlined_call_operand.hbm [shape: f32[32,64], index: 5, kind: input, shape index: {}]
  %s6 = inlined_call_operand.hbm [shape: f32[2,64], index: 6, kind: input, shape index: {}]
  %s7 = inlined_call_operand.hbm [shape: f32[64,64], index: 7, kind: input, shape index: {}]
  %s8 = inlined_call_operand.hbm [shape: f32[1,64], index: 8, kind: input, shape index: {}]
  %s9 = inlined_call_operand.hbm [shape: f32[32,1024], index: 9, kind: input, shape index: {}]
  %s10 = inlined_call_operand.hbm [shape: f32[1,1024], index: 10, kind: input, shape index: {}]
  %s11 = inlined_call_operand.vmem [shape: f32[2,32], index: 11, kind: output, shape index: {0}]
  %s12 = inlined_call_operand.vmem [shape: f32[2,1024], index: 12, kind: output, shape index: {1}]
  %13 = xla_tuple %s11, %s12
  %s14 = sld [smem:[#allocation0]]
  $region98: #{glo_forward.4} parent=0
    _
  %s16 = ssub.s32 1, %s14
  %s17 = scalar_select 0, %s16, %s14
  $region1: #{glo_forward.4} parent=0
    #allocation2 [shape = 'u8[1024]{0}', space=vmem, size = 0x400, scoped, tag = 'input window, operand 2, single buffered']
    #allocation3 [shape = 's32[1]{0}', space=sflag, size = 0x4, scoped, tag = 'scoped memory for glo_forward.4']
    #allocation4 [shape = 'u8[16384]{0}', space=vmem, size = 0x4000, scoped, tag = 'input window, operand 3, single buffered']
    #allocation5 [shape = 's32[1]{0}', space=sflag, size = 0x4, scoped, tag = 'scoped memory for glo_forward.4']
    #allocation6 [shape = 'u8[1024]{0}', space=vmem, size = 0x400, scoped, tag = 'input window, operand 4, single buffered']
    #allocation7 [shape = 'u8[16384]{0}', space=vmem, size = 0x4000, scoped, tag = 'input window, operand 5, single buffered']
    #allocation8 [shape = 's32[1]{0}', space=sflag, size = 0x4, scoped, tag = 'scoped memory for glo_forward.4']
    #allocation9 [shape = 'u8[1024]{0}', space=vmem, size = 0x400, scoped, tag = 'input window, operand 6, single buffered']
    #allocation10 [shape = 'u8[32768]{0}', space=vmem, size = 0x8000, scoped, tag = 'input window, operand 7, single buffered']
    #allocation11 [shape = 's32[1]{0}', space=sflag, size = 0x4, scoped, tag = 'scoped memory for glo_forward.4']
    #allocation12 [shape = 'u8[512]{0}', space=vmem, size = 0x400, scoped, tag = 'input window, operand 8, single buffered']
    #allocation13 [shape = 'u8[131072]{0}', space=vmem, size = 0x20000, scoped, tag = 'input window, operand 9, single buffered']
    #allocation14 [shape = 's32[1]{0}', space=sflag, size = 0x4, scoped, tag = 'scoped memory for glo_forward.4']
    #allocation15 [shape = 'u8[4096]{0}', space=vmem, size = 0x1000, scoped, tag = 'input window, operand 10, single buffered']
    %18 = vsyncpa [#allocation3], 0
    %19 = vsyncpa [#allocation5], 0
    %20 = vsyncpa [#allocation8], 0
    %21 = vsyncpa [#allocation11], 0
    %22 = vsyncpa [#allocation14], 0
    // Predicated region
    $region2: #{glo_forward.4} parent=1 // pred_check
      _
    $region3: #{glo_forward.4} parent=1 // pred_check_branch
      %24 = sbr.rel (0) target = $region5
    $region4: #{glo_forward.4} parent=1 // pred_region
      _
    $region5: #{glo_forward.4} parent=1 // pred_fallthru
      _
    // Predicated region
    $region6: #{glo_forward.4} parent=1 // pred_check
      _
    $region7: #{glo_forward.4} parent=1 // pred_check_branch
      %26 = sbr.rel (0) target = $region9
    $region8: #{glo_forward.4} parent=1 // pred_region
      _
    $region9: #{glo_forward.4} parent=1 // pred_fallthru
      _
    // Predicated region
    $region10: #{glo_forward.4} parent=1 // pred_check
      _
    $region11: #{glo_forward.4} parent=1 // pred_check_branch
      %28 = sbr.rel (0) target = $region13
    $region12: #{glo_forward.4} parent=1 // pred_region
      %30 = vsyncadd [#allocation3], 0
      %s32 = sshll.u32 %s2, 4
      %s33 = int_to_ptr.hbm [resolvable:$true] %s32
      %s34 = sshll.u32 [#allocation2], 4
      %s35 = int_to_ptr.vmem [resolvable:$true] %s34
      %37 = dma.hbm_to_vmem [thread:$0]  %s33, 32, %s35, [#allocation3]
    $region13: #{glo_forward.4} parent=1 // pred_fallthru
      _
    // Predicated region
    $region14: #{glo_forward.4} parent=1 // pred_check
      _
    $region15: #{glo_forward.4} parent=1 // pred_check_branch
      %39 = sbr.rel (0) target = $region17
    $region16: #{glo_forward.4} parent=1 // pred_region
      %41 = vsyncadd [#allocation5], 0
      %s42 = sshll.u32 %s3, 4
      %s43 = int_to_ptr.hbm [resolvable:$true] %s42
      %s44 = sshll.u32 [#allocation4], 4
      %s45 = int_to_ptr.vmem [resolvable:$true] %s44
      %50 = dma.hbm_to_vmem [thread:$0]  %s43, 512, %s45, [#allocation5], 128, 128, 8
    $region17: #{glo_forward.4} parent=1 // pred_fallthru
      _
    // Predicated region
    $region18: #{glo_forward.4} parent=1 // pred_check
      _
    $region19: #{glo_forward.4} parent=1 // pred_check_branch
      %52 = sbr.rel (0) target = $region21
    $region20: #{glo_forward.4} parent=1 // pred_region
      %54 = vsyncadd [#allocation5], 0
      %s56 = sshll.u32 %s4, 4
      %s57 = int_to_ptr.hbm [resolvable:$true] %s56
      %s58 = sshll.u32 [#allocation6], 4
      %s59 = int_to_ptr.vmem [resolvable:$true] %s58
      %61 = dma.hbm_to_vmem [thread:$0]  %s57, 32, %s59, [#allocation5]
    $region21: #{glo_forward.4} parent=1 // pred_fallthru
      _
    // Predicated region
    $region22: #{glo_forward.4} parent=1 // pred_check
      _
    $region23: #{glo_forward.4} parent=1 // pred_check_branch
      %63 = sbr.rel (0) target = $region25
    $region24: #{glo_forward.4} parent=1 // pred_region
      %65 = vsyncadd [#allocation8], 0
      %s66 = sshll.u32 %s5, 4
      %s67 = int_to_ptr.hbm [resolvable:$true] %s66
      %s68 = sshll.u32 [#allocation7], 4
      %s69 = int_to_ptr.vmem [resolvable:$true] %s68
      %74 = dma.hbm_to_vmem [thread:$0]  %s67, 512, %s69, [#allocation8], 128, 128, 8
    $region25: #{glo_forward.4} parent=1 // pred_fallthru
      _
    // Predicated region
    $region26: #{glo_forward.4} parent=1 // pred_check
      _
    $region27: #{glo_forward.4} parent=1 // pred_check_branch
      %76 = sbr.rel (0) target = $region29
    $region28: #{glo_forward.4} parent=1 // pred_region
      %78 = vsyncadd [#allocation8], 0
      %s80 = sshll.u32 %s6, 4
      %s81 = int_to_ptr.hbm [resolvable:$true] %s80
      %s82 = sshll.u32 [#allocation9], 4
      %s83 = int_to_ptr.vmem [resolvable:$true] %s82
      %85 = dma.hbm_to_vmem [thread:$0]  %s81, 32, %s83, [#allocation8]
    $region29: #{glo_forward.4} parent=1 // pred_fallthru
      _
    // Predicated region
    $region30: #{glo_forward.4} parent=1 // pred_check
      _
    $region31: #{glo_forward.4} parent=1 // pred_check_branch
      %87 = sbr.rel (0) target = $region33
    $region32: #{glo_forward.4} parent=1 // pred_region
      %89 = vsyncadd [#allocation11], 0
      %s90 = sshll.u32 %s7, 4
      %s91 = int_to_ptr.hbm [resolvable:$true] %s90
      %s92 = sshll.u32 [#allocation10], 4
      %s93 = int_to_ptr.vmem [resolvable:$true] %s92
      %98 = dma.hbm_to_vmem [thread:$0]  %s91, 1024, %s93, [#allocation11], 128, 128, 8
    $region33: #{glo_forward.4} parent=1 // pred_fallthru
      _
    // Predicated region
    $region34: #{glo_forward.4} parent=1 // pred_check
      _
    $region35: #{glo_forward.4} parent=1 // pred_check_branch
      %100 = sbr.rel (0) target = $region37
    $region36: #{glo_forward.4} parent=1 // pred_region
      %102 = vsyncadd [#allocation11], 0
      %s104 = sshll.u32 %s8, 4
      %s105 = int_to_ptr.hbm [resolvable:$true] %s104
      %s106 = sshll.u32 [#allocation12], 4
      %s107 = int_to_ptr.vmem [resolvable:$true] %s106
      %109 = dma.hbm_to_vmem [thread:$0]  %s105, 16, %s107, [#allocation11]
    $region37: #{glo_forward.4} parent=1 // pred_fallthru
      _
    // Predicated region
    $region38: #{glo_forward.4} parent=1 // pred_check
      _
    $region39: #{glo_forward.4} parent=1 // pred_check_branch
      %111 = sbr.rel (0) target = $region41
    $region40: #{glo_forward.4} parent=1 // pred_region
      %113 = vsyncadd [#allocation14], 0
      %s114 = sshll.u32 %s9, 4
      %s115 = int_to_ptr.hbm [resolvable:$true] %s114
      %s116 = sshll.u32 [#allocation13], 4
      %s117 = int_to_ptr.vmem [resolvable:$true] %s116
      %122 = dma.hbm_to_vmem [thread:$0]  %s115, 4096, %s117, [#allocation14], 1024, 1024, 64
    $region41: #{glo_forward.4} parent=1 // pred_fallthru
      _
    // Predicated region
    $region42: #{glo_forward.4} parent=1 // pred_check
      _
    $region43: #{glo_forward.4} parent=1 // pred_check_branch
      %124 = sbr.rel (0) target = $region45
    $region44: #{glo_forward.4} parent=1 // pred_region
      %126 = vsyncadd [#allocation14], 0
      %s128 = sshll.u32 %s10, 4
      %s129 = int_to_ptr.hbm [resolvable:$true] %s128
      %s130 = sshll.u32 [#allocation15], 4
      %s131 = int_to_ptr.vmem [resolvable:$true] %s130
      %133 = dma.hbm_to_vmem [thread:$0]  %s129, 128, %s131, [#allocation14]
    $region45: #{glo_forward.4} parent=1 // pred_fallthru
      _
    // Predicated region
    $region46: #{glo_forward.4} parent=1 // pred_check
      _
    $region47: #{glo_forward.4} parent=1 // pred_check_branch
      %135 = sbr.rel (0) target = $region49
    $region48: #{glo_forward.4} parent=1 // pred_region
      %137 = dma.done [#allocation3], 32
    $region49: #{glo_forward.4} parent=1 // pred_fallthru
      _
    // Predicated region
    $region50: #{glo_forward.4} parent=1 // pred_check
      _
    $region51: #{glo_forward.4} parent=1 // pred_check_branch
      %139 = sbr.rel (0) target = $region53
    $region52: #{glo_forward.4} parent=1 // pred_region
      %141 = dma.done [#allocation5], 512
    $region53: #{glo_forward.4} parent=1 // pred_fallthru
      _
    // Predicated region
    $region54: #{glo_forward.4} parent=1 // pred_check
      _
    $region55: #{glo_forward.4} parent=1 // pred_check_branch
      %143 = sbr.rel (0) target = $region57
    $region56: #{glo_forward.4} parent=1 // pred_region
      %145 = dma.done [#allocation5], 32
    $region57: #{glo_forward.4} parent=1 // pred_fallthru
      _
    // Predicated region
    $region58: #{glo_forward.4} parent=1 // pred_check
      _
    $region59: #{glo_forward.4} parent=1 // pred_check_branch
      %147 = sbr.rel (0) target = $region61
    $region60: #{glo_forward.4} parent=1 // pred_region
      %149 = dma.done [#allocation8], 512
    $region61: #{glo_forward.4} parent=1 // pred_fallthru
      _
    // Predicated region
    $region62: #{glo_forward.4} parent=1 // pred_check
      _
    $region63: #{glo_forward.4} parent=1 // pred_check_branch
      %151 = sbr.rel (0) target = $region65
    $region64: #{glo_forward.4} parent=1 // pred_region
      %153 = dma.done [#allocation8], 32
    $region65: #{glo_forward.4} parent=1 // pred_fallthru
      _
    // Predicated region
    $region66: #{glo_forward.4} parent=1 // pred_check
      _
    $region67: #{glo_forward.4} parent=1 // pred_check_branch
      %155 = sbr.rel (0) target = $region69
    $region68: #{glo_forward.4} parent=1 // pred_region
      %157 = dma.done [#allocation11], 1024
    $region69: #{glo_forward.4} parent=1 // pred_fallthru
      _
    // Predicated region
    $region70: #{glo_forward.4} parent=1 // pred_check
      _
    $region71: #{glo_forward.4} parent=1 // pred_check_branch
      %159 = sbr.rel (0) target = $region73
    $region72: #{glo_forward.4} parent=1 // pred_region
      %161 = dma.done [#allocation11], 16
    $region73: #{glo_forward.4} parent=1 // pred_fallthru
      _
    // Predicated region
    $region74: #{glo_forward.4} parent=1 // pred_check
      _
    $region75: #{glo_forward.4} parent=1 // pred_check_branch
      %163 = sbr.rel (0) target = $region77
    $region76: #{glo_forward.4} parent=1 // pred_region
      %165 = dma.done [#allocation14], 4096
    $region77: #{glo_forward.4} parent=1 // pred_fallthru
      _
    // Predicated region
    $region78: #{glo_forward.4} parent=1 // pred_check
      _
    $region79: #{glo_forward.4} parent=1 // pred_check_branch
      %167 = sbr.rel (0) target = $region81
    $region80: #{glo_forward.4} parent=1 // pred_region
      %169 = dma.done [#allocation14], 128
    $region81: #{glo_forward.4} parent=1 // pred_fallthru
      _
    %v171 = vld [vmem:[%s0] sm:$0xff]
    %v172 = vld [vmem:[%s0 + $0x8] sm:$0xff]
    %v173 = vld [vmem:[%s0 + $0x10] sm:$0xff]
    %v174 = vld [vmem:[%s0 + $0x18] sm:$0xff]
    %v175 = vld [vmem:[%s0 + $0x20] sm:$0xff]
    %v176 = vld [vmem:[%s0 + $0x28] sm:$0xff]
    %v177 = vld [vmem:[%s0 + $0x30] sm:$0xff]
    %v178 = vld [vmem:[%s0 + $0x38] sm:$0xff]
    %v179 = vld [vmem:[%s0 + $0x40] sm:$0xff]
    %v180 = vld [vmem:[%s0 + $0x48] sm:$0xff]
    %v181 = vld [vmem:[%s0 + $0x50] sm:$0xff]
    %v182 = vld [vmem:[%s0 + $0x58] sm:$0xff]
    %v183 = vld [vmem:[%s0 + $0x60] sm:$0xff]
    %v184 = vld [vmem:[%s0 + $0x68] sm:$0xff]
    %v185 = vld [vmem:[%s0 + $0x70] sm:$0xff]
    %v186 = vld [vmem:[%s0 + $0x78] sm:$0xff]
    %v187 = vld [vmem:[%s0 + $0x80] sm:$0xff]
    %v188 = vld [vmem:[%s0 + $0x88] sm:$0xff]
    %v189 = vld [vmem:[%s0 + $0x90] sm:$0xff]
    %v190 = vld [vmem:[%s0 + $0x98] sm:$0xff]
    %v191 = vld [vmem:[%s0 + $0xa0] sm:$0xff]
    %v192 = vld [vmem:[%s0 + $0xa8] sm:$0xff]
    %v193 = vld [vmem:[%s0 + $0xb0] sm:$0xff]
    %v194 = vld [vmem:[%s0 + $0xb8] sm:$0xff]
    %v195 = vld [vmem:[%s0 + $0xc0] sm:$0xff]
    %v196 = vld [vmem:[%s0 + $0xc8] sm:$0xff]
    %v197 = vld [vmem:[%s0 + $0xd0] sm:$0xff]
    %v198 = vld [vmem:[%s0 + $0xd8] sm:$0xff]
    %v199 = vld [vmem:[%s0 + $0xe0] sm:$0xff]
    %v200 = vld [vmem:[%s0 + $0xe8] sm:$0xff]
    %v201 = vld [vmem:[%s0 + $0xf0] sm:$0xff]
    %v202 = vld [vmem:[%s0 + $0xf8] sm:$0xff]
    %v203 = vld [vmem:[%s0 + $0x100] sm:$0xff]
    %v204 = vld [vmem:[%s0 + $0x108] sm:$0xff]
    %v205 = vld [vmem:[%s0 + $0x110] sm:$0xff]
    %v206 = vld [vmem:[%s0 + $0x118] sm:$0xff]
    %v207 = vld [vmem:[%s0 + $0x120] sm:$0xff]
    %v208 = vld [vmem:[%s0 + $0x128] sm:$0xff]
    %v209 = vld [vmem:[%s0 + $0x130] sm:$0xff]
    %v210 = vld [vmem:[%s0 + $0x138] sm:$0xff]
    %v211 = vld [vmem:[%s0 + $0x140] sm:$0xff]
    %v212 = vld [vmem:[%s0 + $0x148] sm:$0xff]
    %v213 = vld [vmem:[%s0 + $0x150] sm:$0xff]
    %v214 = vld [vmem:[%s0 + $0x158] sm:$0xff]
    %v215 = vld [vmem:[%s0 + $0x160] sm:$0xff]
    %v216 = vld [vmem:[%s0 + $0x168] sm:$0xff]
    %v217 = vld [vmem:[%s0 + $0x170] sm:$0xff]
    %v218 = vld [vmem:[%s0 + $0x178] sm:$0xff]
    %v219 = vld [vmem:[%s0 + $0x180] sm:$0xff]
    %v220 = vld [vmem:[%s0 + $0x188] sm:$0xff]
    %v221 = vld [vmem:[%s0 + $0x190] sm:$0xff]
    %v222 = vld [vmem:[%s0 + $0x198] sm:$0xff]
    %v223 = vld [vmem:[%s0 + $0x1a0] sm:$0xff]
    %v224 = vld [vmem:[%s0 + $0x1a8] sm:$0xff]
    %v225 = vld [vmem:[%s0 + $0x1b0] sm:$0xff]
    %v226 = vld [vmem:[%s0 + $0x1b8] sm:$0xff]
    %v227 = vld [vmem:[%s0 + $0x1c0] sm:$0xff]
    %v228 = vld [vmem:[%s0 + $0x1c8] sm:$0xff]
    %v229 = vld [vmem:[%s0 + $0x1d0] sm:$0xff]
    %v230 = vld [vmem:[%s0 + $0x1d8] sm:$0xff]
    %v231 = vld [vmem:[%s0 + $0x1e0] sm:$0xff]
    %v232 = vld [vmem:[%s0 + $0x1e8] sm:$0xff]
    %v233 = vld [vmem:[%s0 + $0x1f0] sm:$0xff]
    %v234 = vld [vmem:[%s0 + $0x1f8] sm:$0xff]
    %v235 = vld [vmem:[#allocation4] sm:$0xff]
    %v236 = vld [vmem:[#allocation4 + $0x8] sm:$0xff]
    %v237 = vld [vmem:[#allocation4 + $0x10] sm:$0xff]
    %v238 = vld [vmem:[#allocation4 + $0x18] sm:$0x7]
    %v239 = vpack.c.bf16 %v172, %v171
    %v240 = vpack.c.bf16 %v174, %v173
    %v241 = vpack.c.bf16 %v176, %v175
    %v242 = vpack.c.bf16 %v178, %v177
    %v243 = vpack.c.bf16 %v180, %v179
    %v244 = vpack.c.bf16 %v182, %v181
    %v245 = vpack.c.bf16 %v184, %v183
    %v246 = vpack.c.bf16 %v186, %v185
    %v247 = vpack.c.bf16 %v188, %v187
    %v248 = vpack.c.bf16 %v190, %v189
    %v249 = vpack.c.bf16 %v192, %v191
    %v250 = vpack.c.bf16 %v194, %v193
    %v251 = vpack.c.bf16 %v196, %v195
    %v252 = vpack.c.bf16 %v198, %v197
    %v253 = vpack.c.bf16 %v200, %v199
    %v254 = vpack.c.bf16 %v202, %v201
    %v255 = vpack.c.bf16 %v204, %v203
    %v256 = vpack.c.bf16 %v206, %v205
    %v257 = vpack.c.bf16 %v208, %v207
    %v258 = vpack.c.bf16 %v210, %v209
    %v259 = vpack.c.bf16 %v212, %v211
    %v260 = vpack.c.bf16 %v214, %v213
    %v261 = vpack.c.bf16 %v216, %v215
    %v262 = vpack.c.bf16 %v218, %v217
    %v263 = vpack.c.bf16 %v220, %v219
    %v264 = vpack.c.bf16 %v222, %v221
    %v265 = vpack.c.bf16 %v224, %v223
    %v266 = vpack.c.bf16 %v226, %v225
    %v267 = vpack.c.bf16 %v228, %v227
    %v268 = vpack.c.bf16 %v230, %v229
    %v269 = vpack.c.bf16 %v232, %v231
    %v270 = vpack.c.bf16 %v234, %v233
    %v271 = vpack.c.bf16 %v236, %v235
    %v272 = vpack.c.bf16 %v238, %v237
    %vm273 = vcmask 220160
    %v275 = vsel %vm273, %v239, 0
    %v278 = vsel %vm273, %v240, 0
    %v281 = vsel %vm273, %v241, 0
    %v284 = vsel %vm273, %v242, 0
    %v287 = vsel %vm273, %v243, 0
    %v290 = vsel %vm273, %v244, 0
    %v293 = vsel %vm273, %v245, 0
    %v296 = vsel %vm273, %v246, 0
    %v299 = vsel %vm273, %v247, 0
    %v302 = vsel %vm273, %v248, 0
    %v305 = vsel %vm273, %v249, 0
    %v308 = vsel %vm273, %v250, 0
    %v311 = vsel %vm273, %v251, 0
    %v314 = vsel %vm273, %v252, 0
    %v317 = vsel %vm273, %v253, 0
    %v320 = vsel %vm273, %v254, 0
    %v323 = vsel %vm273, %v255, 0
    %v326 = vsel %vm273, %v256, 0
    %v329 = vsel %vm273, %v257, 0
    %v332 = vsel %vm273, %v258, 0
    %v335 = vsel %vm273, %v259, 0
    %v338 = vsel %vm273, %v260, 0
    %v341 = vsel %vm273, %v261, 0
    %v344 = vsel %vm273, %v262, 0
    %v347 = vsel %vm273, %v263, 0
    %v350 = vsel %vm273, %v264, 0
    %v353 = vsel %vm273, %v265, 0
    %v356 = vsel %vm273, %v266, 0
    %v359 = vsel %vm273, %v267, 0
    %v362 = vsel %vm273, %v268, 0
    %v365 = vsel %vm273, %v269, 0
    %v368 = vsel %vm273, %v270, 0
    %vm370 = vcmask 1044480
    %vm371 = vcmask 1045504
    %v372 = vsel %vm370, 4294967295, 65535
    %v373 = vsel %vm371, %v372, 0
    %v375 = vand.u32 %v272, %v373
    %377 = vmatpush.bf16.msra.mxu0 0
    %378 = vmatpush.bf16.msra.mxu0 0
    %379 = vmatpush.bf16.msra.mxu0 0
    %380 = vmatpush.bf16.msra.mxu0 0
    %381 = vmatpush.bf16.msra.mxu0 0
    %382 = vmatpush.bf16.msra.mxu0 0
    %383 = vmatpush.bf16.msra.mxu0 %v375
    %384 = vmatpush.bf16.msra.mxu0 %v271
    %385 = vmatmul.bf16.gmra.mxu0 %v275
    %v386 = vpop.f32.mrf.mxu0
    %v387 = vadd.f32 0.0, %v386
    %v388 = vpop.f32.mrf.mxu0
    %v389 = vadd.f32 0.0, %v388
    %390 = vmatmul.bf16.gmra.mxu0 %v278
    %v391 = vpop.f32.mrf.mxu0
    %v392 = vadd.f32 0.0, %v391
    %v393 = vpop.f32.mrf.mxu0
    %v394 = vadd.f32 0.0, %v393
    %395 = vmatmul.bf16.gmra.mxu0 %v281
    %v396 = vpop.f32.mrf.mxu0
    %v397 = vadd.f32 0.0, %v396
    %v398 = vpop.f32.mrf.mxu0
    %v399 = vadd.f32 0.0, %v398
    %400 = vmatmul.bf16.gmra.mxu0 %v284
    %v401 = vpop.f32.mrf.mxu0
    %v402 = vadd.f32 0.0, %v401
    %v403 = vpop.f32.mrf.mxu0
    %v404 = vadd.f32 0.0, %v403
    %405 = vmatmul.bf16.gmra.mxu0 %v287
    %v406 = vpop.f32.mrf.mxu0
    %v407 = vadd.f32 0.0, %v406
    %v408 = vpop.f32.mrf.mxu0
    %v409 = vadd.f32 0.0, %v408
    %410 = vmatmul.bf16.gmra.mxu0 %v290
    %v411 = vpop.f32.mrf.mxu0
    %v412 = vadd.f32 0.0, %v411
    %v413 = vpop.f32.mrf.mxu0
    %v414 = vadd.f32 0.0, %v413
    %415 = vmatmul.bf16.gmra.mxu0 %v293
    %v416 = vpop.f32.mrf.mxu0
    %v417 = vadd.f32 0.0, %v416
    %v418 = vpop.f32.mrf.mxu0
    %v419 = vadd.f32 0.0, %v418
    %420 = vmatmul.bf16.gmra.mxu0 %v296
    %v421 = vpop.f32.mrf.mxu0
    %v422 = vadd.f32 0.0, %v421
    %v423 = vpop.f32.mrf.mxu0
    %v424 = vadd.f32 0.0, %v423
    %425 = vmatmul.bf16.gmra.mxu0 %v299
    %v426 = vpop.f32.mrf.mxu0
    %v427 = vadd.f32 0.0, %v426
    %v428 = vpop.f32.mrf.mxu0
    %v429 = vadd.f32 0.0, %v428
    %430 = vmatmul.bf16.gmra.mxu0 %v302
    %v431 = vpop.f32.mrf.mxu0
    %v432 = vadd.f32 0.0, %v431
    %v433 = vpop.f32.mrf.mxu0
    %v434 = vadd.f32 0.0, %v433
    %435 = vmatmul.bf16.gmra.mxu0 %v305
    %v436 = vpop.f32.mrf.mxu0
    %v437 = vadd.f32 0.0, %v436
    %v438 = vpop.f32.mrf.mxu0
    %v439 = vadd.f32 0.0, %v438
    %440 = vmatmul.bf16.gmra.mxu0 %v308
    %v441 = vpop.f32.mrf.mxu0
    %v442 = vadd.f32 0.0, %v441
    %v443 = vpop.f32.mrf.mxu0
    %v444 = vadd.f32 0.0, %v443
    %445 = vmatmul.bf16.gmra.mxu0 %v311
    %v446 = vpop.f32.mrf.mxu0
    %v447 = vadd.f32 0.0, %v446
    %v448 = vpop.f32.mrf.mxu0
    %v449 = vadd.f32 0.0, %v448
    %450 = vmatmul.bf16.gmra.mxu0 %v314
    %v451 = vpop.f32.mrf.mxu0
    %v452 = vadd.f32 0.0, %v451
    %v453 = vpop.f32.mrf.mxu0
    %v454 = vadd.f32 0.0, %v453
    %455 = vmatmul.bf16.gmra.mxu0 %v317
    %v456 = vpop.f32.mrf.mxu0
    %v457 = vadd.f32 0.0, %v456
    %v458 = vpop.f32.mrf.mxu0
    %v459 = vadd.f32 0.0, %v458
    %460 = vmatmul.bf16.gmra.mxu0 %v320
    %v461 = vpop.f32.mrf.mxu0
    %v462 = vadd.f32 0.0, %v461
    %v463 = vpop.f32.mrf.mxu0
    %v464 = vadd.f32 0.0, %v463
    %465 = vmatmul.bf16.gmra.mxu0 %v323
    %v466 = vpop.f32.mrf.mxu0
    %v467 = vadd.f32 0.0, %v466
    %v468 = vpop.f32.mrf.mxu0
    %v469 = vadd.f32 0.0, %v468
    %470 = vmatmul.bf16.gmra.mxu0 %v326
    %v471 = vpop.f32.mrf.mxu0
    %v472 = vadd.f32 0.0, %v471
    %v473 = vpop.f32.mrf.mxu0
    %v474 = vadd.f32 0.0, %v473
    %475 = vmatmul.bf16.gmra.mxu0 %v329
    %v476 = vpop.f32.mrf.mxu0
    %v477 = vadd.f32 0.0, %v476
    %v478 = vpop.f32.mrf.mxu0
    %v479 = vadd.f32 0.0, %v478
    %480 = vmatmul.bf16.gmra.mxu0 %v332
    %v481 = vpop.f32.mrf.mxu0
    %v482 = vadd.f32 0.0, %v481
    %v483 = vpop.f32.mrf.mxu0
    %v484 = vadd.f32 0.0, %v483
    %485 = vmatmul.bf16.gmra.mxu0 %v335
    %v486 = vpop.f32.mrf.mxu0
    %v487 = vadd.f32 0.0, %v486
    %v488 = vpop.f32.mrf.mxu0
    %v489 = vadd.f32 0.0, %v488
    %490 = vmatmul.bf16.gmra.mxu0 %v338
    %v491 = vpop.f32.mrf.mxu0
    %v492 = vadd.f32 0.0, %v491
    %v493 = vpop.f32.mrf.mxu0
    %v494 = vadd.f32 0.0, %v493
    %495 = vmatmul.bf16.gmra.mxu0 %v341
    %v496 = vpop.f32.mrf.mxu0
    %v497 = vadd.f32 0.0, %v496
    %v498 = vpop.f32.mrf.mxu0
    %v499 = vadd.f32 0.0, %v498
    %500 = vmatmul.bf16.gmra.mxu0 %v344
    %v501 = vpop.f32.mrf.mxu0
    %v502 = vadd.f32 0.0, %v501
    %v503 = vpop.f32.mrf.mxu0
    %v504 = vadd.f32 0.0, %v503
    %505 = vmatmul.bf16.gmra.mxu0 %v347
    %v506 = vpop.f32.mrf.mxu0
    %v507 = vadd.f32 0.0, %v506
    %v508 = vpop.f32.mrf.mxu0
    %v509 = vadd.f32 0.0, %v508
    %510 = vmatmul.bf16.gmra.mxu0 %v350
    %v511 = vpop.f32.mrf.mxu0
    %v512 = vadd.f32 0.0, %v511
    %v513 = vpop.f32.mrf.mxu0
    %v514 = vadd.f32 0.0, %v513
    %515 = vmatmul.bf16.gmra.mxu0 %v353
    %v516 = vpop.f32.mrf.mxu0
    %v517 = vadd.f32 0.0, %v516
    %v518 = vpop.f32.mrf.mxu0
    %v519 = vadd.f32 0.0, %v518
    %520 = vmatmul.bf16.gmra.mxu0 %v356
    %v521 = vpop.f32.mrf.mxu0
    %v522 = vadd.f32 0.0, %v521
    %v523 = vpop.f32.mrf.mxu0
    %v524 = vadd.f32 0.0, %v523
    %525 = vmatmul.bf16.gmra.mxu0 %v359
    %v526 = vpop.f32.mrf.mxu0
    %v527 = vadd.f32 0.0, %v526
    %v528 = vpop.f32.mrf.mxu0
    %v529 = vadd.f32 0.0, %v528
    %530 = vmatmul.bf16.gmra.mxu0 %v362
    %v531 = vpop.f32.mrf.mxu0
    %v532 = vadd.f32 0.0, %v531
    %v533 = vpop.f32.mrf.mxu0
    %v534 = vadd.f32 0.0, %v533
    %535 = vmatmul.bf16.gmra.mxu0 %v365
    %v536 = vpop.f32.mrf.mxu0
    %v537 = vadd.f32 0.0, %v536
    %v538 = vpop.f32.mrf.mxu0
    %v539 = vadd.f32 0.0, %v538
    %540 = vmatmul.bf16.gmra.mxu0 %v368
    %v541 = vpop.f32.mrf.mxu0
    %v542 = vadd.f32 0.0, %v541
    %v543 = vpop.f32.mrf.mxu0
    %v544 = vadd.f32 0.0, %v543
    %545 = vdwg.mxu0
    %v546 = vld [vmem:[#allocation6] sm:$0x3]
    %vm547 = vcmask 261120
    %v548 = vsel %vm547, %v387, 0.0
    %v549 = vsel %vm547, %v389, 0.0
    %v550 = vadd.f32 %v548, %v549
    %v551 = vsel %vm547, %v392, 0.0
    %v552 = vadd.f32 %v550, %v551
    %v553 = vsel %vm547, %v394, 0.0
    %v554 = vadd.f32 %v552, %v553
    %v555 = vsel %vm547, %v397, 0.0
    %v556 = vadd.f32 %v554, %v555
    %v557 = vsel %vm547, %v399, 0.0
    %v558 = vadd.f32 %v556, %v557
    %v559 = vsel %vm547, %v402, 0.0
    %v560 = vadd.f32 %v558, %v559
    %v561 = vsel %vm547, %v404, 0.0
    %v562 = vadd.f32 %v560, %v561
    %v563 = vsel %vm547, %v407, 0.0
    %v564 = vadd.f32 %v562, %v563
    %v565 = vsel %vm547, %v409, 0.0
    %v566 = vadd.f32 %v564, %v565
    %v567 = vsel %vm547, %v412, 0.0
    %v568 = vadd.f32 %v566, %v567
    %v569 = vsel %vm547, %v414, 0.0
    %v570 = vadd.f32 %v568, %v569
    %v571 = vsel %vm547, %v417, 0.0
    %v572 = vadd.f32 %v570, %v571
    %v573 = vsel %vm547, %v419, 0.0
    %v574 = vadd.f32 %v572, %v573
    %v575 = vsel %vm547, %v422, 0.0
    %v576 = vadd.f32 %v574, %v575
    %v577 = vsel %vm547, %v424, 0.0
    %v578 = vadd.f32 %v576, %v577
    %v579 = vsel %vm547, %v427, 0.0
    %v580 = vadd.f32 %v578, %v579
    %v581 = vsel %vm547, %v429, 0.0
    %v582 = vadd.f32 %v580, %v581
    %v583 = vsel %vm547, %v432, 0.0
    %v584 = vadd.f32 %v582, %v583
    %v585 = vsel %vm547, %v434, 0.0
    %v586 = vadd.f32 %v584, %v585
    %v587 = vsel %vm547, %v437, 0.0
    %v588 = vadd.f32 %v586, %v587
    %v589 = vsel %vm547, %v439, 0.0
    %v590 = vadd.f32 %v588, %v589
    %v591 = vsel %vm547, %v442, 0.0
    %v592 = vadd.f32 %v590, %v591
    %v593 = vsel %vm547, %v444, 0.0
    %v594 = vadd.f32 %v592, %v593
    %v595 = vsel %vm547, %v447, 0.0
    %v596 = vadd.f32 %v594, %v595
    %v597 = vsel %vm547, %v449, 0.0
    %v598 = vadd.f32 %v596, %v597
    %v599 = vsel %vm547, %v452, 0.0
    %v600 = vadd.f32 %v598, %v599
    %v601 = vsel %vm547, %v454, 0.0
    %v602 = vadd.f32 %v600, %v601
    %v603 = vsel %vm547, %v457, 0.0
    %v604 = vadd.f32 %v602, %v603
    %v605 = vsel %vm547, %v459, 0.0
    %v606 = vadd.f32 %v604, %v605
    %v607 = vsel %vm547, %v462, 0.0
    %v608 = vadd.f32 %v606, %v607
    %v609 = vsel %vm547, %v464, 0.0
    %v610 = vadd.f32 %v608, %v609
    %v611 = vsel %vm547, %v467, 0.0
    %v612 = vadd.f32 %v610, %v611
    %v613 = vsel %vm547, %v469, 0.0
    %v614 = vadd.f32 %v612, %v613
    %v615 = vsel %vm547, %v472, 0.0
    %v616 = vadd.f32 %v614, %v615
    %v617 = vsel %vm547, %v474, 0.0
    %v618 = vadd.f32 %v616, %v617
    %v619 = vsel %vm547, %v477, 0.0
    %v620 = vadd.f32 %v618, %v619
    %v621 = vsel %vm547, %v479, 0.0
    %v622 = vadd.f32 %v620, %v621
    %v623 = vsel %vm547, %v482, 0.0
    %v624 = vadd.f32 %v622, %v623
    %v625 = vsel %vm547, %v484, 0.0
    %v626 = vadd.f32 %v624, %v625
    %v627 = vsel %vm547, %v487, 0.0
    %v628 = vadd.f32 %v626, %v627
    %v629 = vsel %vm547, %v489, 0.0
    %v630 = vadd.f32 %v628, %v629
    %v631 = vsel %vm547, %v492, 0.0
    %v632 = vadd.f32 %v630, %v631
    %v633 = vsel %vm547, %v494, 0.0
    %v634 = vadd.f32 %v632, %v633
    %v635 = vsel %vm547, %v497, 0.0
    %v636 = vadd.f32 %v634, %v635
    %v637 = vsel %vm547, %v499, 0.0
    %v638 = vadd.f32 %v636, %v637
    %v639 = vsel %vm547, %v502, 0.0
    %v640 = vadd.f32 %v638, %v639
    %v641 = vsel %vm547, %v504, 0.0
    %v642 = vadd.f32 %v640, %v641
    %v643 = vsel %vm547, %v507, 0.0
    %v644 = vadd.f32 %v642, %v643
    %v645 = vsel %vm547, %v509, 0.0
    %v646 = vadd.f32 %v644, %v645
    %v647 = vsel %vm547, %v512, 0.0
    %v648 = vadd.f32 %v646, %v647
    %v649 = vsel %vm547, %v514, 0.0
    %v650 = vadd.f32 %v648, %v649
    %v651 = vsel %vm547, %v517, 0.0
    %v652 = vadd.f32 %v650, %v651
    %v653 = vsel %vm547, %v519, 0.0
    %v654 = vadd.f32 %v652, %v653
    %v655 = vsel %vm547, %v522, 0.0
    %v656 = vadd.f32 %v654, %v655
    %v657 = vsel %vm547, %v524, 0.0
    %v658 = vadd.f32 %v656, %v657
    %v659 = vsel %vm547, %v527, 0.0
    %v660 = vadd.f32 %v658, %v659
    %v661 = vsel %vm547, %v529, 0.0
    %v662 = vadd.f32 %v660, %v661
    %v663 = vsel %vm547, %v532, 0.0
    %v664 = vadd.f32 %v662, %v663
    %v665 = vsel %vm547, %v534, 0.0
    %v666 = vadd.f32 %v664, %v665
    %v667 = vsel %vm547, %v537, 0.0
    %v668 = vadd.f32 %v666, %v667
    %v669 = vsel %vm547, %v539, 0.0
    %v670 = vadd.f32 %v668, %v669
    %v671 = vsel %vm547, %v542, 0.0
    %v672 = vadd.f32 %v670, %v671
    %v673 = vsel %vm547, %v544, 0.0
    %v674 = vadd.f32 %v672, %v673
    %v675 = vrot.slane %v674, 4
    %v676 = vadd.f32 %v674, %v675
    %v677 = vrot.slane %v676, 2
    %v678 = vadd.f32 %v676, %v677
    %v679 = vrot.slane %v678, 1
    %v680 = vadd.f32 %v678, %v679
    %v681 = vrcp.pop 512.0
    %v682 = vmul.f32 512.0, %v681
    %v683 = vsub.f32 1.0, %v682
    %v684 = vmul.f32 %v681, %v683
    %v685 = vadd.f32 %v681, %v684
    %vm686 = vweird.f32 %v681
    %v687 = vsel %vm686, %v681, %v685
    %v688 = vmul.f32 %v680, %v687
    %v689 = vsub.f32 %v387, %v688
    %v690 = vsub.f32 %v389, %v688
    %v691 = vsub.f32 %v392, %v688
    %v692 = vsub.f32 %v394, %v688
    %v693 = vsub.f32 %v397, %v688
    %v694 = vsub.f32 %v399, %v688
    %v695 = vsub.f32 %v402, %v688
    %v696 = vsub.f32 %v404, %v688
    %v697 = vsub.f32 %v407, %v688
    %v698 = vsub.f32 %v409, %v688
    %v699 = vsub.f32 %v412, %v688
    %v700 = vsub.f32 %v414, %v688
    %v701 = vsub.f32 %v417, %v688
    %v702 = vsub.f32 %v419, %v688
    %v703 = vsub.f32 %v422, %v688
    %v704 = vsub.f32 %v424, %v688
    %v705 = vsub.f32 %v427, %v688
    %v706 = vsub.f32 %v429, %v688
    %v707 = vsub.f32 %v432, %v688
    %v708 = vsub.f32 %v434, %v688
    %v709 = vsub.f32 %v437, %v688
    %v710 = vsub.f32 %v439, %v688
    %v711 = vsub.f32 %v442, %v688
    %v712 = vsub.f32 %v444, %v688
    %v713 = vsub.f32 %v447, %v688
    %v714 = vsub.f32 %v449, %v688
    %v715 = vsub.f32 %v452, %v688
    %v716 = vsub.f32 %v454, %v688
    %v717 = vsub.f32 %v457, %v688
    %v718 = vsub.f32 %v459, %v688
    %v719 = vsub.f32 %v462, %v688
    %v720 = vsub.f32 %v464, %v688
    %v721 = vsub.f32 %v467, %v688
    %v722 = vsub.f32 %v469, %v688
    %v723 = vsub.f32 %v472, %v688
    %v724 = vsub.f32 %v474, %v688
    %v725 = vsub.f32 %v477, %v688
    %v726 = vsub.f32 %v479, %v688
    %v727 = vsub.f32 %v482, %v688
    %v728 = vsub.f32 %v484, %v688
    %v729 = vsub.f32 %v487, %v688
    %v730 = vsub.f32 %v489, %v688
    %v731 = vsub.f32 %v492, %v688
    %v732 = vsub.f32 %v494, %v688
    %v733 = vsub.f32 %v497, %v688
    %v734 = vsub.f32 %v499, %v688
    %v735 = vsub.f32 %v502, %v688
    %v736 = vsub.f32 %v504, %v688
    %v737 = vsub.f32 %v507, %v688
    %v738 = vsub.f32 %v509, %v688
    %v739 = vsub.f32 %v512, %v688
    %v740 = vsub.f32 %v514, %v688
    %v741 = vsub.f32 %v517, %v688
    %v742 = vsub.f32 %v519, %v688
    %v743 = vsub.f32 %v522, %v688
    %v744 = vsub.f32 %v524, %v688
    %v745 = vsub.f32 %v527, %v688
    %v746 = vsub.f32 %v529, %v688
    %v747 = vsub.f32 %v532, %v688
    %v748 = vsub.f32 %v534, %v688
    %v749 = vsub.f32 %v537, %v688
    %v750 = vsub.f32 %v539, %v688
    %v751 = vsub.f32 %v542, %v688
    %v752 = vsub.f32 %v544, %v688
    %v753 = vmul.f32 %v689, %v689
    %v754 = vmul.f32 %v690, %v690
    %v755 = vmul.f32 %v691, %v691
    %v756 = vmul.f32 %v692, %v692
    %v757 = vmul.f32 %v693, %v693
    %v758 = vmul.f32 %v694, %v694
    %v759 = vmul.f32 %v695, %v695
    %v760 = vmul.f32 %v696, %v696
    %v761 = vmul.f32 %v697, %v697
    %v762 = vmul.f32 %v698, %v698
    %v763 = vmul.f32 %v699, %v699
    %v764 = vmul.f32 %v700, %v700
    %v765 = vmul.f32 %v701, %v701
    %v766 = vmul.f32 %v702, %v702
    %v767 = vmul.f32 %v703, %v703
    %v768 = vmul.f32 %v704, %v704
    %v769 = vmul.f32 %v705, %v705
    %v770 = vmul.f32 %v706, %v706
    %v771 = vmul.f32 %v707, %v707
    %v772 = vmul.f32 %v708, %v708
    %v773 = vmul.f32 %v709, %v709
    %v774 = vmul.f32 %v710, %v710
    %v775 = vmul.f32 %v711, %v711
    %v776 = vmul.f32 %v712, %v712
    %v777 = vmul.f32 %v713, %v713
    %v778 = vmul.f32 %v714, %v714
    %v779 = vmul.f32 %v715, %v715
    %v780 = vmul.f32 %v716, %v716
    %v781 = vmul.f32 %v717, %v717
    %v782 = vmul.f32 %v718, %v718
    %v783 = vmul.f32 %v719, %v719
    %v784 = vmul.f32 %v720, %v720
    %v785 = vmul.f32 %v721, %v721
    %v786 = vmul.f32 %v722, %v722
    %v787 = vmul.f32 %v723, %v723
    %v788 = vmul.f32 %v724, %v724
    %v789 = vmul.f32 %v725, %v725
    %v790 = vmul.f32 %v726, %v726
    %v791 = vmul.f32 %v727, %v727
    %v792 = vmul.f32 %v728, %v728
    %v793 = vmul.f32 %v729, %v729
    %v794 = vmul.f32 %v730, %v730
    %v795 = vmul.f32 %v731, %v731
    %v796 = vmul.f32 %v732, %v732
    %v797 = vmul.f32 %v733, %v733
    %v798 = vmul.f32 %v734, %v734
    %v799 = vmul.f32 %v735, %v735
    %v800 = vmul.f32 %v736, %v736
    %v801 = vmul.f32 %v737, %v737
    %v802 = vmul.f32 %v738, %v738
    %v803 = vmul.f32 %v739, %v739
    %v804 = vmul.f32 %v740, %v740
    %v805 = vmul.f32 %v741, %v741
    %v806 = vmul.f32 %v742, %v742
    %v807 = vmul.f32 %v743, %v743
    %v808 = vmul.f32 %v744, %v744
    %v809 = vmul.f32 %v745, %v745
    %v810 = vmul.f32 %v746, %v746
    %v811 = vmul.f32 %v747, %v747
    %v812 = vmul.f32 %v748, %v748
    %v813 = vmul.f32 %v749, %v749
    %v814 = vmul.f32 %v750, %v750
    %v815 = vmul.f32 %v751, %v751
    %v816 = vmul.f32 %v752, %v752
    %v817 = vsel %vm547, %v753, 0.0
    %v818 = vsel %vm547, %v754, 0.0
    %v819 = vadd.f32 %v817, %v818
    %v820 = vsel %vm547, %v755, 0.0
    %v821 = vadd.f32 %v819, %v820
    %v822 = vsel %vm547, %v756, 0.0
    %v823 = vadd.f32 %v821, %v822
    %v824 = vsel %vm547, %v757, 0.0
    %v825 = vadd.f32 %v823, %v824
    %v826 = vsel %vm547, %v758, 0.0
    %v827 = vadd.f32 %v825, %v826
    %v828 = vsel %vm547, %v759, 0.0
    %v829 = vadd.f32 %v827, %v828
    %v830 = vsel %vm547, %v760, 0.0
    %v831 = vadd.f32 %v829, %v830
    %v832 = vsel %vm547, %v761, 0.0
    %v833 = vadd.f32 %v831, %v832
    %v834 = vsel %vm547, %v762, 0.0
    %v835 = vadd.f32 %v833, %v834
    %v836 = vsel %vm547, %v763, 0.0
    %v837 = vadd.f32 %v835, %v836
    %v838 = vsel %vm547, %v764, 0.0
    %v839 = vadd.f32 %v837, %v838
    %v840 = vsel %vm547, %v765, 0.0
    %v841 = vadd.f32 %v839, %v840
    %v842 = vsel %vm547, %v766, 0.0
    %v843 = vadd.f32 %v841, %v842
    %v844 = vsel %vm547, %v767, 0.0
    %v845 = vadd.f32 %v843, %v844
    %v846 = vsel %vm547, %v768, 0.0
    %v847 = vadd.f32 %v845, %v846
    %v848 = vsel %vm547, %v769, 0.0
    %v849 = vadd.f32 %v847, %v848
    %v850 = vsel %vm547, %v770, 0.0
    %v851 = vadd.f32 %v849, %v850
    %v852 = vsel %vm547, %v771, 0.0
    %v853 = vadd.f32 %v851, %v852
    %v854 = vsel %vm547, %v772, 0.0
    %v855 = vadd.f32 %v853, %v854
    %v856 = vsel %vm547, %v773, 0.0
    %v857 = vadd.f32 %v855, %v856
    %v858 = vsel %vm547, %v774, 0.0
    %v859 = vadd.f32 %v857, %v858
    %v860 = vsel %vm547, %v775, 0.0
    %v861 = vadd.f32 %v859, %v860
    %v862 = vsel %vm547, %v776, 0.0
    %v863 = vadd.f32 %v861, %v862
    %v864 = vsel %vm547, %v777, 0.0
    %v865 = vadd.f32 %v863, %v864
    %v866 = vsel %vm547, %v778, 0.0
    %v867 = vadd.f32 %v865, %v866
    %v868 = vsel %vm547, %v779, 0.0
    %v869 = vadd.f32 %v867, %v868
    %v870 = vsel %vm547, %v780, 0.0
    %v871 = vadd.f32 %v869, %v870
    %v872 = vsel %vm547, %v781, 0.0
    %v873 = vadd.f32 %v871, %v872
    %v874 = vsel %vm547, %v782, 0.0
    %v875 = vadd.f32 %v873, %v874
    %v876 = vsel %vm547, %v783, 0.0
    %v877 = vadd.f32 %v875, %v876
    %v878 = vsel %vm547, %v784, 0.0
    %v879 = vadd.f32 %v877, %v878
    %v880 = vsel %vm547, %v785, 0.0
    %v881 = vadd.f32 %v879, %v880
    %v882 = vsel %vm547, %v786, 0.0
    %v883 = vadd.f32 %v881, %v882
    %v884 = vsel %vm547, %v787, 0.0
    %v885 = vadd.f32 %v883, %v884
    %v886 = vsel %vm547, %v788, 0.0
    %v887 = vadd.f32 %v885, %v886
    %v888 = vsel %vm547, %v789, 0.0
    %v889 = vadd.f32 %v887, %v888
    %v890 = vsel %vm547, %v790, 0.0
    %v891 = vadd.f32 %v889, %v890
    %v892 = vsel %vm547, %v791, 0.0
    %v893 = vadd.f32 %v891, %v892
    %v894 = vsel %vm547, %v792, 0.0
    %v895 = vadd.f32 %v893, %v894
    %v896 = vsel %vm547, %v793, 0.0
    %v897 = vadd.f32 %v895, %v896
    %v898 = vsel %vm547, %v794, 0.0
    %v899 = vadd.f32 %v897, %v898
    %v900 = vsel %vm547, %v795, 0.0
    %v901 = vadd.f32 %v899, %v900
    %v902 = vsel %vm547, %v796, 0.0
    %v903 = vadd.f32 %v901, %v902
    %v904 = vsel %vm547, %v797, 0.0
    %v905 = vadd.f32 %v903, %v904
    %v906 = vsel %vm547, %v798, 0.0
    %v907 = vadd.f32 %v905, %v906
    %v908 = vsel %vm547, %v799, 0.0
    %v909 = vadd.f32 %v907, %v908
    %v910 = vsel %vm547, %v800, 0.0
    %v911 = vadd.f32 %v909, %v910
    %v912 = vsel %vm547, %v801, 0.0
    %v913 = vadd.f32 %v911, %v912
    %v914 = vsel %vm547, %v802, 0.0
    %v915 = vadd.f32 %v913, %v914
    %v916 = vsel %vm547, %v803, 0.0
    %v917 = vadd.f32 %v915, %v916
    %v918 = vsel %vm547, %v804, 0.0
    %v919 = vadd.f32 %v917, %v918
    %v920 = vsel %vm547, %v805, 0.0
    %v921 = vadd.f32 %v919, %v920
    %v922 = vsel %vm547, %v806, 0.0
    %v923 = vadd.f32 %v921, %v922
    %v924 = vsel %vm547, %v807, 0.0
    %v925 = vadd.f32 %v923, %v924
    %v926 = vsel %vm547, %v808, 0.0
    %v927 = vadd.f32 %v925, %v926
    %v928 = vsel %vm547, %v809, 0.0
    %v929 = vadd.f32 %v927, %v928
    %v930 = vsel %vm547, %v810, 0.0
    %v931 = vadd.f32 %v929, %v930
    %v932 = vsel %vm547, %v811, 0.0
    %v933 = vadd.f32 %v931, %v932
    %v934 = vsel %vm547, %v812, 0.0
    %v935 = vadd.f32 %v933, %v934
    %v936 = vsel %vm547, %v813, 0.0
    %v937 = vadd.f32 %v935, %v936
    %v938 = vsel %vm547, %v814, 0.0
    %v939 = vadd.f32 %v937, %v938
    %v940 = vsel %vm547, %v815, 0.0
    %v941 = vadd.f32 %v939, %v940
    %v942 = vsel %vm547, %v816, 0.0
    %v943 = vadd.f32 %v941, %v942
    %v944 = vrot.slane %v943, 4
    %v945 = vadd.f32 %v943, %v944
    %v946 = vrot.slane %v945, 2
    %v947 = vadd.f32 %v945, %v946
    %v948 = vrot.slane %v947, 1
    %v949 = vadd.f32 %v947, %v948
    %v950 = vmul.f32 %v949, %v687
    %v951 = vadd.f32 %v950, 1e-05
    %v952 = vrsqrt.pop %v951
    %v953 = vmul.f32 %v952, %v951
    %v954 = vmul.f32 %v953, %v952
    %v955 = vmul.f32 0.5, %v954
    %v956 = vsub.f32 1.5, %v955
    %v957 = vmul.f32 %v952, %v956
    %vm958 = vweird.f32 %v951
    %vm959 = vweird.f32 %v952
    %vm960 = vmor %vm958, %vm959
    %v961 = vsel %vm960, %v952, %v957
    %v962 = vmul.f32 %v689, %v961
    %v963 = vmul.f32 %v690, %v961
    %v964 = vmul.f32 %v691, %v961
    %v965 = vmul.f32 %v692, %v961
    %v966 = vmul.f32 %v693, %v961
    %v967 = vmul.f32 %v694, %v961
    %v968 = vmul.f32 %v695, %v961
    %v969 = vmul.f32 %v696, %v961
    %v970 = vmul.f32 %v697, %v961
    %v971 = vmul.f32 %v698, %v961
    %v972 = vmul.f32 %v699, %v961
    %v973 = vmul.f32 %v700, %v961
    %v974 = vmul.f32 %v701, %v961
    %v975 = vmul.f32 %v702, %v961
    %v976 = vmul.f32 %v703, %v961
    %v977 = vmul.f32 %v704, %v961
    %v978 = vmul.f32 %v705, %v961
    %v979 = vmul.f32 %v706, %v961
    %v980 = vmul.f32 %v707, %v961
    %v981 = vmul.f32 %v708, %v961
    %v982 = vmul.f32 %v709, %v961
    %v983 = vmul.f32 %v710, %v961
    %v984 = vmul.f32 %v711, %v961
    %v985 = vmul.f32 %v712, %v961
    %v986 = vmul.f32 %v713, %v961
    %v987 = vmul.f32 %v714, %v961
    %v988 = vmul.f32 %v715, %v961
    %v989 = vmul.f32 %v716, %v961
    %v990 = vmul.f32 %v717, %v961
    %v991 = vmul.f32 %v718, %v961
    %v992 = vmul.f32 %v719, %v961
    %v993 = vmul.f32 %v720, %v961
    %v994 = vmul.f32 %v721, %v961
    %v995 = vmul.f32 %v722, %v961
    %v996 = vmul.f32 %v723, %v961
    %v997 = vmul.f32 %v724, %v961
    %v998 = vmul.f32 %v725, %v961
    %v999 = vmul.f32 %v726, %v961
    %v1000 = vmul.f32 %v727, %v961
    %v1001 = vmul.f32 %v728, %v961
    %v1002 = vmul.f32 %v729, %v961
    %v1003 = vmul.f32 %v730, %v961
    %v1004 = vmul.f32 %v731, %v961
    %v1005 = vmul.f32 %v732, %v961
    %v1006 = vmul.f32 %v733, %v961
    %v1007 = vmul.f32 %v734, %v961
    %v1008 = vmul.f32 %v735, %v961
    %v1009 = vmul.f32 %v736, %v961
    %v1010 = vmul.f32 %v737, %v961
    %v1011 = vmul.f32 %v738, %v961
    %v1012 = vmul.f32 %v739, %v961
    %v1013 = vmul.f32 %v740, %v961
    %v1014 = vmul.f32 %v741, %v961
    %v1015 = vmul.f32 %v742, %v961
    %v1016 = vmul.f32 %v743, %v961
    %v1017 = vmul.f32 %v744, %v961
    %v1018 = vmul.f32 %v745, %v961
    %v1019 = vmul.f32 %v746, %v961
    %v1020 = vmul.f32 %v747, %v961
    %v1021 = vmul.f32 %v748, %v961
    %v1022 = vmul.f32 %v749, %v961
    %v1023 = vmul.f32 %v750, %v961
    %v1024 = vmul.f32 %v751, %v961
    %v1025 = vmul.f32 %v752, %v961
    %v1026 = vperm.slane %v546, 0
    %v1027 = vmul.f32 %v962, %v1026
    %v1028 = vmul.f32 %v963, %v1026
    %v1029 = vmul.f32 %v964, %v1026
    %v1030 = vmul.f32 %v965, %v1026
    %v1031 = vmul.f32 %v966, %v1026
    %v1032 = vmul.f32 %v967, %v1026
    %v1033 = vmul.f32 %v968, %v1026
    %v1034 = vmul.f32 %v969, %v1026
    %v1035 = vmul.f32 %v970, %v1026
    %v1036 = vmul.f32 %v971, %v1026
    %v1037 = vmul.f32 %v972, %v1026
    %v1038 = vmul.f32 %v973, %v1026
    %v1039 = vmul.f32 %v974, %v1026
    %v1040 = vmul.f32 %v975, %v1026
    %v1041 = vmul.f32 %v976, %v1026
    %v1042 = vmul.f32 %v977, %v1026
    %v1043 = vmul.f32 %v978, %v1026
    %v1044 = vmul.f32 %v979, %v1026
    %v1045 = vmul.f32 %v980, %v1026
    %v1046 = vmul.f32 %v981, %v1026
    %v1047 = vmul.f32 %v982, %v1026
    %v1048 = vmul.f32 %v983, %v1026
    %v1049 = vmul.f32 %v984, %v1026
    %v1050 = vmul.f32 %v985, %v1026
    %v1051 = vmul.f32 %v986, %v1026
    %v1052 = vmul.f32 %v987, %v1026
    %v1053 = vmul.f32 %v988, %v1026
    %v1054 = vmul.f32 %v989, %v1026
    %v1055 = vmul.f32 %v990, %v1026
    %v1056 = vmul.f32 %v991, %v1026
    %v1057 = vmul.f32 %v992, %v1026
    %v1058 = vmul.f32 %v993, %v1026
    %v1059 = vmul.f32 %v994, %v1026
    %v1060 = vmul.f32 %v995, %v1026
    %v1061 = vmul.f32 %v996, %v1026
    %v1062 = vmul.f32 %v997, %v1026
    %v1063 = vmul.f32 %v998, %v1026
    %v1064 = vmul.f32 %v999, %v1026
    %v1065 = vmul.f32 %v1000, %v1026
    %v1066 = vmul.f32 %v1001, %v1026
    %v1067 = vmul.f32 %v1002, %v1026
    %v1068 = vmul.f32 %v1003, %v1026
    %v1069 = vmul.f32 %v1004, %v1026
    %v1070 = vmul.f32 %v1005, %v1026
    %v1071 = vmul.f32 %v1006, %v1026
    %v1072 = vmul.f32 %v1007, %v1026
    %v1073 = vmul.f32 %v1008, %v1026
    %v1074 = vmul.f32 %v1009, %v1026
    %v1075 = vmul.f32 %v1010, %v1026
    %v1076 = vmul.f32 %v1011, %v1026
    %v1077 = vmul.f32 %v1012, %v1026
    %v1078 = vmul.f32 %v1013, %v1026
    %v1079 = vmul.f32 %v1014, %v1026
    %v1080 = vmul.f32 %v1015, %v1026
    %v1081 = vmul.f32 %v1016, %v1026
    %v1082 = vmul.f32 %v1017, %v1026
    %v1083 = vmul.f32 %v1018, %v1026
    %v1084 = vmul.f32 %v1019, %v1026
    %v1085 = vmul.f32 %v1020, %v1026
    %v1086 = vmul.f32 %v1021, %v1026
    %v1087 = vmul.f32 %v1022, %v1026
    %v1088 = vmul.f32 %v1023, %v1026
    %v1089 = vmul.f32 %v1024, %v1026
    %v1090 = vmul.f32 %v1025, %v1026
    %v1091 = vperm.slane %v546, 1
    %v1092 = vadd.f32 %v1027, %v1091
    %v1093 = vadd.f32 %v1028, %v1091
    %v1094 = vadd.f32 %v1029, %v1091
    %v1095 = vadd.f32 %v1030, %v1091
    %v1096 = vadd.f32 %v1031, %v1091
    %v1097 = vadd.f32 %v1032, %v1091
    %v1098 = vadd.f32 %v1033, %v1091
    %v1099 = vadd.f32 %v1034, %v1091
    %v1100 = vadd.f32 %v1035, %v1091
    %v1101 = vadd.f32 %v1036, %v1091
    %v1102 = vadd.f32 %v1037, %v1091
    %v1103 = vadd.f32 %v1038, %v1091
    %v1104 = vadd.f32 %v1039, %v1091
    %v1105 = vadd.f32 %v1040, %v1091
    %v1106 = vadd.f32 %v1041, %v1091
    %v1107 = vadd.f32 %v1042, %v1091
    %v1108 = vadd.f32 %v1043, %v1091
    %v1109 = vadd.f32 %v1044, %v1091
    %v1110 = vadd.f32 %v1045, %v1091
    %v1111 = vadd.f32 %v1046, %v1091
    %v1112 = vadd.f32 %v1047, %v1091
    %v1113 = vadd.f32 %v1048, %v1091
    %v1114 = vadd.f32 %v1049, %v1091
    %v1115 = vadd.f32 %v1050, %v1091
    %v1116 = vadd.f32 %v1051, %v1091
    %v1117 = vadd.f32 %v1052, %v1091
    %v1118 = vadd.f32 %v1053, %v1091
    %v1119 = vadd.f32 %v1054, %v1091
    %v1120 = vadd.f32 %v1055, %v1091
    %v1121 = vadd.f32 %v1056, %v1091
    %v1122 = vadd.f32 %v1057, %v1091
    %v1123 = vadd.f32 %v1058, %v1091
    %v1124 = vadd.f32 %v1059, %v1091
    %v1125 = vadd.f32 %v1060, %v1091
    %v1126 = vadd.f32 %v1061, %v1091
    %v1127 = vadd.f32 %v1062, %v1091
    %v1128 = vadd.f32 %v1063, %v1091
    %v1129 = vadd.f32 %v1064, %v1091
    %v1130 = vadd.f32 %v1065, %v1091
    %v1131 = vadd.f32 %v1066, %v1091
    %v1132 = vadd.f32 %v1067, %v1091
    %v1133 = vadd.f32 %v1068, %v1091
    %v1134 = vadd.f32 %v1069, %v1091
    %v1135 = vadd.f32 %v1070, %v1091
    %v1136 = vadd.f32 %v1071, %v1091
    %v1137 = vadd.f32 %v1072, %v1091
    %v1138 = vadd.f32 %v1073, %v1091
    %v1139 = vadd.f32 %v1074, %v1091
    %v1140 = vadd.f32 %v1075, %v1091
    %v1141 = vadd.f32 %v1076, %v1091
    %v1142 = vadd.f32 %v1077, %v1091
    %v1143 = vadd.f32 %v1078, %v1091
    %v1144 = vadd.f32 %v1079, %v1091
    %v1145 = vadd.f32 %v1080, %v1091
    %v1146 = vadd.f32 %v1081, %v1091
    %v1147 = vadd.f32 %v1082, %v1091
    %v1148 = vadd.f32 %v1083, %v1091
    %v1149 = vadd.f32 %v1084, %v1091
    %v1150 = vadd.f32 %v1085, %v1091
    %v1151 = vadd.f32 %v1086, %v1091
    %v1152 = vadd.f32 %v1087, %v1091
    %v1153 = vadd.f32 %v1088, %v1091
    %v1154 = vadd.f32 %v1089, %v1091
    %v1155 = vadd.f32 %v1090, %v1091
    %v1156 = vsub.f32 0.0, %v1092
    %v1157 = vsub.f32 0.0, %v1093
    %v1158 = vsub.f32 0.0, %v1094
    %v1159 = vsub.f32 0.0, %v1095
    %v1160 = vsub.f32 0.0, %v1096
    %v1161 = vsub.f32 0.0, %v1097
    %v1162 = vsub.f32 0.0, %v1098
    %v1163 = vsub.f32 0.0, %v1099
    %v1164 = vsub.f32 0.0, %v1100
    %v1165 = vsub.f32 0.0, %v1101
    %v1166 = vsub.f32 0.0, %v1102
    %v1167 = vsub.f32 0.0, %v1103
    %v1168 = vsub.f32 0.0, %v1104
    %v1169 = vsub.f32 0.0, %v1105
    %v1170 = vsub.f32 0.0, %v1106
    %v1171 = vsub.f32 0.0, %v1107
    %v1172 = vsub.f32 0.0, %v1108
    %v1173 = vsub.f32 0.0, %v1109
    %v1174 = vsub.f32 0.0, %v1110
    %v1175 = vsub.f32 0.0, %v1111
    %v1176 = vsub.f32 0.0, %v1112
    %v1177 = vsub.f32 0.0, %v1113
    %v1178 = vsub.f32 0.0, %v1114
    %v1179 = vsub.f32 0.0, %v1115
    %v1180 = vsub.f32 0.0, %v1116
    %v1181 = vsub.f32 0.0, %v1117
    %v1182 = vsub.f32 0.0, %v1118
    %v1183 = vsub.f32 0.0, %v1119
    %v1184 = vsub.f32 0.0, %v1120
    %v1185 = vsub.f32 0.0, %v1121
    %v1186 = vsub.f32 0.0, %v1122
    %v1187 = vsub.f32 0.0, %v1123
    %v1188 = vsub.f32 0.0, %v1124
    %v1189 = vsub.f32 0.0, %v1125
    %v1190 = vsub.f32 0.0, %v1126
    %v1191 = vsub.f32 0.0, %v1127
    %v1192 = vsub.f32 0.0, %v1128
    %v1193 = vsub.f32 0.0, %v1129
    %v1194 = vsub.f32 0.0, %v1130
    %v1195 = vsub.f32 0.0, %v1131
    %v1196 = vsub.f32 0.0, %v1132
    %v1197 = vsub.f32 0.0, %v1133
    %v1198 = vsub.f32 0.0, %v1134
    %v1199 = vsub.f32 0.0, %v1135
    %v1200 = vsub.f32 0.0, %v1136
    %v1201 = vsub.f32 0.0, %v1137
    %v1202 = vsub.f32 0.0, %v1138
    %v1203 = vsub.f32 0.0, %v1139
    %v1204 = vsub.f32 0.0, %v1140
    %v1205 = vsub.f32 0.0, %v1141
    %v1206 = vsub.f32 0.0, %v1142
    %v1207 = vsub.f32 0.0, %v1143
    %v1208 = vsub.f32 0.0, %v1144
    %v1209 = vsub.f32 0.0, %v1145
    %v1210 = vsub.f32 0.0, %v1146
    %v1211 = vsub.f32 0.0, %v1147
    %v1212 = vsub.f32 0.0, %v1148
    %v1213 = vsub.f32 0.0, %v1149
    %v1214 = vsub.f32 0.0, %v1150
    %v1215 = vsub.f32 0.0, %v1151
    %v1216 = vsub.f32 0.0, %v1152
    %v1217 = vsub.f32 0.0, %v1153
    %v1218 = vsub.f32 0.0, %v1154
    %v1219 = vsub.f32 0.0, %v1155
    %v1220 = vmul.f32 %v1156, 1.442695
    %v1221 = vpow.pop %v1220
    %v1222 = vmul.f32 %v1157, 1.442695
    %v1223 = vpow.pop %v1222
    %v1224 = vmul.f32 %v1158, 1.442695
    %v1225 = vpow.pop %v1224
    %v1226 = vmul.f32 %v1159, 1.442695
    %v1227 = vpow.pop %v1226
    %v1228 = vmul.f32 %v1160, 1.442695
    %v1229 = vpow.pop %v1228
    %v1230 = vmul.f32 %v1161, 1.442695
    %v1231 = vpow.pop %v1230
    %v1232 = vmul.f32 %v1162, 1.442695
    %v1233 = vpow.pop %v1232
    %v1234 = vmul.f32 %v1163, 1.442695
    %v1235 = vpow.pop %v1234
    %v1236 = vmul.f32 %v1164, 1.442695
    %v1237 = vpow.pop %v1236
    %v1238 = vmul.f32 %v1165, 1.442695
    %v1239 = vpow.pop %v1238
    %v1240 = vmul.f32 %v1166, 1.442695
    %v1241 = vpow.pop %v1240
    %v1242 = vmul.f32 %v1167, 1.442695
    %v1243 = vpow.pop %v1242
    %v1244 = vmul.f32 %v1168, 1.442695
    %v1245 = vpow.pop %v1244
    %v1246 = vmul.f32 %v1169, 1.442695
    %v1247 = vpow.pop %v1246
    %v1248 = vmul.f32 %v1170, 1.442695
    %v1249 = vpow.pop %v1248
    %v1250 = vmul.f32 %v1171, 1.442695
    %v1251 = vpow.pop %v1250
    %v1252 = vmul.f32 %v1172, 1.442695
    %v1253 = vpow.pop %v1252
    %v1254 = vmul.f32 %v1173, 1.442695
    %v1255 = vpow.pop %v1254
    %v1256 = vmul.f32 %v1174, 1.442695
    %v1257 = vpow.pop %v1256
    %v1258 = vmul.f32 %v1175, 1.442695
    %v1259 = vpow.pop %v1258
    %v1260 = vmul.f32 %v1176, 1.442695
    %v1261 = vpow.pop %v1260
    %v1262 = vmul.f32 %v1177, 1.442695
    %v1263 = vpow.pop %v1262
    %v1264 = vmul.f32 %v1178, 1.442695
    %v1265 = vpow.pop %v1264
    %v1266 = vmul.f32 %v1179, 1.442695
    %v1267 = vpow.pop %v1266
    %v1268 = vmul.f32 %v1180, 1.442695
    %v1269 = vpow.pop %v1268
    %v1270 = vmul.f32 %v1181, 1.442695
    %v1271 = vpow.pop %v1270
    %v1272 = vmul.f32 %v1182, 1.442695
    %v1273 = vpow.pop %v1272
    %v1274 = vmul.f32 %v1183, 1.442695
    %v1275 = vpow.pop %v1274
    %v1276 = vmul.f32 %v1184, 1.442695
    %v1277 = vpow.pop %v1276
    %v1278 = vmul.f32 %v1185, 1.442695
    %v1279 = vpow.pop %v1278
    %v1280 = vmul.f32 %v1186, 1.442695
    %v1281 = vpow.pop %v1280
    %v1282 = vmul.f32 %v1187, 1.442695
    %v1283 = vpow.pop %v1282
    %v1284 = vmul.f32 %v1188, 1.442695
    %v1285 = vpow.pop %v1284
    %v1286 = vmul.f32 %v1189, 1.442695
    %v1287 = vpow.pop %v1286
    %v1288 = vmul.f32 %v1190, 1.442695
    %v1289 = vpow.pop %v1288
    %v1290 = vmul.f32 %v1191, 1.442695
    %v1291 = vpow.pop %v1290
    %v1292 = vmul.f32 %v1192, 1.442695
    %v1293 = vpow.pop %v1292
    %v1294 = vmul.f32 %v1193, 1.442695
    %v1295 = vpow.pop %v1294
    %v1296 = vmul.f32 %v1194, 1.442695
    %v1297 = vpow.pop %v1296
    %v1298 = vmul.f32 %v1195, 1.442695
    %v1299 = vpow.pop %v1298
    %v1300 = vmul.f32 %v1196, 1.442695
    %v1301 = vpow.pop %v1300
    %v1302 = vmul.f32 %v1197, 1.442695
    %v1303 = vpow.pop %v1302
    %v1304 = vmul.f32 %v1198, 1.442695
    %v1305 = vpow.pop %v1304
    %v1306 = vmul.f32 %v1199, 1.442695
    %v1307 = vpow.pop %v1306
    %v1308 = vmul.f32 %v1200, 1.442695
    %v1309 = vpow.pop %v1308
    %v1310 = vmul.f32 %v1201, 1.442695
    %v1311 = vpow.pop %v1310
    %v1312 = vmul.f32 %v1202, 1.442695
    %v1313 = vpow.pop %v1312
    %v1314 = vmul.f32 %v1203, 1.442695
    %v1315 = vpow.pop %v1314
    %v1316 = vmul.f32 %v1204, 1.442695
    %v1317 = vpow.pop %v1316
    %v1318 = vmul.f32 %v1205, 1.442695
    %v1319 = vpow.pop %v1318
    %v1320 = vmul.f32 %v1206, 1.442695
    %v1321 = vpow.pop %v1320
    %v1322 = vmul.f32 %v1207, 1.442695
    %v1323 = vpow.pop %v1322
    %v1324 = vmul.f32 %v1208, 1.442695
    %v1325 = vpow.pop %v1324
    %v1326 = vmul.f32 %v1209, 1.442695
    %v1327 = vpow.pop %v1326
    %v1328 = vmul.f32 %v1210, 1.442695
    %v1329 = vpow.pop %v1328
    %v1330 = vmul.f32 %v1211, 1.442695
    %v1331 = vpow.pop %v1330
    %v1332 = vmul.f32 %v1212, 1.442695
    %v1333 = vpow.pop %v1332
    %v1334 = vmul.f32 %v1213, 1.442695
    %v1335 = vpow.pop %v1334
    %v1336 = vmul.f32 %v1214, 1.442695
    %v1337 = vpow.pop %v1336
    %v1338 = vmul.f32 %v1215, 1.442695
    %v1339 = vpow.pop %v1338
    %v1340 = vmul.f32 %v1216, 1.442695
    %v1341 = vpow.pop %v1340
    %v1342 = vmul.f32 %v1217, 1.442695
    %v1343 = vpow.pop %v1342
    %v1344 = vmul.f32 %v1218, 1.442695
    %v1345 = vpow.pop %v1344
    %v1346 = vmul.f32 %v1219, 1.442695
    %v1347 = vpow.pop %v1346
    %v1348 = vadd.f32 %v1221, 1.0
    %v1349 = vadd.f32 %v1223, 1.0
    %v1350 = vadd.f32 %v1225, 1.0
    %v1351 = vadd.f32 %v1227, 1.0
    %v1352 = vadd.f32 %v1229, 1.0
    %v1353 = vadd.f32 %v1231, 1.0
    %v1354 = vadd.f32 %v1233, 1.0
    %v1355 = vadd.f32 %v1235, 1.0
    %v1356 = vadd.f32 %v1237, 1.0
    %v1357 = vadd.f32 %v1239, 1.0
    %v1358 = vadd.f32 %v1241, 1.0
    %v1359 = vadd.f32 %v1243, 1.0
    %v1360 = vadd.f32 %v1245, 1.0
    %v1361 = vadd.f32 %v1247, 1.0
    %v1362 = vadd.f32 %v1249, 1.0
    %v1363 = vadd.f32 %v1251, 1.0
    %v1364 = vadd.f32 %v1253, 1.0
    %v1365 = vadd.f32 %v1255, 1.0
    %v1366 = vadd.f32 %v1257, 1.0
    %v1367 = vadd.f32 %v1259, 1.0
    %v1368 = vadd.f32 %v1261, 1.0
    %v1369 = vadd.f32 %v1263, 1.0
    %v1370 = vadd.f32 %v1265, 1.0
    %v1371 = vadd.f32 %v1267, 1.0
    %v1372 = vadd.f32 %v1269, 1.0
    %v1373 = vadd.f32 %v1271, 1.0
    %v1374 = vadd.f32 %v1273, 1.0
    %v1375 = vadd.f32 %v1275, 1.0
    %v1376 = vadd.f32 %v1277, 1.0
    %v1377 = vadd.f32 %v1279, 1.0
    %v1378 = vadd.f32 %v1281, 1.0
    %v1379 = vadd.f32 %v1283, 1.0
    %v1380 = vadd.f32 %v1285, 1.0
    %v1381 = vadd.f32 %v1287, 1.0
    %v1382 = vadd.f32 %v1289, 1.0
    %v1383 = vadd.f32 %v1291, 1.0
    %v1384 = vadd.f32 %v1293, 1.0
    %v1385 = vadd.f32 %v1295, 1.0
    %v1386 = vadd.f32 %v1297, 1.0
    %v1387 = vadd.f32 %v1299, 1.0
    %v1388 = vadd.f32 %v1301, 1.0
    %v1389 = vadd.f32 %v1303, 1.0
    %v1390 = vadd.f32 %v1305, 1.0
    %v1391 = vadd.f32 %v1307, 1.0
    %v1392 = vadd.f32 %v1309, 1.0
    %v1393 = vadd.f32 %v1311, 1.0
    %v1394 = vadd.f32 %v1313, 1.0
    %v1395 = vadd.f32 %v1315, 1.0
    %v1396 = vadd.f32 %v1317, 1.0
    %v1397 = vadd.f32 %v1319, 1.0
    %v1398 = vadd.f32 %v1321, 1.0
    %v1399 = vadd.f32 %v1323, 1.0
    %v1400 = vadd.f32 %v1325, 1.0
    %v1401 = vadd.f32 %v1327, 1.0
    %v1402 = vadd.f32 %v1329, 1.0
    %v1403 = vadd.f32 %v1331, 1.0
    %v1404 = vadd.f32 %v1333, 1.0
    %v1405 = vadd.f32 %v1335, 1.0
    %v1406 = vadd.f32 %v1337, 1.0
    %v1407 = vadd.f32 %v1339, 1.0
    %v1408 = vadd.f32 %v1341, 1.0
    %v1409 = vadd.f32 %v1343, 1.0
    %v1410 = vadd.f32 %v1345, 1.0
    %v1411 = vadd.f32 %v1347, 1.0
    %v1412 = vrcp.pop %v1348
    %v1413 = vrcp.pop %v1349
    %v1414 = vrcp.pop %v1350
    %v1415 = vrcp.pop %v1351
    %v1416 = vrcp.pop %v1352
    %v1417 = vrcp.pop %v1353
    %v1418 = vrcp.pop %v1354
    %v1419 = vrcp.pop %v1355
    %v1420 = vrcp.pop %v1356
    %v1421 = vrcp.pop %v1357
    %v1422 = vrcp.pop %v1358
    %v1423 = vrcp.pop %v1359
    %v1424 = vrcp.pop %v1360
    %v1425 = vrcp.pop %v1361
    %v1426 = vrcp.pop %v1362
    %v1427 = vrcp.pop %v1363
    %v1428 = vrcp.pop %v1364
    %v1429 = vrcp.pop %v1365
    %v1430 = vrcp.pop %v1366
    %v1431 = vrcp.pop %v1367
    %v1432 = vrcp.pop %v1368
    %v1433 = vrcp.pop %v1369
    %v1434 = vrcp.pop %v1370
    %v1435 = vrcp.pop %v1371
    %v1436 = vrcp.pop %v1372
    %v1437 = vrcp.pop %v1373
    %v1438 = vrcp.pop %v1374
    %v1439 = vrcp.pop %v1375
    %v1440 = vrcp.pop %v1376
    %v1441 = vrcp.pop %v1377
    %v1442 = vrcp.pop %v1378
    %v1443 = vrcp.pop %v1379
    %v1444 = vrcp.pop %v1380
    %v1445 = vrcp.pop %v1381
    %v1446 = vrcp.pop %v1382
    %v1447 = vrcp.pop %v1383
    %v1448 = vrcp.pop %v1384
    %v1449 = vrcp.pop %v1385
    %v1450 = vrcp.pop %v1386
    %v1451 = vrcp.pop %v1387
    %v1452 = vrcp.pop %v1388
    %v1453 = vrcp.pop %v1389
    %v1454 = vrcp.pop %v1390
    %v1455 = vrcp.pop %v1391
    %v1456 = vrcp.pop %v1392
    %v1457 = vrcp.pop %v1393
    %v1458 = vrcp.pop %v1394
    %v1459 = vrcp.pop %v1395
    %v1460 = vrcp.pop %v1396
    %v1461 = vrcp.pop %v1397
    %v1462 = vrcp.pop %v1398
    %v1463 = vrcp.pop %v1399
    %v1464 = vrcp.pop %v1400
    %v1465 = vrcp.pop %v1401
    %v1466 = vrcp.pop %v1402
    %v1467 = vrcp.pop %v1403
    %v1468 = vrcp.pop %v1404
    %v1469 = vrcp.pop %v1405
    %v1470 = vrcp.pop %v1406
    %v1471 = vrcp.pop %v1407
    %v1472 = vrcp.pop %v1408
    %v1473 = vrcp.pop %v1409
    %v1474 = vrcp.pop %v1410
    %v1475 = vrcp.pop %v1411
    %v1476 = vmul.f32 %v1092, %v1412
    %v1477 = vmul.f32 %v1093, %v1413
    %v1478 = vmul.f32 %v1094, %v1414
    %v1479 = vmul.f32 %v1095, %v1415
    %v1480 = vmul.f32 %v1096, %v1416
    %v1481 = vmul.f32 %v1097, %v1417
    %v1482 = vmul.f32 %v1098, %v1418
    %v1483 = vmul.f32 %v1099, %v1419
    %v1484 = vmul.f32 %v1100, %v1420
    %v1485 = vmul.f32 %v1101, %v1421
    %v1486 = vmul.f32 %v1102, %v1422
    %v1487 = vmul.f32 %v1103, %v1423
    %v1488 = vmul.f32 %v1104, %v1424
    %v1489 = vmul.f32 %v1105, %v1425
    %v1490 = vmul.f32 %v1106, %v1426
    %v1491 = vmul.f32 %v1107, %v1427
    %v1492 = vmul.f32 %v1108, %v1428
    %v1493 = vmul.f32 %v1109, %v1429
    %v1494 = vmul.f32 %v1110, %v1430
    %v1495 = vmul.f32 %v1111, %v1431
    %v1496 = vmul.f32 %v1112, %v1432
    %v1497 = vmul.f32 %v1113, %v1433
    %v1498 = vmul.f32 %v1114, %v1434
    %v1499 = vmul.f32 %v1115, %v1435
    %v1500 = vmul.f32 %v1116, %v1436
    %v1501 = vmul.f32 %v1117, %v1437
    %v1502 = vmul.f32 %v1118, %v1438
    %v1503 = vmul.f32 %v1119, %v1439
    %v1504 = vmul.f32 %v1120, %v1440
    %v1505 = vmul.f32 %v1121, %v1441
    %v1506 = vmul.f32 %v1122, %v1442
    %v1507 = vmul.f32 %v1123, %v1443
    %v1508 = vmul.f32 %v1124, %v1444
    %v1509 = vmul.f32 %v1125, %v1445
    %v1510 = vmul.f32 %v1126, %v1446
    %v1511 = vmul.f32 %v1127, %v1447
    %v1512 = vmul.f32 %v1128, %v1448
    %v1513 = vmul.f32 %v1129, %v1449
    %v1514 = vmul.f32 %v1130, %v1450
    %v1515 = vmul.f32 %v1131, %v1451
    %v1516 = vmul.f32 %v1132, %v1452
    %v1517 = vmul.f32 %v1133, %v1453
    %v1518 = vmul.f32 %v1134, %v1454
    %v1519 = vmul.f32 %v1135, %v1455
    %v1520 = vmul.f32 %v1136, %v1456
    %v1521 = vmul.f32 %v1137, %v1457
    %v1522 = vmul.f32 %v1138, %v1458
    %v1523 = vmul.f32 %v1139, %v1459
    %v1524 = vmul.f32 %v1140, %v1460
    %v1525 = vmul.f32 %v1141, %v1461
    %v1526 = vmul.f32 %v1142, %v1462
    %v1527 = vmul.f32 %v1143, %v1463
    %v1528 = vmul.f32 %v1144, %v1464
    %v1529 = vmul.f32 %v1145, %v1465
    %v1530 = vmul.f32 %v1146, %v1466
    %v1531 = vmul.f32 %v1147, %v1467
    %v1532 = vmul.f32 %v1148, %v1468
    %v1533 = vmul.f32 %v1149, %v1469
    %v1534 = vmul.f32 %v1150, %v1470
    %v1535 = vmul.f32 %v1151, %v1471
    %v1536 = vmul.f32 %v1152, %v1472
    %v1537 = vmul.f32 %v1153, %v1473
    %v1538 = vmul.f32 %v1154, %v1474
    %v1539 = vmul.f32 %v1155, %v1475
    %v1540 = vld [vmem:[#allocation7] sm:$0xff]
    %v1541 = vld [vmem:[#allocation7 + $0x8] sm:$0xff]
    %v1542 = vld [vmem:[#allocation7 + $0x10] sm:$0xff]
    %v1543 = vld [vmem:[#allocation7 + $0x18] sm:$0xff]
    %v1544 = vpack.c.bf16 %v1477, %v1476
    %v1545 = vpack.c.bf16 %v1479, %v1478
    %v1546 = vpack.c.bf16 %v1481, %v1480
    %v1547 = vpack.c.bf16 %v1483, %v1482
    %v1548 = vpack.c.bf16 %v1485, %v1484
    %v1549 = vpack.c.bf16 %v1487, %v1486
    %v1550 = vpack.c.bf16 %v1489, %v1488
    %v1551 = vpack.c.bf16 %v1491, %v1490
    %v1552 = vpack.c.bf16 %v1493, %v1492
    %v1553 = vpack.c.bf16 %v1495, %v1494
    %v1554 = vpack.c.bf16 %v1497, %v1496
    %v1555 = vpack.c.bf16 %v1499, %v1498
    %v1556 = vpack.c.bf16 %v1501, %v1500
    %v1557 = vpack.c.bf16 %v1503, %v1502
    %v1558 = vpack.c.bf16 %v1505, %v1504
    %v1559 = vpack.c.bf16 %v1507, %v1506
    %v1560 = vpack.c.bf16 %v1509, %v1508
    %v1561 = vpack.c.bf16 %v1511, %v1510
    %v1562 = vpack.c.bf16 %v1513, %v1512
    %v1563 = vpack.c.bf16 %v1515, %v1514
    %v1564 = vpack.c.bf16 %v1517, %v1516
    %v1565 = vpack.c.bf16 %v1519, %v1518
    %v1566 = vpack.c.bf16 %v1521, %v1520
    %v1567 = vpack.c.bf16 %v1523, %v1522
    %v1568 = vpack.c.bf16 %v1525, %v1524
    %v1569 = vpack.c.bf16 %v1527, %v1526
    %v1570 = vpack.c.bf16 %v1529, %v1528
    %v1571 = vpack.c.bf16 %v1531, %v1530
    %v1572 = vpack.c.bf16 %v1533, %v1532
    %v1573 = vpack.c.bf16 %v1535, %v1534
    %v1574 = vpack.c.bf16 %v1537, %v1536
    %v1575 = vpack.c.bf16 %v1539, %v1538
    %v1576 = vpack.c.bf16 %v1541, %v1540
    %v1577 = vpack.c.bf16 %v1543, %v1542
    %v1579 = vsel %vm547, %v1544, 0
    %v1582 = vsel %vm547, %v1545, 0
    %v1585 = vsel %vm547, %v1546, 0
    %v1588 = vsel %vm547, %v1547, 0
    %v1591 = vsel %vm547, %v1548, 0
    %v1594 = vsel %vm547, %v1549, 0
    %v1597 = vsel %vm547, %v1550, 0
    %v1600 = vsel %vm547, %v1551, 0
    %v1603 = vsel %vm547, %v1552, 0
    %v1606 = vsel %vm547, %v1553, 0
    %v1609 = vsel %vm547, %v1554, 0
    %v1612 = vsel %vm547, %v1555, 0
    %v1615 = vsel %vm547, %v1556, 0
    %v1618 = vsel %vm547, %v1557, 0
    %v1621 = vsel %vm547, %v1558, 0
    %v1624 = vsel %vm547, %v1559, 0
    %v1627 = vsel %vm547, %v1560, 0
    %v1630 = vsel %vm547, %v1561, 0
    %v1633 = vsel %vm547, %v1562, 0
    %v1636 = vsel %vm547, %v1563, 0
    %v1639 = vsel %vm547, %v1564, 0
    %v1642 = vsel %vm547, %v1565, 0
    %v1645 = vsel %vm547, %v1566, 0
    %v1648 = vsel %vm547, %v1567, 0
    %v1651 = vsel %vm547, %v1568, 0
    %v1654 = vsel %vm547, %v1569, 0
    %v1657 = vsel %vm547, %v1570, 0
    %v1660 = vsel %vm547, %v1571, 0
    %v1663 = vsel %vm547, %v1572, 0
    %v1666 = vsel %vm547, %v1573, 0
    %v1669 = vsel %vm547, %v1574, 0
    %v1672 = vsel %vm547, %v1575, 0
    %1674 = vmatpush.bf16.msra.mxu0 0
    %1675 = vmatpush.bf16.msra.mxu0 0
    %1676 = vmatpush.bf16.msra.mxu0 0
    %1677 = vmatpush.bf16.msra.mxu0 0
    %1678 = vmatpush.bf16.msra.mxu0 0
    %1679 = vmatpush.bf16.msra.mxu0 0
    %1680 = vmatpush.bf16.msra.mxu0 %v1577
    %1681 = vmatpush.bf16.msra.mxu0 %v1576
    %1682 = vmatmul.bf16.gmra.mxu0 %v1579
    %v1683 = vpop.f32.mrf.mxu0
    %v1684 = vadd.f32 0.0, %v1683
    %v1685 = vpop.f32.mrf.mxu0
    %v1686 = vadd.f32 0.0, %v1685
    %1687 = vmatmul.bf16.gmra.mxu0 %v1582
    %v1688 = vpop.f32.mrf.mxu0
    %v1689 = vadd.f32 0.0, %v1688
    %v1690 = vpop.f32.mrf.mxu0
    %v1691 = vadd.f32 0.0, %v1690
    %1692 = vmatmul.bf16.gmra.mxu0 %v1585
    %v1693 = vpop.f32.mrf.mxu0
    %v1694 = vadd.f32 0.0, %v1693
    %v1695 = vpop.f32.mrf.mxu0
    %v1696 = vadd.f32 0.0, %v1695
    %1697 = vmatmul.bf16.gmra.mxu0 %v1588
    %v1698 = vpop.f32.mrf.mxu0
    %v1699 = vadd.f32 0.0, %v1698
    %v1700 = vpop.f32.mrf.mxu0
    %v1701 = vadd.f32 0.0, %v1700
    %1702 = vmatmul.bf16.gmra.mxu0 %v1591
    %v1703 = vpop.f32.mrf.mxu0
    %v1704 = vadd.f32 0.0, %v1703
    %v1705 = vpop.f32.mrf.mxu0
    %v1706 = vadd.f32 0.0, %v1705
    %1707 = vmatmul.bf16.gmra.mxu0 %v1594
    %v1708 = vpop.f32.mrf.mxu0
    %v1709 = vadd.f32 0.0, %v1708
    %v1710 = vpop.f32.mrf.mxu0
    %v1711 = vadd.f32 0.0, %v1710
    %1712 = vmatmul.bf16.gmra.mxu0 %v1597
    %v1713 = vpop.f32.mrf.mxu0
    %v1714 = vadd.f32 0.0, %v1713
    %v1715 = vpop.f32.mrf.mxu0
    %v1716 = vadd.f32 0.0, %v1715
    %1717 = vmatmul.bf16.gmra.mxu0 %v1600
    %v1718 = vpop.f32.mrf.mxu0
    %v1719 = vadd.f32 0.0, %v1718
    %v1720 = vpop.f32.mrf.mxu0
    %v1721 = vadd.f32 0.0, %v1720
    %1722 = vmatmul.bf16.gmra.mxu0 %v1603
    %v1723 = vpop.f32.mrf.mxu0
    %v1724 = vadd.f32 0.0, %v1723
    %v1725 = vpop.f32.mrf.mxu0
    %v1726 = vadd.f32 0.0, %v1725
    %1727 = vmatmul.bf16.gmra.mxu0 %v1606
    %v1728 = vpop.f32.mrf.mxu0
    %v1729 = vadd.f32 0.0, %v1728
    %v1730 = vpop.f32.mrf.mxu0
    %v1731 = vadd.f32 0.0, %v1730
    %1732 = vmatmul.bf16.gmra.mxu0 %v1609
    %v1733 = vpop.f32.mrf.mxu0
    %v1734 = vadd.f32 0.0, %v1733
    %v1735 = vpop.f32.mrf.mxu0
    %v1736 = vadd.f32 0.0, %v1735
    %1737 = vmatmul.bf16.gmra.mxu0 %v1612
    %v1738 = vpop.f32.mrf.mxu0
    %v1739 = vadd.f32 0.0, %v1738
    %v1740 = vpop.f32.mrf.mxu0
    %v1741 = vadd.f32 0.0, %v1740
    %1742 = vmatmul.bf16.gmra.mxu0 %v1615
    %v1743 = vpop.f32.mrf.mxu0
    %v1744 = vadd.f32 0.0, %v1743
    %v1745 = vpop.f32.mrf.mxu0
    %v1746 = vadd.f32 0.0, %v1745
    %1747 = vmatmul.bf16.gmra.mxu0 %v1618
    %v1748 = vpop.f32.mrf.mxu0
    %v1749 = vadd.f32 0.0, %v1748
    %v1750 = vpop.f32.mrf.mxu0
    %v1751 = vadd.f32 0.0, %v1750
    %1752 = vmatmul.bf16.gmra.mxu0 %v1621
    %v1753 = vpop.f32.mrf.mxu0
    %v1754 = vadd.f32 0.0, %v1753
    %v1755 = vpop.f32.mrf.mxu0
    %v1756 = vadd.f32 0.0, %v1755
    %1757 = vmatmul.bf16.gmra.mxu0 %v1624
    %v1758 = vpop.f32.mrf.mxu0
    %v1759 = vadd.f32 0.0, %v1758
    %v1760 = vpop.f32.mrf.mxu0
    %v1761 = vadd.f32 0.0, %v1760
    %1762 = vmatmul.bf16.gmra.mxu0 %v1627
    %v1763 = vpop.f32.mrf.mxu0
    %v1764 = vadd.f32 0.0, %v1763
    %v1765 = vpop.f32.mrf.mxu0
    %v1766 = vadd.f32 0.0, %v1765
    %1767 = vmatmul.bf16.gmra.mxu0 %v1630
    %v1768 = vpop.f32.mrf.mxu0
    %v1769 = vadd.f32 0.0, %v1768
    %v1770 = vpop.f32.mrf.mxu0
    %v1771 = vadd.f32 0.0, %v1770
    %1772 = vmatmul.bf16.gmra.mxu0 %v1633
    %v1773 = vpop.f32.mrf.mxu0
    %v1774 = vadd.f32 0.0, %v1773
    %v1775 = vpop.f32.mrf.mxu0
    %v1776 = vadd.f32 0.0, %v1775
    %1777 = vmatmul.bf16.gmra.mxu0 %v1636
    %v1778 = vpop.f32.mrf.mxu0
    %v1779 = vadd.f32 0.0, %v1778
    %v1780 = vpop.f32.mrf.mxu0
    %v1781 = vadd.f32 0.0, %v1780
    %1782 = vmatmul.bf16.gmra.mxu0 %v1639
    %v1783 = vpop.f32.mrf.mxu0
    %v1784 = vadd.f32 0.0, %v1783
    %v1785 = vpop.f32.mrf.mxu0
    %v1786 = vadd.f32 0.0, %v1785
    %1787 = vmatmul.bf16.gmra.mxu0 %v1642
    %v1788 = vpop.f32.mrf.mxu0
    %v1789 = vadd.f32 0.0, %v1788
    %v1790 = vpop.f32.mrf.mxu0
    %v1791 = vadd.f32 0.0, %v1790
    %1792 = vmatmul.bf16.gmra.mxu0 %v1645
    %v1793 = vpop.f32.mrf.mxu0
    %v1794 = vadd.f32 0.0, %v1793
    %v1795 = vpop.f32.mrf.mxu0
    %v1796 = vadd.f32 0.0, %v1795
    %1797 = vmatmul.bf16.gmra.mxu0 %v1648
    %v1798 = vpop.f32.mrf.mxu0
    %v1799 = vadd.f32 0.0, %v1798
    %v1800 = vpop.f32.mrf.mxu0
    %v1801 = vadd.f32 0.0, %v1800
    %1802 = vmatmul.bf16.gmra.mxu0 %v1651
    %v1803 = vpop.f32.mrf.mxu0
    %v1804 = vadd.f32 0.0, %v1803
    %v1805 = vpop.f32.mrf.mxu0
    %v1806 = vadd.f32 0.0, %v1805
    %1807 = vmatmul.bf16.gmra.mxu0 %v1654
    %v1808 = vpop.f32.mrf.mxu0
    %v1809 = vadd.f32 0.0, %v1808
    %v1810 = vpop.f32.mrf.mxu0
    %v1811 = vadd.f32 0.0, %v1810
    %1812 = vmatmul.bf16.gmra.mxu0 %v1657
    %v1813 = vpop.f32.mrf.mxu0
    %v1814 = vadd.f32 0.0, %v1813
    %v1815 = vpop.f32.mrf.mxu0
    %v1816 = vadd.f32 0.0, %v1815
    %1817 = vmatmul.bf16.gmra.mxu0 %v1660
    %v1818 = vpop.f32.mrf.mxu0
    %v1819 = vadd.f32 0.0, %v1818
    %v1820 = vpop.f32.mrf.mxu0
    %v1821 = vadd.f32 0.0, %v1820
    %1822 = vmatmul.bf16.gmra.mxu0 %v1663
    %v1823 = vpop.f32.mrf.mxu0
    %v1824 = vadd.f32 0.0, %v1823
    %v1825 = vpop.f32.mrf.mxu0
    %v1826 = vadd.f32 0.0, %v1825
    %1827 = vmatmul.bf16.gmra.mxu0 %v1666
    %v1828 = vpop.f32.mrf.mxu0
    %v1829 = vadd.f32 0.0, %v1828
    %v1830 = vpop.f32.mrf.mxu0
    %v1831 = vadd.f32 0.0, %v1830
    %1832 = vmatmul.bf16.gmra.mxu0 %v1669
    %v1833 = vpop.f32.mrf.mxu0
    %v1834 = vadd.f32 0.0, %v1833
    %v1835 = vpop.f32.mrf.mxu0
    %v1836 = vadd.f32 0.0, %v1835
    %1837 = vmatmul.bf16.gmra.mxu0 %v1672
    %v1838 = vpop.f32.mrf.mxu0
    %v1839 = vadd.f32 0.0, %v1838
    %v1840 = vpop.f32.mrf.mxu0
    %v1841 = vadd.f32 0.0, %v1840
    %1842 = vdwg.mxu0
    %v1843 = vld [vmem:[#allocation9] sm:$0x3]
    %vm1844 = vcmask 523264
    %v1845 = vsel %vm1844, %v1684, 0.0
    %v1846 = vsel %vm1844, %v1686, 0.0
    %v1847 = vadd.f32 %v1845, %v1846
    %v1848 = vsel %vm1844, %v1689, 0.0
    %v1849 = vadd.f32 %v1847, %v1848
    %v1850 = vsel %vm1844, %v1691, 0.0
    %v1851 = vadd.f32 %v1849, %v1850
    %v1852 = vsel %vm1844, %v1694, 0.0
    %v1853 = vadd.f32 %v1851, %v1852
    %v1854 = vsel %vm1844, %v1696, 0.0
    %v1855 = vadd.f32 %v1853, %v1854
    %v1856 = vsel %vm1844, %v1699, 0.0
    %v1857 = vadd.f32 %v1855, %v1856
    %v1858 = vsel %vm1844, %v1701, 0.0
    %v1859 = vadd.f32 %v1857, %v1858
    %v1860 = vsel %vm1844, %v1704, 0.0
    %v1861 = vadd.f32 %v1859, %v1860
    %v1862 = vsel %vm1844, %v1706, 0.0
    %v1863 = vadd.f32 %v1861, %v1862
    %v1864 = vsel %vm1844, %v1709, 0.0
    %v1865 = vadd.f32 %v1863, %v1864
    %v1866 = vsel %vm1844, %v1711, 0.0
    %v1867 = vadd.f32 %v1865, %v1866
    %v1868 = vsel %vm1844, %v1714, 0.0
    %v1869 = vadd.f32 %v1867, %v1868
    %v1870 = vsel %vm1844, %v1716, 0.0
    %v1871 = vadd.f32 %v1869, %v1870
    %v1872 = vsel %vm1844, %v1719, 0.0
    %v1873 = vadd.f32 %v1871, %v1872
    %v1874 = vsel %vm1844, %v1721, 0.0
    %v1875 = vadd.f32 %v1873, %v1874
    %v1876 = vsel %vm1844, %v1724, 0.0
    %v1877 = vadd.f32 %v1875, %v1876
    %v1878 = vsel %vm1844, %v1726, 0.0
    %v1879 = vadd.f32 %v1877, %v1878
    %v1880 = vsel %vm1844, %v1729, 0.0
    %v1881 = vadd.f32 %v1879, %v1880
    %v1882 = vsel %vm1844, %v1731, 0.0
    %v1883 = vadd.f32 %v1881, %v1882
    %v1884 = vsel %vm1844, %v1734, 0.0
    %v1885 = vadd.f32 %v1883, %v1884
    %v1886 = vsel %vm1844, %v1736, 0.0
    %v1887 = vadd.f32 %v1885, %v1886
    %v1888 = vsel %vm1844, %v1739, 0.0
    %v1889 = vadd.f32 %v1887, %v1888
    %v1890 = vsel %vm1844, %v1741, 0.0
    %v1891 = vadd.f32 %v1889, %v1890
    %v1892 = vsel %vm1844, %v1744, 0.0
    %v1893 = vadd.f32 %v1891, %v1892
    %v1894 = vsel %vm1844, %v1746, 0.0
    %v1895 = vadd.f32 %v1893, %v1894
    %v1896 = vsel %vm1844, %v1749, 0.0
    %v1897 = vadd.f32 %v1895, %v1896
    %v1898 = vsel %vm1844, %v1751, 0.0
    %v1899 = vadd.f32 %v1897, %v1898
    %v1900 = vsel %vm1844, %v1754, 0.0
    %v1901 = vadd.f32 %v1899, %v1900
    %v1902 = vsel %vm1844, %v1756, 0.0
    %v1903 = vadd.f32 %v1901, %v1902
    %v1904 = vsel %vm1844, %v1759, 0.0
    %v1905 = vadd.f32 %v1903, %v1904
    %v1906 = vsel %vm1844, %v1761, 0.0
    %v1907 = vadd.f32 %v1905, %v1906
    %v1908 = vsel %vm1844, %v1764, 0.0
    %v1909 = vadd.f32 %v1907, %v1908
    %v1910 = vsel %vm1844, %v1766, 0.0
    %v1911 = vadd.f32 %v1909, %v1910
    %v1912 = vsel %vm1844, %v1769, 0.0
    %v1913 = vadd.f32 %v1911, %v1912
    %v1914 = vsel %vm1844, %v1771, 0.0
    %v1915 = vadd.f32 %v1913, %v1914
    %v1916 = vsel %vm1844, %v1774, 0.0
    %v1917 = vadd.f32 %v1915, %v1916
    %v1918 = vsel %vm1844, %v1776, 0.0
    %v1919 = vadd.f32 %v1917, %v1918
    %v1920 = vsel %vm1844, %v1779, 0.0
    %v1921 = vadd.f32 %v1919, %v1920
    %v1922 = vsel %vm1844, %v1781, 0.0
    %v1923 = vadd.f32 %v1921, %v1922
    %v1924 = vsel %vm1844, %v1784, 0.0
    %v1925 = vadd.f32 %v1923, %v1924
    %v1926 = vsel %vm1844, %v1786, 0.0
    %v1927 = vadd.f32 %v1925, %v1926
    %v1928 = vsel %vm1844, %v1789, 0.0
    %v1929 = vadd.f32 %v1927, %v1928
    %v1930 = vsel %vm1844, %v1791, 0.0
    %v1931 = vadd.f32 %v1929, %v1930
    %v1932 = vsel %vm1844, %v1794, 0.0
    %v1933 = vadd.f32 %v1931, %v1932
    %v1934 = vsel %vm1844, %v1796, 0.0
    %v1935 = vadd.f32 %v1933, %v1934
    %v1936 = vsel %vm1844, %v1799, 0.0
    %v1937 = vadd.f32 %v1935, %v1936
    %v1938 = vsel %vm1844, %v1801, 0.0
    %v1939 = vadd.f32 %v1937, %v1938
    %v1940 = vsel %vm1844, %v1804, 0.0
    %v1941 = vadd.f32 %v1939, %v1940
    %v1942 = vsel %vm1844, %v1806, 0.0
    %v1943 = vadd.f32 %v1941, %v1942
    %v1944 = vsel %vm1844, %v1809, 0.0
    %v1945 = vadd.f32 %v1943, %v1944
    %v1946 = vsel %vm1844, %v1811, 0.0
    %v1947 = vadd.f32 %v1945, %v1946
    %v1948 = vsel %vm1844, %v1814, 0.0
    %v1949 = vadd.f32 %v1947, %v1948
    %v1950 = vsel %vm1844, %v1816, 0.0
    %v1951 = vadd.f32 %v1949, %v1950
    %v1952 = vsel %vm1844, %v1819, 0.0
    %v1953 = vadd.f32 %v1951, %v1952
    %v1954 = vsel %vm1844, %v1821, 0.0
    %v1955 = vadd.f32 %v1953, %v1954
    %v1956 = vsel %vm1844, %v1824, 0.0
    %v1957 = vadd.f32 %v1955, %v1956
    %v1958 = vsel %vm1844, %v1826, 0.0
    %v1959 = vadd.f32 %v1957, %v1958
    %v1960 = vsel %vm1844, %v1829, 0.0
    %v1961 = vadd.f32 %v1959, %v1960
    %v1962 = vsel %vm1844, %v1831, 0.0
    %v1963 = vadd.f32 %v1961, %v1962
    %v1964 = vsel %vm1844, %v1834, 0.0
    %v1965 = vadd.f32 %v1963, %v1964
    %v1966 = vsel %vm1844, %v1836, 0.0
    %v1967 = vadd.f32 %v1965, %v1966
    %v1968 = vsel %vm1844, %v1839, 0.0
    %v1969 = vadd.f32 %v1967, %v1968
    %v1970 = vsel %vm1844, %v1841, 0.0
    %v1971 = vadd.f32 %v1969, %v1970
    %v1972 = vrot.slane %v1971, 4
    %v1973 = vadd.f32 %v1971, %v1972
    %v1974 = vrot.slane %v1973, 2
    %v1975 = vadd.f32 %v1973, %v1974
    %v1976 = vrot.slane %v1975, 1
    %v1977 = vadd.f32 %v1975, %v1976
    %v1978 = vmul.f32 %v1977, %v687
    %v1979 = vsub.f32 %v1684, %v1978
    %v1980 = vsub.f32 %v1686, %v1978
    %v1981 = vsub.f32 %v1689, %v1978
    %v1982 = vsub.f32 %v1691, %v1978
    %v1983 = vsub.f32 %v1694, %v1978
    %v1984 = vsub.f32 %v1696, %v1978
    %v1985 = vsub.f32 %v1699, %v1978
    %v1986 = vsub.f32 %v1701, %v1978
    %v1987 = vsub.f32 %v1704, %v1978
    %v1988 = vsub.f32 %v1706, %v1978
    %v1989 = vsub.f32 %v1709, %v1978
    %v1990 = vsub.f32 %v1711, %v1978
    %v1991 = vsub.f32 %v1714, %v1978
    %v1992 = vsub.f32 %v1716, %v1978
    %v1993 = vsub.f32 %v1719, %v1978
    %v1994 = vsub.f32 %v1721, %v1978
    %v1995 = vsub.f32 %v1724, %v1978
    %v1996 = vsub.f32 %v1726, %v1978
    %v1997 = vsub.f32 %v1729, %v1978
    %v1998 = vsub.f32 %v1731, %v1978
    %v1999 = vsub.f32 %v1734, %v1978
    %v2000 = vsub.f32 %v1736, %v1978
    %v2001 = vsub.f32 %v1739, %v1978
    %v2002 = vsub.f32 %v1741, %v1978
    %v2003 = vsub.f32 %v1744, %v1978
    %v2004 = vsub.f32 %v1746, %v1978
    %v2005 = vsub.f32 %v1749, %v1978
    %v2006 = vsub.f32 %v1751, %v1978
    %v2007 = vsub.f32 %v1754, %v1978
    %v2008 = vsub.f32 %v1756, %v1978
    %v2009 = vsub.f32 %v1759, %v1978
    %v2010 = vsub.f32 %v1761, %v1978
    %v2011 = vsub.f32 %v1764, %v1978
    %v2012 = vsub.f32 %v1766, %v1978
    %v2013 = vsub.f32 %v1769, %v1978
    %v2014 = vsub.f32 %v1771, %v1978
    %v2015 = vsub.f32 %v1774, %v1978
    %v2016 = vsub.f32 %v1776, %v1978
    %v2017 = vsub.f32 %v1779, %v1978
    %v2018 = vsub.f32 %v1781, %v1978
    %v2019 = vsub.f32 %v1784, %v1978
    %v2020 = vsub.f32 %v1786, %v1978
    %v2021 = vsub.f32 %v1789, %v1978
    %v2022 = vsub.f32 %v1791, %v1978
    %v2023 = vsub.f32 %v1794, %v1978
    %v2024 = vsub.f32 %v1796, %v1978
    %v2025 = vsub.f32 %v1799, %v1978
    %v2026 = vsub.f32 %v1801, %v1978
    %v2027 = vsub.f32 %v1804, %v1978
    %v2028 = vsub.f32 %v1806, %v1978
    %v2029 = vsub.f32 %v1809, %v1978
    %v2030 = vsub.f32 %v1811, %v1978
    %v2031 = vsub.f32 %v1814, %v1978
    %v2032 = vsub.f32 %v1816, %v1978
    %v2033 = vsub.f32 %v1819, %v1978
    %v2034 = vsub.f32 %v1821, %v1978
    %v2035 = vsub.f32 %v1824, %v1978
    %v2036 = vsub.f32 %v1826, %v1978
    %v2037 = vsub.f32 %v1829, %v1978
    %v2038 = vsub.f32 %v1831, %v1978
    %v2039 = vsub.f32 %v1834, %v1978
    %v2040 = vsub.f32 %v1836, %v1978
    %v2041 = vsub.f32 %v1839, %v1978
    %v2042 = vsub.f32 %v1841, %v1978
    %v2043 = vmul.f32 %v1979, %v1979
    %v2044 = vmul.f32 %v1980, %v1980
    %v2045 = vmul.f32 %v1981, %v1981
    %v2046 = vmul.f32 %v1982, %v1982
    %v2047 = vmul.f32 %v1983, %v1983
    %v2048 = vmul.f32 %v1984, %v1984
    %v2049 = vmul.f32 %v1985, %v1985
    %v2050 = vmul.f32 %v1986, %v1986
    %v2051 = vmul.f32 %v1987, %v1987
    %v2052 = vmul.f32 %v1988, %v1988
    %v2053 = vmul.f32 %v1989, %v1989
    %v2054 = vmul.f32 %v1990, %v1990
    %v2055 = vmul.f32 %v1991, %v1991
    %v2056 = vmul.f32 %v1992, %v1992
    %v2057 = vmul.f32 %v1993, %v1993
    %v2058 = vmul.f32 %v1994, %v1994
    %v2059 = vmul.f32 %v1995, %v1995
    %v2060 = vmul.f32 %v1996, %v1996
    %v2061 = vmul.f32 %v1997, %v1997
    %v2062 = vmul.f32 %v1998, %v1998
    %v2063 = vmul.f32 %v1999, %v1999
    %v2064 = vmul.f32 %v2000, %v2000
    %v2065 = vmul.f32 %v2001, %v2001
    %v2066 = vmul.f32 %v2002, %v2002
    %v2067 = vmul.f32 %v2003, %v2003
    %v2068 = vmul.f32 %v2004, %v2004
    %v2069 = vmul.f32 %v2005, %v2005
    %v2070 = vmul.f32 %v2006, %v2006
    %v2071 = vmul.f32 %v2007, %v2007
    %v2072 = vmul.f32 %v2008, %v2008
    %v2073 = vmul.f32 %v2009, %v2009
    %v2074 = vmul.f32 %v2010, %v2010
    %v2075 = vmul.f32 %v2011, %v2011
    %v2076 = vmul.f32 %v2012, %v2012
    %v2077 = vmul.f32 %v2013, %v2013
    %v2078 = vmul.f32 %v2014, %v2014
    %v2079 = vmul.f32 %v2015, %v2015
    %v2080 = vmul.f32 %v2016, %v2016
    %v2081 = vmul.f32 %v2017, %v2017
    %v2082 = vmul.f32 %v2018, %v2018
    %v2083 = vmul.f32 %v2019, %v2019
    %v2084 = vmul.f32 %v2020, %v2020
    %v2085 = vmul.f32 %v2021, %v2021
    %v2086 = vmul.f32 %v2022, %v2022
    %v2087 = vmul.f32 %v2023, %v2023
    %v2088 = vmul.f32 %v2024, %v2024
    %v2089 = vmul.f32 %v2025, %v2025
    %v2090 = vmul.f32 %v2026, %v2026
    %v2091 = vmul.f32 %v2027, %v2027
    %v2092 = vmul.f32 %v2028, %v2028
    %v2093 = vmul.f32 %v2029, %v2029
    %v2094 = vmul.f32 %v2030, %v2030
    %v2095 = vmul.f32 %v2031, %v2031
    %v2096 = vmul.f32 %v2032, %v2032
    %v2097 = vmul.f32 %v2033, %v2033
    %v2098 = vmul.f32 %v2034, %v2034
    %v2099 = vmul.f32 %v2035, %v2035
    %v2100 = vmul.f32 %v2036, %v2036
    %v2101 = vmul.f32 %v2037, %v2037
    %v2102 = vmul.f32 %v2038, %v2038
    %v2103 = vmul.f32 %v2039, %v2039
    %v2104 = vmul.f32 %v2040, %v2040
    %v2105 = vmul.f32 %v2041, %v2041
    %v2106 = vmul.f32 %v2042, %v2042
    %v2107 = vsel %vm1844, %v2043, 0.0
    %v2108 = vsel %vm1844, %v2044, 0.0
    %v2109 = vadd.f32 %v2107, %v2108
    %v2110 = vsel %vm1844, %v2045, 0.0
    %v2111 = vadd.f32 %v2109, %v2110
    %v2112 = vsel %vm1844, %v2046, 0.0
    %v2113 = vadd.f32 %v2111, %v2112
    %v2114 = vsel %vm1844, %v2047, 0.0
    %v2115 = vadd.f32 %v2113, %v2114
    %v2116 = vsel %vm1844, %v2048, 0.0
    %v2117 = vadd.f32 %v2115, %v2116
    %v2118 = vsel %vm1844, %v2049, 0.0
    %v2119 = vadd.f32 %v2117, %v2118
    %v2120 = vsel %vm1844, %v2050, 0.0
    %v2121 = vadd.f32 %v2119, %v2120
    %v2122 = vsel %vm1844, %v2051, 0.0
    %v2123 = vadd.f32 %v2121, %v2122
    %v2124 = vsel %vm1844, %v2052, 0.0
    %v2125 = vadd.f32 %v2123, %v2124
    %v2126 = vsel %vm1844, %v2053, 0.0
    %v2127 = vadd.f32 %v2125, %v2126
    %v2128 = vsel %vm1844, %v2054, 0.0
    %v2129 = vadd.f32 %v2127, %v2128
    %v2130 = vsel %vm1844, %v2055, 0.0
    %v2131 = vadd.f32 %v2129, %v2130
    %v2132 = vsel %vm1844, %v2056, 0.0
    %v2133 = vadd.f32 %v2131, %v2132
    %v2134 = vsel %vm1844, %v2057, 0.0
    %v2135 = vadd.f32 %v2133, %v2134
    %v2136 = vsel %vm1844, %v2058, 0.0
    %v2137 = vadd.f32 %v2135, %v2136
    %v2138 = vsel %vm1844, %v2059, 0.0
    %v2139 = vadd.f32 %v2137, %v2138
    %v2140 = vsel %vm1844, %v2060, 0.0
    %v2141 = vadd.f32 %v2139, %v2140
    %v2142 = vsel %vm1844, %v2061, 0.0
    %v2143 = vadd.f32 %v2141, %v2142
    %v2144 = vsel %vm1844, %v2062, 0.0
    %v2145 = vadd.f32 %v2143, %v2144
    %v2146 = vsel %vm1844, %v2063, 0.0
    %v2147 = vadd.f32 %v2145, %v2146
    %v2148 = vsel %vm1844, %v2064, 0.0
    %v2149 = vadd.f32 %v2147, %v2148
    %v2150 = vsel %vm1844, %v2065, 0.0
    %v2151 = vadd.f32 %v2149, %v2150
    %v2152 = vsel %vm1844, %v2066, 0.0
    %v2153 = vadd.f32 %v2151, %v2152
    %v2154 = vsel %vm1844, %v2067, 0.0
    %v2155 = vadd.f32 %v2153, %v2154
    %v2156 = vsel %vm1844, %v2068, 0.0
    %v2157 = vadd.f32 %v2155, %v2156
    %v2158 = vsel %vm1844, %v2069, 0.0
    %v2159 = vadd.f32 %v2157, %v2158
    %v2160 = vsel %vm1844, %v2070, 0.0
    %v2161 = vadd.f32 %v2159, %v2160
    %v2162 = vsel %vm1844, %v2071, 0.0
    %v2163 = vadd.f32 %v2161, %v2162
    %v2164 = vsel %vm1844, %v2072, 0.0
    %v2165 = vadd.f32 %v2163, %v2164
    %v2166 = vsel %vm1844, %v2073, 0.0
    %v2167 = vadd.f32 %v2165, %v2166
    %v2168 = vsel %vm1844, %v2074, 0.0
    %v2169 = vadd.f32 %v2167, %v2168
    %v2170 = vsel %vm1844, %v2075, 0.0
    %v2171 = vadd.f32 %v2169, %v2170
    %v2172 = vsel %vm1844, %v2076, 0.0
    %v2173 = vadd.f32 %v2171, %v2172
    %v2174 = vsel %vm1844, %v2077, 0.0
    %v2175 = vadd.f32 %v2173, %v2174
    %v2176 = vsel %vm1844, %v2078, 0.0
    %v2177 = vadd.f32 %v2175, %v2176
    %v2178 = vsel %vm1844, %v2079, 0.0
    %v2179 = vadd.f32 %v2177, %v2178
    %v2180 = vsel %vm1844, %v2080, 0.0
    %v2181 = vadd.f32 %v2179, %v2180
    %v2182 = vsel %vm1844, %v2081, 0.0
    %v2183 = vadd.f32 %v2181, %v2182
    %v2184 = vsel %vm1844, %v2082, 0.0
    %v2185 = vadd.f32 %v2183, %v2184
    %v2186 = vsel %vm1844, %v2083, 0.0
    %v2187 = vadd.f32 %v2185, %v2186
    %v2188 = vsel %vm1844, %v2084, 0.0
    %v2189 = vadd.f32 %v2187, %v2188
    %v2190 = vsel %vm1844, %v2085, 0.0
    %v2191 = vadd.f32 %v2189, %v2190
    %v2192 = vsel %vm1844, %v2086, 0.0
    %v2193 = vadd.f32 %v2191, %v2192
    %v2194 = vsel %vm1844, %v2087, 0.0
    %v2195 = vadd.f32 %v2193, %v2194
    %v2196 = vsel %vm1844, %v2088, 0.0
    %v2197 = vadd.f32 %v2195, %v2196
    %v2198 = vsel %vm1844, %v2089, 0.0
    %v2199 = vadd.f32 %v2197, %v2198
    %v2200 = vsel %vm1844, %v2090, 0.0
    %v2201 = vadd.f32 %v2199, %v2200
    %v2202 = vsel %vm1844, %v2091, 0.0
    %v2203 = vadd.f32 %v2201, %v2202
    %v2204 = vsel %vm1844, %v2092, 0.0
    %v2205 = vadd.f32 %v2203, %v2204
    %v2206 = vsel %vm1844, %v2093, 0.0
    %v2207 = vadd.f32 %v2205, %v2206
    %v2208 = vsel %vm1844, %v2094, 0.0
    %v2209 = vadd.f32 %v2207, %v2208
    %v2210 = vsel %vm1844, %v2095, 0.0
    %v2211 = vadd.f32 %v2209, %v2210
    %v2212 = vsel %vm1844, %v2096, 0.0
    %v2213 = vadd.f32 %v2211, %v2212
    %v2214 = vsel %vm1844, %v2097, 0.0
    %v2215 = vadd.f32 %v2213, %v2214
    %v2216 = vsel %vm1844, %v2098, 0.0
    %v2217 = vadd.f32 %v2215, %v2216
    %v2218 = vsel %vm1844, %v2099, 0.0
    %v2219 = vadd.f32 %v2217, %v2218
    %v2220 = vsel %vm1844, %v2100, 0.0
    %v2221 = vadd.f32 %v2219, %v2220
    %v2222 = vsel %vm1844, %v2101, 0.0
    %v2223 = vadd.f32 %v2221, %v2222
    %v2224 = vsel %vm1844, %v2102, 0.0
    %v2225 = vadd.f32 %v2223, %v2224
    %v2226 = vsel %vm1844, %v2103, 0.0
    %v2227 = vadd.f32 %v2225, %v2226
    %v2228 = vsel %vm1844, %v2104, 0.0
    %v2229 = vadd.f32 %v2227, %v2228
    %v2230 = vsel %vm1844, %v2105, 0.0
    %v2231 = vadd.f32 %v2229, %v2230
    %v2232 = vsel %vm1844, %v2106, 0.0
    %v2233 = vadd.f32 %v2231, %v2232
    %v2234 = vrot.slane %v2233, 4
    %v2235 = vadd.f32 %v2233, %v2234
    %v2236 = vrot.slane %v2235, 2
    %v2237 = vadd.f32 %v2235, %v2236
    %v2238 = vrot.slane %v2237, 1
    %v2239 = vadd.f32 %v2237, %v2238
    %v2240 = vmul.f32 %v2239, %v687
    %v2241 = vadd.f32 %v2240, 1e-05
    %v2242 = vrsqrt.pop %v2241
    %v2243 = vmul.f32 %v2242, %v2241
    %v2244 = vmul.f32 %v2243, %v2242
    %v2245 = vmul.f32 0.5, %v2244
    %v2246 = vsub.f32 1.5, %v2245
    %v2247 = vmul.f32 %v2242, %v2246
    %vm2248 = vweird.f32 %v2241
    %vm2249 = vweird.f32 %v2242
    %vm2250 = vmor %vm2248, %vm2249
    %v2251 = vsel %vm2250, %v2242, %v2247
    %v2252 = vmul.f32 %v1979, %v2251
    %v2253 = vmul.f32 %v1980, %v2251
    %v2254 = vmul.f32 %v1981, %v2251
    %v2255 = vmul.f32 %v1982, %v2251
    %v2256 = vmul.f32 %v1983, %v2251
    %v2257 = vmul.f32 %v1984, %v2251
    %v2258 = vmul.f32 %v1985, %v2251
    %v2259 = vmul.f32 %v1986, %v2251
    %v2260 = vmul.f32 %v1987, %v2251
    %v2261 = vmul.f32 %v1988, %v2251
    %v2262 = vmul.f32 %v1989, %v2251
    %v2263 = vmul.f32 %v1990, %v2251
    %v2264 = vmul.f32 %v1991, %v2251
    %v2265 = vmul.f32 %v1992, %v2251
    %v2266 = vmul.f32 %v1993, %v2251
    %v2267 = vmul.f32 %v1994, %v2251
    %v2268 = vmul.f32 %v1995, %v2251
    %v2269 = vmul.f32 %v1996, %v2251
    %v2270 = vmul.f32 %v1997, %v2251
    %v2271 = vmul.f32 %v1998, %v2251
    %v2272 = vmul.f32 %v1999, %v2251
    %v2273 = vmul.f32 %v2000, %v2251
    %v2274 = vmul.f32 %v2001, %v2251
    %v2275 = vmul.f32 %v2002, %v2251
    %v2276 = vmul.f32 %v2003, %v2251
    %v2277 = vmul.f32 %v2004, %v2251
    %v2278 = vmul.f32 %v2005, %v2251
    %v2279 = vmul.f32 %v2006, %v2251
    %v2280 = vmul.f32 %v2007, %v2251
    %v2281 = vmul.f32 %v2008, %v2251
    %v2282 = vmul.f32 %v2009, %v2251
    %v2283 = vmul.f32 %v2010, %v2251
    %v2284 = vmul.f32 %v2011, %v2251
    %v2285 = vmul.f32 %v2012, %v2251
    %v2286 = vmul.f32 %v2013, %v2251
    %v2287 = vmul.f32 %v2014, %v2251
    %v2288 = vmul.f32 %v2015, %v2251
    %v2289 = vmul.f32 %v2016, %v2251
    %v2290 = vmul.f32 %v2017, %v2251
    %v2291 = vmul.f32 %v2018, %v2251
    %v2292 = vmul.f32 %v2019, %v2251
    %v2293 = vmul.f32 %v2020, %v2251
    %v2294 = vmul.f32 %v2021, %v2251
    %v2295 = vmul.f32 %v2022, %v2251
    %v2296 = vmul.f32 %v2023, %v2251
    %v2297 = vmul.f32 %v2024, %v2251
    %v2298 = vmul.f32 %v2025, %v2251
    %v2299 = vmul.f32 %v2026, %v2251
    %v2300 = vmul.f32 %v2027, %v2251
    %v2301 = vmul.f32 %v2028, %v2251
    %v2302 = vmul.f32 %v2029, %v2251
    %v2303 = vmul.f32 %v2030, %v2251
    %v2304 = vmul.f32 %v2031, %v2251
    %v2305 = vmul.f32 %v2032, %v2251
    %v2306 = vmul.f32 %v2033, %v2251
    %v2307 = vmul.f32 %v2034, %v2251
    %v2308 = vmul.f32 %v2035, %v2251
    %v2309 = vmul.f32 %v2036, %v2251
    %v2310 = vmul.f32 %v2037, %v2251
    %v2311 = vmul.f32 %v2038, %v2251
    %v2312 = vmul.f32 %v2039, %v2251
    %v2313 = vmul.f32 %v2040, %v2251
    %v2314 = vmul.f32 %v2041, %v2251
    %v2315 = vmul.f32 %v2042, %v2251
    %v2316 = vperm.slane %v1843, 0
    %v2317 = vmul.f32 %v2252, %v2316
    %v2318 = vmul.f32 %v2253, %v2316
    %v2319 = vmul.f32 %v2254, %v2316
    %v2320 = vmul.f32 %v2255, %v2316
    %v2321 = vmul.f32 %v2256, %v2316
    %v2322 = vmul.f32 %v2257, %v2316
    %v2323 = vmul.f32 %v2258, %v2316
    %v2324 = vmul.f32 %v2259, %v2316
    %v2325 = vmul.f32 %v2260, %v2316
    %v2326 = vmul.f32 %v2261, %v2316
    %v2327 = vmul.f32 %v2262, %v2316
    %v2328 = vmul.f32 %v2263, %v2316
    %v2329 = vmul.f32 %v2264, %v2316
    %v2330 = vmul.f32 %v2265, %v2316
    %v2331 = vmul.f32 %v2266, %v2316
    %v2332 = vmul.f32 %v2267, %v2316
    %v2333 = vmul.f32 %v2268, %v2316
    %v2334 = vmul.f32 %v2269, %v2316
    %v2335 = vmul.f32 %v2270, %v2316
    %v2336 = vmul.f32 %v2271, %v2316
    %v2337 = vmul.f32 %v2272, %v2316
    %v2338 = vmul.f32 %v2273, %v2316
    %v2339 = vmul.f32 %v2274, %v2316
    %v2340 = vmul.f32 %v2275, %v2316
    %v2341 = vmul.f32 %v2276, %v2316
    %v2342 = vmul.f32 %v2277, %v2316
    %v2343 = vmul.f32 %v2278, %v2316
    %v2344 = vmul.f32 %v2279, %v2316
    %v2345 = vmul.f32 %v2280, %v2316
    %v2346 = vmul.f32 %v2281, %v2316
    %v2347 = vmul.f32 %v2282, %v2316
    %v2348 = vmul.f32 %v2283, %v2316
    %v2349 = vmul.f32 %v2284, %v2316
    %v2350 = vmul.f32 %v2285, %v2316
    %v2351 = vmul.f32 %v2286, %v2316
    %v2352 = vmul.f32 %v2287, %v2316
    %v2353 = vmul.f32 %v2288, %v2316
    %v2354 = vmul.f32 %v2289, %v2316
    %v2355 = vmul.f32 %v2290, %v2316
    %v2356 = vmul.f32 %v2291, %v2316
    %v2357 = vmul.f32 %v2292, %v2316
    %v2358 = vmul.f32 %v2293, %v2316
    %v2359 = vmul.f32 %v2294, %v2316
    %v2360 = vmul.f32 %v2295, %v2316
    %v2361 = vmul.f32 %v2296, %v2316
    %v2362 = vmul.f32 %v2297, %v2316
    %v2363 = vmul.f32 %v2298, %v2316
    %v2364 = vmul.f32 %v2299, %v2316
    %v2365 = vmul.f32 %v2300, %v2316
    %v2366 = vmul.f32 %v2301, %v2316
    %v2367 = vmul.f32 %v2302, %v2316
    %v2368 = vmul.f32 %v2303, %v2316
    %v2369 = vmul.f32 %v2304, %v2316
    %v2370 = vmul.f32 %v2305, %v2316
    %v2371 = vmul.f32 %v2306, %v2316
    %v2372 = vmul.f32 %v2307, %v2316
    %v2373 = vmul.f32 %v2308, %v2316
    %v2374 = vmul.f32 %v2309, %v2316
    %v2375 = vmul.f32 %v2310, %v2316
    %v2376 = vmul.f32 %v2311, %v2316
    %v2377 = vmul.f32 %v2312, %v2316
    %v2378 = vmul.f32 %v2313, %v2316
    %v2379 = vmul.f32 %v2314, %v2316
    %v2380 = vmul.f32 %v2315, %v2316
    %v2381 = vperm.slane %v1843, 1
    %v2382 = vadd.f32 %v2317, %v2381
    %v2383 = vadd.f32 %v2318, %v2381
    %v2384 = vadd.f32 %v2319, %v2381
    %v2385 = vadd.f32 %v2320, %v2381
    %v2386 = vadd.f32 %v2321, %v2381
    %v2387 = vadd.f32 %v2322, %v2381
    %v2388 = vadd.f32 %v2323, %v2381
    %v2389 = vadd.f32 %v2324, %v2381
    %v2390 = vadd.f32 %v2325, %v2381
    %v2391 = vadd.f32 %v2326, %v2381
    %v2392 = vadd.f32 %v2327, %v2381
    %v2393 = vadd.f32 %v2328, %v2381
    %v2394 = vadd.f32 %v2329, %v2381
    %v2395 = vadd.f32 %v2330, %v2381
    %v2396 = vadd.f32 %v2331, %v2381
    %v2397 = vadd.f32 %v2332, %v2381
    %v2398 = vadd.f32 %v2333, %v2381
    %v2399 = vadd.f32 %v2334, %v2381
    %v2400 = vadd.f32 %v2335, %v2381
    %v2401 = vadd.f32 %v2336, %v2381
    %v2402 = vadd.f32 %v2337, %v2381
    %v2403 = vadd.f32 %v2338, %v2381
    %v2404 = vadd.f32 %v2339, %v2381
    %v2405 = vadd.f32 %v2340, %v2381
    %v2406 = vadd.f32 %v2341, %v2381
    %v2407 = vadd.f32 %v2342, %v2381
    %v2408 = vadd.f32 %v2343, %v2381
    %v2409 = vadd.f32 %v2344, %v2381
    %v2410 = vadd.f32 %v2345, %v2381
    %v2411 = vadd.f32 %v2346, %v2381
    %v2412 = vadd.f32 %v2347, %v2381
    %v2413 = vadd.f32 %v2348, %v2381
    %v2414 = vadd.f32 %v2349, %v2381
    %v2415 = vadd.f32 %v2350, %v2381
    %v2416 = vadd.f32 %v2351, %v2381
    %v2417 = vadd.f32 %v2352, %v2381
    %v2418 = vadd.f32 %v2353, %v2381
    %v2419 = vadd.f32 %v2354, %v2381
    %v2420 = vadd.f32 %v2355, %v2381
    %v2421 = vadd.f32 %v2356, %v2381
    %v2422 = vadd.f32 %v2357, %v2381
    %v2423 = vadd.f32 %v2358, %v2381
    %v2424 = vadd.f32 %v2359, %v2381
    %v2425 = vadd.f32 %v2360, %v2381
    %v2426 = vadd.f32 %v2361, %v2381
    %v2427 = vadd.f32 %v2362, %v2381
    %v2428 = vadd.f32 %v2363, %v2381
    %v2429 = vadd.f32 %v2364, %v2381
    %v2430 = vadd.f32 %v2365, %v2381
    %v2431 = vadd.f32 %v2366, %v2381
    %v2432 = vadd.f32 %v2367, %v2381
    %v2433 = vadd.f32 %v2368, %v2381
    %v2434 = vadd.f32 %v2369, %v2381
    %v2435 = vadd.f32 %v2370, %v2381
    %v2436 = vadd.f32 %v2371, %v2381
    %v2437 = vadd.f32 %v2372, %v2381
    %v2438 = vadd.f32 %v2373, %v2381
    %v2439 = vadd.f32 %v2374, %v2381
    %v2440 = vadd.f32 %v2375, %v2381
    %v2441 = vadd.f32 %v2376, %v2381
    %v2442 = vadd.f32 %v2377, %v2381
    %v2443 = vadd.f32 %v2378, %v2381
    %v2444 = vadd.f32 %v2379, %v2381
    %v2445 = vadd.f32 %v2380, %v2381
    %v2446 = vsub.f32 0.0, %v2382
    %v2447 = vsub.f32 0.0, %v2383
    %v2448 = vsub.f32 0.0, %v2384
    %v2449 = vsub.f32 0.0, %v2385
    %v2450 = vsub.f32 0.0, %v2386
    %v2451 = vsub.f32 0.0, %v2387
    %v2452 = vsub.f32 0.0, %v2388
    %v2453 = vsub.f32 0.0, %v2389
    %v2454 = vsub.f32 0.0, %v2390
    %v2455 = vsub.f32 0.0, %v2391
    %v2456 = vsub.f32 0.0, %v2392
    %v2457 = vsub.f32 0.0, %v2393
    %v2458 = vsub.f32 0.0, %v2394
    %v2459 = vsub.f32 0.0, %v2395
    %v2460 = vsub.f32 0.0, %v2396
    %v2461 = vsub.f32 0.0, %v2397
    %v2462 = vsub.f32 0.0, %v2398
    %v2463 = vsub.f32 0.0, %v2399
    %v2464 = vsub.f32 0.0, %v2400
    %v2465 = vsub.f32 0.0, %v2401
    %v2466 = vsub.f32 0.0, %v2402
    %v2467 = vsub.f32 0.0, %v2403
    %v2468 = vsub.f32 0.0, %v2404
    %v2469 = vsub.f32 0.0, %v2405
    %v2470 = vsub.f32 0.0, %v2406
    %v2471 = vsub.f32 0.0, %v2407
    %v2472 = vsub.f32 0.0, %v2408
    %v2473 = vsub.f32 0.0, %v2409
    %v2474 = vsub.f32 0.0, %v2410
    %v2475 = vsub.f32 0.0, %v2411
    %v2476 = vsub.f32 0.0, %v2412
    %v2477 = vsub.f32 0.0, %v2413
    %v2478 = vsub.f32 0.0, %v2414
    %v2479 = vsub.f32 0.0, %v2415
    %v2480 = vsub.f32 0.0, %v2416
    %v2481 = vsub.f32 0.0, %v2417
    %v2482 = vsub.f32 0.0, %v2418
    %v2483 = vsub.f32 0.0, %v2419
    %v2484 = vsub.f32 0.0, %v2420
    %v2485 = vsub.f32 0.0, %v2421
    %v2486 = vsub.f32 0.0, %v2422
    %v2487 = vsub.f32 0.0, %v2423
    %v2488 = vsub.f32 0.0, %v2424
    %v2489 = vsub.f32 0.0, %v2425
    %v2490 = vsub.f32 0.0, %v2426
    %v2491 = vsub.f32 0.0, %v2427
    %v2492 = vsub.f32 0.0, %v2428
    %v2493 = vsub.f32 0.0, %v2429
    %v2494 = vsub.f32 0.0, %v2430
    %v2495 = vsub.f32 0.0, %v2431
    %v2496 = vsub.f32 0.0, %v2432
    %v2497 = vsub.f32 0.0, %v2433
    %v2498 = vsub.f32 0.0, %v2434
    %v2499 = vsub.f32 0.0, %v2435
    %v2500 = vsub.f32 0.0, %v2436
    %v2501 = vsub.f32 0.0, %v2437
    %v2502 = vsub.f32 0.0, %v2438
    %v2503 = vsub.f32 0.0, %v2439
    %v2504 = vsub.f32 0.0, %v2440
    %v2505 = vsub.f32 0.0, %v2441
    %v2506 = vsub.f32 0.0, %v2442
    %v2507 = vsub.f32 0.0, %v2443
    %v2508 = vsub.f32 0.0, %v2444
    %v2509 = vsub.f32 0.0, %v2445
    %v2510 = vmul.f32 %v2446, 1.442695
    %v2511 = vpow.pop %v2510
    %v2512 = vmul.f32 %v2447, 1.442695
    %v2513 = vpow.pop %v2512
    %v2514 = vmul.f32 %v2448, 1.442695
    %v2515 = vpow.pop %v2514
    %v2516 = vmul.f32 %v2449, 1.442695
    %v2517 = vpow.pop %v2516
    %v2518 = vmul.f32 %v2450, 1.442695
    %v2519 = vpow.pop %v2518
    %v2520 = vmul.f32 %v2451, 1.442695
    %v2521 = vpow.pop %v2520
    %v2522 = vmul.f32 %v2452, 1.442695
    %v2523 = vpow.pop %v2522
    %v2524 = vmul.f32 %v2453, 1.442695
    %v2525 = vpow.pop %v2524
    %v2526 = vmul.f32 %v2454, 1.442695
    %v2527 = vpow.pop %v2526
    %v2528 = vmul.f32 %v2455, 1.442695
    %v2529 = vpow.pop %v2528
    %v2530 = vmul.f32 %v2456, 1.442695
    %v2531 = vpow.pop %v2530
    %v2532 = vmul.f32 %v2457, 1.442695
    %v2533 = vpow.pop %v2532
    %v2534 = vmul.f32 %v2458, 1.442695
    %v2535 = vpow.pop %v2534
    %v2536 = vmul.f32 %v2459, 1.442695
    %v2537 = vpow.pop %v2536
    %v2538 = vmul.f32 %v2460, 1.442695
    %v2539 = vpow.pop %v2538
    %v2540 = vmul.f32 %v2461, 1.442695
    %v2541 = vpow.pop %v2540
    %v2542 = vmul.f32 %v2462, 1.442695
    %v2543 = vpow.pop %v2542
    %v2544 = vmul.f32 %v2463, 1.442695
    %v2545 = vpow.pop %v2544
    %v2546 = vmul.f32 %v2464, 1.442695
    %v2547 = vpow.pop %v2546
    %v2548 = vmul.f32 %v2465, 1.442695
    %v2549 = vpow.pop %v2548
    %v2550 = vmul.f32 %v2466, 1.442695
    %v2551 = vpow.pop %v2550
    %v2552 = vmul.f32 %v2467, 1.442695
    %v2553 = vpow.pop %v2552
    %v2554 = vmul.f32 %v2468, 1.442695
    %v2555 = vpow.pop %v2554
    %v2556 = vmul.f32 %v2469, 1.442695
    %v2557 = vpow.pop %v2556
    %v2558 = vmul.f32 %v2470, 1.442695
    %v2559 = vpow.pop %v2558
    %v2560 = vmul.f32 %v2471, 1.442695
    %v2561 = vpow.pop %v2560
    %v2562 = vmul.f32 %v2472, 1.442695
    %v2563 = vpow.pop %v2562
    %v2564 = vmul.f32 %v2473, 1.442695
    %v2565 = vpow.pop %v2564
    %v2566 = vmul.f32 %v2474, 1.442695
    %v2567 = vpow.pop %v2566
    %v2568 = vmul.f32 %v2475, 1.442695
    %v2569 = vpow.pop %v2568
    %v2570 = vmul.f32 %v2476, 1.442695
    %v2571 = vpow.pop %v2570
    %v2572 = vmul.f32 %v2477, 1.442695
    %v2573 = vpow.pop %v2572
    %v2574 = vmul.f32 %v2478, 1.442695
    %v2575 = vpow.pop %v2574
    %v2576 = vmul.f32 %v2479, 1.442695
    %v2577 = vpow.pop %v2576
    %v2578 = vmul.f32 %v2480, 1.442695
    %v2579 = vpow.pop %v2578
    %v2580 = vmul.f32 %v2481, 1.442695
    %v2581 = vpow.pop %v2580
    %v2582 = vmul.f32 %v2482, 1.442695
    %v2583 = vpow.pop %v2582
    %v2584 = vmul.f32 %v2483, 1.442695
    %v2585 = vpow.pop %v2584
    %v2586 = vmul.f32 %v2484, 1.442695
    %v2587 = vpow.pop %v2586
    %v2588 = vmul.f32 %v2485, 1.442695
    %v2589 = vpow.pop %v2588
    %v2590 = vmul.f32 %v2486, 1.442695
    %v2591 = vpow.pop %v2590
    %v2592 = vmul.f32 %v2487, 1.442695
    %v2593 = vpow.pop %v2592
    %v2594 = vmul.f32 %v2488, 1.442695
    %v2595 = vpow.pop %v2594
    %v2596 = vmul.f32 %v2489, 1.442695
    %v2597 = vpow.pop %v2596
    %v2598 = vmul.f32 %v2490, 1.442695
    %v2599 = vpow.pop %v2598
    %v2600 = vmul.f32 %v2491, 1.442695
    %v2601 = vpow.pop %v2600
    %v2602 = vmul.f32 %v2492, 1.442695
    %v2603 = vpow.pop %v2602
    %v2604 = vmul.f32 %v2493, 1.442695
    %v2605 = vpow.pop %v2604
    %v2606 = vmul.f32 %v2494, 1.442695
    %v2607 = vpow.pop %v2606
    %v2608 = vmul.f32 %v2495, 1.442695
    %v2609 = vpow.pop %v2608
    %v2610 = vmul.f32 %v2496, 1.442695
    %v2611 = vpow.pop %v2610
    %v2612 = vmul.f32 %v2497, 1.442695
    %v2613 = vpow.pop %v2612
    %v2614 = vmul.f32 %v2498, 1.442695
    %v2615 = vpow.pop %v2614
    %v2616 = vmul.f32 %v2499, 1.442695
    %v2617 = vpow.pop %v2616
    %v2618 = vmul.f32 %v2500, 1.442695
    %v2619 = vpow.pop %v2618
    %v2620 = vmul.f32 %v2501, 1.442695
    %v2621 = vpow.pop %v2620
    %v2622 = vmul.f32 %v2502, 1.442695
    %v2623 = vpow.pop %v2622
    %v2624 = vmul.f32 %v2503, 1.442695
    %v2625 = vpow.pop %v2624
    %v2626 = vmul.f32 %v2504, 1.442695
    %v2627 = vpow.pop %v2626
    %v2628 = vmul.f32 %v2505, 1.442695
    %v2629 = vpow.pop %v2628
    %v2630 = vmul.f32 %v2506, 1.442695
    %v2631 = vpow.pop %v2630
    %v2632 = vmul.f32 %v2507, 1.442695
    %v2633 = vpow.pop %v2632
    %v2634 = vmul.f32 %v2508, 1.442695
    %v2635 = vpow.pop %v2634
    %v2636 = vmul.f32 %v2509, 1.442695
    %v2637 = vpow.pop %v2636
    %v2638 = vadd.f32 %v2511, 1.0
    %v2639 = vadd.f32 %v2513, 1.0
    %v2640 = vadd.f32 %v2515, 1.0
    %v2641 = vadd.f32 %v2517, 1.0
    %v2642 = vadd.f32 %v2519, 1.0
    %v2643 = vadd.f32 %v2521, 1.0
    %v2644 = vadd.f32 %v2523, 1.0
    %v2645 = vadd.f32 %v2525, 1.0
    %v2646 = vadd.f32 %v2527, 1.0
    %v2647 = vadd.f32 %v2529, 1.0
    %v2648 = vadd.f32 %v2531, 1.0
    %v2649 = vadd.f32 %v2533, 1.0
    %v2650 = vadd.f32 %v2535, 1.0
    %v2651 = vadd.f32 %v2537, 1.0
    %v2652 = vadd.f32 %v2539, 1.0
    %v2653 = vadd.f32 %v2541, 1.0
    %v2654 = vadd.f32 %v2543, 1.0
    %v2655 = vadd.f32 %v2545, 1.0
    %v2656 = vadd.f32 %v2547, 1.0
    %v2657 = vadd.f32 %v2549, 1.0
    %v2658 = vadd.f32 %v2551, 1.0
    %v2659 = vadd.f32 %v2553, 1.0
    %v2660 = vadd.f32 %v2555, 1.0
    %v2661 = vadd.f32 %v2557, 1.0
    %v2662 = vadd.f32 %v2559, 1.0
    %v2663 = vadd.f32 %v2561, 1.0
    %v2664 = vadd.f32 %v2563, 1.0
    %v2665 = vadd.f32 %v2565, 1.0
    %v2666 = vadd.f32 %v2567, 1.0
    %v2667 = vadd.f32 %v2569, 1.0
    %v2668 = vadd.f32 %v2571, 1.0
    %v2669 = vadd.f32 %v2573, 1.0
    %v2670 = vadd.f32 %v2575, 1.0
    %v2671 = vadd.f32 %v2577, 1.0
    %v2672 = vadd.f32 %v2579, 1.0
    %v2673 = vadd.f32 %v2581, 1.0
    %v2674 = vadd.f32 %v2583, 1.0
    %v2675 = vadd.f32 %v2585, 1.0
    %v2676 = vadd.f32 %v2587, 1.0
    %v2677 = vadd.f32 %v2589, 1.0
    %v2678 = vadd.f32 %v2591, 1.0
    %v2679 = vadd.f32 %v2593, 1.0
    %v2680 = vadd.f32 %v2595, 1.0
    %v2681 = vadd.f32 %v2597, 1.0
    %v2682 = vadd.f32 %v2599, 1.0
    %v2683 = vadd.f32 %v2601, 1.0
    %v2684 = vadd.f32 %v2603, 1.0
    %v2685 = vadd.f32 %v2605, 1.0
    %v2686 = vadd.f32 %v2607, 1.0
    %v2687 = vadd.f32 %v2609, 1.0
    %v2688 = vadd.f32 %v2611, 1.0
    %v2689 = vadd.f32 %v2613, 1.0
    %v2690 = vadd.f32 %v2615, 1.0
    %v2691 = vadd.f32 %v2617, 1.0
    %v2692 = vadd.f32 %v2619, 1.0
    %v2693 = vadd.f32 %v2621, 1.0
    %v2694 = vadd.f32 %v2623, 1.0
    %v2695 = vadd.f32 %v2625, 1.0
    %v2696 = vadd.f32 %v2627, 1.0
    %v2697 = vadd.f32 %v2629, 1.0
    %v2698 = vadd.f32 %v2631, 1.0
    %v2699 = vadd.f32 %v2633, 1.0
    %v2700 = vadd.f32 %v2635, 1.0
    %v2701 = vadd.f32 %v2637, 1.0
    %v2702 = vrcp.pop %v2638
    %v2703 = vrcp.pop %v2639
    %v2704 = vrcp.pop %v2640
    %v2705 = vrcp.pop %v2641
    %v2706 = vrcp.pop %v2642
    %v2707 = vrcp.pop %v2643
    %v2708 = vrcp.pop %v2644
    %v2709 = vrcp.pop %v2645
    %v2710 = vrcp.pop %v2646
    %v2711 = vrcp.pop %v2647
    %v2712 = vrcp.pop %v2648
    %v2713 = vrcp.pop %v2649
    %v2714 = vrcp.pop %v2650
    %v2715 = vrcp.pop %v2651
    %v2716 = vrcp.pop %v2652
    %v2717 = vrcp.pop %v2653
    %v2718 = vrcp.pop %v2654
    %v2719 = vrcp.pop %v2655
    %v2720 = vrcp.pop %v2656
    %v2721 = vrcp.pop %v2657
    %v2722 = vrcp.pop %v2658
    %v2723 = vrcp.pop %v2659
    %v2724 = vrcp.pop %v2660
    %v2725 = vrcp.pop %v2661
    %v2726 = vrcp.pop %v2662
    %v2727 = vrcp.pop %v2663
    %v2728 = vrcp.pop %v2664
    %v2729 = vrcp.pop %v2665
    %v2730 = vrcp.pop %v2666
    %v2731 = vrcp.pop %v2667
    %v2732 = vrcp.pop %v2668
    %v2733 = vrcp.pop %v2669
    %v2734 = vrcp.pop %v2670
    %v2735 = vrcp.pop %v2671
    %v2736 = vrcp.pop %v2672
    %v2737 = vrcp.pop %v2673
    %v2738 = vrcp.pop %v2674
    %v2739 = vrcp.pop %v2675
    %v2740 = vrcp.pop %v2676
    %v2741 = vrcp.pop %v2677
    %v2742 = vrcp.pop %v2678
    %v2743 = vrcp.pop %v2679
    %v2744 = vrcp.pop %v2680
    %v2745 = vrcp.pop %v2681
    %v2746 = vrcp.pop %v2682
    %v2747 = vrcp.pop %v2683
    %v2748 = vrcp.pop %v2684
    %v2749 = vrcp.pop %v2685
    %v2750 = vrcp.pop %v2686
    %v2751 = vrcp.pop %v2687
    %v2752 = vrcp.pop %v2688
    %v2753 = vrcp.pop %v2689
    %v2754 = vrcp.pop %v2690
    %v2755 = vrcp.pop %v2691
    %v2756 = vrcp.pop %v2692
    %v2757 = vrcp.pop %v2693
    %v2758 = vrcp.pop %v2694
    %v2759 = vrcp.pop %v2695
    %v2760 = vrcp.pop %v2696
    %v2761 = vrcp.pop %v2697
    %v2762 = vrcp.pop %v2698
    %v2763 = vrcp.pop %v2699
    %v2764 = vrcp.pop %v2700
    %v2765 = vrcp.pop %v2701
    %v2766 = vmul.f32 %v2382, %v2702
    %v2767 = vmul.f32 %v2383, %v2703
    %v2768 = vmul.f32 %v2384, %v2704
    %v2769 = vmul.f32 %v2385, %v2705
    %v2770 = vmul.f32 %v2386, %v2706
    %v2771 = vmul.f32 %v2387, %v2707
    %v2772 = vmul.f32 %v2388, %v2708
    %v2773 = vmul.f32 %v2389, %v2709
    %v2774 = vmul.f32 %v2390, %v2710
    %v2775 = vmul.f32 %v2391, %v2711
    %v2776 = vmul.f32 %v2392, %v2712
    %v2777 = vmul.f32 %v2393, %v2713
    %v2778 = vmul.f32 %v2394, %v2714
    %v2779 = vmul.f32 %v2395, %v2715
    %v2780 = vmul.f32 %v2396, %v2716
    %v2781 = vmul.f32 %v2397, %v2717
    %v2782 = vmul.f32 %v2398, %v2718
    %v2783 = vmul.f32 %v2399, %v2719
    %v2784 = vmul.f32 %v2400, %v2720
    %v2785 = vmul.f32 %v2401, %v2721
    %v2786 = vmul.f32 %v2402, %v2722
    %v2787 = vmul.f32 %v2403, %v2723
    %v2788 = vmul.f32 %v2404, %v2724
    %v2789 = vmul.f32 %v2405, %v2725
    %v2790 = vmul.f32 %v2406, %v2726
    %v2791 = vmul.f32 %v2407, %v2727
    %v2792 = vmul.f32 %v2408, %v2728
    %v2793 = vmul.f32 %v2409, %v2729
    %v2794 = vmul.f32 %v2410, %v2730
    %v2795 = vmul.f32 %v2411, %v2731
    %v2796 = vmul.f32 %v2412, %v2732
    %v2797 = vmul.f32 %v2413, %v2733
    %v2798 = vmul.f32 %v2414, %v2734
    %v2799 = vmul.f32 %v2415, %v2735
    %v2800 = vmul.f32 %v2416, %v2736
    %v2801 = vmul.f32 %v2417, %v2737
    %v2802 = vmul.f32 %v2418, %v2738
    %v2803 = vmul.f32 %v2419, %v2739
    %v2804 = vmul.f32 %v2420, %v2740
    %v2805 = vmul.f32 %v2421, %v2741
    %v2806 = vmul.f32 %v2422, %v2742
    %v2807 = vmul.f32 %v2423, %v2743
    %v2808 = vmul.f32 %v2424, %v2744
    %v2809 = vmul.f32 %v2425, %v2745
    %v2810 = vmul.f32 %v2426, %v2746
    %v2811 = vmul.f32 %v2427, %v2747
    %v2812 = vmul.f32 %v2428, %v2748
    %v2813 = vmul.f32 %v2429, %v2749
    %v2814 = vmul.f32 %v2430, %v2750
    %v2815 = vmul.f32 %v2431, %v2751
    %v2816 = vmul.f32 %v2432, %v2752
    %v2817 = vmul.f32 %v2433, %v2753
    %v2818 = vmul.f32 %v2434, %v2754
    %v2819 = vmul.f32 %v2435, %v2755
    %v2820 = vmul.f32 %v2436, %v2756
    %v2821 = vmul.f32 %v2437, %v2757
    %v2822 = vmul.f32 %v2438, %v2758
    %v2823 = vmul.f32 %v2439, %v2759
    %v2824 = vmul.f32 %v2440, %v2760
    %v2825 = vmul.f32 %v2441, %v2761
    %v2826 = vmul.f32 %v2442, %v2762
    %v2827 = vmul.f32 %v2443, %v2763
    %v2828 = vmul.f32 %v2444, %v2764
    %v2829 = vmul.f32 %v2445, %v2765
    %v2830 = vld [vmem:[%s1] sm:$0xff]
    %2832 = vst [vmem:[#allocation1] ss:$4 sm:$0xff] %v2830
    %v2833 = vld.sshfl [vmem:[#allocation1] sm:$0xff pattern:$0x73625140]
    %v2834 = vld.sshfl [vmem:[#allocation1 + $0x8] sm:$0xff pattern:$0x73625140]
    %v2835 = vld.sshfl [vmem:[#allocation1 + $0x10] sm:$0xff pattern:$0x73625140]
    %v2836 = vld.sshfl [vmem:[#allocation1 + $0x18] sm:$0xff pattern:$0x73625140]
    %v2841 = vpack.c.bf16 %v2833, %v2833
    %v2842 = vpack.c.bf16 %v2834, %v2834
    %v2843 = vpack.c.bf16 %v2835, %v2835
    %v2844 = vpack.c.bf16 %v2836, %v2836
    %v2845 = vpack.c.bf16 %v2767, %v2766
    %v2846 = vpack.c.bf16 %v2769, %v2768
    %v2847 = vpack.c.bf16 %v2771, %v2770
    %v2848 = vpack.c.bf16 %v2773, %v2772
    %v2849 = vpack.c.bf16 %v2775, %v2774
    %v2850 = vpack.c.bf16 %v2777, %v2776
    %v2851 = vpack.c.bf16 %v2779, %v2778
    %v2852 = vpack.c.bf16 %v2781, %v2780
    %v2853 = vpack.c.bf16 %v2783, %v2782
    %v2854 = vpack.c.bf16 %v2785, %v2784
    %v2855 = vpack.c.bf16 %v2787, %v2786
    %v2856 = vpack.c.bf16 %v2789, %v2788
    %v2857 = vpack.c.bf16 %v2791, %v2790
    %v2858 = vpack.c.bf16 %v2793, %v2792
    %v2859 = vpack.c.bf16 %v2795, %v2794
    %v2860 = vpack.c.bf16 %v2797, %v2796
    %v2861 = vpack.c.bf16 %v2799, %v2798
    %v2862 = vpack.c.bf16 %v2801, %v2800
    %v2863 = vpack.c.bf16 %v2803, %v2802
    %v2864 = vpack.c.bf16 %v2805, %v2804
    %v2865 = vpack.c.bf16 %v2807, %v2806
    %v2866 = vpack.c.bf16 %v2809, %v2808
    %v2867 = vpack.c.bf16 %v2811, %v2810
    %v2868 = vpack.c.bf16 %v2813, %v2812
    %v2869 = vpack.c.bf16 %v2815, %v2814
    %v2870 = vpack.c.bf16 %v2817, %v2816
    %v2871 = vpack.c.bf16 %v2819, %v2818
    %v2872 = vpack.c.bf16 %v2821, %v2820
    %v2873 = vpack.c.bf16 %v2823, %v2822
    %v2874 = vpack.c.bf16 %v2825, %v2824
    %v2875 = vpack.c.bf16 %v2827, %v2826
    %v2876 = vpack.c.bf16 %v2829, %v2828
    %2877 = vmatpush.bf16.msra.mxu0 %v2852
    %2878 = vmatpush.bf16.msra.mxu0 %v2851
    %2879 = vmatpush.bf16.msra.mxu0 %v2850
    %2880 = vmatpush.bf16.msra.mxu0 %v2849
    %2881 = vmatpush.bf16.msra.mxu0 %v2848
    %2882 = vmatpush.bf16.msra.mxu0 %v2847
    %2883 = vmatpush.bf16.msra.mxu0 %v2846
    %2884 = vmatpush.bf16.msra.mxu0 %v2845
    %2885 = vmatmul.bf16.gmra.mxu0 %v2841
    %v2886 = vpop.f32.mrf.mxu0
    %v2887 = vadd.f32 0.0, %v2886
    %v2888 = vpop.f32.mrf.mxu0
    %2889 = vdwg.mxu0
    %2890 = vmatpush.bf16.msra.mxu0 %v2860
    %2891 = vmatpush.bf16.msra.mxu0 %v2859
    %2892 = vmatpush.bf16.msra.mxu0 %v2858
    %2893 = vmatpush.bf16.msra.mxu0 %v2857
    %2894 = vmatpush.bf16.msra.mxu0 %v2856
    %2895 = vmatpush.bf16.msra.mxu0 %v2855
    %2896 = vmatpush.bf16.msra.mxu0 %v2854
    %2897 = vmatpush.bf16.msra.mxu0 %v2853
    %2898 = vmatmul.bf16.gmra.mxu0 %v2842
    %v2899 = vpop.f32.mrf.mxu0
    %v2900 = vadd.f32 %v2887, %v2899
    %v2901 = vpop.f32.mrf.mxu0
    %2902 = vdwg.mxu0
    %2903 = vmatpush.bf16.msra.mxu0 %v2868
    %2904 = vmatpush.bf16.msra.mxu0 %v2867
    %2905 = vmatpush.bf16.msra.mxu0 %v2866
    %2906 = vmatpush.bf16.msra.mxu0 %v2865
    %2907 = vmatpush.bf16.msra.mxu0 %v2864
    %2908 = vmatpush.bf16.msra.mxu0 %v2863
    %2909 = vmatpush.bf16.msra.mxu0 %v2862
    %2910 = vmatpush.bf16.msra.mxu0 %v2861
    %2911 = vmatmul.bf16.gmra.mxu0 %v2843
    %v2912 = vpop.f32.mrf.mxu0
    %v2913 = vadd.f32 %v2900, %v2912
    %v2914 = vpop.f32.mrf.mxu0
    %2915 = vdwg.mxu0
    %2916 = vmatpush.bf16.msra.mxu0 %v2876
    %2917 = vmatpush.bf16.msra.mxu0 %v2875
    %2918 = vmatpush.bf16.msra.mxu0 %v2874
    %2919 = vmatpush.bf16.msra.mxu0 %v2873
    %2920 = vmatpush.bf16.msra.mxu0 %v2872
    %2921 = vmatpush.bf16.msra.mxu0 %v2871
    %2922 = vmatpush.bf16.msra.mxu0 %v2870
    %2923 = vmatpush.bf16.msra.mxu0 %v2869
    %2924 = vmatmul.bf16.gmra.mxu0 %v2844
    %v2925 = vpop.f32.mrf.mxu0
    %v2926 = vadd.f32 %v2913, %v2925
    %v2927 = vpop.f32.mrf.mxu0
    %2928 = vdwg.mxu0
    %v2929 = vld [vmem:[#allocation10] sm:$0xff]
    %v2930 = vld [vmem:[#allocation10 + $0x8] sm:$0xff]
    %v2931 = vld [vmem:[#allocation10 + $0x10] sm:$0xff]
    %v2932 = vld [vmem:[#allocation10 + $0x18] sm:$0xff]
    %v2933 = vld [vmem:[#allocation10 + $0x20] sm:$0xff]
    %v2934 = vld [vmem:[#allocation10 + $0x28] sm:$0xff]
    %v2935 = vld [vmem:[#allocation10 + $0x30] sm:$0xff]
    %v2936 = vld [vmem:[#allocation10 + $0x38] sm:$0xff]
    %v2937 = vpack.c.bf16 %v2926, %v2926
    %v2938 = vpack.c.bf16 %v2930, %v2929
    %v2939 = vpack.c.bf16 %v2932, %v2931
    %v2940 = vpack.c.bf16 %v2934, %v2933
    %v2941 = vpack.c.bf16 %v2936, %v2935
    %v2942 = vld [vmem:[#allocation12] sm:$0x1]
    %v2944 = vperm.slane %v2942, 0
    %v2947 = vsel %vm1844, %v2937, 0
    %2949 = vmatpush.bf16.msra.mxu0 0
    %2950 = vmatpush.bf16.msra.mxu0 0
    %2951 = vmatpush.bf16.msra.mxu0 0
    %2952 = vmatpush.bf16.msra.mxu0 0
    %2953 = vmatpush.bf16.msra.mxu0 %v2941
    %2954 = vmatpush.bf16.msra.mxu0 %v2940
    %2955 = vmatpush.bf16.msra.mxu0 %v2939
    %2956 = vmatpush.bf16.msra.mxu0 %v2938
    %2957 = vmatmul.bf16.gmra.mxu0 %v2947
    %v2958 = vpop.f32.mrf.mxu0
    %v2959 = vadd.f32 %v2944, %v2958
    %v2960 = vpop.f32.mrf.mxu0
    %2961 = vdwg.mxu0
    %v2962 = vld [vmem:[#allocation2] sm:$0x3]
    %v2963 = vmul.f32 %v2959, 0.5
    %v2964 = vmul.f32 %v2963, 1.442695
    %v2965 = vpow.pop %v2964
    %2967 = vrot.lane.b32.xlu0 %v2965, 96
    %v2968 = vpop.permute.xlu0 %2967
    %v2970 = vmul.f32 %v2962, %v2968
    %v2971 = vadd.f32 %v2959, %v2970
    %vm2972 = vcmask 254976
    %2973 = vst.msk [vmem:[%s11] sm:$0x3] %vm2972, %v2971
    %v2974 = vld [vmem:[#allocation13] sm:$0xff]
    %v2975 = vld [vmem:[#allocation13 + $0x8] sm:$0xff]
    %v2976 = vld [vmem:[#allocation13 + $0x10] sm:$0xff]
    %v2977 = vld [vmem:[#allocation13 + $0x18] sm:$0xff]
    %v2978 = vld [vmem:[#allocation13 + $0x20] sm:$0xff]
    %v2979 = vld [vmem:[#allocation13 + $0x28] sm:$0xff]
    %v2980 = vld [vmem:[#allocation13 + $0x30] sm:$0xff]
    %v2981 = vld [vmem:[#allocation13 + $0x38] sm:$0xff]
    %v2982 = vld [vmem:[#allocation13 + $0x40] sm:$0xff]
    %v2983 = vld [vmem:[#allocation13 + $0x48] sm:$0xff]
    %v2984 = vld [vmem:[#allocation13 + $0x50] sm:$0xff]
    %v2985 = vld [vmem:[#allocation13 + $0x58] sm:$0xff]
    %v2986 = vld [vmem:[#allocation13 + $0x60] sm:$0xff]
    %v2987 = vld [vmem:[#allocation13 + $0x68] sm:$0xff]
    %v2988 = vld [vmem:[#allocation13 + $0x70] sm:$0xff]
    %v2989 = vld [vmem:[#allocation13 + $0x78] sm:$0xff]
    %v2990 = vld [vmem:[#allocation13 + $0x80] sm:$0xff]
    %v2991 = vld [vmem:[#allocation13 + $0x88] sm:$0xff]
    %v2992 = vld [vmem:[#allocation13 + $0x90] sm:$0xff]
    %v2993 = vld [vmem:[#allocation13 + $0x98] sm:$0xff]
    %v2994 = vld [vmem:[#allocation13 + $0xa0] sm:$0xff]
    %v2995 = vld [vmem:[#allocation13 + $0xa8] sm:$0xff]
    %v2996 = vld [vmem:[#allocation13 + $0xb0] sm:$0xff]
    %v2997 = vld [vmem:[#allocation13 + $0xb8] sm:$0xff]
    %v2998 = vld [vmem:[#allocation13 + $0xc0] sm:$0xff]
    %v2999 = vld [vmem:[#allocation13 + $0xc8] sm:$0xff]
    %v3000 = vld [vmem:[#allocation13 + $0xd0] sm:$0xff]
    %v3001 = vld [vmem:[#allocation13 + $0xd8] sm:$0xff]
    %v3002 = vld [vmem:[#allocation13 + $0xe0] sm:$0xff]
    %v3003 = vld [vmem:[#allocation13 + $0xe8] sm:$0xff]
    %v3004 = vld [vmem:[#allocation13 + $0xf0] sm:$0xff]
    %v3005 = vld [vmem:[#allocation13 + $0xf8] sm:$0xff]
    %v3006 = vpack.c.bf16 %v2971, %v2971
    %v3007 = vpack.c.bf16 %v2982, %v2974
    %v3008 = vpack.c.bf16 %v2983, %v2975
    %v3009 = vpack.c.bf16 %v2984, %v2976
    %v3010 = vpack.c.bf16 %v2985, %v2977
    %v3011 = vpack.c.bf16 %v2986, %v2978
    %v3012 = vpack.c.bf16 %v2987, %v2979
    %v3013 = vpack.c.bf16 %v2988, %v2980
    %v3014 = vpack.c.bf16 %v2989, %v2981
    %v3015 = vpack.c.bf16 %v2998, %v2990
    %v3016 = vpack.c.bf16 %v2999, %v2991
    %v3017 = vpack.c.bf16 %v3000, %v2992
    %v3018 = vpack.c.bf16 %v3001, %v2993
    %v3019 = vpack.c.bf16 %v3002, %v2994
    %v3020 = vpack.c.bf16 %v3003, %v2995
    %v3021 = vpack.c.bf16 %v3004, %v2996
    %v3022 = vpack.c.bf16 %v3005, %v2997
    %v3023 = vld [vmem:[#allocation15] sm:$0xff]
    %v3025 = vperm.slane %v3023, 0
    %v3026 = vperm.slane %v3023, 1
    %v3027 = vperm.slane %v3023, 2
    %v3028 = vperm.slane %v3023, 3
    %v3029 = vperm.slane %v3023, 4
    %v3030 = vperm.slane %v3023, 5
    %v3031 = vperm.slane %v3023, 6
    %v3032 = vperm.slane %v3023, 7
    %v3042 = vsel %vm547, %v3006, 0
    %3044 = vmatpush.bf16.msra.mxu0 0
    %3045 = vmatpush.bf16.msra.mxu0 0
    %3046 = vmatpush.bf16.msra.mxu0 0
    %3047 = vmatpush.bf16.msra.mxu0 0
    %3048 = vmatpush.bf16.msra.mxu0 0
    %3049 = vmatpush.bf16.msra.mxu0 0
    %3050 = vmatpush.bf16.msra.mxu0 %v3015
    %3051 = vmatpush.bf16.msra.mxu0 %v3007
    %3052 = vmatmul.bf16.gmra.mxu0 %v3042
    %v3053 = vpop.f32.mrf.mxu0
    %v3054 = vadd.f32 %v3025, %v3053
    %v3055 = vpop.f32.mrf.mxu0
    %3056 = vdwg.mxu0
    %3057 = vmatpush.bf16.msra.mxu0 0
    %3058 = vmatpush.bf16.msra.mxu0 0
    %3059 = vmatpush.bf16.msra.mxu0 0
    %3060 = vmatpush.bf16.msra.mxu0 0
    %3061 = vmatpush.bf16.msra.mxu0 0
    %3062 = vmatpush.bf16.msra.mxu0 0
    %3063 = vmatpush.bf16.msra.mxu0 %v3016
    %3064 = vmatpush.bf16.msra.mxu0 %v3008
    %3065 = vmatmul.bf16.gmra.mxu0 %v3042
    %v3066 = vpop.f32.mrf.mxu0
    %v3067 = vadd.f32 %v3026, %v3066
    %v3068 = vpop.f32.mrf.mxu0
    %3069 = vdwg.mxu0
    %3070 = vmatpush.bf16.msra.mxu0 0
    %3071 = vmatpush.bf16.msra.mxu0 0
    %3072 = vmatpush.bf16.msra.mxu0 0
    %3073 = vmatpush.bf16.msra.mxu0 0
    %3074 = vmatpush.bf16.msra.mxu0 0
    %3075 = vmatpush.bf16.msra.mxu0 0
    %3076 = vmatpush.bf16.msra.mxu0 %v3017
    %3077 = vmatpush.bf16.msra.mxu0 %v3009
    %3078 = vmatmul.bf16.gmra.mxu0 %v3042
    %v3079 = vpop.f32.mrf.mxu0
    %v3080 = vadd.f32 %v3027, %v3079
    %v3081 = vpop.f32.mrf.mxu0
    %3082 = vdwg.mxu0
    %3083 = vmatpush.bf16.msra.mxu0 0
    %3084 = vmatpush.bf16.msra.mxu0 0
    %3085 = vmatpush.bf16.msra.mxu0 0
    %3086 = vmatpush.bf16.msra.mxu0 0
    %3087 = vmatpush.bf16.msra.mxu0 0
    %3088 = vmatpush.bf16.msra.mxu0 0
    %3089 = vmatpush.bf16.msra.mxu0 %v3018
    %3090 = vmatpush.bf16.msra.mxu0 %v3010
    %3091 = vmatmul.bf16.gmra.mxu0 %v3042
    %v3092 = vpop.f32.mrf.mxu0
    %v3093 = vadd.f32 %v3028, %v3092
    %v3094 = vpop.f32.mrf.mxu0
    %3095 = vdwg.mxu0
    %3096 = vmatpush.bf16.msra.mxu0 0
    %3097 = vmatpush.bf16.msra.mxu0 0
    %3098 = vmatpush.bf16.msra.mxu0 0
    %3099 = vmatpush.bf16.msra.mxu0 0
    %3100 = vmatpush.bf16.msra.mxu0 0
    %3101 = vmatpush.bf16.msra.mxu0 0
    %3102 = vmatpush.bf16.msra.mxu0 %v3019
    %3103 = vmatpush.bf16.msra.mxu0 %v3011
    %3104 = vmatmul.bf16.gmra.mxu0 %v3042
    %v3105 = vpop.f32.mrf.mxu0
    %v3106 = vadd.f32 %v3029, %v3105
    %v3107 = vpop.f32.mrf.mxu0
    %3108 = vdwg.mxu0
    %3109 = vmatpush.bf16.msra.mxu0 0
    %3110 = vmatpush.bf16.msra.mxu0 0
    %3111 = vmatpush.bf16.msra.mxu0 0
    %3112 = vmatpush.bf16.msra.mxu0 0
    %3113 = vmatpush.bf16.msra.mxu0 0
    %3114 = vmatpush.bf16.msra.mxu0 0
    %3115 = vmatpush.bf16.msra.mxu0 %v3020
    %3116 = vmatpush.bf16.msra.mxu0 %v3012
    %3117 = vmatmul.bf16.gmra.mxu0 %v3042
    %v3118 = vpop.f32.mrf.mxu0
    %v3119 = vadd.f32 %v3030, %v3118
    %v3120 = vpop.f32.mrf.mxu0
    %3121 = vdwg.mxu0
    %3122 = vmatpush.bf16.msra.mxu0 0
    %3123 = vmatpush.bf16.msra.mxu0 0
    %3124 = vmatpush.bf16.msra.mxu0 0
    %3125 = vmatpush.bf16.msra.mxu0 0
    %3126 = vmatpush.bf16.msra.mxu0 0
    %3127 = vmatpush.bf16.msra.mxu0 0
    %3128 = vmatpush.bf16.msra.mxu0 %v3021
    %3129 = vmatpush.bf16.msra.mxu0 %v3013
    %3130 = vmatmul.bf16.gmra.mxu0 %v3042
    %v3131 = vpop.f32.mrf.mxu0
    %v3132 = vadd.f32 %v3031, %v3131
    %v3133 = vpop.f32.mrf.mxu0
    %3134 = vdwg.mxu0
    %3135 = vmatpush.bf16.msra.mxu0 0
    %3136 = vmatpush.bf16.msra.mxu0 0
    %3137 = vmatpush.bf16.msra.mxu0 0
    %3138 = vmatpush.bf16.msra.mxu0 0
    %3139 = vmatpush.bf16.msra.mxu0 0
    %3140 = vmatpush.bf16.msra.mxu0 0
    %3141 = vmatpush.bf16.msra.mxu0 %v3022
    %3142 = vmatpush.bf16.msra.mxu0 %v3014
    %3143 = vmatmul.bf16.gmra.mxu0 %v3042
    %v3144 = vpop.f32.mrf.mxu0
    %v3145 = vadd.f32 %v3032, %v3144
    %v3146 = vpop.f32.mrf.mxu0
    %3147 = vdwg.mxu0
    %v3156 = vrot.slane %v3067, 6
    %v3157 = vrot.slane %v3080, 4
    %v3158 = vrot.slane %v3093, 2
    %v3159 = vrot.slane %v3119, 6
    %v3160 = vrot.slane %v3132, 4
    %v3161 = vrot.slane %v3145, 2
    %vm3162 = vcmask 1041408
    %v3163 = vsel %vm3162, %v3054, %v3156
    %vm3164 = vcmask 1045508
    %v3165 = vsel %vm3164, %v3157, %v3158
    %vm3166 = vcmask 1043456
    %v3167 = vsel %vm3166, %v3163, %v3165
    %v3168 = vsel %vm3162, %v3106, %v3159
    %v3169 = vsel %vm3164, %v3160, %v3161
    %v3170 = vsel %vm3166, %v3168, %v3169
    %3173 = vst [vmem:[%s12] sm:$0xff] %v3167
    %3174 = vst [vmem:[%s12 + $0x8] sm:$0xff] %v3170
    // Predicated region
    $region82: #{glo_forward.4} parent=1 // pred_check
      _
    $region83: #{glo_forward.4} parent=1 // pred_check_branch
      %3176 = sbr.rel (0) target = $region85
    $region84: #{glo_forward.4} parent=1 // pred_region
      _
    $region85: #{glo_forward.4} parent=1 // pred_fallthru
      _
    // Predicated region
    $region86: #{glo_forward.4} parent=1 // pred_check
      _
    $region87: #{glo_forward.4} parent=1 // pred_check_branch
      %3178 = sbr.rel (0) target = $region89
    $region88: #{glo_forward.4} parent=1 // pred_region
      _
    $region89: #{glo_forward.4} parent=1 // pred_fallthru
      _
    // Predicated region
    $region90: #{glo_forward.4} parent=1 // pred_check
      _
    $region91: #{glo_forward.4} parent=1 // pred_check_branch
      %3180 = sbr.rel (0) target = $region93
    $region92: #{glo_forward.4} parent=1 // pred_region
      _
    $region93: #{glo_forward.4} parent=1 // pred_fallthru
      _
    // Predicated region
    $region94: #{glo_forward.4} parent=1 // pred_check
      _
    $region95: #{glo_forward.4} parent=1 // pred_check_branch
      %3182 = sbr.rel (0) target = $region97
    $region96: #{glo_forward.4} parent=1 // pred_region
      _
    $region97: #{glo_forward.4} parent=1 // pred_fallthru
      _
    %3183 = vsyncpa [#allocation3], 1
    %3184 = vsyncpa [#allocation5], 1
    %3185 = vsyncpa [#allocation8], 1
    %3186 = vsyncpa [#allocation11], 1
    %3187 = vsyncpa [#allocation14], 1

// kernel: glo_forward.5
$region0: #{glo_forward.5}
  #allocation0 [shape = 'u32[]', space=smem, size = 0x4, offset = 0x4, fixed_abs, tag = 'smem constant byte address 0x4 - core index']
  #allocation1 [shape = 'u32[72,128]{1,0:T(1,128)}', space=vmem, size = 0x9000, scoped, tag = 'internal scratch']
  %s0 = inlined_call_operand.vmem [shape: f32[128,1024], index: 0, kind: input, shape index: {}]
  %s1 = inlined_call_operand.vmem [shape: f32[1024,32], index: 1, kind: input, shape index: {}]
  %s2 = inlined_call_operand.vmem [shape: f32[1,32], index: 2, kind: input, shape index: {}]
  %s3 = inlined_call_operand.vmem [shape: f32[2,32], index: 3, kind: input, shape index: {}]
  %s4 = inlined_call_operand.vmem [shape: f32[128,32], index: 4, kind: output, shape index: {}]
  %s5 = sld [smem:[#allocation0]]
  $region26: #{glo_forward.5} parent=0
    _
  %s7 = ssub.s32 1, %s5
  %s8 = scalar_select 0, %s7, %s5
  // Predicated region
  $region2: #{glo_forward.5} parent=0 // pred_check
    _
  $region3: #{glo_forward.5} parent=0 // pred_check_branch
    %10 = sbr.rel (0) target = $region5
  $region4: #{glo_forward.5} parent=0 // pred_region
    _
  $region5: #{glo_forward.5} parent=0 // pred_fallthru
    _
  // Predicated region
  $region6: #{glo_forward.5} parent=0 // pred_check
    _
  $region7: #{glo_forward.5} parent=0 // pred_check_branch
    %12 = sbr.rel (0) target = $region9
  $region8: #{glo_forward.5} parent=0 // pred_region
    _
  $region9: #{glo_forward.5} parent=0 // pred_fallthru
    _
  // Predicated region
  $region10: #{glo_forward.5} parent=0 // pred_check
    _
  $region11: #{glo_forward.5} parent=0 // pred_check_branch
    %14 = sbr.rel (0) target = $region13
  $region12: #{glo_forward.5} parent=0 // pred_region
    _
  $region13: #{glo_forward.5} parent=0 // pred_fallthru
    _
  // Predicated region
  $region14: #{glo_forward.5} parent=0 // pred_check
    _
  $region15: #{glo_forward.5} parent=0 // pred_check_branch
    %16 = sbr.rel (0) target = $region17
  $region16: #{glo_forward.5} parent=0 // pred_region
    _
  $region17: #{glo_forward.5} parent=0 // pred_fallthru
    _
  %v17 = vld [vmem:[%s0] sm:$0xff]
  %v18 = vld [vmem:[%s0 + $0x8] sm:$0xff]
  %v19 = vld [vmem:[%s0 + $0x10] sm:$0xff]
  %v20 = vld [vmem:[%s0 + $0x18] sm:$0xff]
  %v21 = vld [vmem:[%s0 + $0x20] sm:$0xff]
  %v22 = vld [vmem:[%s0 + $0x28] sm:$0xff]
  %v23 = vld [vmem:[%s0 + $0x30] sm:$0xff]
  %v24 = vld [vmem:[%s0 + $0x38] sm:$0xff]
  %v25 = vld [vmem:[%s0 + $0x40] sm:$0xff]
  %v26 = vld [vmem:[%s0 + $0x48] sm:$0xff]
  %v27 = vld [vmem:[%s0 + $0x50] sm:$0xff]
  %v28 = vld [vmem:[%s0 + $0x58] sm:$0xff]
  %v29 = vld [vmem:[%s0 + $0x60] sm:$0xff]
  %v30 = vld [vmem:[%s0 + $0x68] sm:$0xff]
  %v31 = vld [vmem:[%s0 + $0x70] sm:$0xff]
  %v32 = vld [vmem:[%s0 + $0x78] sm:$0xff]
  %v33 = vld [vmem:[%s0 + $0x80] sm:$0xff]
  %v34 = vld [vmem:[%s0 + $0x88] sm:$0xff]
  %v35 = vld [vmem:[%s0 + $0x90] sm:$0xff]
  %v36 = vld [vmem:[%s0 + $0x98] sm:$0xff]
  %v37 = vld [vmem:[%s0 + $0xa0] sm:$0xff]
  %v38 = vld [vmem:[%s0 + $0xa8] sm:$0xff]
  %v39 = vld [vmem:[%s0 + $0xb0] sm:$0xff]
  %v40 = vld [vmem:[%s0 + $0xb8] sm:$0xff]
  %v41 = vld [vmem:[%s0 + $0xc0] sm:$0xff]
  %v42 = vld [vmem:[%s0 + $0xc8] sm:$0xff]
  %v43 = vld [vmem:[%s0 + $0xd0] sm:$0xff]
  %v44 = vld [vmem:[%s0 + $0xd8] sm:$0xff]
  %v45 = vld [vmem:[%s0 + $0xe0] sm:$0xff]
  %v46 = vld [vmem:[%s0 + $0xe8] sm:$0xff]
  %v47 = vld [vmem:[%s0 + $0xf0] sm:$0xff]
  %v48 = vld [vmem:[%s0 + $0xf8] sm:$0xff]
  %v49 = vld [vmem:[%s0 + $0x100] sm:$0xff]
  %v50 = vld [vmem:[%s0 + $0x108] sm:$0xff]
  %v51 = vld [vmem:[%s0 + $0x110] sm:$0xff]
  %v52 = vld [vmem:[%s0 + $0x118] sm:$0xff]
  %v53 = vld [vmem:[%s0 + $0x120] sm:$0xff]
  %v54 = vld [vmem:[%s0 + $0x128] sm:$0xff]
  %v55 = vld [vmem:[%s0 + $0x130] sm:$0xff]
  %v56 = vld [vmem:[%s0 + $0x138] sm:$0xff]
  %v57 = vld [vmem:[%s0 + $0x140] sm:$0xff]
  %v58 = vld [vmem:[%s0 + $0x148] sm:$0xff]
  %v59 = vld [vmem:[%s0 + $0x150] sm:$0xff]
  %v60 = vld [vmem:[%s0 + $0x158] sm:$0xff]
  %v61 = vld [vmem:[%s0 + $0x160] sm:$0xff]
  %v62 = vld [vmem:[%s0 + $0x168] sm:$0xff]
  %v63 = vld [vmem:[%s0 + $0x170] sm:$0xff]
  %v64 = vld [vmem:[%s0 + $0x178] sm:$0xff]
  %v65 = vld [vmem:[%s0 + $0x180] sm:$0xff]
  %v66 = vld [vmem:[%s0 + $0x188] sm:$0xff]
  %v67 = vld [vmem:[%s0 + $0x190] sm:$0xff]
  %v68 = vld [vmem:[%s0 + $0x198] sm:$0xff]
  %v69 = vld [vmem:[%s0 + $0x1a0] sm:$0xff]
  %v70 = vld [vmem:[%s0 + $0x1a8] sm:$0xff]
  %v71 = vld [vmem:[%s0 + $0x1b0] sm:$0xff]
  %v72 = vld [vmem:[%s0 + $0x1b8] sm:$0xff]
  %v73 = vld [vmem:[%s0 + $0x1c0] sm:$0xff]
  %v74 = vld [vmem:[%s0 + $0x1c8] sm:$0xff]
  %v75 = vld [vmem:[%s0 + $0x1d0] sm:$0xff]
  %v76 = vld [vmem:[%s0 + $0x1d8] sm:$0xff]
  %v77 = vld [vmem:[%s0 + $0x1e0] sm:$0xff]
  %v78 = vld [vmem:[%s0 + $0x1e8] sm:$0xff]
  %v79 = vld [vmem:[%s0 + $0x1f0] sm:$0xff]
  %v80 = vld [vmem:[%s0 + $0x1f8] sm:$0xff]
  %v81 = vld [vmem:[%s0 + $0x200] sm:$0xff]
  %v82 = vld [vmem:[%s0 + $0x208] sm:$0xff]
  %v83 = vld [vmem:[%s0 + $0x210] sm:$0xff]
  %v84 = vld [vmem:[%s0 + $0x218] sm:$0xff]
  %v85 = vld [vmem:[%s0 + $0x220] sm:$0xff]
  %v86 = vld [vmem:[%s0 + $0x228] sm:$0xff]
  %v87 = vld [vmem:[%s0 + $0x230] sm:$0xff]
  %v88 = vld [vmem:[%s0 + $0x238] sm:$0xff]
  %v89 = vld [vmem:[%s0 + $0x240] sm:$0xff]
  %v90 = vld [vmem:[%s0 + $0x248] sm:$0xff]
  %v91 = vld [vmem:[%s0 + $0x250] sm:$0xff]
  %v92 = vld [vmem:[%s0 + $0x258] sm:$0xff]
  %v93 = vld [vmem:[%s0 + $0x260] sm:$0xff]
  %v94 = vld [vmem:[%s0 + $0x268] sm:$0xff]
  %v95 = vld [vmem:[%s0 + $0x270] sm:$0xff]
  %v96 = vld [vmem:[%s0 + $0x278] sm:$0xff]
  %v97 = vld [vmem:[%s0 + $0x280] sm:$0xff]
  %v98 = vld [vmem:[%s0 + $0x288] sm:$0xff]
  %v99 = vld [vmem:[%s0 + $0x290] sm:$0xff]
  %v100 = vld [vmem:[%s0 + $0x298] sm:$0xff]
  %v101 = vld [vmem:[%s0 + $0x2a0] sm:$0xff]
  %v102 = vld [vmem:[%s0 + $0x2a8] sm:$0xff]
  %v103 = vld [vmem:[%s0 + $0x2b0] sm:$0xff]
  %v104 = vld [vmem:[%s0 + $0x2b8] sm:$0xff]
  %v105 = vld [vmem:[%s0 + $0x2c0] sm:$0xff]
  %v106 = vld [vmem:[%s0 + $0x2c8] sm:$0xff]
  %v107 = vld [vmem:[%s0 + $0x2d0] sm:$0xff]
  %v108 = vld [vmem:[%s0 + $0x2d8] sm:$0xff]
  %v109 = vld [vmem:[%s0 + $0x2e0] sm:$0xff]
  %v110 = vld [vmem:[%s0 + $0x2e8] sm:$0xff]
  %v111 = vld [vmem:[%s0 + $0x2f0] sm:$0xff]
  %v112 = vld [vmem:[%s0 + $0x2f8] sm:$0xff]
  %v113 = vld [vmem:[%s0 + $0x300] sm:$0xff]
  %v114 = vld [vmem:[%s0 + $0x308] sm:$0xff]
  %v115 = vld [vmem:[%s0 + $0x310] sm:$0xff]
  %v116 = vld [vmem:[%s0 + $0x318] sm:$0xff]
  %v117 = vld [vmem:[%s0 + $0x320] sm:$0xff]
  %v118 = vld [vmem:[%s0 + $0x328] sm:$0xff]
  %v119 = vld [vmem:[%s0 + $0x330] sm:$0xff]
  %v120 = vld [vmem:[%s0 + $0x338] sm:$0xff]
  %v121 = vld [vmem:[%s0 + $0x340] sm:$0xff]
  %v122 = vld [vmem:[%s0 + $0x348] sm:$0xff]
  %v123 = vld [vmem:[%s0 + $0x350] sm:$0xff]
  %v124 = vld [vmem:[%s0 + $0x358] sm:$0xff]
  %v125 = vld [vmem:[%s0 + $0x360] sm:$0xff]
  %v126 = vld [vmem:[%s0 + $0x368] sm:$0xff]
  %v127 = vld [vmem:[%s0 + $0x370] sm:$0xff]
  %v128 = vld [vmem:[%s0 + $0x378] sm:$0xff]
  %v129 = vld [vmem:[%s0 + $0x380] sm:$0xff]
  %v130 = vld [vmem:[%s0 + $0x388] sm:$0xff]
  %v131 = vld [vmem:[%s0 + $0x390] sm:$0xff]
  %v132 = vld [vmem:[%s0 + $0x398] sm:$0xff]
  %v133 = vld [vmem:[%s0 + $0x3a0] sm:$0xff]
  %v134 = vld [vmem:[%s0 + $0x3a8] sm:$0xff]
  %v135 = vld [vmem:[%s0 + $0x3b0] sm:$0xff]
  %v136 = vld [vmem:[%s0 + $0x3b8] sm:$0xff]
  %v137 = vld [vmem:[%s0 + $0x3c0] sm:$0xff]
  %v138 = vld [vmem:[%s0 + $0x3c8] sm:$0xff]
  %v139 = vld [vmem:[%s0 + $0x3d0] sm:$0xff]
  %v140 = vld [vmem:[%s0 + $0x3d8] sm:$0xff]
  %v141 = vld [vmem:[%s0 + $0x3e0] sm:$0xff]
  %v142 = vld [vmem:[%s0 + $0x3e8] sm:$0xff]
  %v143 = vld [vmem:[%s0 + $0x3f0] sm:$0xff]
  %v144 = vld [vmem:[%s0 + $0x3f8] sm:$0xff]
  %v145 = vld [vmem:[%s1] sm:$0xff]
  %v146 = vld [vmem:[%s1 + $0x8] sm:$0xff]
  %v147 = vld [vmem:[%s1 + $0x10] sm:$0xff]
  %v148 = vld [vmem:[%s1 + $0x18] sm:$0xff]
  %v149 = vld [vmem:[%s1 + $0x20] sm:$0xff]
  %v150 = vld [vmem:[%s1 + $0x28] sm:$0xff]
  %v151 = vld [vmem:[%s1 + $0x30] sm:$0xff]
  %v152 = vld [vmem:[%s1 + $0x38] sm:$0xff]
  %v153 = vld [vmem:[%s1 + $0x40] sm:$0xff]
  %v154 = vld [vmem:[%s1 + $0x48] sm:$0xff]
  %v155 = vld [vmem:[%s1 + $0x50] sm:$0xff]
  %v156 = vld [vmem:[%s1 + $0x58] sm:$0xff]
  %v157 = vld [vmem:[%s1 + $0x60] sm:$0xff]
  %v158 = vld [vmem:[%s1 + $0x68] sm:$0xff]
  %v159 = vld [vmem:[%s1 + $0x70] sm:$0xff]
  %v160 = vld [vmem:[%s1 + $0x78] sm:$0xff]
  %v161 = vld [vmem:[%s1 + $0x80] sm:$0xff]
  %v162 = vld [vmem:[%s1 + $0x88] sm:$0xff]
  %v163 = vld [vmem:[%s1 + $0x90] sm:$0xff]
  %v164 = vld [vmem:[%s1 + $0x98] sm:$0xff]
  %v165 = vld [vmem:[%s1 + $0xa0] sm:$0xff]
  %v166 = vld [vmem:[%s1 + $0xa8] sm:$0xff]
  %v167 = vld [vmem:[%s1 + $0xb0] sm:$0xff]
  %v168 = vld [vmem:[%s1 + $0xb8] sm:$0xff]
  %v169 = vld [vmem:[%s1 + $0xc0] sm:$0xff]
  %v170 = vld [vmem:[%s1 + $0xc8] sm:$0xff]
  %v171 = vld [vmem:[%s1 + $0xd0] sm:$0xff]
  %v172 = vld [vmem:[%s1 + $0xd8] sm:$0xff]
  %v173 = vld [vmem:[%s1 + $0xe0] sm:$0xff]
  %v174 = vld [vmem:[%s1 + $0xe8] sm:$0xff]
  %v175 = vld [vmem:[%s1 + $0xf0] sm:$0xff]
  %v176 = vld [vmem:[%s1 + $0xf8] sm:$0xff]
  %v177 = vld [vmem:[%s1 + $0x100] sm:$0xff]
  %v178 = vld [vmem:[%s1 + $0x108] sm:$0xff]
  %v179 = vld [vmem:[%s1 + $0x110] sm:$0xff]
  %v180 = vld [vmem:[%s1 + $0x118] sm:$0xff]
  %v181 = vld [vmem:[%s1 + $0x120] sm:$0xff]
  %v182 = vld [vmem:[%s1 + $0x128] sm:$0xff]
  %v183 = vld [vmem:[%s1 + $0x130] sm:$0xff]
  %v184 = vld [vmem:[%s1 + $0x138] sm:$0xff]
  %v185 = vld [vmem:[%s1 + $0x140] sm:$0xff]
  %v186 = vld [vmem:[%s1 + $0x148] sm:$0xff]
  %v187 = vld [vmem:[%s1 + $0x150] sm:$0xff]
  %v188 = vld [vmem:[%s1 + $0x158] sm:$0xff]
  %v189 = vld [vmem:[%s1 + $0x160] sm:$0xff]
  %v190 = vld [vmem:[%s1 + $0x168] sm:$0xff]
  %v191 = vld [vmem:[%s1 + $0x170] sm:$0xff]
  %v192 = vld [vmem:[%s1 + $0x178] sm:$0xff]
  %v193 = vld [vmem:[%s1 + $0x180] sm:$0xff]
  %v194 = vld [vmem:[%s1 + $0x188] sm:$0xff]
  %v195 = vld [vmem:[%s1 + $0x190] sm:$0xff]
  %v196 = vld [vmem:[%s1 + $0x198] sm:$0xff]
  %v197 = vld [vmem:[%s1 + $0x1a0] sm:$0xff]
  %v198 = vld [vmem:[%s1 + $0x1a8] sm:$0xff]
  %v199 = vld [vmem:[%s1 + $0x1b0] sm:$0xff]
  %v200 = vld [vmem:[%s1 + $0x1b8] sm:$0xff]
  %v201 = vld [vmem:[%s1 + $0x1c0] sm:$0xff]
  %v202 = vld [vmem:[%s1 + $0x1c8] sm:$0xff]
  %v203 = vld [vmem:[%s1 + $0x1d0] sm:$0xff]
  %v204 = vld [vmem:[%s1 + $0x1d8] sm:$0xff]
  %v205 = vld [vmem:[%s1 + $0x1e0] sm:$0xff]
  %v206 = vld [vmem:[%s1 + $0x1e8] sm:$0xff]
  %v207 = vld [vmem:[%s1 + $0x1f0] sm:$0xff]
  %v208 = vld [vmem:[%s1 + $0x1f8] sm:$0xff]
  %v209 = vld [vmem:[%s1 + $0x200] sm:$0xff]
  %v210 = vld [vmem:[%s1 + $0x208] sm:$0xff]
  %v211 = vld [vmem:[%s1 + $0x210] sm:$0xff]
  %v212 = vld [vmem:[%s1 + $0x218] sm:$0xff]
  %v213 = vld [vmem:[%s1 + $0x220] sm:$0xff]
  %v214 = vld [vmem:[%s1 + $0x228] sm:$0xff]
  %v215 = vld [vmem:[%s1 + $0x230] sm:$0xff]
  %v216 = vld [vmem:[%s1 + $0x238] sm:$0xff]
  %v217 = vld [vmem:[%s1 + $0x240] sm:$0xff]
  %v218 = vld [vmem:[%s1 + $0x248] sm:$0xff]
  %v219 = vld [vmem:[%s1 + $0x250] sm:$0xff]
  %v220 = vld [vmem:[%s1 + $0x258] sm:$0xff]
  %v221 = vld [vmem:[%s1 + $0x260] sm:$0xff]
  %v222 = vld [vmem:[%s1 + $0x268] sm:$0xff]
  %v223 = vld [vmem:[%s1 + $0x270] sm:$0xff]
  %v224 = vld [vmem:[%s1 + $0x278] sm:$0xff]
  %v225 = vld [vmem:[%s1 + $0x280] sm:$0xff]
  %v226 = vld [vmem:[%s1 + $0x288] sm:$0xff]
  %v227 = vld [vmem:[%s1 + $0x290] sm:$0xff]
  %v228 = vld [vmem:[%s1 + $0x298] sm:$0xff]
  %v229 = vld [vmem:[%s1 + $0x2a0] sm:$0xff]
  %v230 = vld [vmem:[%s1 + $0x2a8] sm:$0xff]
  %v231 = vld [vmem:[%s1 + $0x2b0] sm:$0xff]
  %v232 = vld [vmem:[%s1 + $0x2b8] sm:$0xff]
  %v233 = vld [vmem:[%s1 + $0x2c0] sm:$0xff]
  %v234 = vld [vmem:[%s1 + $0x2c8] sm:$0xff]
  %v235 = vld [vmem:[%s1 + $0x2d0] sm:$0xff]
  %v236 = vld [vmem:[%s1 + $0x2d8] sm:$0xff]
  %v237 = vld [vmem:[%s1 + $0x2e0] sm:$0xff]
  %v238 = vld [vmem:[%s1 + $0x2e8] sm:$0xff]
  %v239 = vld [vmem:[%s1 + $0x2f0] sm:$0xff]
  %v240 = vld [vmem:[%s1 + $0x2f8] sm:$0xff]
  %v241 = vld [vmem:[%s1 + $0x300] sm:$0xff]
  %v242 = vld [vmem:[%s1 + $0x308] sm:$0xff]
  %v243 = vld [vmem:[%s1 + $0x310] sm:$0xff]
  %v244 = vld [vmem:[%s1 + $0x318] sm:$0xff]
  %v245 = vld [vmem:[%s1 + $0x320] sm:$0xff]
  %v246 = vld [vmem:[%s1 + $0x328] sm:$0xff]
  %v247 = vld [vmem:[%s1 + $0x330] sm:$0xff]
  %v248 = vld [vmem:[%s1 + $0x338] sm:$0xff]
  %v249 = vld [vmem:[%s1 + $0x340] sm:$0xff]
  %v250 = vld [vmem:[%s1 + $0x348] sm:$0xff]
  %v251 = vld [vmem:[%s1 + $0x350] sm:$0xff]
  %v252 = vld [vmem:[%s1 + $0x358] sm:$0xff]
  %v253 = vld [vmem:[%s1 + $0x360] sm:$0xff]
  %v254 = vld [vmem:[%s1 + $0x368] sm:$0xff]
  %v255 = vld [vmem:[%s1 + $0x370] sm:$0xff]
  %v256 = vld [vmem:[%s1 + $0x378] sm:$0xff]
  %v257 = vld [vmem:[%s1 + $0x380] sm:$0xff]
  %v258 = vld [vmem:[%s1 + $0x388] sm:$0xff]
  %v259 = vld [vmem:[%s1 + $0x390] sm:$0xff]
  %v260 = vld [vmem:[%s1 + $0x398] sm:$0xff]
  %v261 = vld [vmem:[%s1 + $0x3a0] sm:$0xff]
  %v262 = vld [vmem:[%s1 + $0x3a8] sm:$0xff]
  %v263 = vld [vmem:[%s1 + $0x3b0] sm:$0xff]
  %v264 = vld [vmem:[%s1 + $0x3b8] sm:$0xff]
  %v265 = vld [vmem:[%s1 + $0x3c0] sm:$0xff]
  %v266 = vld [vmem:[%s1 + $0x3c8] sm:$0xff]
  %v267 = vld [vmem:[%s1 + $0x3d0] sm:$0xff]
  %v268 = vld [vmem:[%s1 + $0x3d8] sm:$0xff]
  %v269 = vld [vmem:[%s1 + $0x3e0] sm:$0xff]
  %v270 = vld [vmem:[%s1 + $0x3e8] sm:$0xff]
  %v271 = vld [vmem:[%s1 + $0x3f0] sm:$0xff]
  %v272 = vld [vmem:[%s1 + $0x3f8] sm:$0xff]
  %v273 = vpack.c.bf16 %v25, %v17
  %v274 = vpack.c.bf16 %v26, %v18
  %v275 = vpack.c.bf16 %v27, %v19
  %v276 = vpack.c.bf16 %v28, %v20
  %v277 = vpack.c.bf16 %v29, %v21
  %v278 = vpack.c.bf16 %v30, %v22
  %v279 = vpack.c.bf16 %v31, %v23
  %v280 = vpack.c.bf16 %v32, %v24
  %v281 = vpack.c.bf16 %v41, %v33
  %v282 = vpack.c.bf16 %v42, %v34
  %v283 = vpack.c.bf16 %v43, %v35
  %v284 = vpack.c.bf16 %v44, %v36
  %v285 = vpack.c.bf16 %v45, %v37
  %v286 = vpack.c.bf16 %v46, %v38
  %v287 = vpack.c.bf16 %v47, %v39
  %v288 = vpack.c.bf16 %v48, %v40
  %v289 = vpack.c.bf16 %v57, %v49
  %v290 = vpack.c.bf16 %v58, %v50
  %v291 = vpack.c.bf16 %v59, %v51
  %v292 = vpack.c.bf16 %v60, %v52
  %v293 = vpack.c.bf16 %v61, %v53
  %v294 = vpack.c.bf16 %v62, %v54
  %v295 = vpack.c.bf16 %v63, %v55
  %v296 = vpack.c.bf16 %v64, %v56
  %v297 = vpack.c.bf16 %v73, %v65
  %v298 = vpack.c.bf16 %v74, %v66
  %v299 = vpack.c.bf16 %v75, %v67
  %v300 = vpack.c.bf16 %v76, %v68
  %v301 = vpack.c.bf16 %v77, %v69
  %v302 = vpack.c.bf16 %v78, %v70
  %v303 = vpack.c.bf16 %v79, %v71
  %v304 = vpack.c.bf16 %v80, %v72
  %v305 = vpack.c.bf16 %v89, %v81
  %v306 = vpack.c.bf16 %v90, %v82
  %v307 = vpack.c.bf16 %v91, %v83
  %v308 = vpack.c.bf16 %v92, %v84
  %v309 = vpack.c.bf16 %v93, %v85
  %v310 = vpack.c.bf16 %v94, %v86
  %v311 = vpack.c.bf16 %v95, %v87
  %v312 = vpack.c.bf16 %v96, %v88
  %v313 = vpack.c.bf16 %v105, %v97
  %v314 = vpack.c.bf16 %v106, %v98
  %v315 = vpack.c.bf16 %v107, %v99
  %v316 = vpack.c.bf16 %v108, %v100
  %v317 = vpack.c.bf16 %v109, %v101
  %v318 = vpack.c.bf16 %v110, %v102
  %v319 = vpack.c.bf16 %v111, %v103
  %v320 = vpack.c.bf16 %v112, %v104
  %v321 = vpack.c.bf16 %v121, %v113
  %v322 = vpack.c.bf16 %v122, %v114
  %v323 = vpack.c.bf16 %v123, %v115
  %v324 = vpack.c.bf16 %v124, %v116
  %v325 = vpack.c.bf16 %v125, %v117
  %v326 = vpack.c.bf16 %v126, %v118
  %v327 = vpack.c.bf16 %v127, %v119
  %v328 = vpack.c.bf16 %v128, %v120
  %v329 = vpack.c.bf16 %v137, %v129
  %v330 = vpack.c.bf16 %v138, %v130
  %v331 = vpack.c.bf16 %v139, %v131
  %v332 = vpack.c.bf16 %v140, %v132
  %v333 = vpack.c.bf16 %v141, %v133
  %v334 = vpack.c.bf16 %v142, %v134
  %v335 = vpack.c.bf16 %v143, %v135
  %v336 = vpack.c.bf16 %v144, %v136
  %v337 = vpack.c.bf16 %v146, %v145
  %v338 = vpack.c.bf16 %v148, %v147
  %v339 = vpack.c.bf16 %v150, %v149
  %v340 = vpack.c.bf16 %v152, %v151
  %v341 = vpack.c.bf16 %v154, %v153
  %v342 = vpack.c.bf16 %v156, %v155
  %v343 = vpack.c.bf16 %v158, %v157
  %v344 = vpack.c.bf16 %v160, %v159
  %v345 = vpack.c.bf16 %v162, %v161
  %v346 = vpack.c.bf16 %v164, %v163
  %v347 = vpack.c.bf16 %v166, %v165
  %v348 = vpack.c.bf16 %v168, %v167
  %v349 = vpack.c.bf16 %v170, %v169
  %v350 = vpack.c.bf16 %v172, %v171
  %v351 = vpack.c.bf16 %v174, %v173
  %v352 = vpack.c.bf16 %v176, %v175
  %v353 = vpack.c.bf16 %v178, %v177
  %v354 = vpack.c.bf16 %v180, %v179
  %v355 = vpack.c.bf16 %v182, %v181
  %v356 = vpack.c.bf16 %v184, %v183
  %v357 = vpack.c.bf16 %v186, %v185
  %v358 = vpack.c.bf16 %v188, %v187
  %v359 = vpack.c.bf16 %v190, %v189
  %v360 = vpack.c.bf16 %v192, %v191
  %v361 = vpack.c.bf16 %v194, %v193
  %v362 = vpack.c.bf16 %v196, %v195
  %v363 = vpack.c.bf16 %v198, %v197
  %v364 = vpack.c.bf16 %v200, %v199
  %v365 = vpack.c.bf16 %v202, %v201
  %v366 = vpack.c.bf16 %v204, %v203
  %v367 = vpack.c.bf16 %v206, %v205
  %v368 = vpack.c.bf16 %v208, %v207
  %v369 = vpack.c.bf16 %v210, %v209
  %v370 = vpack.c.bf16 %v212, %v211
  %v371 = vpack.c.bf16 %v214, %v213
  %v372 = vpack.c.bf16 %v216, %v215
  %v373 = vpack.c.bf16 %v218, %v217
  %v374 = vpack.c.bf16 %v220, %v219
  %v375 = vpack.c.bf16 %v222, %v221
  %v376 = vpack.c.bf16 %v224, %v223
  %v377 = vpack.c.bf16 %v226, %v225
  %v378 = vpack.c.bf16 %v228, %v227
  %v379 = vpack.c.bf16 %v230, %v229
  %v380 = vpack.c.bf16 %v232, %v231
  %v381 = vpack.c.bf16 %v234, %v233
  %v382 = vpack.c.bf16 %v236, %v235
  %v383 = vpack.c.bf16 %v238, %v237
  %v384 = vpack.c.bf16 %v240, %v239
  %v385 = vpack.c.bf16 %v242, %v241
  %v386 = vpack.c.bf16 %v244, %v243
  %v387 = vpack.c.bf16 %v246, %v245
  %v388 = vpack.c.bf16 %v248, %v247
  %v389 = vpack.c.bf16 %v250, %v249
  %v390 = vpack.c.bf16 %v252, %v251
  %v391 = vpack.c.bf16 %v254, %v253
  %v392 = vpack.c.bf16 %v256, %v255
  %v393 = vpack.c.bf16 %v258, %v257
  %v394 = vpack.c.bf16 %v260, %v259
  %v395 = vpack.c.bf16 %v262, %v261
  %v396 = vpack.c.bf16 %v264, %v263
  %v397 = vpack.c.bf16 %v266, %v265
  %v398 = vpack.c.bf16 %v268, %v267
  %v399 = vpack.c.bf16 %v270, %v269
  %v400 = vpack.c.bf16 %v272, %v271
  %v401 = vld [vmem:[%s2] sm:$0x1]
  %v403 = vperm.slane %v401, 0
  %405 = vmatpush.bf16.msra.mxu0 %v344
  %406 = vmatpush.bf16.msra.mxu0 %v343
  %407 = vmatpush.bf16.msra.mxu0 %v342
  %408 = vmatpush.bf16.msra.mxu0 %v341
  %409 = vmatpush.bf16.msra.mxu0 %v340
  %410 = vmatpush.bf16.msra.mxu0 %v339
  %411 = vmatpush.bf16.msra.mxu0 %v338
  %412 = vmatpush.bf16.msra.mxu0 %v337
  %413 = vmatmul.bf16.gmra.mxu0 %v273
  %v414 = vpop.f32.mrf.mxu0
  %v415 = vadd.f32 %v403, %v414
  %v416 = vpop.f32.mrf.mxu0
  %v417 = vadd.f32 %v403, %v416
  %418 = vmatmul.bf16.gmra.mxu0 %v281
  %v419 = vpop.f32.mrf.mxu0
  %v420 = vadd.f32 %v403, %v419
  %v421 = vpop.f32.mrf.mxu0
  %v422 = vadd.f32 %v403, %v421
  %423 = vmatmul.bf16.gmra.mxu0 %v289
  %v424 = vpop.f32.mrf.mxu0
  %v425 = vadd.f32 %v403, %v424
  %v426 = vpop.f32.mrf.mxu0
  %v427 = vadd.f32 %v403, %v426
  %428 = vmatmul.bf16.gmra.mxu0 %v297
  %v429 = vpop.f32.mrf.mxu0
  %v430 = vadd.f32 %v403, %v429
  %v431 = vpop.f32.mrf.mxu0
  %v432 = vadd.f32 %v403, %v431
  %433 = vmatmul.bf16.gmra.mxu0 %v305
  %v434 = vpop.f32.mrf.mxu0
  %v435 = vadd.f32 %v403, %v434
  %v436 = vpop.f32.mrf.mxu0
  %v437 = vadd.f32 %v403, %v436
  %438 = vmatmul.bf16.gmra.mxu0 %v313
  %v439 = vpop.f32.mrf.mxu0
  %v440 = vadd.f32 %v403, %v439
  %v441 = vpop.f32.mrf.mxu0
  %v442 = vadd.f32 %v403, %v441
  %443 = vmatmul.bf16.gmra.mxu0 %v321
  %v444 = vpop.f32.mrf.mxu0
  %v445 = vadd.f32 %v403, %v444
  %v446 = vpop.f32.mrf.mxu0
  %v447 = vadd.f32 %v403, %v446
  %448 = vmatmul.bf16.gmra.mxu0 %v329
  %v449 = vpop.f32.mrf.mxu0
  %v450 = vadd.f32 %v403, %v449
  %v451 = vpop.f32.mrf.mxu0
  %v452 = vadd.f32 %v403, %v451
  %453 = vdwg.mxu0
  %454 = vmatpush.bf16.msra.mxu0 %v352
  %455 = vmatpush.bf16.msra.mxu0 %v351
  %456 = vmatpush.bf16.msra.mxu0 %v350
  %457 = vmatpush.bf16.msra.mxu0 %v349
  %458 = vmatpush.bf16.msra.mxu0 %v348
  %459 = vmatpush.bf16.msra.mxu0 %v347
  %460 = vmatpush.bf16.msra.mxu0 %v346
  %461 = vmatpush.bf16.msra.mxu0 %v345
  %462 = vmatmul.bf16.gmra.mxu0 %v274
  %v463 = vpop.f32.mrf.mxu0
  %v464 = vadd.f32 %v415, %v463
  %v465 = vpop.f32.mrf.mxu0
  %v466 = vadd.f32 %v417, %v465
  %467 = vmatmul.bf16.gmra.mxu0 %v282
  %v468 = vpop.f32.mrf.mxu0
  %v469 = vadd.f32 %v420, %v468
  %v470 = vpop.f32.mrf.mxu0
  %v471 = vadd.f32 %v422, %v470
  %472 = vmatmul.bf16.gmra.mxu0 %v290
  %v473 = vpop.f32.mrf.mxu0
  %v474 = vadd.f32 %v425, %v473
  %v475 = vpop.f32.mrf.mxu0
  %v476 = vadd.f32 %v427, %v475
  %477 = vmatmul.bf16.gmra.mxu0 %v298
  %v478 = vpop.f32.mrf.mxu0
  %v479 = vadd.f32 %v430, %v478
  %v480 = vpop.f32.mrf.mxu0
  %v481 = vadd.f32 %v432, %v480
  %482 = vmatmul.bf16.gmra.mxu0 %v306
  %v483 = vpop.f32.mrf.mxu0
  %v484 = vadd.f32 %v435, %v483
  %v485 = vpop.f32.mrf.mxu0
  %v486 = vadd.f32 %v437, %v485
  %487 = vmatmul.bf16.gmra.mxu0 %v314
  %v488 = vpop.f32.mrf.mxu0
  %v489 = vadd.f32 %v440, %v488
  %v490 = vpop.f32.mrf.mxu0
  %v491 = vadd.f32 %v442, %v490
  %492 = vmatmul.bf16.gmra.mxu0 %v322
  %v493 = vpop.f32.mrf.mxu0
  %v494 = vadd.f32 %v445, %v493
  %v495 = vpop.f32.mrf.mxu0
  %v496 = vadd.f32 %v447, %v495
  %497 = vmatmul.bf16.gmra.mxu0 %v330
  %v498 = vpop.f32.mrf.mxu0
  %v499 = vadd.f32 %v450, %v498
  %v500 = vpop.f32.mrf.mxu0
  %v501 = vadd.f32 %v452, %v500
  %502 = vdwg.mxu0
  %503 = vmatpush.bf16.msra.mxu0 %v360
  %504 = vmatpush.bf16.msra.mxu0 %v359
  %505 = vmatpush.bf16.msra.mxu0 %v358
  %506 = vmatpush.bf16.msra.mxu0 %v357
  %507 = vmatpush.bf16.msra.mxu0 %v356
  %508 = vmatpush.bf16.msra.mxu0 %v355
  %509 = vmatpush.bf16.msra.mxu0 %v354
  %510 = vmatpush.bf16.msra.mxu0 %v353
  %511 = vmatmul.bf16.gmra.mxu0 %v275
  %v512 = vpop.f32.mrf.mxu0
  %v513 = vadd.f32 %v464, %v512
  %v514 = vpop.f32.mrf.mxu0
  %v515 = vadd.f32 %v466, %v514
  %516 = vmatmul.bf16.gmra.mxu0 %v283
  %v517 = vpop.f32.mrf.mxu0
  %v518 = vadd.f32 %v469, %v517
  %v519 = vpop.f32.mrf.mxu0
  %v520 = vadd.f32 %v471, %v519
  %521 = vmatmul.bf16.gmra.mxu0 %v291
  %v522 = vpop.f32.mrf.mxu0
  %v523 = vadd.f32 %v474, %v522
  %v524 = vpop.f32.mrf.mxu0
  %v525 = vadd.f32 %v476, %v524
  %526 = vmatmul.bf16.gmra.mxu0 %v299
  %v527 = vpop.f32.mrf.mxu0
  %v528 = vadd.f32 %v479, %v527
  %v529 = vpop.f32.mrf.mxu0
  %v530 = vadd.f32 %v481, %v529
  %531 = vmatmul.bf16.gmra.mxu0 %v307
  %v532 = vpop.f32.mrf.mxu0
  %v533 = vadd.f32 %v484, %v532
  %v534 = vpop.f32.mrf.mxu0
  %v535 = vadd.f32 %v486, %v534
  %536 = vmatmul.bf16.gmra.mxu0 %v315
  %v537 = vpop.f32.mrf.mxu0
  %v538 = vadd.f32 %v489, %v537
  %v539 = vpop.f32.mrf.mxu0
  %v540 = vadd.f32 %v491, %v539
  %541 = vmatmul.bf16.gmra.mxu0 %v323
  %v542 = vpop.f32.mrf.mxu0
  %v543 = vadd.f32 %v494, %v542
  %v544 = vpop.f32.mrf.mxu0
  %v545 = vadd.f32 %v496, %v544
  %546 = vmatmul.bf16.gmra.mxu0 %v331
  %v547 = vpop.f32.mrf.mxu0
  %v548 = vadd.f32 %v499, %v547
  %v549 = vpop.f32.mrf.mxu0
  %v550 = vadd.f32 %v501, %v549
  %551 = vdwg.mxu0
  %552 = vmatpush.bf16.msra.mxu0 %v368
  %553 = vmatpush.bf16.msra.mxu0 %v367
  %554 = vmatpush.bf16.msra.mxu0 %v366
  %555 = vmatpush.bf16.msra.mxu0 %v365
  %556 = vmatpush.bf16.msra.mxu0 %v364
  %557 = vmatpush.bf16.msra.mxu0 %v363
  %558 = vmatpush.bf16.msra.mxu0 %v362
  %559 = vmatpush.bf16.msra.mxu0 %v361
  %560 = vmatmul.bf16.gmra.mxu0 %v276
  %v561 = vpop.f32.mrf.mxu0
  %v562 = vadd.f32 %v513, %v561
  %v563 = vpop.f32.mrf.mxu0
  %v564 = vadd.f32 %v515, %v563
  %565 = vmatmul.bf16.gmra.mxu0 %v284
  %v566 = vpop.f32.mrf.mxu0
  %v567 = vadd.f32 %v518, %v566
  %v568 = vpop.f32.mrf.mxu0
  %v569 = vadd.f32 %v520, %v568
  %570 = vmatmul.bf16.gmra.mxu0 %v292
  %v571 = vpop.f32.mrf.mxu0
  %v572 = vadd.f32 %v523, %v571
  %v573 = vpop.f32.mrf.mxu0
  %v574 = vadd.f32 %v525, %v573
  %575 = vmatmul.bf16.gmra.mxu0 %v300
  %v576 = vpop.f32.mrf.mxu0
  %v577 = vadd.f32 %v528, %v576
  %v578 = vpop.f32.mrf.mxu0
  %v579 = vadd.f32 %v530, %v578
  %580 = vmatmul.bf16.gmra.mxu0 %v308
  %v581 = vpop.f32.mrf.mxu0
  %v582 = vadd.f32 %v533, %v581
  %v583 = vpop.f32.mrf.mxu0
  %v584 = vadd.f32 %v535, %v583
  %585 = vmatmul.bf16.gmra.mxu0 %v316
  %v586 = vpop.f32.mrf.mxu0
  %v587 = vadd.f32 %v538, %v586
  %v588 = vpop.f32.mrf.mxu0
  %v589 = vadd.f32 %v540, %v588
  %590 = vmatmul.bf16.gmra.mxu0 %v324
  %v591 = vpop.f32.mrf.mxu0
  %v592 = vadd.f32 %v543, %v591
  %v593 = vpop.f32.mrf.mxu0
  %v594 = vadd.f32 %v545, %v593
  %595 = vmatmul.bf16.gmra.mxu0 %v332
  %v596 = vpop.f32.mrf.mxu0
  %v597 = vadd.f32 %v548, %v596
  %v598 = vpop.f32.mrf.mxu0
  %v599 = vadd.f32 %v550, %v598
  %600 = vdwg.mxu0
  %601 = vmatpush.bf16.msra.mxu0 %v376
  %602 = vmatpush.bf16.msra.mxu0 %v375
  %603 = vmatpush.bf16.msra.mxu0 %v374
  %604 = vmatpush.bf16.msra.mxu0 %v373
  %605 = vmatpush.bf16.msra.mxu0 %v372
  %606 = vmatpush.bf16.msra.mxu0 %v371
  %607 = vmatpush.bf16.msra.mxu0 %v370
  %608 = vmatpush.bf16.msra.mxu0 %v369
  %609 = vmatmul.bf16.gmra.mxu0 %v277
  %v610 = vpop.f32.mrf.mxu0
  %v611 = vadd.f32 %v562, %v610
  %v612 = vpop.f32.mrf.mxu0
  %v613 = vadd.f32 %v564, %v612
  %614 = vmatmul.bf16.gmra.mxu0 %v285
  %v615 = vpop.f32.mrf.mxu0
  %v616 = vadd.f32 %v567, %v615
  %v617 = vpop.f32.mrf.mxu0
  %v618 = vadd.f32 %v569, %v617
  %619 = vmatmul.bf16.gmra.mxu0 %v293
  %v620 = vpop.f32.mrf.mxu0
  %v621 = vadd.f32 %v572, %v620
  %v622 = vpop.f32.mrf.mxu0
  %v623 = vadd.f32 %v574, %v622
  %624 = vmatmul.bf16.gmra.mxu0 %v301
  %v625 = vpop.f32.mrf.mxu0
  %v626 = vadd.f32 %v577, %v625
  %v627 = vpop.f32.mrf.mxu0
  %v628 = vadd.f32 %v579, %v627
  %629 = vmatmul.bf16.gmra.mxu0 %v309
  %v630 = vpop.f32.mrf.mxu0
  %v631 = vadd.f32 %v582, %v630
  %v632 = vpop.f32.mrf.mxu0
  %v633 = vadd.f32 %v584, %v632
  %634 = vmatmul.bf16.gmra.mxu0 %v317
  %v635 = vpop.f32.mrf.mxu0
  %v636 = vadd.f32 %v587, %v635
  %v637 = vpop.f32.mrf.mxu0
  %v638 = vadd.f32 %v589, %v637
  %639 = vmatmul.bf16.gmra.mxu0 %v325
  %v640 = vpop.f32.mrf.mxu0
  %v641 = vadd.f32 %v592, %v640
  %v642 = vpop.f32.mrf.mxu0
  %v643 = vadd.f32 %v594, %v642
  %644 = vmatmul.bf16.gmra.mxu0 %v333
  %v645 = vpop.f32.mrf.mxu0
  %v646 = vadd.f32 %v597, %v645
  %v647 = vpop.f32.mrf.mxu0
  %v648 = vadd.f32 %v599, %v647
  %649 = vdwg.mxu0
  %650 = vmatpush.bf16.msra.mxu0 %v384
  %651 = vmatpush.bf16.msra.mxu0 %v383
  %652 = vmatpush.bf16.msra.mxu0 %v382
  %653 = vmatpush.bf16.msra.mxu0 %v381
  %654 = vmatpush.bf16.msra.mxu0 %v380
  %655 = vmatpush.bf16.msra.mxu0 %v379
  %656 = vmatpush.bf16.msra.mxu0 %v378
  %657 = vmatpush.bf16.msra.mxu0 %v377
  %658 = vmatmul.bf16.gmra.mxu0 %v278
  %v659 = vpop.f32.mrf.mxu0
  %v660 = vadd.f32 %v611, %v659
  %v661 = vpop.f32.mrf.mxu0
  %v662 = vadd.f32 %v613, %v661
  %663 = vmatmul.bf16.gmra.mxu0 %v286
  %v664 = vpop.f32.mrf.mxu0
  %v665 = vadd.f32 %v616, %v664
  %v666 = vpop.f32.mrf.mxu0
  %v667 = vadd.f32 %v618, %v666
  %668 = vmatmul.bf16.gmra.mxu0 %v294
  %v669 = vpop.f32.mrf.mxu0
  %v670 = vadd.f32 %v621, %v669
  %v671 = vpop.f32.mrf.mxu0
  %v672 = vadd.f32 %v623, %v671
  %673 = vmatmul.bf16.gmra.mxu0 %v302
  %v674 = vpop.f32.mrf.mxu0
  %v675 = vadd.f32 %v626, %v674
  %v676 = vpop.f32.mrf.mxu0
  %v677 = vadd.f32 %v628, %v676
  %678 = vmatmul.bf16.gmra.mxu0 %v310
  %v679 = vpop.f32.mrf.mxu0
  %v680 = vadd.f32 %v631, %v679
  %v681 = vpop.f32.mrf.mxu0
  %v682 = vadd.f32 %v633, %v681
  %683 = vmatmul.bf16.gmra.mxu0 %v318
  %v684 = vpop.f32.mrf.mxu0
  %v685 = vadd.f32 %v636, %v684
  %v686 = vpop.f32.mrf.mxu0
  %v687 = vadd.f32 %v638, %v686
  %688 = vmatmul.bf16.gmra.mxu0 %v326
  %v689 = vpop.f32.mrf.mxu0
  %v690 = vadd.f32 %v641, %v689
  %v691 = vpop.f32.mrf.mxu0
  %v692 = vadd.f32 %v643, %v691
  %693 = vmatmul.bf16.gmra.mxu0 %v334
  %v694 = vpop.f32.mrf.mxu0
  %v695 = vadd.f32 %v646, %v694
  %v696 = vpop.f32.mrf.mxu0
  %v697 = vadd.f32 %v648, %v696
  %698 = vdwg.mxu0
  %699 = vmatpush.bf16.msra.mxu0 %v392
  %700 = vmatpush.bf16.msra.mxu0 %v391
  %701 = vmatpush.bf16.msra.mxu0 %v390
  %702 = vmatpush.bf16.msra.mxu0 %v389
  %703 = vmatpush.bf16.msra.mxu0 %v388
  %704 = vmatpush.bf16.msra.mxu0 %v387
  %705 = vmatpush.bf16.msra.mxu0 %v386
  %706 = vmatpush.bf16.msra.mxu0 %v385
  %707 = vmatmul.bf16.gmra.mxu0 %v279
  %v708 = vpop.f32.mrf.mxu0
  %v709 = vadd.f32 %v660, %v708
  %v710 = vpop.f32.mrf.mxu0
  %v711 = vadd.f32 %v662, %v710
  %712 = vmatmul.bf16.gmra.mxu0 %v287
  %v713 = vpop.f32.mrf.mxu0
  %v714 = vadd.f32 %v665, %v713
  %v715 = vpop.f32.mrf.mxu0
  %v716 = vadd.f32 %v667, %v715
  %717 = vmatmul.bf16.gmra.mxu0 %v295
  %v718 = vpop.f32.mrf.mxu0
  %v719 = vadd.f32 %v670, %v718
  %v720 = vpop.f32.mrf.mxu0
  %v721 = vadd.f32 %v672, %v720
  %722 = vmatmul.bf16.gmra.mxu0 %v303
  %v723 = vpop.f32.mrf.mxu0
  %v724 = vadd.f32 %v675, %v723
  %v725 = vpop.f32.mrf.mxu0
  %v726 = vadd.f32 %v677, %v725
  %727 = vmatmul.bf16.gmra.mxu0 %v311
  %v728 = vpop.f32.mrf.mxu0
  %v729 = vadd.f32 %v680, %v728
  %v730 = vpop.f32.mrf.mxu0
  %v731 = vadd.f32 %v682, %v730
  %732 = vmatmul.bf16.gmra.mxu0 %v319
  %v733 = vpop.f32.mrf.mxu0
  %v734 = vadd.f32 %v685, %v733
  %v735 = vpop.f32.mrf.mxu0
  %v736 = vadd.f32 %v687, %v735
  %737 = vmatmul.bf16.gmra.mxu0 %v327
  %v738 = vpop.f32.mrf.mxu0
  %v739 = vadd.f32 %v690, %v738
  %v740 = vpop.f32.mrf.mxu0
  %v741 = vadd.f32 %v692, %v740
  %742 = vmatmul.bf16.gmra.mxu0 %v335
  %v743 = vpop.f32.mrf.mxu0
  %v744 = vadd.f32 %v695, %v743
  %v745 = vpop.f32.mrf.mxu0
  %v746 = vadd.f32 %v697, %v745
  %747 = vdwg.mxu0
  %748 = vmatpush.bf16.msra.mxu0 %v400
  %749 = vmatpush.bf16.msra.mxu0 %v399
  %750 = vmatpush.bf16.msra.mxu0 %v398
  %751 = vmatpush.bf16.msra.mxu0 %v397
  %752 = vmatpush.bf16.msra.mxu0 %v396
  %753 = vmatpush.bf16.msra.mxu0 %v395
  %754 = vmatpush.bf16.msra.mxu0 %v394
  %755 = vmatpush.bf16.msra.mxu0 %v393
  %756 = vmatmul.bf16.gmra.mxu0 %v280
  %v757 = vpop.f32.mrf.mxu0
  %v758 = vadd.f32 %v709, %v757
  %v759 = vpop.f32.mrf.mxu0
  %v760 = vadd.f32 %v711, %v759
  %761 = vmatmul.bf16.gmra.mxu0 %v288
  %v762 = vpop.f32.mrf.mxu0
  %v763 = vadd.f32 %v714, %v762
  %v764 = vpop.f32.mrf.mxu0
  %v765 = vadd.f32 %v716, %v764
  %766 = vmatmul.bf16.gmra.mxu0 %v296
  %v767 = vpop.f32.mrf.mxu0
  %v768 = vadd.f32 %v719, %v767
  %v769 = vpop.f32.mrf.mxu0
  %v770 = vadd.f32 %v721, %v769
  %771 = vmatmul.bf16.gmra.mxu0 %v304
  %v772 = vpop.f32.mrf.mxu0
  %v773 = vadd.f32 %v724, %v772
  %v774 = vpop.f32.mrf.mxu0
  %v775 = vadd.f32 %v726, %v774
  %776 = vmatmul.bf16.gmra.mxu0 %v312
  %v777 = vpop.f32.mrf.mxu0
  %v778 = vadd.f32 %v729, %v777
  %v779 = vpop.f32.mrf.mxu0
  %v780 = vadd.f32 %v731, %v779
  %781 = vmatmul.bf16.gmra.mxu0 %v320
  %v782 = vpop.f32.mrf.mxu0
  %v783 = vadd.f32 %v734, %v782
  %v784 = vpop.f32.mrf.mxu0
  %v785 = vadd.f32 %v736, %v784
  %786 = vmatmul.bf16.gmra.mxu0 %v328
  %v787 = vpop.f32.mrf.mxu0
  %v788 = vadd.f32 %v739, %v787
  %v789 = vpop.f32.mrf.mxu0
  %v790 = vadd.f32 %v741, %v789
  %791 = vmatmul.bf16.gmra.mxu0 %v336
  %v792 = vpop.f32.mrf.mxu0
  %v793 = vadd.f32 %v744, %v792
  %v794 = vpop.f32.mrf.mxu0
  %v795 = vadd.f32 %v746, %v794
  %796 = vdwg.mxu0
  %v797 = vld [vmem:[%s3] sm:$0x3]
  %vm798 = vcmask 261120
  %v799 = vsel %vm798, %v758, 0.0
  %v800 = vsel %vm798, %v760, 0.0
  %v801 = vadd.f32 %v799, %v800
  %v802 = vsel %vm798, %v763, 0.0
  %v803 = vadd.f32 %v801, %v802
  %v804 = vsel %vm798, %v765, 0.0
  %v805 = vadd.f32 %v803, %v804
  %v806 = vsel %vm798, %v768, 0.0
  %v807 = vadd.f32 %v805, %v806
  %v808 = vsel %vm798, %v770, 0.0
  %v809 = vadd.f32 %v807, %v808
  %v810 = vsel %vm798, %v773, 0.0
  %v811 = vadd.f32 %v809, %v810
  %v812 = vsel %vm798, %v775, 0.0
  %v813 = vadd.f32 %v811, %v812
  %v814 = vsel %vm798, %v778, 0.0
  %v815 = vadd.f32 %v813, %v814
  %v816 = vsel %vm798, %v780, 0.0
  %v817 = vadd.f32 %v815, %v816
  %v818 = vsel %vm798, %v783, 0.0
  %v819 = vadd.f32 %v817, %v818
  %v820 = vsel %vm798, %v785, 0.0
  %v821 = vadd.f32 %v819, %v820
  %v822 = vsel %vm798, %v788, 0.0
  %v823 = vadd.f32 %v821, %v822
  %v824 = vsel %vm798, %v790, 0.0
  %v825 = vadd.f32 %v823, %v824
  %v826 = vsel %vm798, %v793, 0.0
  %v827 = vadd.f32 %v825, %v826
  %v828 = vsel %vm798, %v795, 0.0
  %v829 = vadd.f32 %v827, %v828
  %v830 = vrot.slane %v829, 4
  %v831 = vadd.f32 %v829, %v830
  %v832 = vrot.slane %v831, 2
  %v833 = vadd.f32 %v831, %v832
  %v834 = vrot.slane %v833, 1
  %v835 = vadd.f32 %v833, %v834
  %v836 = vrcp.pop 128.0
  %v837 = vmul.f32 128.0, %v836
  %v838 = vsub.f32 1.0, %v837
  %v839 = vmul.f32 %v836, %v838
  %v840 = vadd.f32 %v836, %v839
  %vm841 = vweird.f32 %v836
  %v842 = vsel %vm841, %v836, %v840
  %v843 = vmul.f32 %v835, %v842
  %v844 = vsub.f32 %v758, %v843
  %v845 = vsub.f32 %v760, %v843
  %v846 = vsub.f32 %v763, %v843
  %v847 = vsub.f32 %v765, %v843
  %v848 = vsub.f32 %v768, %v843
  %v849 = vsub.f32 %v770, %v843
  %v850 = vsub.f32 %v773, %v843
  %v851 = vsub.f32 %v775, %v843
  %v852 = vsub.f32 %v778, %v843
  %v853 = vsub.f32 %v780, %v843
  %v854 = vsub.f32 %v783, %v843
  %v855 = vsub.f32 %v785, %v843
  %v856 = vsub.f32 %v788, %v843
  %v857 = vsub.f32 %v790, %v843
  %v858 = vsub.f32 %v793, %v843
  %v859 = vsub.f32 %v795, %v843
  %v860 = vmul.f32 %v844, %v844
  %v861 = vmul.f32 %v845, %v845
  %v862 = vmul.f32 %v846, %v846
  %v863 = vmul.f32 %v847, %v847
  %v864 = vmul.f32 %v848, %v848
  %v865 = vmul.f32 %v849, %v849
  %v866 = vmul.f32 %v850, %v850
  %v867 = vmul.f32 %v851, %v851
  %v868 = vmul.f32 %v852, %v852
  %v869 = vmul.f32 %v853, %v853
  %v870 = vmul.f32 %v854, %v854
  %v871 = vmul.f32 %v855, %v855
  %v872 = vmul.f32 %v856, %v856
  %v873 = vmul.f32 %v857, %v857
  %v874 = vmul.f32 %v858, %v858
  %v875 = vmul.f32 %v859, %v859
  %v876 = vsel %vm798, %v860, 0.0
  %v877 = vsel %vm798, %v861, 0.0
  %v878 = vadd.f32 %v876, %v877
  %v879 = vsel %vm798, %v862, 0.0
  %v880 = vadd.f32 %v878, %v879
  %v881 = vsel %vm798, %v863, 0.0
  %v882 = vadd.f32 %v880, %v881
  %v883 = vsel %vm798, %v864, 0.0
  %v884 = vadd.f32 %v882, %v883
  %v885 = vsel %vm798, %v865, 0.0
  %v886 = vadd.f32 %v884, %v885
  %v887 = vsel %vm798, %v866, 0.0
  %v888 = vadd.f32 %v886, %v887
  %v889 = vsel %vm798, %v867, 0.0
  %v890 = vadd.f32 %v888, %v889
  %v891 = vsel %vm798, %v868, 0.0
  %v892 = vadd.f32 %v890, %v891
  %v893 = vsel %vm798, %v869, 0.0
  %v894 = vadd.f32 %v892, %v893
  %v895 = vsel %vm798, %v870, 0.0
  %v896 = vadd.f32 %v894, %v895
  %v897 = vsel %vm798, %v871, 0.0
  %v898 = vadd.f32 %v896, %v897
  %v899 = vsel %vm798, %v872, 0.0
  %v900 = vadd.f32 %v898, %v899
  %v901 = vsel %vm798, %v873, 0.0
  %v902 = vadd.f32 %v900, %v901
  %v903 = vsel %vm798, %v874, 0.0
  %v904 = vadd.f32 %v902, %v903
  %v905 = vsel %vm798, %v875, 0.0
  %v906 = vadd.f32 %v904, %v905
  %v907 = vrot.slane %v906, 4
  %v908 = vadd.f32 %v906, %v907
  %v909 = vrot.slane %v908, 2
  %v910 = vadd.f32 %v908, %v909
  %v911 = vrot.slane %v910, 1
  %v912 = vadd.f32 %v910, %v911
  %v913 = vmul.f32 %v912, %v842
  %v914 = vadd.f32 %v913, 1e-05
  %v915 = vrsqrt.pop %v914
  %v916 = vmul.f32 %v915, %v914
  %v917 = vmul.f32 %v916, %v915
  %v918 = vmul.f32 0.5, %v917
  %v919 = vsub.f32 1.5, %v918
  %v920 = vmul.f32 %v915, %v919
  %vm921 = vweird.f32 %v914
  %vm922 = vweird.f32 %v915
  %vm923 = vmor %vm921, %vm922
  %v924 = vsel %vm923, %v915, %v920
  %v925 = vmul.f32 %v844, %v924
  %v926 = vmul.f32 %v845, %v924
  %v927 = vmul.f32 %v846, %v924
  %v928 = vmul.f32 %v847, %v924
  %v929 = vmul.f32 %v848, %v924
  %v930 = vmul.f32 %v849, %v924
  %v931 = vmul.f32 %v850, %v924
  %v932 = vmul.f32 %v851, %v924
  %v933 = vmul.f32 %v852, %v924
  %v934 = vmul.f32 %v853, %v924
  %v935 = vmul.f32 %v854, %v924
  %v936 = vmul.f32 %v855, %v924
  %v937 = vmul.f32 %v856, %v924
  %v938 = vmul.f32 %v857, %v924
  %v939 = vmul.f32 %v858, %v924
  %v940 = vmul.f32 %v859, %v924
  %v941 = vperm.slane %v797, 0
  %v942 = vmul.f32 %v925, %v941
  %v943 = vmul.f32 %v926, %v941
  %v944 = vmul.f32 %v927, %v941
  %v945 = vmul.f32 %v928, %v941
  %v946 = vmul.f32 %v929, %v941
  %v947 = vmul.f32 %v930, %v941
  %v948 = vmul.f32 %v931, %v941
  %v949 = vmul.f32 %v932, %v941
  %v950 = vmul.f32 %v933, %v941
  %v951 = vmul.f32 %v934, %v941
  %v952 = vmul.f32 %v935, %v941
  %v953 = vmul.f32 %v936, %v941
  %v954 = vmul.f32 %v937, %v941
  %v955 = vmul.f32 %v938, %v941
  %v956 = vmul.f32 %v939, %v941
  %v957 = vmul.f32 %v940, %v941
  %v958 = vperm.slane %v797, 1
  %v959 = vadd.f32 %v942, %v958
  %v960 = vadd.f32 %v943, %v958
  %v961 = vadd.f32 %v944, %v958
  %v962 = vadd.f32 %v945, %v958
  %v963 = vadd.f32 %v946, %v958
  %v964 = vadd.f32 %v947, %v958
  %v965 = vadd.f32 %v948, %v958
  %v966 = vadd.f32 %v949, %v958
  %v967 = vadd.f32 %v950, %v958
  %v968 = vadd.f32 %v951, %v958
  %v969 = vadd.f32 %v952, %v958
  %v970 = vadd.f32 %v953, %v958
  %v971 = vadd.f32 %v954, %v958
  %v972 = vadd.f32 %v955, %v958
  %v973 = vadd.f32 %v956, %v958
  %v974 = vadd.f32 %v957, %v958
  %v975 = vmax.f32 %v959, 0.0
  %v976 = vmax.f32 %v960, 0.0
  %v977 = vmax.f32 %v961, 0.0
  %v978 = vmax.f32 %v962, 0.0
  %v979 = vmax.f32 %v963, 0.0
  %v980 = vmax.f32 %v964, 0.0
  %v981 = vmax.f32 %v965, 0.0
  %v982 = vmax.f32 %v966, 0.0
  %v983 = vmax.f32 %v967, 0.0
  %v984 = vmax.f32 %v968, 0.0
  %v985 = vmax.f32 %v969, 0.0
  %v986 = vmax.f32 %v970, 0.0
  %v987 = vmax.f32 %v971, 0.0
  %v988 = vmax.f32 %v972, 0.0
  %v989 = vmax.f32 %v973, 0.0
  %v990 = vmax.f32 %v974, 0.0
  %991 = vst.msk [vmem:[%s4] sm:$0xff] %vm798, %v975
  %992 = vst.msk [vmem:[%s4 + $0x8] sm:$0xff] %vm798, %v976
  %993 = vst.msk [vmem:[%s4 + $0x10] sm:$0xff] %vm798, %v977
  %994 = vst.msk [vmem:[%s4 + $0x18] sm:$0xff] %vm798, %v978
  %995 = vst.msk [vmem:[%s4 + $0x20] sm:$0xff] %vm798, %v979
  %996 = vst.msk [vmem:[%s4 + $0x28] sm:$0xff] %vm798, %v980
  %997 = vst.msk [vmem:[%s4 + $0x30] sm:$0xff] %vm798, %v981
  %998 = vst.msk [vmem:[%s4 + $0x38] sm:$0xff] %vm798, %v982
  %999 = vst.msk [vmem:[%s4 + $0x40] sm:$0xff] %vm798, %v983
  %1000 = vst.msk [vmem:[%s4 + $0x48] sm:$0xff] %vm798, %v984
  %1001 = vst.msk [vmem:[%s4 + $0x50] sm:$0xff] %vm798, %v985
  %1002 = vst.msk [vmem:[%s4 + $0x58] sm:$0xff] %vm798, %v986
  %1003 = vst.msk [vmem:[%s4 + $0x60] sm:$0xff] %vm798, %v987
  %1004 = vst.msk [vmem:[%s4 + $0x68] sm:$0xff] %vm798, %v988
  %1005 = vst.msk [vmem:[%s4 + $0x70] sm:$0xff] %vm798, %v989
  %1006 = vst.msk [vmem:[%s4 + $0x78] sm:$0xff] %vm798, %v990
  // Predicated region
  $region18: #{glo_forward.5} parent=0 // pred_check
    _
  $region19: #{glo_forward.5} parent=0 // pred_check_branch
    %1008 = sbr.rel (0) target = $region21
  $region20: #{glo_forward.5} parent=0 // pred_region
    _
  $region21: #{glo_forward.5} parent=0 // pred_fallthru
    _
  // Predicated region
  $region22: #{glo_forward.5} parent=0 // pred_check
    _
  $region23: #{glo_forward.5} parent=0 // pred_check_branch
    %1010 = sbr.rel (0) target = $region25
  $region24: #{glo_forward.5} parent=0 // pred_region
    _
  $region25: #{glo_forward.5} parent=0 // pred_fallthru
    _

// kernel: glo_forward.6
$region0: #{glo_forward.6}
  #allocation0 [shape = 'u32[]', space=smem, size = 0x4, offset = 0x4, fixed_abs, tag = 'smem constant byte address 0x4 - core index']
  #allocation1 [shape = 'u32[72,128]{1,0:T(1,128)}', space=vmem, size = 0x9000, scoped, tag = 'internal scratch']
  %s0 = inlined_call_operand.vmem [shape: f32[512,512], index: 0, kind: input, shape index: {}]
  %s1 = inlined_call_operand.vmem [shape: f32[512,16], index: 1, kind: input, shape index: {}]
  %s2 = inlined_call_operand.vmem [shape: f32[1,16], index: 2, kind: input, shape index: {}]
  %s3 = inlined_call_operand.vmem [shape: f32[2,16], index: 3, kind: input, shape index: {}]
  %s4 = inlined_call_operand.vmem [shape: f32[512,16], index: 4, kind: output, shape index: {}]
  %s5 = sld [smem:[#allocation0]]
  $region26: #{glo_forward.6} parent=0
    _
  %s7 = ssub.s32 1, %s5
  %s8 = scalar_select 0, %s7, %s5
  // Predicated region
  $region2: #{glo_forward.6} parent=0 // pred_check
    _
  $region3: #{glo_forward.6} parent=0 // pred_check_branch
    %10 = sbr.rel (0) target = $region5
  $region4: #{glo_forward.6} parent=0 // pred_region
    _
  $region5: #{glo_forward.6} parent=0 // pred_fallthru
    _
  // Predicated region
  $region6: #{glo_forward.6} parent=0 // pred_check
    _
  $region7: #{glo_forward.6} parent=0 // pred_check_branch
    %12 = sbr.rel (0) target = $region9
  $region8: #{glo_forward.6} parent=0 // pred_region
    _
  $region9: #{glo_forward.6} parent=0 // pred_fallthru
    _
  // Predicated region
  $region10: #{glo_forward.6} parent=0 // pred_check
    _
  $region11: #{glo_forward.6} parent=0 // pred_check_branch
    %14 = sbr.rel (0) target = $region13
  $region12: #{glo_forward.6} parent=0 // pred_region
    _
  $region13: #{glo_forward.6} parent=0 // pred_fallthru
    _
  // Predicated region
  $region14: #{glo_forward.6} parent=0 // pred_check
    _
  $region15: #{glo_forward.6} parent=0 // pred_check_branch
    %16 = sbr.rel (0) target = $region17
  $region16: #{glo_forward.6} parent=0 // pred_region
    _
  $region17: #{glo_forward.6} parent=0 // pred_fallthru
    _
  %v17 = vld [vmem:[%s0] sm:$0xff]
  %v18 = vld [vmem:[%s0 + $0x8] sm:$0xff]
  %v19 = vld [vmem:[%s0 + $0x10] sm:$0xff]
  %v20 = vld [vmem:[%s0 + $0x18] sm:$0xff]
  %v21 = vld [vmem:[%s0 + $0x20] sm:$0xff]
  %v22 = vld [vmem:[%s0 + $0x28] sm:$0xff]
  %v23 = vld [vmem:[%s0 + $0x30] sm:$0xff]
  %v24 = vld [vmem:[%s0 + $0x38] sm:$0xff]
  %v25 = vld [vmem:[%s0 + $0x40] sm:$0xff]
  %v26 = vld [vmem:[%s0 + $0x48] sm:$0xff]
  %v27 = vld [vmem:[%s0 + $0x50] sm:$0xff]
  %v28 = vld [vmem:[%s0 + $0x58] sm:$0xff]
  %v29 = vld [vmem:[%s0 + $0x60] sm:$0xff]
  %v30 = vld [vmem:[%s0 + $0x68] sm:$0xff]
  %v31 = vld [vmem:[%s0 + $0x70] sm:$0xff]
  %v32 = vld [vmem:[%s0 + $0x78] sm:$0xff]
  %v33 = vld [vmem:[%s0 + $0x80] sm:$0xff]
  %v34 = vld [vmem:[%s0 + $0x88] sm:$0xff]
  %v35 = vld [vmem:[%s0 + $0x90] sm:$0xff]
  %v36 = vld [vmem:[%s0 + $0x98] sm:$0xff]
  %v37 = vld [vmem:[%s0 + $0xa0] sm:$0xff]
  %v38 = vld [vmem:[%s0 + $0xa8] sm:$0xff]
  %v39 = vld [vmem:[%s0 + $0xb0] sm:$0xff]
  %v40 = vld [vmem:[%s0 + $0xb8] sm:$0xff]
  %v41 = vld [vmem:[%s0 + $0xc0] sm:$0xff]
  %v42 = vld [vmem:[%s0 + $0xc8] sm:$0xff]
  %v43 = vld [vmem:[%s0 + $0xd0] sm:$0xff]
  %v44 = vld [vmem:[%s0 + $0xd8] sm:$0xff]
  %v45 = vld [vmem:[%s0 + $0xe0] sm:$0xff]
  %v46 = vld [vmem:[%s0 + $0xe8] sm:$0xff]
  %v47 = vld [vmem:[%s0 + $0xf0] sm:$0xff]
  %v48 = vld [vmem:[%s0 + $0xf8] sm:$0xff]
  %v49 = vld [vmem:[%s0 + $0x100] sm:$0xff]
  %v50 = vld [vmem:[%s0 + $0x108] sm:$0xff]
  %v51 = vld [vmem:[%s0 + $0x110] sm:$0xff]
  %v52 = vld [vmem:[%s0 + $0x118] sm:$0xff]
  %v53 = vld [vmem:[%s0 + $0x120] sm:$0xff]
  %v54 = vld [vmem:[%s0 + $0x128] sm:$0xff]
  %v55 = vld [vmem:[%s0 + $0x130] sm:$0xff]
  %v56 = vld [vmem:[%s0 + $0x138] sm:$0xff]
  %v57 = vld [vmem:[%s0 + $0x140] sm:$0xff]
  %v58 = vld [vmem:[%s0 + $0x148] sm:$0xff]
  %v59 = vld [vmem:[%s0 + $0x150] sm:$0xff]
  %v60 = vld [vmem:[%s0 + $0x158] sm:$0xff]
  %v61 = vld [vmem:[%s0 + $0x160] sm:$0xff]
  %v62 = vld [vmem:[%s0 + $0x168] sm:$0xff]
  %v63 = vld [vmem:[%s0 + $0x170] sm:$0xff]
  %v64 = vld [vmem:[%s0 + $0x178] sm:$0xff]
  %v65 = vld [vmem:[%s0 + $0x180] sm:$0xff]
  %v66 = vld [vmem:[%s0 + $0x188] sm:$0xff]
  %v67 = vld [vmem:[%s0 + $0x190] sm:$0xff]
  %v68 = vld [vmem:[%s0 + $0x198] sm:$0xff]
  %v69 = vld [vmem:[%s0 + $0x1a0] sm:$0xff]
  %v70 = vld [vmem:[%s0 + $0x1a8] sm:$0xff]
  %v71 = vld [vmem:[%s0 + $0x1b0] sm:$0xff]
  %v72 = vld [vmem:[%s0 + $0x1b8] sm:$0xff]
  %v73 = vld [vmem:[%s0 + $0x1c0] sm:$0xff]
  %v74 = vld [vmem:[%s0 + $0x1c8] sm:$0xff]
  %v75 = vld [vmem:[%s0 + $0x1d0] sm:$0xff]
  %v76 = vld [vmem:[%s0 + $0x1d8] sm:$0xff]
  %v77 = vld [vmem:[%s0 + $0x1e0] sm:$0xff]
  %v78 = vld [vmem:[%s0 + $0x1e8] sm:$0xff]
  %v79 = vld [vmem:[%s0 + $0x1f0] sm:$0xff]
  %v80 = vld [vmem:[%s0 + $0x1f8] sm:$0xff]
  %v81 = vld [vmem:[%s0 + $0x200] sm:$0xff]
  %v82 = vld [vmem:[%s0 + $0x208] sm:$0xff]
  %v83 = vld [vmem:[%s0 + $0x210] sm:$0xff]
  %v84 = vld [vmem:[%s0 + $0x218] sm:$0xff]
  %v85 = vld [vmem:[%s0 + $0x220] sm:$0xff]
  %v86 = vld [vmem:[%s0 + $0x228] sm:$0xff]
  %v87 = vld [vmem:[%s0 + $0x230] sm:$0xff]
  %v88 = vld [vmem:[%s0 + $0x238] sm:$0xff]
  %v89 = vld [vmem:[%s0 + $0x240] sm:$0xff]
  %v90 = vld [vmem:[%s0 + $0x248] sm:$0xff]
  %v91 = vld [vmem:[%s0 + $0x250] sm:$0xff]
  %v92 = vld [vmem:[%s0 + $0x258] sm:$0xff]
  %v93 = vld [vmem:[%s0 + $0x260] sm:$0xff]
  %v94 = vld [vmem:[%s0 + $0x268] sm:$0xff]
  %v95 = vld [vmem:[%s0 + $0x270] sm:$0xff]
  %v96 = vld [vmem:[%s0 + $0x278] sm:$0xff]
  %v97 = vld [vmem:[%s0 + $0x280] sm:$0xff]
  %v98 = vld [vmem:[%s0 + $0x288] sm:$0xff]
  %v99 = vld [vmem:[%s0 + $0x290] sm:$0xff]
  %v100 = vld [vmem:[%s0 + $0x298] sm:$0xff]
  %v101 = vld [vmem:[%s0 + $0x2a0] sm:$0xff]
  %v102 = vld [vmem:[%s0 + $0x2a8] sm:$0xff]
  %v103 = vld [vmem:[%s0 + $0x2b0] sm:$0xff]
  %v104 = vld [vmem:[%s0 + $0x2b8] sm:$0xff]
  %v105 = vld [vmem:[%s0 + $0x2c0] sm:$0xff]
  %v106 = vld [vmem:[%s0 + $0x2c8] sm:$0xff]
  %v107 = vld [vmem:[%s0 + $0x2d0] sm:$0xff]
  %v108 = vld [vmem:[%s0 + $0x2d8] sm:$0xff]
  %v109 = vld [vmem:[%s0 + $0x2e0] sm:$0xff]
  %v110 = vld [vmem:[%s0 + $0x2e8] sm:$0xff]
  %v111 = vld [vmem:[%s0 + $0x2f0] sm:$0xff]
  %v112 = vld [vmem:[%s0 + $0x2f8] sm:$0xff]
  %v113 = vld [vmem:[%s0 + $0x300] sm:$0xff]
  %v114 = vld [vmem:[%s0 + $0x308] sm:$0xff]
  %v115 = vld [vmem:[%s0 + $0x310] sm:$0xff]
  %v116 = vld [vmem:[%s0 + $0x318] sm:$0xff]
  %v117 = vld [vmem:[%s0 + $0x320] sm:$0xff]
  %v118 = vld [vmem:[%s0 + $0x328] sm:$0xff]
  %v119 = vld [vmem:[%s0 + $0x330] sm:$0xff]
  %v120 = vld [vmem:[%s0 + $0x338] sm:$0xff]
  %v121 = vld [vmem:[%s0 + $0x340] sm:$0xff]
  %v122 = vld [vmem:[%s0 + $0x348] sm:$0xff]
  %v123 = vld [vmem:[%s0 + $0x350] sm:$0xff]
  %v124 = vld [vmem:[%s0 + $0x358] sm:$0xff]
  %v125 = vld [vmem:[%s0 + $0x360] sm:$0xff]
  %v126 = vld [vmem:[%s0 + $0x368] sm:$0xff]
  %v127 = vld [vmem:[%s0 + $0x370] sm:$0xff]
  %v128 = vld [vmem:[%s0 + $0x378] sm:$0xff]
  %v129 = vld [vmem:[%s0 + $0x380] sm:$0xff]
  %v130 = vld [vmem:[%s0 + $0x388] sm:$0xff]
  %v131 = vld [vmem:[%s0 + $0x390] sm:$0xff]
  %v132 = vld [vmem:[%s0 + $0x398] sm:$0xff]
  %v133 = vld [vmem:[%s0 + $0x3a0] sm:$0xff]
  %v134 = vld [vmem:[%s0 + $0x3a8] sm:$0xff]
  %v135 = vld [vmem:[%s0 + $0x3b0] sm:$0xff]
  %v136 = vld [vmem:[%s0 + $0x3b8] sm:$0xff]
  %v137 = vld [vmem:[%s0 + $0x3c0] sm:$0xff]
  %v138 = vld [vmem:[%s0 + $0x3c8] sm:$0xff]
  %v139 = vld [vmem:[%s0 + $0x3d0] sm:$0xff]
  %v140 = vld [vmem:[%s0 + $0x3d8] sm:$0xff]
  %v141 = vld [vmem:[%s0 + $0x3e0] sm:$0xff]
  %v142 = vld [vmem:[%s0 + $0x3e8] sm:$0xff]
  %v143 = vld [vmem:[%s0 + $0x3f0] sm:$0xff]
  %v144 = vld [vmem:[%s0 + $0x3f8] sm:$0xff]
  %v145 = vld [vmem:[%s0 + $0x400] sm:$0xff]
  %v146 = vld [vmem:[%s0 + $0x408] sm:$0xff]
  %v147 = vld [vmem:[%s0 + $0x410] sm:$0xff]
  %v148 = vld [vmem:[%s0 + $0x418] sm:$0xff]
  %v149 = vld [vmem:[%s0 + $0x420] sm:$0xff]
  %v150 = vld [vmem:[%s0 + $0x428] sm:$0xff]
  %v151 = vld [vmem:[%s0 + $0x430] sm:$0xff]
  %v152 = vld [vmem:[%s0 + $0x438] sm:$0xff]
  %v153 = vld [vmem:[%s0 + $0x440] sm:$0xff]
  %v154 = vld [vmem:[%s0 + $0x448] sm:$0xff]
  %v155 = vld [vmem:[%s0 + $0x450] sm:$0xff]
  %v156 = vld [vmem:[%s0 + $0x458] sm:$0xff]
  %v157 = vld [vmem:[%s0 + $0x460] sm:$0xff]
  %v158 = vld [vmem:[%s0 + $0x468] sm:$0xff]
  %v159 = vld [vmem:[%s0 + $0x470] sm:$0xff]
  %v160 = vld [vmem:[%s0 + $0x478] sm:$0xff]
  %v161 = vld [vmem:[%s0 + $0x480] sm:$0xff]
  %v162 = vld [vmem:[%s0 + $0x488] sm:$0xff]
  %v163 = vld [vmem:[%s0 + $0x490] sm:$0xff]
  %v164 = vld [vmem:[%s0 + $0x498] sm:$0xff]
  %v165 = vld [vmem:[%s0 + $0x4a0] sm:$0xff]
  %v166 = vld [vmem:[%s0 + $0x4a8] sm:$0xff]
  %v167 = vld [vmem:[%s0 + $0x4b0] sm:$0xff]
  %v168 = vld [vmem:[%s0 + $0x4b8] sm:$0xff]
  %v169 = vld [vmem:[%s0 + $0x4c0] sm:$0xff]
  %v170 = vld [vmem:[%s0 + $0x4c8] sm:$0xff]
  %v171 = vld [vmem:[%s0 + $0x4d0] sm:$0xff]
  %v172 = vld [vmem:[%s0 + $0x4d8] sm:$0xff]
  %v173 = vld [vmem:[%s0 + $0x4e0] sm:$0xff]
  %v174 = vld [vmem:[%s0 + $0x4e8] sm:$0xff]
  %v175 = vld [vmem:[%s0 + $0x4f0] sm:$0xff]
  %v176 = vld [vmem:[%s0 + $0x4f8] sm:$0xff]
  %v177 = vld [vmem:[%s0 + $0x500] sm:$0xff]
  %v178 = vld [vmem:[%s0 + $0x508] sm:$0xff]
  %v179 = vld [vmem:[%s0 + $0x510] sm:$0xff]
  %v180 = vld [vmem:[%s0 + $0x518] sm:$0xff]
  %v181 = vld [vmem:[%s0 + $0x520] sm:$0xff]
  %v182 = vld [vmem:[%s0 + $0x528] sm:$0xff]
  %v183 = vld [vmem:[%s0 + $0x530] sm:$0xff]
  %v184 = vld [vmem:[%s0 + $0x538] sm:$0xff]
  %v185 = vld [vmem:[%s0 + $0x540] sm:$0xff]
  %v186 = vld [vmem:[%s0 + $0x548] sm:$0xff]
  %v187 = vld [vmem:[%s0 + $0x550] sm:$0xff]
  %v188 = vld [vmem:[%s0 + $0x558] sm:$0xff]
  %v189 = vld [vmem:[%s0 + $0x560] sm:$0xff]
  %v190 = vld [vmem:[%s0 + $0x568] sm:$0xff]
  %v191 = vld [vmem:[%s0 + $0x570] sm:$0xff]
  %v192 = vld [vmem:[%s0 + $0x578] sm:$0xff]
  %v193 = vld [vmem:[%s0 + $0x580] sm:$0xff]
  %v194 = vld [vmem:[%s0 + $0x588] sm:$0xff]
  %v195 = vld [vmem:[%s0 + $0x590] sm:$0xff]
  %v196 = vld [vmem:[%s0 + $0x598] sm:$0xff]
  %v197 = vld [vmem:[%s0 + $0x5a0] sm:$0xff]
  %v198 = vld [vmem:[%s0 + $0x5a8] sm:$0xff]
  %v199 = vld [vmem:[%s0 + $0x5b0] sm:$0xff]
  %v200 = vld [vmem:[%s0 + $0x5b8] sm:$0xff]
  %v201 = vld [vmem:[%s0 + $0x5c0] sm:$0xff]
  %v202 = vld [vmem:[%s0 + $0x5c8] sm:$0xff]
  %v203 = vld [vmem:[%s0 + $0x5d0] sm:$0xff]
  %v204 = vld [vmem:[%s0 + $0x5d8] sm:$0xff]
  %v205 = vld [vmem:[%s0 + $0x5e0] sm:$0xff]
  %v206 = vld [vmem:[%s0 + $0x5e8] sm:$0xff]
  %v207 = vld [vmem:[%s0 + $0x5f0] sm:$0xff]
  %v208 = vld [vmem:[%s0 + $0x5f8] sm:$0xff]
  %v209 = vld [vmem:[%s0 + $0x600] sm:$0xff]
  %v210 = vld [vmem:[%s0 + $0x608] sm:$0xff]
  %v211 = vld [vmem:[%s0 + $0x610] sm:$0xff]
  %v212 = vld [vmem:[%s0 + $0x618] sm:$0xff]
  %v213 = vld [vmem:[%s0 + $0x620] sm:$0xff]
  %v214 = vld [vmem:[%s0 + $0x628] sm:$0xff]
  %v215 = vld [vmem:[%s0 + $0x630] sm:$0xff]
  %v216 = vld [vmem:[%s0 + $0x638] sm:$0xff]
  %v217 = vld [vmem:[%s0 + $0x640] sm:$0xff]
  %v218 = vld [vmem:[%s0 + $0x648] sm:$0xff]
  %v219 = vld [vmem:[%s0 + $0x650] sm:$0xff]
  %v220 = vld [vmem:[%s0 + $0x658] sm:$0xff]
  %v221 = vld [vmem:[%s0 + $0x660] sm:$0xff]
  %v222 = vld [vmem:[%s0 + $0x668] sm:$0xff]
  %v223 = vld [vmem:[%s0 + $0x670] sm:$0xff]
  %v224 = vld [vmem:[%s0 + $0x678] sm:$0xff]
  %v225 = vld [vmem:[%s0 + $0x680] sm:$0xff]
  %v226 = vld [vmem:[%s0 + $0x688] sm:$0xff]
  %v227 = vld [vmem:[%s0 + $0x690] sm:$0xff]
  %v228 = vld [vmem:[%s0 + $0x698] sm:$0xff]
  %v229 = vld [vmem:[%s0 + $0x6a0] sm:$0xff]
  %v230 = vld [vmem:[%s0 + $0x6a8] sm:$0xff]
  %v231 = vld [vmem:[%s0 + $0x6b0] sm:$0xff]
  %v232 = vld [vmem:[%s0 + $0x6b8] sm:$0xff]
  %v233 = vld [vmem:[%s0 + $0x6c0] sm:$0xff]
  %v234 = vld [vmem:[%s0 + $0x6c8] sm:$0xff]
  %v235 = vld [vmem:[%s0 + $0x6d0] sm:$0xff]
  %v236 = vld [vmem:[%s0 + $0x6d8] sm:$0xff]
  %v237 = vld [vmem:[%s0 + $0x6e0] sm:$0xff]
  %v238 = vld [vmem:[%s0 + $0x6e8] sm:$0xff]
  %v239 = vld [vmem:[%s0 + $0x6f0] sm:$0xff]
  %v240 = vld [vmem:[%s0 + $0x6f8] sm:$0xff]
  %v241 = vld [vmem:[%s0 + $0x700] sm:$0xff]
  %v242 = vld [vmem:[%s0 + $0x708] sm:$0xff]
  %v243 = vld [vmem:[%s0 + $0x710] sm:$0xff]
  %v244 = vld [vmem:[%s0 + $0x718] sm:$0xff]
  %v245 = vld [vmem:[%s0 + $0x720] sm:$0xff]
  %v246 = vld [vmem:[%s0 + $0x728] sm:$0xff]
  %v247 = vld [vmem:[%s0 + $0x730] sm:$0xff]
  %v248 = vld [vmem:[%s0 + $0x738] sm:$0xff]
  %v249 = vld [vmem:[%s0 + $0x740] sm:$0xff]
  %v250 = vld [vmem:[%s0 + $0x748] sm:$0xff]
  %v251 = vld [vmem:[%s0 + $0x750] sm:$0xff]
  %v252 = vld [vmem:[%s0 + $0x758] sm:$0xff]
  %v253 = vld [vmem:[%s0 + $0x760] sm:$0xff]
  %v254 = vld [vmem:[%s0 + $0x768] sm:$0xff]
  %v255 = vld [vmem:[%s0 + $0x770] sm:$0xff]
  %v256 = vld [vmem:[%s0 + $0x778] sm:$0xff]
  %v257 = vld [vmem:[%s0 + $0x780] sm:$0xff]
  %v258 = vld [vmem:[%s0 + $0x788] sm:$0xff]
  %v259 = vld [vmem:[%s0 + $0x790] sm:$0xff]
  %v260 = vld [vmem:[%s0 + $0x798] sm:$0xff]
  %v261 = vld [vmem:[%s0 + $0x7a0] sm:$0xff]
  %v262 = vld [vmem:[%s0 + $0x7a8] sm:$0xff]
  %v263 = vld [vmem:[%s0 + $0x7b0] sm:$0xff]
  %v264 = vld [vmem:[%s0 + $0x7b8] sm:$0xff]
  %v265 = vld [vmem:[%s0 + $0x7c0] sm:$0xff]
  %v266 = vld [vmem:[%s0 + $0x7c8] sm:$0xff]
  %v267 = vld [vmem:[%s0 + $0x7d0] sm:$0xff]
  %v268 = vld [vmem:[%s0 + $0x7d8] sm:$0xff]
  %v269 = vld [vmem:[%s0 + $0x7e0] sm:$0xff]
  %v270 = vld [vmem:[%s0 + $0x7e8] sm:$0xff]
  %v271 = vld [vmem:[%s0 + $0x7f0] sm:$0xff]
  %v272 = vld [vmem:[%s0 + $0x7f8] sm:$0xff]
  %v273 = vld [vmem:[%s1] sm:$0xff]
  %v274 = vld [vmem:[%s1 + $0x8] sm:$0xff]
  %v275 = vld [vmem:[%s1 + $0x10] sm:$0xff]
  %v276 = vld [vmem:[%s1 + $0x18] sm:$0xff]
  %v277 = vld [vmem:[%s1 + $0x20] sm:$0xff]
  %v278 = vld [vmem:[%s1 + $0x28] sm:$0xff]
  %v279 = vld [vmem:[%s1 + $0x30] sm:$0xff]
  %v280 = vld [vmem:[%s1 + $0x38] sm:$0xff]
  %v281 = vld [vmem:[%s1 + $0x40] sm:$0xff]
  %v282 = vld [vmem:[%s1 + $0x48] sm:$0xff]
  %v283 = vld [vmem:[%s1 + $0x50] sm:$0xff]
  %v284 = vld [vmem:[%s1 + $0x58] sm:$0xff]
  %v285 = vld [vmem:[%s1 + $0x60] sm:$0xff]
  %v286 = vld [vmem:[%s1 + $0x68] sm:$0xff]
  %v287 = vld [vmem:[%s1 + $0x70] sm:$0xff]
  %v288 = vld [vmem:[%s1 + $0x78] sm:$0xff]
  %v289 = vld [vmem:[%s1 + $0x80] sm:$0xff]
  %v290 = vld [vmem:[%s1 + $0x88] sm:$0xff]
  %v291 = vld [vmem:[%s1 + $0x90] sm:$0xff]
  %v292 = vld [vmem:[%s1 + $0x98] sm:$0xff]
  %v293 = vld [vmem:[%s1 + $0xa0] sm:$0xff]
  %v294 = vld [vmem:[%s1 + $0xa8] sm:$0xff]
  %v295 = vld [vmem:[%s1 + $0xb0] sm:$0xff]
  %v296 = vld [vmem:[%s1 + $0xb8] sm:$0xff]
  %v297 = vld [vmem:[%s1 + $0xc0] sm:$0xff]
  %v298 = vld [vmem:[%s1 + $0xc8] sm:$0xff]
  %v299 = vld [vmem:[%s1 + $0xd0] sm:$0xff]
  %v300 = vld [vmem:[%s1 + $0xd8] sm:$0xff]
  %v301 = vld [vmem:[%s1 + $0xe0] sm:$0xff]
  %v302 = vld [vmem:[%s1 + $0xe8] sm:$0xff]
  %v303 = vld [vmem:[%s1 + $0xf0] sm:$0xff]
  %v304 = vld [vmem:[%s1 + $0xf8] sm:$0xff]
  %v305 = vld [vmem:[%s1 + $0x100] sm:$0xff]
  %v306 = vld [vmem:[%s1 + $0x108] sm:$0xff]
  %v307 = vld [vmem:[%s1 + $0x110] sm:$0xff]
  %v308 = vld [vmem:[%s1 + $0x118] sm:$0xff]
  %v309 = vld [vmem:[%s1 + $0x120] sm:$0xff]
  %v310 = vld [vmem:[%s1 + $0x128] sm:$0xff]
  %v311 = vld [vmem:[%s1 + $0x130] sm:$0xff]
  %v312 = vld [vmem:[%s1 + $0x138] sm:$0xff]
  %v313 = vld [vmem:[%s1 + $0x140] sm:$0xff]
  %v314 = vld [vmem:[%s1 + $0x148] sm:$0xff]
  %v315 = vld [vmem:[%s1 + $0x150] sm:$0xff]
  %v316 = vld [vmem:[%s1 + $0x158] sm:$0xff]
  %v317 = vld [vmem:[%s1 + $0x160] sm:$0xff]
  %v318 = vld [vmem:[%s1 + $0x168] sm:$0xff]
  %v319 = vld [vmem:[%s1 + $0x170] sm:$0xff]
  %v320 = vld [vmem:[%s1 + $0x178] sm:$0xff]
  %v321 = vld [vmem:[%s1 + $0x180] sm:$0xff]
  %v322 = vld [vmem:[%s1 + $0x188] sm:$0xff]
  %v323 = vld [vmem:[%s1 + $0x190] sm:$0xff]
  %v324 = vld [vmem:[%s1 + $0x198] sm:$0xff]
  %v325 = vld [vmem:[%s1 + $0x1a0] sm:$0xff]
  %v326 = vld [vmem:[%s1 + $0x1a8] sm:$0xff]
  %v327 = vld [vmem:[%s1 + $0x1b0] sm:$0xff]
  %v328 = vld [vmem:[%s1 + $0x1b8] sm:$0xff]
  %v329 = vld [vmem:[%s1 + $0x1c0] sm:$0xff]
  %v330 = vld [vmem:[%s1 + $0x1c8] sm:$0xff]
  %v331 = vld [vmem:[%s1 + $0x1d0] sm:$0xff]
  %v332 = vld [vmem:[%s1 + $0x1d8] sm:$0xff]
  %v333 = vld [vmem:[%s1 + $0x1e0] sm:$0xff]
  %v334 = vld [vmem:[%s1 + $0x1e8] sm:$0xff]
  %v335 = vld [vmem:[%s1 + $0x1f0] sm:$0xff]
  %v336 = vld [vmem:[%s1 + $0x1f8] sm:$0xff]
  %v337 = vpack.c.bf16 %v21, %v17
  %v338 = vpack.c.bf16 %v22, %v18
  %v339 = vpack.c.bf16 %v23, %v19
  %v340 = vpack.c.bf16 %v24, %v20
  %v341 = vpack.c.bf16 %v29, %v25
  %v342 = vpack.c.bf16 %v30, %v26
  %v343 = vpack.c.bf16 %v31, %v27
  %v344 = vpack.c.bf16 %v32, %v28
  %v345 = vpack.c.bf16 %v37, %v33
  %v346 = vpack.c.bf16 %v38, %v34
  %v347 = vpack.c.bf16 %v39, %v35
  %v348 = vpack.c.bf16 %v40, %v36
  %v349 = vpack.c.bf16 %v45, %v41
  %v350 = vpack.c.bf16 %v46, %v42
  %v351 = vpack.c.bf16 %v47, %v43
  %v352 = vpack.c.bf16 %v48, %v44
  %v353 = vpack.c.bf16 %v53, %v49
  %v354 = vpack.c.bf16 %v54, %v50
  %v355 = vpack.c.bf16 %v55, %v51
  %v356 = vpack.c.bf16 %v56, %v52
  %v357 = vpack.c.bf16 %v61, %v57
  %v358 = vpack.c.bf16 %v62, %v58
  %v359 = vpack.c.bf16 %v63, %v59
  %v360 = vpack.c.bf16 %v64, %v60
  %v361 = vpack.c.bf16 %v69, %v65
  %v362 = vpack.c.bf16 %v70, %v66
  %v363 = vpack.c.bf16 %v71, %v67
  %v364 = vpack.c.bf16 %v72, %v68
  %v365 = vpack.c.bf16 %v77, %v73
  %v366 = vpack.c.bf16 %v78, %v74
  %v367 = vpack.c.bf16 %v79, %v75
  %v368 = vpack.c.bf16 %v80, %v76
  %v369 = vpack.c.bf16 %v85, %v81
  %v370 = vpack.c.bf16 %v86, %v82
  %v371 = vpack.c.bf16 %v87, %v83
  %v372 = vpack.c.bf16 %v88, %v84
  %v373 = vpack.c.bf16 %v93, %v89
  %v374 = vpack.c.bf16 %v94, %v90
  %v375 = vpack.c.bf16 %v95, %v91
  %v376 = vpack.c.bf16 %v96, %v92
  %v377 = vpack.c.bf16 %v101, %v97
  %v378 = vpack.c.bf16 %v102, %v98
  %v379 = vpack.c.bf16 %v103, %v99
  %v380 = vpack.c.bf16 %v104, %v100
  %v381 = vpack.c.bf16 %v109, %v105
  %v382 = vpack.c.bf16 %v110, %v106
  %v383 = vpack.c.bf16 %v111, %v107
  %v384 = vpack.c.bf16 %v112, %v108
  %v385 = vpack.c.bf16 %v117, %v113
  %v386 = vpack.c.bf16 %v118, %v114
  %v387 = vpack.c.bf16 %v119, %v115
  %v388 = vpack.c.bf16 %v120, %v116
  %v389 = vpack.c.bf16 %v125, %v121
  %v390 = vpack.c.bf16 %v126, %v122
  %v391 = vpack.c.bf16 %v127, %v123
  %v392 = vpack.c.bf16 %v128, %v124
  %v393 = vpack.c.bf16 %v133, %v129
  %v394 = vpack.c.bf16 %v134, %v130
  %v395 = vpack.c.bf16 %v135, %v131
  %v396 = vpack.c.bf16 %v136, %v132
  %v397 = vpack.c.bf16 %v141, %v137
  %v398 = vpack.c.bf16 %v142, %v138
  %v399 = vpack.c.bf16 %v143, %v139
  %v400 = vpack.c.bf16 %v144, %v140
  %v401 = vpack.c.bf16 %v149, %v145
  %v402 = vpack.c.bf16 %v150, %v146
  %v403 = vpack.c.bf16 %v151, %v147
  %v404 = vpack.c.bf16 %v152, %v148
  %v405 = vpack.c.bf16 %v157, %v153
  %v406 = vpack.c.bf16 %v158, %v154
  %v407 = vpack.c.bf16 %v159, %v155
  %v408 = vpack.c.bf16 %v160, %v156
  %v409 = vpack.c.bf16 %v165, %v161
  %v410 = vpack.c.bf16 %v166, %v162
  %v411 = vpack.c.bf16 %v167, %v163
  %v412 = vpack.c.bf16 %v168, %v164
  %v413 = vpack.c.bf16 %v173, %v169
  %v414 = vpack.c.bf16 %v174, %v170
  %v415 = vpack.c.bf16 %v175, %v171
  %v416 = vpack.c.bf16 %v176, %v172
  %v417 = vpack.c.bf16 %v181, %v177
  %v418 = vpack.c.bf16 %v182, %v178
  %v419 = vpack.c.bf16 %v183, %v179
  %v420 = vpack.c.bf16 %v184, %v180
  %v421 = vpack.c.bf16 %v189, %v185
  %v422 = vpack.c.bf16 %v190, %v186
  %v423 = vpack.c.bf16 %v191, %v187
  %v424 = vpack.c.bf16 %v192, %v188
  %v425 = vpack.c.bf16 %v197, %v193
  %v426 = vpack.c.bf16 %v198, %v194
  %v427 = vpack.c.bf16 %v199, %v195
  %v428 = vpack.c.bf16 %v200, %v196
  %v429 = vpack.c.bf16 %v205, %v201
  %v430 = vpack.c.bf16 %v206, %v202
  %v431 = vpack.c.bf16 %v207, %v203
  %v432 = vpack.c.bf16 %v208, %v204
  %v433 = vpack.c.bf16 %v213, %v209
  %v434 = vpack.c.bf16 %v214, %v210
  %v435 = vpack.c.bf16 %v215, %v211
  %v436 = vpack.c.bf16 %v216, %v212
  %v437 = vpack.c.bf16 %v221, %v217
  %v438 = vpack.c.bf16 %v222, %v218
  %v439 = vpack.c.bf16 %v223, %v219
  %v440 = vpack.c.bf16 %v224, %v220
  %v441 = vpack.c.bf16 %v229, %v225
  %v442 = vpack.c.bf16 %v230, %v226
  %v443 = vpack.c.bf16 %v231, %v227
  %v444 = vpack.c.bf16 %v232, %v228
  %v445 = vpack.c.bf16 %v237, %v233
  %v446 = vpack.c.bf16 %v238, %v234
  %v447 = vpack.c.bf16 %v239, %v235
  %v448 = vpack.c.bf16 %v240, %v236
  %v449 = vpack.c.bf16 %v245, %v241
  %v450 = vpack.c.bf16 %v246, %v242
  %v451 = vpack.c.bf16 %v247, %v243
  %v452 = vpack.c.bf16 %v248, %v244
  %v453 = vpack.c.bf16 %v253, %v249
  %v454 = vpack.c.bf16 %v254, %v250
  %v455 = vpack.c.bf16 %v255, %v251
  %v456 = vpack.c.bf16 %v256, %v252
  %v457 = vpack.c.bf16 %v261, %v257
  %v458 = vpack.c.bf16 %v262, %v258
  %v459 = vpack.c.bf16 %v263, %v259
  %v460 = vpack.c.bf16 %v264, %v260
  %v461 = vpack.c.bf16 %v269, %v265
  %v462 = vpack.c.bf16 %v270, %v266
  %v463 = vpack.c.bf16 %v271, %v267
  %v464 = vpack.c.bf16 %v272, %v268
  %v465 = vpack.c.bf16 %v274, %v273
  %v466 = vpack.c.bf16 %v276, %v275
  %v467 = vpack.c.bf16 %v278, %v277
  %v468 = vpack.c.bf16 %v280, %v279
  %v469 = vpack.c.bf16 %v282, %v281
  %v470 = vpack.c.bf16 %v284, %v283
  %v471 = vpack.c.bf16 %v286, %v285
  %v472 = vpack.c.bf16 %v288, %v287
  %v473 = vpack.c.bf16 %v290, %v289
  %v474 = vpack.c.bf16 %v292, %v291
  %v475 = vpack.c.bf16 %v294, %v293
  %v476 = vpack.c.bf16 %v296, %v295
  %v477 = vpack.c.bf16 %v298, %v297
  %v478 = vpack.c.bf16 %v300, %v299
  %v479 = vpack.c.bf16 %v302, %v301
  %v480 = vpack.c.bf16 %v304, %v303
  %v481 = vpack.c.bf16 %v306, %v305
  %v482 = vpack.c.bf16 %v308, %v307
  %v483 = vpack.c.bf16 %v310, %v309
  %v484 = vpack.c.bf16 %v312, %v311
  %v485 = vpack.c.bf16 %v314, %v313
  %v486 = vpack.c.bf16 %v316, %v315
  %v487 = vpack.c.bf16 %v318, %v317
  %v488 = vpack.c.bf16 %v320, %v319
  %v489 = vpack.c.bf16 %v322, %v321
  %v490 = vpack.c.bf16 %v324, %v323
  %v491 = vpack.c.bf16 %v326, %v325
  %v492 = vpack.c.bf16 %v328, %v327
  %v493 = vpack.c.bf16 %v330, %v329
  %v494 = vpack.c.bf16 %v332, %v331
  %v495 = vpack.c.bf16 %v334, %v333
  %v496 = vpack.c.bf16 %v336, %v335
  %v497 = vld [vmem:[%s2] sm:$0x1]
  %v499 = vperm.slane %v497, 0
  %501 = vmatpush.bf16.msra.mxu0 %v472
  %502 = vmatpush.bf16.msra.mxu0 %v471
  %503 = vmatpush.bf16.msra.mxu0 %v470
  %504 = vmatpush.bf16.msra.mxu0 %v469
  %505 = vmatpush.bf16.msra.mxu0 %v468
  %506 = vmatpush.bf16.msra.mxu0 %v467
  %507 = vmatpush.bf16.msra.mxu0 %v466
  %508 = vmatpush.bf16.msra.mxu0 %v465
  %509 = vmatmul.bf16.gmra.mxu0 %v337
  %v510 = vpop.f32.mrf.mxu0
  %v511 = vadd.f32 %v499, %v510
  %v512 = vpop.f32.mrf.mxu0
  %v513 = vadd.f32 %v499, %v512
  %514 = vmatmul.bf16.gmra.mxu0 %v341
  %v515 = vpop.f32.mrf.mxu0
  %v516 = vadd.f32 %v499, %v515
  %v517 = vpop.f32.mrf.mxu0
  %v518 = vadd.f32 %v499, %v517
  %519 = vmatmul.bf16.gmra.mxu0 %v345
  %v520 = vpop.f32.mrf.mxu0
  %v521 = vadd.f32 %v499, %v520
  %v522 = vpop.f32.mrf.mxu0
  %v523 = vadd.f32 %v499, %v522
  %524 = vmatmul.bf16.gmra.mxu0 %v349
  %v525 = vpop.f32.mrf.mxu0
  %v526 = vadd.f32 %v499, %v525
  %v527 = vpop.f32.mrf.mxu0
  %v528 = vadd.f32 %v499, %v527
  %529 = vmatmul.bf16.gmra.mxu0 %v353
  %v530 = vpop.f32.mrf.mxu0
  %v531 = vadd.f32 %v499, %v530
  %v532 = vpop.f32.mrf.mxu0
  %v533 = vadd.f32 %v499, %v532
  %534 = vmatmul.bf16.gmra.mxu0 %v357
  %v535 = vpop.f32.mrf.mxu0
  %v536 = vadd.f32 %v499, %v535
  %v537 = vpop.f32.mrf.mxu0
  %v538 = vadd.f32 %v499, %v537
  %539 = vmatmul.bf16.gmra.mxu0 %v361
  %v540 = vpop.f32.mrf.mxu0
  %v541 = vadd.f32 %v499, %v540
  %v542 = vpop.f32.mrf.mxu0
  %v543 = vadd.f32 %v499, %v542
  %544 = vmatmul.bf16.gmra.mxu0 %v365
  %v545 = vpop.f32.mrf.mxu0
  %v546 = vadd.f32 %v499, %v545
  %v547 = vpop.f32.mrf.mxu0
  %v548 = vadd.f32 %v499, %v547
  %549 = vmatmul.bf16.gmra.mxu0 %v369
  %v550 = vpop.f32.mrf.mxu0
  %v551 = vadd.f32 %v499, %v550
  %v552 = vpop.f32.mrf.mxu0
  %v553 = vadd.f32 %v499, %v552
  %554 = vmatmul.bf16.gmra.mxu0 %v373
  %v555 = vpop.f32.mrf.mxu0
  %v556 = vadd.f32 %v499, %v555
  %v557 = vpop.f32.mrf.mxu0
  %v558 = vadd.f32 %v499, %v557
  %559 = vmatmul.bf16.gmra.mxu0 %v377
  %v560 = vpop.f32.mrf.mxu0
  %v561 = vadd.f32 %v499, %v560
  %v562 = vpop.f32.mrf.mxu0
  %v563 = vadd.f32 %v499, %v562
  %564 = vmatmul.bf16.gmra.mxu0 %v381
  %v565 = vpop.f32.mrf.mxu0
  %v566 = vadd.f32 %v499, %v565
  %v567 = vpop.f32.mrf.mxu0
  %v568 = vadd.f32 %v499, %v567
  %569 = vmatmul.bf16.gmra.mxu0 %v385
  %v570 = vpop.f32.mrf.mxu0
  %v571 = vadd.f32 %v499, %v570
  %v572 = vpop.f32.mrf.mxu0
  %v573 = vadd.f32 %v499, %v572
  %574 = vmatmul.bf16.gmra.mxu0 %v389
  %v575 = vpop.f32.mrf.mxu0
  %v576 = vadd.f32 %v499, %v575
  %v577 = vpop.f32.mrf.mxu0
  %v578 = vadd.f32 %v499, %v577
  %579 = vmatmul.bf16.gmra.mxu0 %v393
  %v580 = vpop.f32.mrf.mxu0
  %v581 = vadd.f32 %v499, %v580
  %v582 = vpop.f32.mrf.mxu0
  %v583 = vadd.f32 %v499, %v582
  %584 = vmatmul.bf16.gmra.mxu0 %v397
  %v585 = vpop.f32.mrf.mxu0
  %v586 = vadd.f32 %v499, %v585
  %v587 = vpop.f32.mrf.mxu0
  %v588 = vadd.f32 %v499, %v587
  %589 = vmatmul.bf16.gmra.mxu0 %v401
  %v590 = vpop.f32.mrf.mxu0
  %v591 = vadd.f32 %v499, %v590
  %v592 = vpop.f32.mrf.mxu0
  %v593 = vadd.f32 %v499, %v592
  %594 = vmatmul.bf16.gmra.mxu0 %v405
  %v595 = vpop.f32.mrf.mxu0
  %v596 = vadd.f32 %v499, %v595
  %v597 = vpop.f32.mrf.mxu0
  %v598 = vadd.f32 %v499, %v597
  %599 = vmatmul.bf16.gmra.mxu0 %v409
  %v600 = vpop.f32.mrf.mxu0
  %v601 = vadd.f32 %v499, %v600
  %v602 = vpop.f32.mrf.mxu0
  %v603 = vadd.f32 %v499, %v602
  %604 = vmatmul.bf16.gmra.mxu0 %v413
  %v605 = vpop.f32.mrf.mxu0
  %v606 = vadd.f32 %v499, %v605
  %v607 = vpop.f32.mrf.mxu0
  %v608 = vadd.f32 %v499, %v607
  %609 = vmatmul.bf16.gmra.mxu0 %v417
  %v610 = vpop.f32.mrf.mxu0
  %v611 = vadd.f32 %v499, %v610
  %v612 = vpop.f32.mrf.mxu0
  %v613 = vadd.f32 %v499, %v612
  %614 = vmatmul.bf16.gmra.mxu0 %v421
  %v615 = vpop.f32.mrf.mxu0
  %v616 = vadd.f32 %v499, %v615
  %v617 = vpop.f32.mrf.mxu0
  %v618 = vadd.f32 %v499, %v617
  %619 = vmatmul.bf16.gmra.mxu0 %v425
  %v620 = vpop.f32.mrf.mxu0
  %v621 = vadd.f32 %v499, %v620
  %v622 = vpop.f32.mrf.mxu0
  %v623 = vadd.f32 %v499, %v622
  %624 = vmatmul.bf16.gmra.mxu0 %v429
  %v625 = vpop.f32.mrf.mxu0
  %v626 = vadd.f32 %v499, %v625
  %v627 = vpop.f32.mrf.mxu0
  %v628 = vadd.f32 %v499, %v627
  %629 = vmatmul.bf16.gmra.mxu0 %v433
  %v630 = vpop.f32.mrf.mxu0
  %v631 = vadd.f32 %v499, %v630
  %v632 = vpop.f32.mrf.mxu0
  %v633 = vadd.f32 %v499, %v632
  %634 = vmatmul.bf16.gmra.mxu0 %v437
  %v635 = vpop.f32.mrf.mxu0
  %v636 = vadd.f32 %v499, %v635
  %v637 = vpop.f32.mrf.mxu0
  %v638 = vadd.f32 %v499, %v637
  %639 = vmatmul.bf16.gmra.mxu0 %v441
  %v640 = vpop.f32.mrf.mxu0
  %v641 = vadd.f32 %v499, %v640
  %v642 = vpop.f32.mrf.mxu0
  %v643 = vadd.f32 %v499, %v642
  %644 = vmatmul.bf16.gmra.mxu0 %v445
  %v645 = vpop.f32.mrf.mxu0
  %v646 = vadd.f32 %v499, %v645
  %v647 = vpop.f32.mrf.mxu0
  %v648 = vadd.f32 %v499, %v647
  %649 = vmatmul.bf16.gmra.mxu0 %v449
  %v650 = vpop.f32.mrf.mxu0
  %v651 = vadd.f32 %v499, %v650
  %v652 = vpop.f32.mrf.mxu0
  %v653 = vadd.f32 %v499, %v652
  %654 = vmatmul.bf16.gmra.mxu0 %v453
  %v655 = vpop.f32.mrf.mxu0
  %v656 = vadd.f32 %v499, %v655
  %v657 = vpop.f32.mrf.mxu0
  %v658 = vadd.f32 %v499, %v657
  %659 = vmatmul.bf16.gmra.mxu0 %v457
  %v660 = vpop.f32.mrf.mxu0
  %v661 = vadd.f32 %v499, %v660
  %v662 = vpop.f32.mrf.mxu0
  %v663 = vadd.f32 %v499, %v662
  %664 = vmatmul.bf16.gmra.mxu0 %v461
  %v665 = vpop.f32.mrf.mxu0
  %v666 = vadd.f32 %v499, %v665
  %v667 = vpop.f32.mrf.mxu0
  %v668 = vadd.f32 %v499, %v667
  %669 = vdwg.mxu0
  %670 = vmatpush.bf16.msra.mxu0 %v480
  %671 = vmatpush.bf16.msra.mxu0 %v479
  %672 = vmatpush.bf16.msra.mxu0 %v478
  %673 = vmatpush.bf16.msra.mxu0 %v477
  %674 = vmatpush.bf16.msra.mxu0 %v476
  %675 = vmatpush.bf16.msra.mxu0 %v475
  %676 = vmatpush.bf16.msra.mxu0 %v474
  %677 = vmatpush.bf16.msra.mxu0 %v473
  %678 = vmatmul.bf16.gmra.mxu0 %v338
  %v679 = vpop.f32.mrf.mxu0
  %v680 = vadd.f32 %v511, %v679
  %v681 = vpop.f32.mrf.mxu0
  %v682 = vadd.f32 %v513, %v681
  %683 = vmatmul.bf16.gmra.mxu0 %v342
  %v684 = vpop.f32.mrf.mxu0
  %v685 = vadd.f32 %v516, %v684
  %v686 = vpop.f32.mrf.mxu0
  %v687 = vadd.f32 %v518, %v686
  %688 = vmatmul.bf16.gmra.mxu0 %v346
  %v689 = vpop.f32.mrf.mxu0
  %v690 = vadd.f32 %v521, %v689
  %v691 = vpop.f32.mrf.mxu0
  %v692 = vadd.f32 %v523, %v691
  %693 = vmatmul.bf16.gmra.mxu0 %v350
  %v694 = vpop.f32.mrf.mxu0
  %v695 = vadd.f32 %v526, %v694
  %v696 = vpop.f32.mrf.mxu0
  %v697 = vadd.f32 %v528, %v696
  %698 = vmatmul.bf16.gmra.mxu0 %v354
  %v699 = vpop.f32.mrf.mxu0
  %v700 = vadd.f32 %v531, %v699
  %v701 = vpop.f32.mrf.mxu0
  %v702 = vadd.f32 %v533, %v701
  %703 = vmatmul.bf16.gmra.mxu0 %v358
  %v704 = vpop.f32.mrf.mxu0
  %v705 = vadd.f32 %v536, %v704
  %v706 = vpop.f32.mrf.mxu0
  %v707 = vadd.f32 %v538, %v706
  %708 = vmatmul.bf16.gmra.mxu0 %v362
  %v709 = vpop.f32.mrf.mxu0
  %v710 = vadd.f32 %v541, %v709
  %v711 = vpop.f32.mrf.mxu0
  %v712 = vadd.f32 %v543, %v711
  %713 = vmatmul.bf16.gmra.mxu0 %v366
  %v714 = vpop.f32.mrf.mxu0
  %v715 = vadd.f32 %v546, %v714
  %v716 = vpop.f32.mrf.mxu0
  %v717 = vadd.f32 %v548, %v716
  %718 = vmatmul.bf16.gmra.mxu0 %v370
  %v719 = vpop.f32.mrf.mxu0
  %v720 = vadd.f32 %v551, %v719
  %v721 = vpop.f32.mrf.mxu0
  %v722 = vadd.f32 %v553, %v721
  %723 = vmatmul.bf16.gmra.mxu0 %v374
  %v724 = vpop.f32.mrf.mxu0
  %v725 = vadd.f32 %v556, %v724
  %v726 = vpop.f32.mrf.mxu0
  %v727 = vadd.f32 %v558, %v726
  %728 = vmatmul.bf16.gmra.mxu0 %v378
  %v729 = vpop.f32.mrf.mxu0
  %v730 = vadd.f32 %v561, %v729
  %v731 = vpop.f32.mrf.mxu0
  %v732 = vadd.f32 %v563, %v731
  %733 = vmatmul.bf16.gmra.mxu0 %v382
  %v734 = vpop.f32.mrf.mxu0
  %v735 = vadd.f32 %v566, %v734
  %v736 = vpop.f32.mrf.mxu0
  %v737 = vadd.f32 %v568, %v736
  %738 = vmatmul.bf16.gmra.mxu0 %v386
  %v739 = vpop.f32.mrf.mxu0
  %v740 = vadd.f32 %v571, %v739
  %v741 = vpop.f32.mrf.mxu0
  %v742 = vadd.f32 %v573, %v741
  %743 = vmatmul.bf16.gmra.mxu0 %v390
  %v744 = vpop.f32.mrf.mxu0
  %v745 = vadd.f32 %v576, %v744
  %v746 = vpop.f32.mrf.mxu0
  %v747 = vadd.f32 %v578, %v746
  %748 = vmatmul.bf16.gmra.mxu0 %v394
  %v749 = vpop.f32.mrf.mxu0
  %v750 = vadd.f32 %v581, %v749
  %v751 = vpop.f32.mrf.mxu0
  %v752 = vadd.f32 %v583, %v751
  %753 = vmatmul.bf16.gmra.mxu0 %v398
  %v754 = vpop.f32.mrf.mxu0
  %v755 = vadd.f32 %v586, %v754
  %v756 = vpop.f32.mrf.mxu0
  %v757 = vadd.f32 %v588, %v756
  %758 = vmatmul.bf16.gmra.mxu0 %v402
  %v759 = vpop.f32.mrf.mxu0
  %v760 = vadd.f32 %v591, %v759
  %v761 = vpop.f32.mrf.mxu0
  %v762 = vadd.f32 %v593, %v761
  %763 = vmatmul.bf16.gmra.mxu0 %v406
  %v764 = vpop.f32.mrf.mxu0
  %v765 = vadd.f32 %v596, %v764
  %v766 = vpop.f32.mrf.mxu0
  %v767 = vadd.f32 %v598, %v766
  %768 = vmatmul.bf16.gmra.mxu0 %v410
  %v769 = vpop.f32.mrf.mxu0
  %v770 = vadd.f32 %v601, %v769
  %v771 = vpop.f32.mrf.mxu0
  %v772 = vadd.f32 %v603, %v771
  %773 = vmatmul.bf16.gmra.mxu0 %v414
  %v774 = vpop.f32.mrf.mxu0
  %v775 = vadd.f32 %v606, %v774
  %v776 = vpop.f32.mrf.mxu0
  %v777 = vadd.f32 %v608, %v776
  %778 = vmatmul.bf16.gmra.mxu0 %v418
  %v779 = vpop.f32.mrf.mxu0
  %v780 = vadd.f32 %v611, %v779
  %v781 = vpop.f32.mrf.mxu0
  %v782 = vadd.f32 %v613, %v781
  %783 = vmatmul.bf16.gmra.mxu0 %v422
  %v784 = vpop.f32.mrf.mxu0
  %v785 = vadd.f32 %v616, %v784
  %v786 = vpop.f32.mrf.mxu0
  %v787 = vadd.f32 %v618, %v786
  %788 = vmatmul.bf16.gmra.mxu0 %v426
  %v789 = vpop.f32.mrf.mxu0
  %v790 = vadd.f32 %v621, %v789
  %v791 = vpop.f32.mrf.mxu0
  %v792 = vadd.f32 %v623, %v791
  %793 = vmatmul.bf16.gmra.mxu0 %v430
  %v794 = vpop.f32.mrf.mxu0
  %v795 = vadd.f32 %v626, %v794
  %v796 = vpop.f32.mrf.mxu0
  %v797 = vadd.f32 %v628, %v796
  %798 = vmatmul.bf16.gmra.mxu0 %v434
  %v799 = vpop.f32.mrf.mxu0
  %v800 = vadd.f32 %v631, %v799
  %v801 = vpop.f32.mrf.mxu0
  %v802 = vadd.f32 %v633, %v801
  %803 = vmatmul.bf16.gmra.mxu0 %v438
  %v804 = vpop.f32.mrf.mxu0
  %v805 = vadd.f32 %v636, %v804
  %v806 = vpop.f32.mrf.mxu0
  %v807 = vadd.f32 %v638, %v806
  %808 = vmatmul.bf16.gmra.mxu0 %v442
  %v809 = vpop.f32.mrf.mxu0
  %v810 = vadd.f32 %v641, %v809
  %v811 = vpop.f32.mrf.mxu0
  %v812 = vadd.f32 %v643, %v811
  %813 = vmatmul.bf16.gmra.mxu0 %v446
  %v814 = vpop.f32.mrf.mxu0
  %v815 = vadd.f32 %v646, %v814
  %v816 = vpop.f32.mrf.mxu0
  %v817 = vadd.f32 %v648, %v816
  %818 = vmatmul.bf16.gmra.mxu0 %v450
  %v819 = vpop.f32.mrf.mxu0
  %v820 = vadd.f32 %v651, %v819
  %v821 = vpop.f32.mrf.mxu0
  %v822 = vadd.f32 %v653, %v821
  %823 = vmatmul.bf16.gmra.mxu0 %v454
  %v824 = vpop.f32.mrf.mxu0
  %v825 = vadd.f32 %v656, %v824
  %v826 = vpop.f32.mrf.mxu0
  %v827 = vadd.f32 %v658, %v826
  %828 = vmatmul.bf16.gmra.mxu0 %v458
  %v829 = vpop.f32.mrf.mxu0
  %v830 = vadd.f32 %v661, %v829
  %v831 = vpop.f32.mrf.mxu0
  %v832 = vadd.f32 %v663, %v831
  %833 = vmatmul.bf16.gmra.mxu0 %v462
  %v834 = vpop.f32.mrf.mxu0
  %v835 = vadd.f32 %v666, %v834
  %v836 = vpop.f32.mrf.mxu0
  %v837 = vadd.f32 %v668, %v836
  %838 = vdwg.mxu0
  %839 = vmatpush.bf16.msra.mxu0 %v488
  %840 = vmatpush.bf16.msra.mxu0 %v487
  %841 = vmatpush.bf16.msra.mxu0 %v486
  %842 = vmatpush.bf16.msra.mxu0 %v485
  %843 = vmatpush.bf16.msra.mxu0 %v484
  %844 = vmatpush.bf16.msra.mxu0 %v483
  %845 = vmatpush.bf16.msra.mxu0 %v482
  %846 = vmatpush.bf16.msra.mxu0 %v481
  %847 = vmatmul.bf16.gmra.mxu0 %v339
  %v848 = vpop.f32.mrf.mxu0
  %v849 = vadd.f32 %v680, %v848
  %v850 = vpop.f32.mrf.mxu0
  %v851 = vadd.f32 %v682, %v850
  %852 = vmatmul.bf16.gmra.mxu0 %v343
  %v853 = vpop.f32.mrf.mxu0
  %v854 = vadd.f32 %v685, %v853
  %v855 = vpop.f32.mrf.mxu0
  %v856 = vadd.f32 %v687, %v855
  %857 = vmatmul.bf16.gmra.mxu0 %v347
  %v858 = vpop.f32.mrf.mxu0
  %v859 = vadd.f32 %v690, %v858
  %v860 = vpop.f32.mrf.mxu0
  %v861 = vadd.f32 %v692, %v860
  %862 = vmatmul.bf16.gmra.mxu0 %v351
  %v863 = vpop.f32.mrf.mxu0
  %v864 = vadd.f32 %v695, %v863
  %v865 = vpop.f32.mrf.mxu0
  %v866 = vadd.f32 %v697, %v865
  %867 = vmatmul.bf16.gmra.mxu0 %v355
  %v868 = vpop.f32.mrf.mxu0
  %v869 = vadd.f32 %v700, %v868
  %v870 = vpop.f32.mrf.mxu0
  %v871 = vadd.f32 %v702, %v870
  %872 = vmatmul.bf16.gmra.mxu0 %v359
  %v873 = vpop.f32.mrf.mxu0
  %v874 = vadd.f32 %v705, %v873
  %v875 = vpop.f32.mrf.mxu0
  %v876 = vadd.f32 %v707, %v875
  %877 = vmatmul.bf16.gmra.mxu0 %v363
  %v878 = vpop.f32.mrf.mxu0
  %v879 = vadd.f32 %v710, %v878
  %v880 = vpop.f32.mrf.mxu0
  %v881 = vadd.f32 %v712, %v880
  %882 = vmatmul.bf16.gmra.mxu0 %v367
  %v883 = vpop.f32.mrf.mxu0
  %v884 = vadd.f32 %v715, %v883
  %v885 = vpop.f32.mrf.mxu0
  %v886 = vadd.f32 %v717, %v885
  %887 = vmatmul.bf16.gmra.mxu0 %v371
  %v888 = vpop.f32.mrf.mxu0
  %v889 = vadd.f32 %v720, %v888
  %v890 = vpop.f32.mrf.mxu0
  %v891 = vadd.f32 %v722, %v890
  %892 = vmatmul.bf16.gmra.mxu0 %v375
  %v893 = vpop.f32.mrf.mxu0
  %v894 = vadd.f32 %v725, %v893
  %v895 = vpop.f32.mrf.mxu0
  %v896 = vadd.f32 %v727, %v895
  %897 = vmatmul.bf16.gmra.mxu0 %v379
  %v898 = vpop.f32.mrf.mxu0
  %v899 = vadd.f32 %v730, %v898
  %v900 = vpop.f32.mrf.mxu0
  %v901 = vadd.f32 %v732, %v900
  %902 = vmatmul.bf16.gmra.mxu0 %v383
  %v903 = vpop.f32.mrf.mxu0
  %v904 = vadd.f32 %v735, %v903
  %v905 = vpop.f32.mrf.mxu0
  %v906 = vadd.f32 %v737, %v905
  %907 = vmatmul.bf16.gmra.mxu0 %v387
  %v908 = vpop.f32.mrf.mxu0
  %v909 = vadd.f32 %v740, %v908
  %v910 = vpop.f32.mrf.mxu0
  %v911 = vadd.f32 %v742, %v910
  %912 = vmatmul.bf16.gmra.mxu0 %v391
  %v913 = vpop.f32.mrf.mxu0
  %v914 = vadd.f32 %v745, %v913
  %v915 = vpop.f32.mrf.mxu0
  %v916 = vadd.f32 %v747, %v915
  %917 = vmatmul.bf16.gmra.mxu0 %v395
  %v918 = vpop.f32.mrf.mxu0
  %v919 = vadd.f32 %v750, %v918
  %v920 = vpop.f32.mrf.mxu0
  %v921 = vadd.f32 %v752, %v920
  %922 = vmatmul.bf16.gmra.mxu0 %v399
  %v923 = vpop.f32.mrf.mxu0
  %v924 = vadd.f32 %v755, %v923
  %v925 = vpop.f32.mrf.mxu0
  %v926 = vadd.f32 %v757, %v925
  %927 = vmatmul.bf16.gmra.mxu0 %v403
  %v928 = vpop.f32.mrf.mxu0
  %v929 = vadd.f32 %v760, %v928
  %v930 = vpop.f32.mrf.mxu0
  %v931 = vadd.f32 %v762, %v930
  %932 = vmatmul.bf16.gmra.mxu0 %v407
  %v933 = vpop.f32.mrf.mxu0
  %v934 = vadd.f32 %v765, %v933
  %v935 = vpop.f32.mrf.mxu0
  %v936 = vadd.f32 %v767, %v935
  %937 = vmatmul.bf16.gmra.mxu0 %v411
  %v938 = vpop.f32.mrf.mxu0
  %v939 = vadd.f32 %v770, %v938
  %v940 = vpop.f32.mrf.mxu0
  %v941 = vadd.f32 %v772, %v940
  %942 = vmatmul.bf16.gmra.mxu0 %v415
  %v943 = vpop.f32.mrf.mxu0
  %v944 = vadd.f32 %v775, %v943
  %v945 = vpop.f32.mrf.mxu0
  %v946 = vadd.f32 %v777, %v945
  %947 = vmatmul.bf16.gmra.mxu0 %v419
  %v948 = vpop.f32.mrf.mxu0
  %v949 = vadd.f32 %v780, %v948
  %v950 = vpop.f32.mrf.mxu0
  %v951 = vadd.f32 %v782, %v950
  %952 = vmatmul.bf16.gmra.mxu0 %v423
  %v953 = vpop.f32.mrf.mxu0
  %v954 = vadd.f32 %v785, %v953
  %v955 = vpop.f32.mrf.mxu0
  %v956 = vadd.f32 %v787, %v955
  %957 = vmatmul.bf16.gmra.mxu0 %v427
  %v958 = vpop.f32.mrf.mxu0
  %v959 = vadd.f32 %v790, %v958
  %v960 = vpop.f32.mrf.mxu0
  %v961 = vadd.f32 %v792, %v960
  %962 = vmatmul.bf16.gmra.mxu0 %v431
  %v963 = vpop.f32.mrf.mxu0
  %v964 = vadd.f32 %v795, %v963
  %v965 = vpop.f32.mrf.mxu0
  %v966 = vadd.f32 %v797, %v965
  %967 = vmatmul.bf16.gmra.mxu0 %v435
  %v968 = vpop.f32.mrf.mxu0
  %v969 = vadd.f32 %v800, %v968
  %v970 = vpop.f32.mrf.mxu0
  %v971 = vadd.f32 %v802, %v970
  %972 = vmatmul.bf16.gmra.mxu0 %v439
  %v973 = vpop.f32.mrf.mxu0
  %v974 = vadd.f32 %v805, %v973
  %v975 = vpop.f32.mrf.mxu0
  %v976 = vadd.f32 %v807, %v975
  %977 = vmatmul.bf16.gmra.mxu0 %v443
  %v978 = vpop.f32.mrf.mxu0
  %v979 = vadd.f32 %v810, %v978
  %v980 = vpop.f32.mrf.mxu0
  %v981 = vadd.f32 %v812, %v980
  %982 = vmatmul.bf16.gmra.mxu0 %v447
  %v983 = vpop.f32.mrf.mxu0
  %v984 = vadd.f32 %v815, %v983
  %v985 = vpop.f32.mrf.mxu0
  %v986 = vadd.f32 %v817, %v985
  %987 = vmatmul.bf16.gmra.mxu0 %v451
  %v988 = vpop.f32.mrf.mxu0
  %v989 = vadd.f32 %v820, %v988
  %v990 = vpop.f32.mrf.mxu0
  %v991 = vadd.f32 %v822, %v990
  %992 = vmatmul.bf16.gmra.mxu0 %v455
  %v993 = vpop.f32.mrf.mxu0
  %v994 = vadd.f32 %v825, %v993
  %v995 = vpop.f32.mrf.mxu0
  %v996 = vadd.f32 %v827, %v995
  %997 = vmatmul.bf16.gmra.mxu0 %v459
  %v998 = vpop.f32.mrf.mxu0
  %v999 = vadd.f32 %v830, %v998
  %v1000 = vpop.f32.mrf.mxu0
  %v1001 = vadd.f32 %v832, %v1000
  %1002 = vmatmul.bf16.gmra.mxu0 %v463
  %v1003 = vpop.f32.mrf.mxu0
  %v1004 = vadd.f32 %v835, %v1003
  %v1005 = vpop.f32.mrf.mxu0
  %v1006 = vadd.f32 %v837, %v1005
  %1007 = vdwg.mxu0
  %1008 = vmatpush.bf16.msra.mxu0 %v496
  %1009 = vmatpush.bf16.msra.mxu0 %v495
  %1010 = vmatpush.bf16.msra.mxu0 %v494
  %1011 = vmatpush.bf16.msra.mxu0 %v493
  %1012 = vmatpush.bf16.msra.mxu0 %v492
  %1013 = vmatpush.bf16.msra.mxu0 %v491
  %1014 = vmatpush.bf16.msra.mxu0 %v490
  %1015 = vmatpush.bf16.msra.mxu0 %v489
  %1016 = vmatmul.bf16.gmra.mxu0 %v340
  %v1017 = vpop.f32.mrf.mxu0
  %v1018 = vadd.f32 %v849, %v1017
  %v1019 = vpop.f32.mrf.mxu0
  %v1020 = vadd.f32 %v851, %v1019
  %1021 = vmatmul.bf16.gmra.mxu0 %v344
  %v1022 = vpop.f32.mrf.mxu0
  %v1023 = vadd.f32 %v854, %v1022
  %v1024 = vpop.f32.mrf.mxu0
  %v1025 = vadd.f32 %v856, %v1024
  %1026 = vmatmul.bf16.gmra.mxu0 %v348
  %v1027 = vpop.f32.mrf.mxu0
  %v1028 = vadd.f32 %v859, %v1027
  %v1029 = vpop.f32.mrf.mxu0
  %v1030 = vadd.f32 %v861, %v1029
  %1031 = vmatmul.bf16.gmra.mxu0 %v352
  %v1032 = vpop.f32.mrf.mxu0
  %v1033 = vadd.f32 %v864, %v1032
  %v1034 = vpop.f32.mrf.mxu0
  %v1035 = vadd.f32 %v866, %v1034
  %1036 = vmatmul.bf16.gmra.mxu0 %v356
  %v1037 = vpop.f32.mrf.mxu0
  %v1038 = vadd.f32 %v869, %v1037
  %v1039 = vpop.f32.mrf.mxu0
  %v1040 = vadd.f32 %v871, %v1039
  %1041 = vmatmul.bf16.gmra.mxu0 %v360
  %v1042 = vpop.f32.mrf.mxu0
  %v1043 = vadd.f32 %v874, %v1042
  %v1044 = vpop.f32.mrf.mxu0
  %v1045 = vadd.f32 %v876, %v1044
  %1046 = vmatmul.bf16.gmra.mxu0 %v364
  %v1047 = vpop.f32.mrf.mxu0
  %v1048 = vadd.f32 %v879, %v1047
  %v1049 = vpop.f32.mrf.mxu0
  %v1050 = vadd.f32 %v881, %v1049
  %1051 = vmatmul.bf16.gmra.mxu0 %v368
  %v1052 = vpop.f32.mrf.mxu0
  %v1053 = vadd.f32 %v884, %v1052
  %v1054 = vpop.f32.mrf.mxu0
  %v1055 = vadd.f32 %v886, %v1054
  %1056 = vmatmul.bf16.gmra.mxu0 %v372
  %v1057 = vpop.f32.mrf.mxu0
  %v1058 = vadd.f32 %v889, %v1057
  %v1059 = vpop.f32.mrf.mxu0
  %v1060 = vadd.f32 %v891, %v1059
  %1061 = vmatmul.bf16.gmra.mxu0 %v376
  %v1062 = vpop.f32.mrf.mxu0
  %v1063 = vadd.f32 %v894, %v1062
  %v1064 = vpop.f32.mrf.mxu0
  %v1065 = vadd.f32 %v896, %v1064
  %1066 = vmatmul.bf16.gmra.mxu0 %v380
  %v1067 = vpop.f32.mrf.mxu0
  %v1068 = vadd.f32 %v899, %v1067
  %v1069 = vpop.f32.mrf.mxu0
  %v1070 = vadd.f32 %v901, %v1069
  %1071 = vmatmul.bf16.gmra.mxu0 %v384
  %v1072 = vpop.f32.mrf.mxu0
  %v1073 = vadd.f32 %v904, %v1072
  %v1074 = vpop.f32.mrf.mxu0
  %v1075 = vadd.f32 %v906, %v1074
  %1076 = vmatmul.bf16.gmra.mxu0 %v388
  %v1077 = vpop.f32.mrf.mxu0
  %v1078 = vadd.f32 %v909, %v1077
  %v1079 = vpop.f32.mrf.mxu0
  %v1080 = vadd.f32 %v911, %v1079
  %1081 = vmatmul.bf16.gmra.mxu0 %v392
  %v1082 = vpop.f32.mrf.mxu0
  %v1083 = vadd.f32 %v914, %v1082
  %v1084 = vpop.f32.mrf.mxu0
  %v1085 = vadd.f32 %v916, %v1084
  %1086 = vmatmul.bf16.gmra.mxu0 %v396
  %v1087 = vpop.f32.mrf.mxu0
  %v1088 = vadd.f32 %v919, %v1087
  %v1089 = vpop.f32.mrf.mxu0
  %v1090 = vadd.f32 %v921, %v1089
  %1091 = vmatmul.bf16.gmra.mxu0 %v400
  %v1092 = vpop.f32.mrf.mxu0
  %v1093 = vadd.f32 %v924, %v1092
  %v1094 = vpop.f32.mrf.mxu0
  %v1095 = vadd.f32 %v926, %v1094
  %1096 = vmatmul.bf16.gmra.mxu0 %v404
  %v1097 = vpop.f32.mrf.mxu0
  %v1098 = vadd.f32 %v929, %v1097
  %v1099 = vpop.f32.mrf.mxu0
  %v1100 = vadd.f32 %v931, %v1099
  %1101 = vmatmul.bf16.gmra.mxu0 %v408
  %v1102 = vpop.f32.mrf.mxu0
  %v1103 = vadd.f32 %v934, %v1102
  %v1104 = vpop.f32.mrf.mxu0
  %v1105 = vadd.f32 %v936, %v1104
  %1106 = vmatmul.bf16.gmra.mxu0 %v412
  %v1107 = vpop.f32.mrf.mxu0
  %v1108 = vadd.f32 %v939, %v1107
  %v1109 = vpop.f32.mrf.mxu0
  %v1110 = vadd.f32 %v941, %v1109
  %1111 = vmatmul.bf16.gmra.mxu0 %v416
  %v1112 = vpop.f32.mrf.mxu0
  %v1113 = vadd.f32 %v944, %v1112
  %v1114 = vpop.f32.mrf.mxu0
  %v1115 = vadd.f32 %v946, %v1114
  %1116 = vmatmul.bf16.gmra.mxu0 %v420
  %v1117 = vpop.f32.mrf.mxu0
  %v1118 = vadd.f32 %v949, %v1117
  %v1119 = vpop.f32.mrf.mxu0
  %v1120 = vadd.f32 %v951, %v1119
  %1121 = vmatmul.bf16.gmra.mxu0 %v424
  %v1122 = vpop.f32.mrf.mxu0
  %v1123 = vadd.f32 %v954, %v1122
  %v1124 = vpop.f32.mrf.mxu0
  %v1125 = vadd.f32 %v956, %v1124
  %1126 = vmatmul.bf16.gmra.mxu0 %v428
  %v1127 = vpop.f32.mrf.mxu0
  %v1128 = vadd.f32 %v959, %v1127
  %v1129 = vpop.f32.mrf.mxu0
  %v1130 = vadd.f32 %v961, %v1129
  %1131 = vmatmul.bf16.gmra.mxu0 %v432
  %v1132 = vpop.f32.mrf.mxu0
  %v1133 = vadd.f32 %v964, %v1132
  %v1134 = vpop.f32.mrf.mxu0
  %v1135 = vadd.f32 %v966, %v1134
  %1136 = vmatmul.bf16.gmra.mxu0 %v436
  %v1137 = vpop.f32.mrf.mxu0
  %v1138 = vadd.f32 %v969, %v1137
  %v1139 = vpop.f32.mrf.mxu0
  %v1140 = vadd.f32 %v971, %v1139
  %1141 = vmatmul.bf16.gmra.mxu0 %v440
  %v1142 = vpop.f32.mrf.mxu0
  %v1143 = vadd.f32 %v974, %v1142
  %v1144 = vpop.f32.mrf.mxu0
  %v1145 = vadd.f32 %v976, %v1144
  %1146 = vmatmul.bf16.gmra.mxu0 %v444
  %v1147 = vpop.f32.mrf.mxu0
  %v1148 = vadd.f32 %v979, %v1147
  %v1149 = vpop.f32.mrf.mxu0
  %v1150 = vadd.f32 %v981, %v1149
  %1151 = vmatmul.bf16.gmra.mxu0 %v448
  %v1152 = vpop.f32.mrf.mxu0
  %v1153 = vadd.f32 %v984, %v1152
  %v1154 = vpop.f32.mrf.mxu0
  %v1155 = vadd.f32 %v986, %v1154
  %1156 = vmatmul.bf16.gmra.mxu0 %v452
  %v1157 = vpop.f32.mrf.mxu0
  %v1158 = vadd.f32 %v989, %v1157
  %v1159 = vpop.f32.mrf.mxu0
  %v1160 = vadd.f32 %v991, %v1159
  %1161 = vmatmul.bf16.gmra.mxu0 %v456
  %v1162 = vpop.f32.mrf.mxu0
  %v1163 = vadd.f32 %v994, %v1162
  %v1164 = vpop.f32.mrf.mxu0
  %v1165 = vadd.f32 %v996, %v1164
  %1166 = vmatmul.bf16.gmra.mxu0 %v460
  %v1167 = vpop.f32.mrf.mxu0
  %v1168 = vadd.f32 %v999, %v1167
  %v1169 = vpop.f32.mrf.mxu0
  %v1170 = vadd.f32 %v1001, %v1169
  %1171 = vmatmul.bf16.gmra.mxu0 %v464
  %v1172 = vpop.f32.mrf.mxu0
  %v1173 = vadd.f32 %v1004, %v1172
  %v1174 = vpop.f32.mrf.mxu0
  %v1175 = vadd.f32 %v1006, %v1174
  %1176 = vdwg.mxu0
  %v1177 = vld [vmem:[%s3] sm:$0x3]
  %vm1178 = vcmask 130048
  %v1179 = vsel %vm1178, %v1018, 0.0
  %v1180 = vsel %vm1178, %v1020, 0.0
  %v1181 = vadd.f32 %v1179, %v1180
  %v1182 = vsel %vm1178, %v1023, 0.0
  %v1183 = vadd.f32 %v1181, %v1182
  %v1184 = vsel %vm1178, %v1025, 0.0
  %v1185 = vadd.f32 %v1183, %v1184
  %v1186 = vsel %vm1178, %v1028, 0.0
  %v1187 = vadd.f32 %v1185, %v1186
  %v1188 = vsel %vm1178, %v1030, 0.0
  %v1189 = vadd.f32 %v1187, %v1188
  %v1190 = vsel %vm1178, %v1033, 0.0
  %v1191 = vadd.f32 %v1189, %v1190
  %v1192 = vsel %vm1178, %v1035, 0.0
  %v1193 = vadd.f32 %v1191, %v1192
  %v1194 = vsel %vm1178, %v1038, 0.0
  %v1195 = vadd.f32 %v1193, %v1194
  %v1196 = vsel %vm1178, %v1040, 0.0
  %v1197 = vadd.f32 %v1195, %v1196
  %v1198 = vsel %vm1178, %v1043, 0.0
  %v1199 = vadd.f32 %v1197, %v1198
  %v1200 = vsel %vm1178, %v1045, 0.0
  %v1201 = vadd.f32 %v1199, %v1200
  %v1202 = vsel %vm1178, %v1048, 0.0
  %v1203 = vadd.f32 %v1201, %v1202
  %v1204 = vsel %vm1178, %v1050, 0.0
  %v1205 = vadd.f32 %v1203, %v1204
  %v1206 = vsel %vm1178, %v1053, 0.0
  %v1207 = vadd.f32 %v1205, %v1206
  %v1208 = vsel %vm1178, %v1055, 0.0
  %v1209 = vadd.f32 %v1207, %v1208
  %v1210 = vsel %vm1178, %v1058, 0.0
  %v1211 = vadd.f32 %v1209, %v1210
  %v1212 = vsel %vm1178, %v1060, 0.0
  %v1213 = vadd.f32 %v1211, %v1212
  %v1214 = vsel %vm1178, %v1063, 0.0
  %v1215 = vadd.f32 %v1213, %v1214
  %v1216 = vsel %vm1178, %v1065, 0.0
  %v1217 = vadd.f32 %v1215, %v1216
  %v1218 = vsel %vm1178, %v1068, 0.0
  %v1219 = vadd.f32 %v1217, %v1218
  %v1220 = vsel %vm1178, %v1070, 0.0
  %v1221 = vadd.f32 %v1219, %v1220
  %v1222 = vsel %vm1178, %v1073, 0.0
  %v1223 = vadd.f32 %v1221, %v1222
  %v1224 = vsel %vm1178, %v1075, 0.0
  %v1225 = vadd.f32 %v1223, %v1224
  %v1226 = vsel %vm1178, %v1078, 0.0
  %v1227 = vadd.f32 %v1225, %v1226
  %v1228 = vsel %vm1178, %v1080, 0.0
  %v1229 = vadd.f32 %v1227, %v1228
  %v1230 = vsel %vm1178, %v1083, 0.0
  %v1231 = vadd.f32 %v1229, %v1230
  %v1232 = vsel %vm1178, %v1085, 0.0
  %v1233 = vadd.f32 %v1231, %v1232
  %v1234 = vsel %vm1178, %v1088, 0.0
  %v1235 = vadd.f32 %v1233, %v1234
  %v1236 = vsel %vm1178, %v1090, 0.0
  %v1237 = vadd.f32 %v1235, %v1236
  %v1238 = vsel %vm1178, %v1093, 0.0
  %v1239 = vadd.f32 %v1237, %v1238
  %v1240 = vsel %vm1178, %v1095, 0.0
  %v1241 = vadd.f32 %v1239, %v1240
  %v1242 = vsel %vm1178, %v1098, 0.0
  %v1243 = vadd.f32 %v1241, %v1242
  %v1244 = vsel %vm1178, %v1100, 0.0
  %v1245 = vadd.f32 %v1243, %v1244
  %v1246 = vsel %vm1178, %v1103, 0.0
  %v1247 = vadd.f32 %v1245, %v1246
  %v1248 = vsel %vm1178, %v1105, 0.0
  %v1249 = vadd.f32 %v1247, %v1248
  %v1250 = vsel %vm1178, %v1108, 0.0
  %v1251 = vadd.f32 %v1249, %v1250
  %v1252 = vsel %vm1178, %v1110, 0.0
  %v1253 = vadd.f32 %v1251, %v1252
  %v1254 = vsel %vm1178, %v1113, 0.0
  %v1255 = vadd.f32 %v1253, %v1254
  %v1256 = vsel %vm1178, %v1115, 0.0
  %v1257 = vadd.f32 %v1255, %v1256
  %v1258 = vsel %vm1178, %v1118, 0.0
  %v1259 = vadd.f32 %v1257, %v1258
  %v1260 = vsel %vm1178, %v1120, 0.0
  %v1261 = vadd.f32 %v1259, %v1260
  %v1262 = vsel %vm1178, %v1123, 0.0
  %v1263 = vadd.f32 %v1261, %v1262
  %v1264 = vsel %vm1178, %v1125, 0.0
  %v1265 = vadd.f32 %v1263, %v1264
  %v1266 = vsel %vm1178, %v1128, 0.0
  %v1267 = vadd.f32 %v1265, %v1266
  %v1268 = vsel %vm1178, %v1130, 0.0
  %v1269 = vadd.f32 %v1267, %v1268
  %v1270 = vsel %vm1178, %v1133, 0.0
  %v1271 = vadd.f32 %v1269, %v1270
  %v1272 = vsel %vm1178, %v1135, 0.0
  %v1273 = vadd.f32 %v1271, %v1272
  %v1274 = vsel %vm1178, %v1138, 0.0
  %v1275 = vadd.f32 %v1273, %v1274
  %v1276 = vsel %vm1178, %v1140, 0.0
  %v1277 = vadd.f32 %v1275, %v1276
  %v1278 = vsel %vm1178, %v1143, 0.0
  %v1279 = vadd.f32 %v1277, %v1278
  %v1280 = vsel %vm1178, %v1145, 0.0
  %v1281 = vadd.f32 %v1279, %v1280
  %v1282 = vsel %vm1178, %v1148, 0.0
  %v1283 = vadd.f32 %v1281, %v1282
  %v1284 = vsel %vm1178, %v1150, 0.0
  %v1285 = vadd.f32 %v1283, %v1284
  %v1286 = vsel %vm1178, %v1153, 0.0
  %v1287 = vadd.f32 %v1285, %v1286
  %v1288 = vsel %vm1178, %v1155, 0.0
  %v1289 = vadd.f32 %v1287, %v1288
  %v1290 = vsel %vm1178, %v1158, 0.0
  %v1291 = vadd.f32 %v1289, %v1290
  %v1292 = vsel %vm1178, %v1160, 0.0
  %v1293 = vadd.f32 %v1291, %v1292
  %v1294 = vsel %vm1178, %v1163, 0.0
  %v1295 = vadd.f32 %v1293, %v1294
  %v1296 = vsel %vm1178, %v1165, 0.0
  %v1297 = vadd.f32 %v1295, %v1296
  %v1298 = vsel %vm1178, %v1168, 0.0
  %v1299 = vadd.f32 %v1297, %v1298
  %v1300 = vsel %vm1178, %v1170, 0.0
  %v1301 = vadd.f32 %v1299, %v1300
  %v1302 = vsel %vm1178, %v1173, 0.0
  %v1303 = vadd.f32 %v1301, %v1302
  %v1304 = vsel %vm1178, %v1175, 0.0
  %v1305 = vadd.f32 %v1303, %v1304
  %v1306 = vrot.slane %v1305, 4
  %v1307 = vadd.f32 %v1305, %v1306
  %v1308 = vrot.slane %v1307, 2
  %v1309 = vadd.f32 %v1307, %v1308
  %v1310 = vrot.slane %v1309, 1
  %v1311 = vadd.f32 %v1309, %v1310
  %v1312 = vrcp.pop 512.0
  %v1313 = vmul.f32 512.0, %v1312
  %v1314 = vsub.f32 1.0, %v1313
  %v1315 = vmul.f32 %v1312, %v1314
  %v1316 = vadd.f32 %v1312, %v1315
  %vm1317 = vweird.f32 %v1312
  %v1318 = vsel %vm1317, %v1312, %v1316
  %v1319 = vmul.f32 %v1311, %v1318
  %v1320 = vsub.f32 %v1018, %v1319
  %v1321 = vsub.f32 %v1020, %v1319
  %v1322 = vsub.f32 %v1023, %v1319
  %v1323 = vsub.f32 %v1025, %v1319
  %v1324 = vsub.f32 %v1028, %v1319
  %v1325 = vsub.f32 %v1030, %v1319
  %v1326 = vsub.f32 %v1033, %v1319
  %v1327 = vsub.f32 %v1035, %v1319
  %v1328 = vsub.f32 %v1038, %v1319
  %v1329 = vsub.f32 %v1040, %v1319
  %v1330 = vsub.f32 %v1043, %v1319
  %v1331 = vsub.f32 %v1045, %v1319
  %v1332 = vsub.f32 %v1048, %v1319
  %v1333 = vsub.f32 %v1050, %v1319
  %v1334 = vsub.f32 %v1053, %v1319
  %v1335 = vsub.f32 %v1055, %v1319
  %v1336 = vsub.f32 %v1058, %v1319
  %v1337 = vsub.f32 %v1060, %v1319
  %v1338 = vsub.f32 %v1063, %v1319
  %v1339 = vsub.f32 %v1065, %v1319
  %v1340 = vsub.f32 %v1068, %v1319
  %v1341 = vsub.f32 %v1070, %v1319
  %v1342 = vsub.f32 %v1073, %v1319
  %v1343 = vsub.f32 %v1075, %v1319
  %v1344 = vsub.f32 %v1078, %v1319
  %v1345 = vsub.f32 %v1080, %v1319
  %v1346 = vsub.f32 %v1083, %v1319
  %v1347 = vsub.f32 %v1085, %v1319
  %v1348 = vsub.f32 %v1088, %v1319
  %v1349 = vsub.f32 %v1090, %v1319
  %v1350 = vsub.f32 %v1093, %v1319
  %v1351 = vsub.f32 %v1095, %v1319
  %v1352 = vsub.f32 %v1098, %v1319
  %v1353 = vsub.f32 %v1100, %v1319
  %v1354 = vsub.f32 %v1103, %v1319
  %v1355 = vsub.f32 %v1105, %v1319
  %v1356 = vsub.f32 %v1108, %v1319
  %v1357 = vsub.f32 %v1110, %v1319
  %v1358 = vsub.f32 %v1113, %v1319
  %v1359 = vsub.f32 %v1115, %v1319
  %v1360 = vsub.f32 %v1118, %v1319
  %v1361 = vsub.f32 %v1120, %v1319
  %v1362 = vsub.f32 %v1123, %v1319
  %v1363 = vsub.f32 %v1125, %v1319
  %v1364 = vsub.f32 %v1128, %v1319
  %v1365 = vsub.f32 %v1130, %v1319
  %v1366 = vsub.f32 %v1133, %v1319
  %v1367 = vsub.f32 %v1135, %v1319
  %v1368 = vsub.f32 %v1138, %v1319
  %v1369 = vsub.f32 %v1140, %v1319
  %v1370 = vsub.f32 %v1143, %v1319
  %v1371 = vsub.f32 %v1145, %v1319
  %v1372 = vsub.f32 %v1148, %v1319
  %v1373 = vsub.f32 %v1150, %v1319
  %v1374 = vsub.f32 %v1153, %v1319
  %v1375 = vsub.f32 %v1155, %v1319
  %v1376 = vsub.f32 %v1158, %v1319
  %v1377 = vsub.f32 %v1160, %v1319
  %v1378 = vsub.f32 %v1163, %v1319
  %v1379 = vsub.f32 %v1165, %v1319
  %v1380 = vsub.f32 %v1168, %v1319
  %v1381 = vsub.f32 %v1170, %v1319
  %v1382 = vsub.f32 %v1173, %v1319
  %v1383 = vsub.f32 %v1175, %v1319
  %v1384 = vmul.f32 %v1320, %v1320
  %v1385 = vmul.f32 %v1321, %v1321
  %v1386 = vmul.f32 %v1322, %v1322
  %v1387 = vmul.f32 %v1323, %v1323
  %v1388 = vmul.f32 %v1324, %v1324
  %v1389 = vmul.f32 %v1325, %v1325
  %v1390 = vmul.f32 %v1326, %v1326
  %v1391 = vmul.f32 %v1327, %v1327
  %v1392 = vmul.f32 %v1328, %v1328
  %v1393 = vmul.f32 %v1329, %v1329
  %v1394 = vmul.f32 %v1330, %v1330
  %v1395 = vmul.f32 %v1331, %v1331
  %v1396 = vmul.f32 %v1332, %v1332
  %v1397 = vmul.f32 %v1333, %v1333
  %v1398 = vmul.f32 %v1334, %v1334
  %v1399 = vmul.f32 %v1335, %v1335
  %v1400 = vmul.f32 %v1336, %v1336
  %v1401 = vmul.f32 %v1337, %v1337
  %v1402 = vmul.f32 %v1338, %v1338
  %v1403 = vmul.f32 %v1339, %v1339
  %v1404 = vmul.f32 %v1340, %v1340
  %v1405 = vmul.f32 %v1341, %v1341
  %v1406 = vmul.f32 %v1342, %v1342
  %v1407 = vmul.f32 %v1343, %v1343
  %v1408 = vmul.f32 %v1344, %v1344
  %v1409 = vmul.f32 %v1345, %v1345
  %v1410 = vmul.f32 %v1346, %v1346
  %v1411 = vmul.f32 %v1347, %v1347
  %v1412 = vmul.f32 %v1348, %v1348
  %v1413 = vmul.f32 %v1349, %v1349
  %v1414 = vmul.f32 %v1350, %v1350
  %v1415 = vmul.f32 %v1351, %v1351
  %v1416 = vmul.f32 %v1352, %v1352
  %v1417 = vmul.f32 %v1353, %v1353
  %v1418 = vmul.f32 %v1354, %v1354
  %v1419 = vmul.f32 %v1355, %v1355
  %v1420 = vmul.f32 %v1356, %v1356
  %v1421 = vmul.f32 %v1357, %v1357
  %v1422 = vmul.f32 %v1358, %v1358
  %v1423 = vmul.f32 %v1359, %v1359
  %v1424 = vmul.f32 %v1360, %v1360
  %v1425 = vmul.f32 %v1361, %v1361
  %v1426 = vmul.f32 %v1362, %v1362
  %v1427 = vmul.f32 %v1363, %v1363
  %v1428 = vmul.f32 %v1364, %v1364
  %v1429 = vmul.f32 %v1365, %v1365
  %v1430 = vmul.f32 %v1366, %v1366
  %v1431 = vmul.f32 %v1367, %v1367
  %v1432 = vmul.f32 %v1368, %v1368
  %v1433 = vmul.f32 %v1369, %v1369
  %v1434 = vmul.f32 %v1370, %v1370
  %v1435 = vmul.f32 %v1371, %v1371
  %v1436 = vmul.f32 %v1372, %v1372
  %v1437 = vmul.f32 %v1373, %v1373
  %v1438 = vmul.f32 %v1374, %v1374
  %v1439 = vmul.f32 %v1375, %v1375
  %v1440 = vmul.f32 %v1376, %v1376
  %v1441 = vmul.f32 %v1377, %v1377
  %v1442 = vmul.f32 %v1378, %v1378
  %v1443 = vmul.f32 %v1379, %v1379
  %v1444 = vmul.f32 %v1380, %v1380
  %v1445 = vmul.f32 %v1381, %v1381
  %v1446 = vmul.f32 %v1382, %v1382
  %v1447 = vmul.f32 %v1383, %v1383
  %v1448 = vsel %vm1178, %v1384, 0.0
  %v1449 = vsel %vm1178, %v1385, 0.0
  %v1450 = vadd.f32 %v1448, %v1449
  %v1451 = vsel %vm1178, %v1386, 0.0
  %v1452 = vadd.f32 %v1450, %v1451
  %v1453 = vsel %vm1178, %v1387, 0.0
  %v1454 = vadd.f32 %v1452, %v1453
  %v1455 = vsel %vm1178, %v1388, 0.0
  %v1456 = vadd.f32 %v1454, %v1455
  %v1457 = vsel %vm1178, %v1389, 0.0
  %v1458 = vadd.f32 %v1456, %v1457
  %v1459 = vsel %vm1178, %v1390, 0.0
  %v1460 = vadd.f32 %v1458, %v1459
  %v1461 = vsel %vm1178, %v1391, 0.0
  %v1462 = vadd.f32 %v1460, %v1461
  %v1463 = vsel %vm1178, %v1392, 0.0
  %v1464 = vadd.f32 %v1462, %v1463
  %v1465 = vsel %vm1178, %v1393, 0.0
  %v1466 = vadd.f32 %v1464, %v1465
  %v1467 = vsel %vm1178, %v1394, 0.0
  %v1468 = vadd.f32 %v1466, %v1467
  %v1469 = vsel %vm1178, %v1395, 0.0
  %v1470 = vadd.f32 %v1468, %v1469
  %v1471 = vsel %vm1178, %v1396, 0.0
  %v1472 = vadd.f32 %v1470, %v1471
  %v1473 = vsel %vm1178, %v1397, 0.0
  %v1474 = vadd.f32 %v1472, %v1473
  %v1475 = vsel %vm1178, %v1398, 0.0
  %v1476 = vadd.f32 %v1474, %v1475
  %v1477 = vsel %vm1178, %v1399, 0.0
  %v1478 = vadd.f32 %v1476, %v1477
  %v1479 = vsel %vm1178, %v1400, 0.0
  %v1480 = vadd.f32 %v1478, %v1479
  %v1481 = vsel %vm1178, %v1401, 0.0
  %v1482 = vadd.f32 %v1480, %v1481
  %v1483 = vsel %vm1178, %v1402, 0.0
  %v1484 = vadd.f32 %v1482, %v1483
  %v1485 = vsel %vm1178, %v1403, 0.0
  %v1486 = vadd.f32 %v1484, %v1485
  %v1487 = vsel %vm1178, %v1404, 0.0
  %v1488 = vadd.f32 %v1486, %v1487
  %v1489 = vsel %vm1178, %v1405, 0.0
  %v1490 = vadd.f32 %v1488, %v1489
  %v1491 = vsel %vm1178, %v1406, 0.0
  %v1492 = vadd.f32 %v1490, %v1491
  %v1493 = vsel %vm1178, %v1407, 0.0
  %v1494 = vadd.f32 %v1492, %v1493
  %v1495 = vsel %vm1178, %v1408, 0.0
  %v1496 = vadd.f32 %v1494, %v1495
  %v1497 = vsel %vm1178, %v1409, 0.0
  %v1498 = vadd.f32 %v1496, %v1497
  %v1499 = vsel %vm1178, %v1410, 0.0
  %v1500 = vadd.f32 %v1498, %v1499
  %v1501 = vsel %vm1178, %v1411, 0.0
  %v1502 = vadd.f32 %v1500, %v1501
  %v1503 = vsel %vm1178, %v1412, 0.0
  %v1504 = vadd.f32 %v1502, %v1503
  %v1505 = vsel %vm1178, %v1413, 0.0
  %v1506 = vadd.f32 %v1504, %v1505
  %v1507 = vsel %vm1178, %v1414, 0.0
  %v1508 = vadd.f32 %v1506, %v1507
  %v1509 = vsel %vm1178, %v1415, 0.0
  %v1510 = vadd.f32 %v1508, %v1509
  %v1511 = vsel %vm1178, %v1416, 0.0
  %v1512 = vadd.f32 %v1510, %v1511
  %v1513 = vsel %vm1178, %v1417, 0.0
  %v1514 = vadd.f32 %v1512, %v1513
  %v1515 = vsel %vm1178, %v1418, 0.0
  %v1516 = vadd.f32 %v1514, %v1515
  %v1517 = vsel %vm1178, %v1419, 0.0
  %v1518 = vadd.f32 %v1516, %v1517
  %v1519 = vsel %vm1178, %v1420, 0.0
  %v1520 = vadd.f32 %v1518, %v1519
  %v1521 = vsel %vm1178, %v1421, 0.0
  %v1522 = vadd.f32 %v1520, %v1521
  %v1523 = vsel %vm1178, %v1422, 0.0
  %v1524 = vadd.f32 %v1522, %v1523
  %v1525 = vsel %vm1178, %v1423, 0.0
  %v1526 = vadd.f32 %v1524, %v1525
  %v1527 = vsel %vm1178, %v1424, 0.0
  %v1528 = vadd.f32 %v1526, %v1527
  %v1529 = vsel %vm1178, %v1425, 0.0
  %v1530 = vadd.f32 %v1528, %v1529
  %v1531 = vsel %vm1178, %v1426, 0.0
  %v1532 = vadd.f32 %v1530, %v1531
  %v1533 = vsel %vm1178, %v1427, 0.0
  %v1534 = vadd.f32 %v1532, %v1533
  %v1535 = vsel %vm1178, %v1428, 0.0
  %v1536 = vadd.f32 %v1534, %v1535
  %v1537 = vsel %vm1178, %v1429, 0.0
  %v1538 = vadd.f32 %v1536, %v1537
  %v1539 = vsel %vm1178, %v1430, 0.0
  %v1540 = vadd.f32 %v1538, %v1539
  %v1541 = vsel %vm1178, %v1431, 0.0
  %v1542 = vadd.f32 %v1540, %v1541
  %v1543 = vsel %vm1178, %v1432, 0.0
  %v1544 = vadd.f32 %v1542, %v1543
  %v1545 = vsel %vm1178, %v1433, 0.0
  %v1546 = vadd.f32 %v1544, %v1545
  %v1547 = vsel %vm1178, %v1434, 0.0
  %v1548 = vadd.f32 %v1546, %v1547
  %v1549 = vsel %vm1178, %v1435, 0.0
  %v1550 = vadd.f32 %v1548, %v1549
  %v1551 = vsel %vm1178, %v1436, 0.0
  %v1552 = vadd.f32 %v1550, %v1551
  %v1553 = vsel %vm1178, %v1437, 0.0
  %v1554 = vadd.f32 %v1552, %v1553
  %v1555 = vsel %vm1178, %v1438, 0.0
  %v1556 = vadd.f32 %v1554, %v1555
  %v1557 = vsel %vm1178, %v1439, 0.0
  %v1558 = vadd.f32 %v1556, %v1557
  %v1559 = vsel %vm1178, %v1440, 0.0
  %v1560 = vadd.f32 %v1558, %v1559
  %v1561 = vsel %vm1178, %v1441, 0.0
  %v1562 = vadd.f32 %v1560, %v1561
  %v1563 = vsel %vm1178, %v1442, 0.0
  %v1564 = vadd.f32 %v1562, %v1563
  %v1565 = vsel %vm1178, %v1443, 0.0
  %v1566 = vadd.f32 %v1564, %v1565
  %v1567 = vsel %vm1178, %v1444, 0.0
  %v1568 = vadd.f32 %v1566, %v1567
  %v1569 = vsel %vm1178, %v1445, 0.0
  %v1570 = vadd.f32 %v1568, %v1569
  %v1571 = vsel %vm1178, %v1446, 0.0
  %v1572 = vadd.f32 %v1570, %v1571
  %v1573 = vsel %vm1178, %v1447, 0.0
  %v1574 = vadd.f32 %v1572, %v1573
  %v1575 = vrot.slane %v1574, 4
  %v1576 = vadd.f32 %v1574, %v1575
  %v1577 = vrot.slane %v1576, 2
  %v1578 = vadd.f32 %v1576, %v1577
  %v1579 = vrot.slane %v1578, 1
  %v1580 = vadd.f32 %v1578, %v1579
  %v1581 = vmul.f32 %v1580, %v1318
  %v1582 = vadd.f32 %v1581, 1e-05
  %v1583 = vrsqrt.pop %v1582
  %v1584 = vmul.f32 %v1583, %v1582
  %v1585 = vmul.f32 %v1584, %v1583
  %v1586 = vmul.f32 0.5, %v1585
  %v1587 = vsub.f32 1.5, %v1586
  %v1588 = vmul.f32 %v1583, %v1587
  %vm1589 = vweird.f32 %v1582
  %vm1590 = vweird.f32 %v1583
  %vm1591 = vmor %vm1589, %vm1590
  %v1592 = vsel %vm1591, %v1583, %v1588
  %v1593 = vmul.f32 %v1320, %v1592
  %v1594 = vmul.f32 %v1321, %v1592
  %v1595 = vmul.f32 %v1322, %v1592
  %v1596 = vmul.f32 %v1323, %v1592
  %v1597 = vmul.f32 %v1324, %v1592
  %v1598 = vmul.f32 %v1325, %v1592
  %v1599 = vmul.f32 %v1326, %v1592
  %v1600 = vmul.f32 %v1327, %v1592
  %v1601 = vmul.f32 %v1328, %v1592
  %v1602 = vmul.f32 %v1329, %v1592
  %v1603 = vmul.f32 %v1330, %v1592
  %v1604 = vmul.f32 %v1331, %v1592
  %v1605 = vmul.f32 %v1332, %v1592
  %v1606 = vmul.f32 %v1333, %v1592
  %v1607 = vmul.f32 %v1334, %v1592
  %v1608 = vmul.f32 %v1335, %v1592
  %v1609 = vmul.f32 %v1336, %v1592
  %v1610 = vmul.f32 %v1337, %v1592
  %v1611 = vmul.f32 %v1338, %v1592
  %v1612 = vmul.f32 %v1339, %v1592
  %v1613 = vmul.f32 %v1340, %v1592
  %v1614 = vmul.f32 %v1341, %v1592
  %v1615 = vmul.f32 %v1342, %v1592
  %v1616 = vmul.f32 %v1343, %v1592
  %v1617 = vmul.f32 %v1344, %v1592
  %v1618 = vmul.f32 %v1345, %v1592
  %v1619 = vmul.f32 %v1346, %v1592
  %v1620 = vmul.f32 %v1347, %v1592
  %v1621 = vmul.f32 %v1348, %v1592
  %v1622 = vmul.f32 %v1349, %v1592
  %v1623 = vmul.f32 %v1350, %v1592
  %v1624 = vmul.f32 %v1351, %v1592
  %v1625 = vmul.f32 %v1352, %v1592
  %v1626 = vmul.f32 %v1353, %v1592
  %v1627 = vmul.f32 %v1354, %v1592
  %v1628 = vmul.f32 %v1355, %v1592
  %v1629 = vmul.f32 %v1356, %v1592
  %v1630 = vmul.f32 %v1357, %v1592
  %v1631 = vmul.f32 %v1358, %v1592
  %v1632 = vmul.f32 %v1359, %v1592
  %v1633 = vmul.f32 %v1360, %v1592
  %v1634 = vmul.f32 %v1361, %v1592
  %v1635 = vmul.f32 %v1362, %v1592
  %v1636 = vmul.f32 %v1363, %v1592
  %v1637 = vmul.f32 %v1364, %v1592
  %v1638 = vmul.f32 %v1365, %v1592
  %v1639 = vmul.f32 %v1366, %v1592
  %v1640 = vmul.f32 %v1367, %v1592
  %v1641 = vmul.f32 %v1368, %v1592
  %v1642 = vmul.f32 %v1369, %v1592
  %v1643 = vmul.f32 %v1370, %v1592
  %v1644 = vmul.f32 %v1371, %v1592
  %v1645 = vmul.f32 %v1372, %v1592
  %v1646 = vmul.f32 %v1373, %v1592
  %v1647 = vmul.f32 %v1374, %v1592
  %v1648 = vmul.f32 %v1375, %v1592
  %v1649 = vmul.f32 %v1376, %v1592
  %v1650 = vmul.f32 %v1377, %v1592
  %v1651 = vmul.f32 %v1378, %v1592
  %v1652 = vmul.f32 %v1379, %v1592
  %v1653 = vmul.f32 %v1380, %v1592
  %v1654 = vmul.f32 %v1381, %v1592
  %v1655 = vmul.f32 %v1382, %v1592
  %v1656 = vmul.f32 %v1383, %v1592
  %v1657 = vperm.slane %v1177, 0
  %v1658 = vmul.f32 %v1593, %v1657
  %v1659 = vmul.f32 %v1594, %v1657
  %v1660 = vmul.f32 %v1595, %v1657
  %v1661 = vmul.f32 %v1596, %v1657
  %v1662 = vmul.f32 %v1597, %v1657
  %v1663 = vmul.f32 %v1598, %v1657
  %v1664 = vmul.f32 %v1599, %v1657
  %v1665 = vmul.f32 %v1600, %v1657
  %v1666 = vmul.f32 %v1601, %v1657
  %v1667 = vmul.f32 %v1602, %v1657
  %v1668 = vmul.f32 %v1603, %v1657
  %v1669 = vmul.f32 %v1604, %v1657
  %v1670 = vmul.f32 %v1605, %v1657
  %v1671 = vmul.f32 %v1606, %v1657
  %v1672 = vmul.f32 %v1607, %v1657
  %v1673 = vmul.f32 %v1608, %v1657
  %v1674 = vmul.f32 %v1609, %v1657
  %v1675 = vmul.f32 %v1610, %v1657
  %v1676 = vmul.f32 %v1611, %v1657
  %v1677 = vmul.f32 %v1612, %v1657
  %v1678 = vmul.f32 %v1613, %v1657
  %v1679 = vmul.f32 %v1614, %v1657
  %v1680 = vmul.f32 %v1615, %v1657
  %v1681 = vmul.f32 %v1616, %v1657
  %v1682 = vmul.f32 %v1617, %v1657
  %v1683 = vmul.f32 %v1618, %v1657
  %v1684 = vmul.f32 %v1619, %v1657
  %v1685 = vmul.f32 %v1620, %v1657
  %v1686 = vmul.f32 %v1621, %v1657
  %v1687 = vmul.f32 %v1622, %v1657
  %v1688 = vmul.f32 %v1623, %v1657
  %v1689 = vmul.f32 %v1624, %v1657
  %v1690 = vmul.f32 %v1625, %v1657
  %v1691 = vmul.f32 %v1626, %v1657
  %v1692 = vmul.f32 %v1627, %v1657
  %v1693 = vmul.f32 %v1628, %v1657
  %v1694 = vmul.f32 %v1629, %v1657
  %v1695 = vmul.f32 %v1630, %v1657
  %v1696 = vmul.f32 %v1631, %v1657
  %v1697 = vmul.f32 %v1632, %v1657
  %v1698 = vmul.f32 %v1633, %v1657
  %v1699 = vmul.f32 %v1634, %v1657
  %v1700 = vmul.f32 %v1635, %v1657
  %v1701 = vmul.f32 %v1636, %v1657
  %v1702 = vmul.f32 %v1637, %v1657
  %v1703 = vmul.f32 %v1638, %v1657
  %v1704 = vmul.f32 %v1639, %v1657
  %v1705 = vmul.f32 %v1640, %v1657
  %v1706 = vmul.f32 %v1641, %v1657
  %v1707 = vmul.f32 %v1642, %v1657
  %v1708 = vmul.f32 %v1643, %v1657
  %v1709 = vmul.f32 %v1644, %v1657
  %v1710 = vmul.f32 %v1645, %v1657
  %v1711 = vmul.f32 %v1646, %v1657
  %v1712 = vmul.f32 %v1647, %v1657
  %v1713 = vmul.f32 %v1648, %v1657
  %v1714 = vmul.f32 %v1649, %v1657
  %v1715 = vmul.f32 %v1650, %v1657
  %v1716 = vmul.f32 %v1651, %v1657
  %v1717 = vmul.f32 %v1652, %v1657
  %v1718 = vmul.f32 %v1653, %v1657
  %v1719 = vmul.f32 %v1654, %v1657
  %v1720 = vmul.f32 %v1655, %v1657
  %v1721 = vmul.f32 %v1656, %v1657
  %v1722 = vperm.slane %v1177, 1
  %v1723 = vadd.f32 %v1658, %v1722
  %v1724 = vadd.f32 %v1659, %v1722
  %v1725 = vadd.f32 %v1660, %v1722
  %v1726 = vadd.f32 %v1661, %v1722
  %v1727 = vadd.f32 %v1662, %v1722
  %v1728 = vadd.f32 %v1663, %v1722
  %v1729 = vadd.f32 %v1664, %v1722
  %v1730 = vadd.f32 %v1665, %v1722
  %v1731 = vadd.f32 %v1666, %v1722
  %v1732 = vadd.f32 %v1667, %v1722
  %v1733 = vadd.f32 %v1668, %v1722
  %v1734 = vadd.f32 %v1669, %v1722
  %v1735 = vadd.f32 %v1670, %v1722
  %v1736 = vadd.f32 %v1671, %v1722
  %v1737 = vadd.f32 %v1672, %v1722
  %v1738 = vadd.f32 %v1673, %v1722
  %v1739 = vadd.f32 %v1674, %v1722
  %v1740 = vadd.f32 %v1675, %v1722
  %v1741 = vadd.f32 %v1676, %v1722
  %v1742 = vadd.f32 %v1677, %v1722
  %v1743 = vadd.f32 %v1678, %v1722
  %v1744 = vadd.f32 %v1679, %v1722
  %v1745 = vadd.f32 %v1680, %v1722
  %v1746 = vadd.f32 %v1681, %v1722
  %v1747 = vadd.f32 %v1682, %v1722
  %v1748 = vadd.f32 %v1683, %v1722
  %v1749 = vadd.f32 %v1684, %v1722
  %v1750 = vadd.f32 %v1685, %v1722
  %v1751 = vadd.f32 %v1686, %v1722
  %v1752 = vadd.f32 %v1687, %v1722
  %v1753 = vadd.f32 %v1688, %v1722
  %v1754 = vadd.f32 %v1689, %v1722
  %v1755 = vadd.f32 %v1690, %v1722
  %v1756 = vadd.f32 %v1691, %v1722
  %v1757 = vadd.f32 %v1692, %v1722
  %v1758 = vadd.f32 %v1693, %v1722
  %v1759 = vadd.f32 %v1694, %v1722
  %v1760 = vadd.f32 %v1695, %v1722
  %v1761 = vadd.f32 %v1696, %v1722
  %v1762 = vadd.f32 %v1697, %v1722
  %v1763 = vadd.f32 %v1698, %v1722
  %v1764 = vadd.f32 %v1699, %v1722
  %v1765 = vadd.f32 %v1700, %v1722
  %v1766 = vadd.f32 %v1701, %v1722
  %v1767 = vadd.f32 %v1702, %v1722
  %v1768 = vadd.f32 %v1703, %v1722
  %v1769 = vadd.f32 %v1704, %v1722
  %v1770 = vadd.f32 %v1705, %v1722
  %v1771 = vadd.f32 %v1706, %v1722
  %v1772 = vadd.f32 %v1707, %v1722
  %v1773 = vadd.f32 %v1708, %v1722
  %v1774 = vadd.f32 %v1709, %v1722
  %v1775 = vadd.f32 %v1710, %v1722
  %v1776 = vadd.f32 %v1711, %v1722
  %v1777 = vadd.f32 %v1712, %v1722
  %v1778 = vadd.f32 %v1713, %v1722
  %v1779 = vadd.f32 %v1714, %v1722
  %v1780 = vadd.f32 %v1715, %v1722
  %v1781 = vadd.f32 %v1716, %v1722
  %v1782 = vadd.f32 %v1717, %v1722
  %v1783 = vadd.f32 %v1718, %v1722
  %v1784 = vadd.f32 %v1719, %v1722
  %v1785 = vadd.f32 %v1720, %v1722
  %v1786 = vadd.f32 %v1721, %v1722
  %v1787 = vmax.f32 %v1723, 0.0
  %v1788 = vmax.f32 %v1724, 0.0
  %v1789 = vmax.f32 %v1725, 0.0
  %v1790 = vmax.f32 %v1726, 0.0
  %v1791 = vmax.f32 %v1727, 0.0
  %v1792 = vmax.f32 %v1728, 0.0
  %v1793 = vmax.f32 %v1729, 0.0
  %v1794 = vmax.f32 %v1730, 0.0
  %v1795 = vmax.f32 %v1731, 0.0
  %v1796 = vmax.f32 %v1732, 0.0
  %v1797 = vmax.f32 %v1733, 0.0
  %v1798 = vmax.f32 %v1734, 0.0
  %v1799 = vmax.f32 %v1735, 0.0
  %v1800 = vmax.f32 %v1736, 0.0
  %v1801 = vmax.f32 %v1737, 0.0
  %v1802 = vmax.f32 %v1738, 0.0
  %v1803 = vmax.f32 %v1739, 0.0
  %v1804 = vmax.f32 %v1740, 0.0
  %v1805 = vmax.f32 %v1741, 0.0
  %v1806 = vmax.f32 %v1742, 0.0
  %v1807 = vmax.f32 %v1743, 0.0
  %v1808 = vmax.f32 %v1744, 0.0
  %v1809 = vmax.f32 %v1745, 0.0
  %v1810 = vmax.f32 %v1746, 0.0
  %v1811 = vmax.f32 %v1747, 0.0
  %v1812 = vmax.f32 %v1748, 0.0
  %v1813 = vmax.f32 %v1749, 0.0
  %v1814 = vmax.f32 %v1750, 0.0
  %v1815 = vmax.f32 %v1751, 0.0
  %v1816 = vmax.f32 %v1752, 0.0
  %v1817 = vmax.f32 %v1753, 0.0
  %v1818 = vmax.f32 %v1754, 0.0
  %v1819 = vmax.f32 %v1755, 0.0
  %v1820 = vmax.f32 %v1756, 0.0
  %v1821 = vmax.f32 %v1757, 0.0
  %v1822 = vmax.f32 %v1758, 0.0
  %v1823 = vmax.f32 %v1759, 0.0
  %v1824 = vmax.f32 %v1760, 0.0
  %v1825 = vmax.f32 %v1761, 0.0
  %v1826 = vmax.f32 %v1762, 0.0
  %v1827 = vmax.f32 %v1763, 0.0
  %v1828 = vmax.f32 %v1764, 0.0
  %v1829 = vmax.f32 %v1765, 0.0
  %v1830 = vmax.f32 %v1766, 0.0
  %v1831 = vmax.f32 %v1767, 0.0
  %v1832 = vmax.f32 %v1768, 0.0
  %v1833 = vmax.f32 %v1769, 0.0
  %v1834 = vmax.f32 %v1770, 0.0
  %v1835 = vmax.f32 %v1771, 0.0
  %v1836 = vmax.f32 %v1772, 0.0
  %v1837 = vmax.f32 %v1773, 0.0
  %v1838 = vmax.f32 %v1774, 0.0
  %v1839 = vmax.f32 %v1775, 0.0
  %v1840 = vmax.f32 %v1776, 0.0
  %v1841 = vmax.f32 %v1777, 0.0
  %v1842 = vmax.f32 %v1778, 0.0
  %v1843 = vmax.f32 %v1779, 0.0
  %v1844 = vmax.f32 %v1780, 0.0
  %v1845 = vmax.f32 %v1781, 0.0
  %v1846 = vmax.f32 %v1782, 0.0
  %v1847 = vmax.f32 %v1783, 0.0
  %v1848 = vmax.f32 %v1784, 0.0
  %v1849 = vmax.f32 %v1785, 0.0
  %v1850 = vmax.f32 %v1786, 0.0
  %1851 = vst.msk [vmem:[%s4] sm:$0xff] %vm1178, %v1787
  %1852 = vst.msk [vmem:[%s4 + $0x8] sm:$0xff] %vm1178, %v1788
  %1853 = vst.msk [vmem:[%s4 + $0x10] sm:$0xff] %vm1178, %v1789
  %1854 = vst.msk [vmem:[%s4 + $0x18] sm:$0xff] %vm1178, %v1790
  %1855 = vst.msk [vmem:[%s4 + $0x20] sm:$0xff] %vm1178, %v1791
  %1856 = vst.msk [vmem:[%s4 + $0x28] sm:$0xff] %vm1178, %v1792
  %1857 = vst.msk [vmem:[%s4 + $0x30] sm:$0xff] %vm1178, %v1793
  %1858 = vst.msk [vmem:[%s4 + $0x38] sm:$0xff] %vm1178, %v1794
  %1859 = vst.msk [vmem:[%s4 + $0x40] sm:$0xff] %vm1178, %v1795
  %1860 = vst.msk [vmem:[%s4 + $0x48] sm:$0xff] %vm1178, %v1796
  %1861 = vst.msk [vmem:[%s4 + $0x50] sm:$0xff] %vm1178, %v1797
  %1862 = vst.msk [vmem:[%s4 + $0x58] sm:$0xff] %vm1178, %v1798
  %1863 = vst.msk [vmem:[%s4 + $0x60] sm:$0xff] %vm1178, %v1799
  %1864 = vst.msk [vmem:[%s4 + $0x68] sm:$0xff] %vm1178, %v1800
  %1865 = vst.msk [vmem:[%s4 + $0x70] sm:$0xff] %vm1178, %v1801
  %1866 = vst.msk [vmem:[%s4 + $0x78] sm:$0xff] %vm1178, %v1802
  %1867 = vst.msk [vmem:[%s4 + $0x80] sm:$0xff] %vm1178, %v1803
  %1868 = vst.msk [vmem:[%s4 + $0x88] sm:$0xff] %vm1178, %v1804
  %1869 = vst.msk [vmem:[%s4 + $0x90] sm:$0xff] %vm1178, %v1805
  %1870 = vst.msk [vmem:[%s4 + $0x98] sm:$0xff] %vm1178, %v1806
  %1871 = vst.msk [vmem:[%s4 + $0xa0] sm:$0xff] %vm1178, %v1807
  %1872 = vst.msk [vmem:[%s4 + $0xa8] sm:$0xff] %vm1178, %v1808
  %1873 = vst.msk [vmem:[%s4 + $0xb0] sm:$0xff] %vm1178, %v1809
  %1874 = vst.msk [vmem:[%s4 + $0xb8] sm:$0xff] %vm1178, %v1810
  %1875 = vst.msk [vmem:[%s4 + $0xc0] sm:$0xff] %vm1178, %v1811
  %1876 = vst.msk [vmem:[%s4 + $0xc8] sm:$0xff] %vm1178, %v1812
  %1877 = vst.msk [vmem:[%s4 + $0xd0] sm:$0xff] %vm1178, %v1813
  %1878 = vst.msk [vmem:[%s4 + $0xd8] sm:$0xff] %vm1178, %v1814
  %1879 = vst.msk [vmem:[%s4 + $0xe0] sm:$0xff] %vm1178, %v1815
  %1880 = vst.msk [vmem:[%s4 + $0xe8] sm:$0xff] %vm1178, %v1816
  %1881 = vst.msk [vmem:[%s4 + $0xf0] sm:$0xff] %vm1178, %v1817
  %1882 = vst.msk [vmem:[%s4 + $0xf8] sm:$0xff] %vm1178, %v1818
  %1883 = vst.msk [vmem:[%s4 + $0x100] sm:$0xff] %vm1178, %v1819
  %1884 = vst.msk [vmem:[%s4 + $0x108] sm:$0xff] %vm1178, %v1820
  %1885 = vst.msk [vmem:[%s4 + $0x110] sm:$0xff] %vm1178, %v1821
  %1886 = vst.msk [vmem:[%s4 + $0x118] sm:$0xff] %vm1178, %v1822
  %1887 = vst.msk [vmem:[%s4 + $0x120] sm:$0xff] %vm1178, %v1823
  %1888 = vst.msk [vmem:[%s4 + $0x128] sm:$0xff] %vm1178, %v1824
  %1889 = vst.msk [vmem:[%s4 + $0x130] sm:$0xff] %vm1178, %v1825
  %1890 = vst.msk [vmem:[%s4 + $0x138] sm:$0xff] %vm1178, %v1826
  %1891 = vst.msk [vmem:[%s4 + $0x140] sm:$0xff] %vm1178, %v1827
  %1892 = vst.msk [vmem:[%s4 + $0x148] sm:$0xff] %vm1178, %v1828
  %1893 = vst.msk [vmem:[%s4 + $0x150] sm:$0xff] %vm1178, %v1829
  %1894 = vst.msk [vmem:[%s4 + $0x158] sm:$0xff] %vm1178, %v1830
  %1895 = vst.msk [vmem:[%s4 + $0x160] sm:$0xff] %vm1178, %v1831
  %1896 = vst.msk [vmem:[%s4 + $0x168] sm:$0xff] %vm1178, %v1832
  %1897 = vst.msk [vmem:[%s4 + $0x170] sm:$0xff] %vm1178, %v1833
  %1898 = vst.msk [vmem:[%s4 + $0x178] sm:$0xff] %vm1178, %v1834
  %1899 = vst.msk [vmem:[%s4 + $0x180] sm:$0xff] %vm1178, %v1835
  %1900 = vst.msk [vmem:[%s4 + $0x188] sm:$0xff] %vm1178, %v1836
  %1901 = vst.msk [vmem:[%s4 + $0x190] sm:$0xff] %vm1178, %v1837
  %1902 = vst.msk [vmem:[%s4 + $0x198] sm:$0xff] %vm1178, %v1838
  %1903 = vst.msk [vmem:[%s4 + $0x1a0] sm:$0xff] %vm1178, %v1839
  %1904 = vst.msk [vmem:[%s4 + $0x1a8] sm:$0xff] %vm1178, %v1840
  %1905 = vst.msk [vmem:[%s4 + $0x1b0] sm:$0xff] %vm1178, %v1841
  %1906 = vst.msk [vmem:[%s4 + $0x1b8] sm:$0xff] %vm1178, %v1842
  %1907 = vst.msk [vmem:[%s4 + $0x1c0] sm:$0xff] %vm1178, %v1843
  %1908 = vst.msk [vmem:[%s4 + $0x1c8] sm:$0xff] %vm1178, %v1844
  %1909 = vst.msk [vmem:[%s4 + $0x1d0] sm:$0xff] %vm1178, %v1845
  %1910 = vst.msk [vmem:[%s4 + $0x1d8] sm:$0xff] %vm1178, %v1846
  %1911 = vst.msk [vmem:[%s4 + $0x1e0] sm:$0xff] %vm1178, %v1847
  %1912 = vst.msk [vmem:[%s4 + $0x1e8] sm:$0xff] %vm1178, %v1848
  %1913 = vst.msk [vmem:[%s4 + $0x1f0] sm:$0xff] %vm1178, %v1849
  %1914 = vst.msk [vmem:[%s4 + $0x1f8] sm:$0xff] %vm1178, %v1850
  // Predicated region
  $region18: #{glo_forward.6} parent=0 // pred_check
    _
  $region19: #{glo_forward.6} parent=0 // pred_check_branch
    %1916 = sbr.rel (0) target = $region21
  $region20: #{glo_forward.6} parent=0 // pred_region
    _
  $region21: #{glo_forward.6} parent=0 // pred_fallthru
    _
  // Predicated region
  $region22: #{glo_forward.6} parent=0 // pred_check
    _
  $region23: #{glo_forward.6} parent=0 // pred_check_branch
    %1918 = sbr.rel (0) target = $region25
  $region24: #{glo_forward.6} parent=0 // pred_region
    _
  $region25: #{glo_forward.6} parent=0 // pred_fallthru
    _

// kernel: glo_forward.7
$region0: #{glo_forward.7}
  #allocation0 [shape = 'u32[]', space=smem, size = 0x4, offset = 0x4, fixed_abs, tag = 'smem constant byte address 0x4 - core index']
  #allocation1 [shape = 'u32[72,128]{1,0:T(1,128)}', space=vmem, size = 0x9000, scoped, tag = 'internal scratch']
  %s0 = inlined_call_operand.vmem [shape: f32[2048,256], index: 0, kind: input, shape index: {}]
  %s1 = inlined_call_operand.vmem [shape: f32[256,3], index: 1, kind: input, shape index: {}]
  %s2 = inlined_call_operand.vmem [shape: f32[1,3], index: 2, kind: input, shape index: {}]
  %s3 = inlined_call_operand.vmem [shape: f32[2048,3], index: 3, kind: output, shape index: {}]
  %s4 = sld [smem:[#allocation0]]
  $region22: #{glo_forward.7} parent=0
    _
  %s6 = ssub.s32 1, %s4
  %s7 = scalar_select 0, %s6, %s4
  // Predicated region
  $region2: #{glo_forward.7} parent=0 // pred_check
    _
  $region3: #{glo_forward.7} parent=0 // pred_check_branch
    %9 = sbr.rel (0) target = $region5
  $region4: #{glo_forward.7} parent=0 // pred_region
    _
  $region5: #{glo_forward.7} parent=0 // pred_fallthru
    _
  // Predicated region
  $region6: #{glo_forward.7} parent=0 // pred_check
    _
  $region7: #{glo_forward.7} parent=0 // pred_check_branch
    %11 = sbr.rel (0) target = $region9
  $region8: #{glo_forward.7} parent=0 // pred_region
    _
  $region9: #{glo_forward.7} parent=0 // pred_fallthru
    _
  // Predicated region
  $region10: #{glo_forward.7} parent=0 // pred_check
    _
  $region11: #{glo_forward.7} parent=0 // pred_check_branch
    %13 = sbr.rel (0) target = $region13
  $region12: #{glo_forward.7} parent=0 // pred_region
    _
  $region13: #{glo_forward.7} parent=0 // pred_fallthru
    _
  %v14 = vld [vmem:[%s0] sm:$0xff]
  %v15 = vld [vmem:[%s0 + $0x8] sm:$0xff]
  %v16 = vld [vmem:[%s0 + $0x10] sm:$0xff]
  %v17 = vld [vmem:[%s0 + $0x18] sm:$0xff]
  %v18 = vld [vmem:[%s0 + $0x20] sm:$0xff]
  %v19 = vld [vmem:[%s0 + $0x28] sm:$0xff]
  %v20 = vld [vmem:[%s0 + $0x30] sm:$0xff]
  %v21 = vld [vmem:[%s0 + $0x38] sm:$0xff]
  %v22 = vld [vmem:[%s0 + $0x40] sm:$0xff]
  %v23 = vld [vmem:[%s0 + $0x48] sm:$0xff]
  %v24 = vld [vmem:[%s0 + $0x50] sm:$0xff]
  %v25 = vld [vmem:[%s0 + $0x58] sm:$0xff]
  %v26 = vld [vmem:[%s0 + $0x60] sm:$0xff]
  %v27 = vld [vmem:[%s0 + $0x68] sm:$0xff]
  %v28 = vld [vmem:[%s0 + $0x70] sm:$0xff]
  %v29 = vld [vmem:[%s0 + $0x78] sm:$0xff]
  %v30 = vld [vmem:[%s0 + $0x80] sm:$0xff]
  %v31 = vld [vmem:[%s0 + $0x88] sm:$0xff]
  %v32 = vld [vmem:[%s0 + $0x90] sm:$0xff]
  %v33 = vld [vmem:[%s0 + $0x98] sm:$0xff]
  %v34 = vld [vmem:[%s0 + $0xa0] sm:$0xff]
  %v35 = vld [vmem:[%s0 + $0xa8] sm:$0xff]
  %v36 = vld [vmem:[%s0 + $0xb0] sm:$0xff]
  %v37 = vld [vmem:[%s0 + $0xb8] sm:$0xff]
  %v38 = vld [vmem:[%s0 + $0xc0] sm:$0xff]
  %v39 = vld [vmem:[%s0 + $0xc8] sm:$0xff]
  %v40 = vld [vmem:[%s0 + $0xd0] sm:$0xff]
  %v41 = vld [vmem:[%s0 + $0xd8] sm:$0xff]
  %v42 = vld [vmem:[%s0 + $0xe0] sm:$0xff]
  %v43 = vld [vmem:[%s0 + $0xe8] sm:$0xff]
  %v44 = vld [vmem:[%s0 + $0xf0] sm:$0xff]
  %v45 = vld [vmem:[%s0 + $0xf8] sm:$0xff]
  %v46 = vld [vmem:[%s0 + $0x100] sm:$0xff]
  %v47 = vld [vmem:[%s0 + $0x108] sm:$0xff]
  %v48 = vld [vmem:[%s0 + $0x110] sm:$0xff]
  %v49 = vld [vmem:[%s0 + $0x118] sm:$0xff]
  %v50 = vld [vmem:[%s0 + $0x120] sm:$0xff]
  %v51 = vld [vmem:[%s0 + $0x128] sm:$0xff]
  %v52 = vld [vmem:[%s0 + $0x130] sm:$0xff]
  %v53 = vld [vmem:[%s0 + $0x138] sm:$0xff]
  %v54 = vld [vmem:[%s0 + $0x140] sm:$0xff]
  %v55 = vld [vmem:[%s0 + $0x148] sm:$0xff]
  %v56 = vld [vmem:[%s0 + $0x150] sm:$0xff]
  %v57 = vld [vmem:[%s0 + $0x158] sm:$0xff]
  %v58 = vld [vmem:[%s0 + $0x160] sm:$0xff]
  %v59 = vld [vmem:[%s0 + $0x168] sm:$0xff]
  %v60 = vld [vmem:[%s0 + $0x170] sm:$0xff]
  %v61 = vld [vmem:[%s0 + $0x178] sm:$0xff]
  %v62 = vld [vmem:[%s0 + $0x180] sm:$0xff]
  %v63 = vld [vmem:[%s0 + $0x188] sm:$0xff]
  %v64 = vld [vmem:[%s0 + $0x190] sm:$0xff]
  %v65 = vld [vmem:[%s0 + $0x198] sm:$0xff]
  %v66 = vld [vmem:[%s0 + $0x1a0] sm:$0xff]
  %v67 = vld [vmem:[%s0 + $0x1a8] sm:$0xff]
  %v68 = vld [vmem:[%s0 + $0x1b0] sm:$0xff]
  %v69 = vld [vmem:[%s0 + $0x1b8] sm:$0xff]
  %v70 = vld [vmem:[%s0 + $0x1c0] sm:$0xff]
  %v71 = vld [vmem:[%s0 + $0x1c8] sm:$0xff]
  %v72 = vld [vmem:[%s0 + $0x1d0] sm:$0xff]
  %v73 = vld [vmem:[%s0 + $0x1d8] sm:$0xff]
  %v74 = vld [vmem:[%s0 + $0x1e0] sm:$0xff]
  %v75 = vld [vmem:[%s0 + $0x1e8] sm:$0xff]
  %v76 = vld [vmem:[%s0 + $0x1f0] sm:$0xff]
  %v77 = vld [vmem:[%s0 + $0x1f8] sm:$0xff]
  %v78 = vld [vmem:[%s0 + $0x200] sm:$0xff]
  %v79 = vld [vmem:[%s0 + $0x208] sm:$0xff]
  %v80 = vld [vmem:[%s0 + $0x210] sm:$0xff]
  %v81 = vld [vmem:[%s0 + $0x218] sm:$0xff]
  %v82 = vld [vmem:[%s0 + $0x220] sm:$0xff]
  %v83 = vld [vmem:[%s0 + $0x228] sm:$0xff]
  %v84 = vld [vmem:[%s0 + $0x230] sm:$0xff]
  %v85 = vld [vmem:[%s0 + $0x238] sm:$0xff]
  %v86 = vld [vmem:[%s0 + $0x240] sm:$0xff]
  %v87 = vld [vmem:[%s0 + $0x248] sm:$0xff]
  %v88 = vld [vmem:[%s0 + $0x250] sm:$0xff]
  %v89 = vld [vmem:[%s0 + $0x258] sm:$0xff]
  %v90 = vld [vmem:[%s0 + $0x260] sm:$0xff]
  %v91 = vld [vmem:[%s0 + $0x268] sm:$0xff]
  %v92 = vld [vmem:[%s0 + $0x270] sm:$0xff]
  %v93 = vld [vmem:[%s0 + $0x278] sm:$0xff]
  %v94 = vld [vmem:[%s0 + $0x280] sm:$0xff]
  %v95 = vld [vmem:[%s0 + $0x288] sm:$0xff]
  %v96 = vld [vmem:[%s0 + $0x290] sm:$0xff]
  %v97 = vld [vmem:[%s0 + $0x298] sm:$0xff]
  %v98 = vld [vmem:[%s0 + $0x2a0] sm:$0xff]
  %v99 = vld [vmem:[%s0 + $0x2a8] sm:$0xff]
  %v100 = vld [vmem:[%s0 + $0x2b0] sm:$0xff]
  %v101 = vld [vmem:[%s0 + $0x2b8] sm:$0xff]
  %v102 = vld [vmem:[%s0 + $0x2c0] sm:$0xff]
  %v103 = vld [vmem:[%s0 + $0x2c8] sm:$0xff]
  %v104 = vld [vmem:[%s0 + $0x2d0] sm:$0xff]
  %v105 = vld [vmem:[%s0 + $0x2d8] sm:$0xff]
  %v106 = vld [vmem:[%s0 + $0x2e0] sm:$0xff]
  %v107 = vld [vmem:[%s0 + $0x2e8] sm:$0xff]
  %v108 = vld [vmem:[%s0 + $0x2f0] sm:$0xff]
  %v109 = vld [vmem:[%s0 + $0x2f8] sm:$0xff]
  %v110 = vld [vmem:[%s0 + $0x300] sm:$0xff]
  %v111 = vld [vmem:[%s0 + $0x308] sm:$0xff]
  %v112 = vld [vmem:[%s0 + $0x310] sm:$0xff]
  %v113 = vld [vmem:[%s0 + $0x318] sm:$0xff]
  %v114 = vld [vmem:[%s0 + $0x320] sm:$0xff]
  %v115 = vld [vmem:[%s0 + $0x328] sm:$0xff]
  %v116 = vld [vmem:[%s0 + $0x330] sm:$0xff]
  %v117 = vld [vmem:[%s0 + $0x338] sm:$0xff]
  %v118 = vld [vmem:[%s0 + $0x340] sm:$0xff]
  %v119 = vld [vmem:[%s0 + $0x348] sm:$0xff]
  %v120 = vld [vmem:[%s0 + $0x350] sm:$0xff]
  %v121 = vld [vmem:[%s0 + $0x358] sm:$0xff]
  %v122 = vld [vmem:[%s0 + $0x360] sm:$0xff]
  %v123 = vld [vmem:[%s0 + $0x368] sm:$0xff]
  %v124 = vld [vmem:[%s0 + $0x370] sm:$0xff]
  %v125 = vld [vmem:[%s0 + $0x378] sm:$0xff]
  %v126 = vld [vmem:[%s0 + $0x380] sm:$0xff]
  %v127 = vld [vmem:[%s0 + $0x388] sm:$0xff]
  %v128 = vld [vmem:[%s0 + $0x390] sm:$0xff]
  %v129 = vld [vmem:[%s0 + $0x398] sm:$0xff]
  %v130 = vld [vmem:[%s0 + $0x3a0] sm:$0xff]
  %v131 = vld [vmem:[%s0 + $0x3a8] sm:$0xff]
  %v132 = vld [vmem:[%s0 + $0x3b0] sm:$0xff]
  %v133 = vld [vmem:[%s0 + $0x3b8] sm:$0xff]
  %v134 = vld [vmem:[%s0 + $0x3c0] sm:$0xff]
  %v135 = vld [vmem:[%s0 + $0x3c8] sm:$0xff]
  %v136 = vld [vmem:[%s0 + $0x3d0] sm:$0xff]
  %v137 = vld [vmem:[%s0 + $0x3d8] sm:$0xff]
  %v138 = vld [vmem:[%s0 + $0x3e0] sm:$0xff]
  %v139 = vld [vmem:[%s0 + $0x3e8] sm:$0xff]
  %v140 = vld [vmem:[%s0 + $0x3f0] sm:$0xff]
  %v141 = vld [vmem:[%s0 + $0x3f8] sm:$0xff]
  %v142 = vld [vmem:[%s0 + $0x400] sm:$0xff]
  %v143 = vld [vmem:[%s0 + $0x408] sm:$0xff]
  %v144 = vld [vmem:[%s0 + $0x410] sm:$0xff]
  %v145 = vld [vmem:[%s0 + $0x418] sm:$0xff]
  %v146 = vld [vmem:[%s0 + $0x420] sm:$0xff]
  %v147 = vld [vmem:[%s0 + $0x428] sm:$0xff]
  %v148 = vld [vmem:[%s0 + $0x430] sm:$0xff]
  %v149 = vld [vmem:[%s0 + $0x438] sm:$0xff]
  %v150 = vld [vmem:[%s0 + $0x440] sm:$0xff]
  %v151 = vld [vmem:[%s0 + $0x448] sm:$0xff]
  %v152 = vld [vmem:[%s0 + $0x450] sm:$0xff]
  %v153 = vld [vmem:[%s0 + $0x458] sm:$0xff]
  %v154 = vld [vmem:[%s0 + $0x460] sm:$0xff]
  %v155 = vld [vmem:[%s0 + $0x468] sm:$0xff]
  %v156 = vld [vmem:[%s0 + $0x470] sm:$0xff]
  %v157 = vld [vmem:[%s0 + $0x478] sm:$0xff]
  %v158 = vld [vmem:[%s0 + $0x480] sm:$0xff]
  %v159 = vld [vmem:[%s0 + $0x488] sm:$0xff]
  %v160 = vld [vmem:[%s0 + $0x490] sm:$0xff]
  %v161 = vld [vmem:[%s0 + $0x498] sm:$0xff]
  %v162 = vld [vmem:[%s0 + $0x4a0] sm:$0xff]
  %v163 = vld [vmem:[%s0 + $0x4a8] sm:$0xff]
  %v164 = vld [vmem:[%s0 + $0x4b0] sm:$0xff]
  %v165 = vld [vmem:[%s0 + $0x4b8] sm:$0xff]
  %v166 = vld [vmem:[%s0 + $0x4c0] sm:$0xff]
  %v167 = vld [vmem:[%s0 + $0x4c8] sm:$0xff]
  %v168 = vld [vmem:[%s0 + $0x4d0] sm:$0xff]
  %v169 = vld [vmem:[%s0 + $0x4d8] sm:$0xff]
  %v170 = vld [vmem:[%s0 + $0x4e0] sm:$0xff]
  %v171 = vld [vmem:[%s0 + $0x4e8] sm:$0xff]
  %v172 = vld [vmem:[%s0 + $0x4f0] sm:$0xff]
  %v173 = vld [vmem:[%s0 + $0x4f8] sm:$0xff]
  %v174 = vld [vmem:[%s0 + $0x500] sm:$0xff]
  %v175 = vld [vmem:[%s0 + $0x508] sm:$0xff]
  %v176 = vld [vmem:[%s0 + $0x510] sm:$0xff]
  %v177 = vld [vmem:[%s0 + $0x518] sm:$0xff]
  %v178 = vld [vmem:[%s0 + $0x520] sm:$0xff]
  %v179 = vld [vmem:[%s0 + $0x528] sm:$0xff]
  %v180 = vld [vmem:[%s0 + $0x530] sm:$0xff]
  %v181 = vld [vmem:[%s0 + $0x538] sm:$0xff]
  %v182 = vld [vmem:[%s0 + $0x540] sm:$0xff]
  %v183 = vld [vmem:[%s0 + $0x548] sm:$0xff]
  %v184 = vld [vmem:[%s0 + $0x550] sm:$0xff]
  %v185 = vld [vmem:[%s0 + $0x558] sm:$0xff]
  %v186 = vld [vmem:[%s0 + $0x560] sm:$0xff]
  %v187 = vld [vmem:[%s0 + $0x568] sm:$0xff]
  %v188 = vld [vmem:[%s0 + $0x570] sm:$0xff]
  %v189 = vld [vmem:[%s0 + $0x578] sm:$0xff]
  %v190 = vld [vmem:[%s0 + $0x580] sm:$0xff]
  %v191 = vld [vmem:[%s0 + $0x588] sm:$0xff]
  %v192 = vld [vmem:[%s0 + $0x590] sm:$0xff]
  %v193 = vld [vmem:[%s0 + $0x598] sm:$0xff]
  %v194 = vld [vmem:[%s0 + $0x5a0] sm:$0xff]
  %v195 = vld [vmem:[%s0 + $0x5a8] sm:$0xff]
  %v196 = vld [vmem:[%s0 + $0x5b0] sm:$0xff]
  %v197 = vld [vmem:[%s0 + $0x5b8] sm:$0xff]
  %v198 = vld [vmem:[%s0 + $0x5c0] sm:$0xff]
  %v199 = vld [vmem:[%s0 + $0x5c8] sm:$0xff]
  %v200 = vld [vmem:[%s0 + $0x5d0] sm:$0xff]
  %v201 = vld [vmem:[%s0 + $0x5d8] sm:$0xff]
  %v202 = vld [vmem:[%s0 + $0x5e0] sm:$0xff]
  %v203 = vld [vmem:[%s0 + $0x5e8] sm:$0xff]
  %v204 = vld [vmem:[%s0 + $0x5f0] sm:$0xff]
  %v205 = vld [vmem:[%s0 + $0x5f8] sm:$0xff]
  %v206 = vld [vmem:[%s0 + $0x600] sm:$0xff]
  %v207 = vld [vmem:[%s0 + $0x608] sm:$0xff]
  %v208 = vld [vmem:[%s0 + $0x610] sm:$0xff]
  %v209 = vld [vmem:[%s0 + $0x618] sm:$0xff]
  %v210 = vld [vmem:[%s0 + $0x620] sm:$0xff]
  %v211 = vld [vmem:[%s0 + $0x628] sm:$0xff]
  %v212 = vld [vmem:[%s0 + $0x630] sm:$0xff]
  %v213 = vld [vmem:[%s0 + $0x638] sm:$0xff]
  %v214 = vld [vmem:[%s0 + $0x640] sm:$0xff]
  %v215 = vld [vmem:[%s0 + $0x648] sm:$0xff]
  %v216 = vld [vmem:[%s0 + $0x650] sm:$0xff]
  %v217 = vld [vmem:[%s0 + $0x658] sm:$0xff]
  %v218 = vld [vmem:[%s0 + $0x660] sm:$0xff]
  %v219 = vld [vmem:[%s0 + $0x668] sm:$0xff]
  %v220 = vld [vmem:[%s0 + $0x670] sm:$0xff]
  %v221 = vld [vmem:[%s0 + $0x678] sm:$0xff]
  %v222 = vld [vmem:[%s0 + $0x680] sm:$0xff]
  %v223 = vld [vmem:[%s0 + $0x688] sm:$0xff]
  %v224 = vld [vmem:[%s0 + $0x690] sm:$0xff]
  %v225 = vld [vmem:[%s0 + $0x698] sm:$0xff]
  %v226 = vld [vmem:[%s0 + $0x6a0] sm:$0xff]
  %v227 = vld [vmem:[%s0 + $0x6a8] sm:$0xff]
  %v228 = vld [vmem:[%s0 + $0x6b0] sm:$0xff]
  %v229 = vld [vmem:[%s0 + $0x6b8] sm:$0xff]
  %v230 = vld [vmem:[%s0 + $0x6c0] sm:$0xff]
  %v231 = vld [vmem:[%s0 + $0x6c8] sm:$0xff]
  %v232 = vld [vmem:[%s0 + $0x6d0] sm:$0xff]
  %v233 = vld [vmem:[%s0 + $0x6d8] sm:$0xff]
  %v234 = vld [vmem:[%s0 + $0x6e0] sm:$0xff]
  %v235 = vld [vmem:[%s0 + $0x6e8] sm:$0xff]
  %v236 = vld [vmem:[%s0 + $0x6f0] sm:$0xff]
  %v237 = vld [vmem:[%s0 + $0x6f8] sm:$0xff]
  %v238 = vld [vmem:[%s0 + $0x700] sm:$0xff]
  %v239 = vld [vmem:[%s0 + $0x708] sm:$0xff]
  %v240 = vld [vmem:[%s0 + $0x710] sm:$0xff]
  %v241 = vld [vmem:[%s0 + $0x718] sm:$0xff]
  %v242 = vld [vmem:[%s0 + $0x720] sm:$0xff]
  %v243 = vld [vmem:[%s0 + $0x728] sm:$0xff]
  %v244 = vld [vmem:[%s0 + $0x730] sm:$0xff]
  %v245 = vld [vmem:[%s0 + $0x738] sm:$0xff]
  %v246 = vld [vmem:[%s0 + $0x740] sm:$0xff]
  %v247 = vld [vmem:[%s0 + $0x748] sm:$0xff]
  %v248 = vld [vmem:[%s0 + $0x750] sm:$0xff]
  %v249 = vld [vmem:[%s0 + $0x758] sm:$0xff]
  %v250 = vld [vmem:[%s0 + $0x760] sm:$0xff]
  %v251 = vld [vmem:[%s0 + $0x768] sm:$0xff]
  %v252 = vld [vmem:[%s0 + $0x770] sm:$0xff]
  %v253 = vld [vmem:[%s0 + $0x778] sm:$0xff]
  %v254 = vld [vmem:[%s0 + $0x780] sm:$0xff]
  %v255 = vld [vmem:[%s0 + $0x788] sm:$0xff]
  %v256 = vld [vmem:[%s0 + $0x790] sm:$0xff]
  %v257 = vld [vmem:[%s0 + $0x798] sm:$0xff]
  %v258 = vld [vmem:[%s0 + $0x7a0] sm:$0xff]
  %v259 = vld [vmem:[%s0 + $0x7a8] sm:$0xff]
  %v260 = vld [vmem:[%s0 + $0x7b0] sm:$0xff]
  %v261 = vld [vmem:[%s0 + $0x7b8] sm:$0xff]
  %v262 = vld [vmem:[%s0 + $0x7c0] sm:$0xff]
  %v263 = vld [vmem:[%s0 + $0x7c8] sm:$0xff]
  %v264 = vld [vmem:[%s0 + $0x7d0] sm:$0xff]
  %v265 = vld [vmem:[%s0 + $0x7d8] sm:$0xff]
  %v266 = vld [vmem:[%s0 + $0x7e0] sm:$0xff]
  %v267 = vld [vmem:[%s0 + $0x7e8] sm:$0xff]
  %v268 = vld [vmem:[%s0 + $0x7f0] sm:$0xff]
  %v269 = vld [vmem:[%s0 + $0x7f8] sm:$0xff]
  %v270 = vld [vmem:[%s0 + $0x800] sm:$0xff]
  %v271 = vld [vmem:[%s0 + $0x808] sm:$0xff]
  %v272 = vld [vmem:[%s0 + $0x810] sm:$0xff]
  %v273 = vld [vmem:[%s0 + $0x818] sm:$0xff]
  %v274 = vld [vmem:[%s0 + $0x820] sm:$0xff]
  %v275 = vld [vmem:[%s0 + $0x828] sm:$0xff]
  %v276 = vld [vmem:[%s0 + $0x830] sm:$0xff]
  %v277 = vld [vmem:[%s0 + $0x838] sm:$0xff]
  %v278 = vld [vmem:[%s0 + $0x840] sm:$0xff]
  %v279 = vld [vmem:[%s0 + $0x848] sm:$0xff]
  %v280 = vld [vmem:[%s0 + $0x850] sm:$0xff]
  %v281 = vld [vmem:[%s0 + $0x858] sm:$0xff]
  %v282 = vld [vmem:[%s0 + $0x860] sm:$0xff]
  %v283 = vld [vmem:[%s0 + $0x868] sm:$0xff]
  %v284 = vld [vmem:[%s0 + $0x870] sm:$0xff]
  %v285 = vld [vmem:[%s0 + $0x878] sm:$0xff]
  %v286 = vld [vmem:[%s0 + $0x880] sm:$0xff]
  %v287 = vld [vmem:[%s0 + $0x888] sm:$0xff]
  %v288 = vld [vmem:[%s0 + $0x890] sm:$0xff]
  %v289 = vld [vmem:[%s0 + $0x898] sm:$0xff]
  %v290 = vld [vmem:[%s0 + $0x8a0] sm:$0xff]
  %v291 = vld [vmem:[%s0 + $0x8a8] sm:$0xff]
  %v292 = vld [vmem:[%s0 + $0x8b0] sm:$0xff]
  %v293 = vld [vmem:[%s0 + $0x8b8] sm:$0xff]
  %v294 = vld [vmem:[%s0 + $0x8c0] sm:$0xff]
  %v295 = vld [vmem:[%s0 + $0x8c8] sm:$0xff]
  %v296 = vld [vmem:[%s0 + $0x8d0] sm:$0xff]
  %v297 = vld [vmem:[%s0 + $0x8d8] sm:$0xff]
  %v298 = vld [vmem:[%s0 + $0x8e0] sm:$0xff]
  %v299 = vld [vmem:[%s0 + $0x8e8] sm:$0xff]
  %v300 = vld [vmem:[%s0 + $0x8f0] sm:$0xff]
  %v301 = vld [vmem:[%s0 + $0x8f8] sm:$0xff]
  %v302 = vld [vmem:[%s0 + $0x900] sm:$0xff]
  %v303 = vld [vmem:[%s0 + $0x908] sm:$0xff]
  %v304 = vld [vmem:[%s0 + $0x910] sm:$0xff]
  %v305 = vld [vmem:[%s0 + $0x918] sm:$0xff]
  %v306 = vld [vmem:[%s0 + $0x920] sm:$0xff]
  %v307 = vld [vmem:[%s0 + $0x928] sm:$0xff]
  %v308 = vld [vmem:[%s0 + $0x930] sm:$0xff]
  %v309 = vld [vmem:[%s0 + $0x938] sm:$0xff]
  %v310 = vld [vmem:[%s0 + $0x940] sm:$0xff]
  %v311 = vld [vmem:[%s0 + $0x948] sm:$0xff]
  %v312 = vld [vmem:[%s0 + $0x950] sm:$0xff]
  %v313 = vld [vmem:[%s0 + $0x958] sm:$0xff]
  %v314 = vld [vmem:[%s0 + $0x960] sm:$0xff]
  %v315 = vld [vmem:[%s0 + $0x968] sm:$0xff]
  %v316 = vld [vmem:[%s0 + $0x970] sm:$0xff]
  %v317 = vld [vmem:[%s0 + $0x978] sm:$0xff]
  %v318 = vld [vmem:[%s0 + $0x980] sm:$0xff]
  %v319 = vld [vmem:[%s0 + $0x988] sm:$0xff]
  %v320 = vld [vmem:[%s0 + $0x990] sm:$0xff]
  %v321 = vld [vmem:[%s0 + $0x998] sm:$0xff]
  %v322 = vld [vmem:[%s0 + $0x9a0] sm:$0xff]
  %v323 = vld [vmem:[%s0 + $0x9a8] sm:$0xff]
  %v324 = vld [vmem:[%s0 + $0x9b0] sm:$0xff]
  %v325 = vld [vmem:[%s0 + $0x9b8] sm:$0xff]
  %v326 = vld [vmem:[%s0 + $0x9c0] sm:$0xff]
  %v327 = vld [vmem:[%s0 + $0x9c8] sm:$0xff]
  %v328 = vld [vmem:[%s0 + $0x9d0] sm:$0xff]
  %v329 = vld [vmem:[%s0 + $0x9d8] sm:$0xff]
  %v330 = vld [vmem:[%s0 + $0x9e0] sm:$0xff]
  %v331 = vld [vmem:[%s0 + $0x9e8] sm:$0xff]
  %v332 = vld [vmem:[%s0 + $0x9f0] sm:$0xff]
  %v333 = vld [vmem:[%s0 + $0x9f8] sm:$0xff]
  %v334 = vld [vmem:[%s0 + $0xa00] sm:$0xff]
  %v335 = vld [vmem:[%s0 + $0xa08] sm:$0xff]
  %v336 = vld [vmem:[%s0 + $0xa10] sm:$0xff]
  %v337 = vld [vmem:[%s0 + $0xa18] sm:$0xff]
  %v338 = vld [vmem:[%s0 + $0xa20] sm:$0xff]
  %v339 = vld [vmem:[%s0 + $0xa28] sm:$0xff]
  %v340 = vld [vmem:[%s0 + $0xa30] sm:$0xff]
  %v341 = vld [vmem:[%s0 + $0xa38] sm:$0xff]
  %v342 = vld [vmem:[%s0 + $0xa40] sm:$0xff]
  %v343 = vld [vmem:[%s0 + $0xa48] sm:$0xff]
  %v344 = vld [vmem:[%s0 + $0xa50] sm:$0xff]
  %v345 = vld [vmem:[%s0 + $0xa58] sm:$0xff]
  %v346 = vld [vmem:[%s0 + $0xa60] sm:$0xff]
  %v347 = vld [vmem:[%s0 + $0xa68] sm:$0xff]
  %v348 = vld [vmem:[%s0 + $0xa70] sm:$0xff]
  %v349 = vld [vmem:[%s0 + $0xa78] sm:$0xff]
  %v350 = vld [vmem:[%s0 + $0xa80] sm:$0xff]
  %v351 = vld [vmem:[%s0 + $0xa88] sm:$0xff]
  %v352 = vld [vmem:[%s0 + $0xa90] sm:$0xff]
  %v353 = vld [vmem:[%s0 + $0xa98] sm:$0xff]
  %v354 = vld [vmem:[%s0 + $0xaa0] sm:$0xff]
  %v355 = vld [vmem:[%s0 + $0xaa8] sm:$0xff]
  %v356 = vld [vmem:[%s0 + $0xab0] sm:$0xff]
  %v357 = vld [vmem:[%s0 + $0xab8] sm:$0xff]
  %v358 = vld [vmem:[%s0 + $0xac0] sm:$0xff]
  %v359 = vld [vmem:[%s0 + $0xac8] sm:$0xff]
  %v360 = vld [vmem:[%s0 + $0xad0] sm:$0xff]
  %v361 = vld [vmem:[%s0 + $0xad8] sm:$0xff]
  %v362 = vld [vmem:[%s0 + $0xae0] sm:$0xff]
  %v363 = vld [vmem:[%s0 + $0xae8] sm:$0xff]
  %v364 = vld [vmem:[%s0 + $0xaf0] sm:$0xff]
  %v365 = vld [vmem:[%s0 + $0xaf8] sm:$0xff]
  %v366 = vld [vmem:[%s0 + $0xb00] sm:$0xff]
  %v367 = vld [vmem:[%s0 + $0xb08] sm:$0xff]
  %v368 = vld [vmem:[%s0 + $0xb10] sm:$0xff]
  %v369 = vld [vmem:[%s0 + $0xb18] sm:$0xff]
  %v370 = vld [vmem:[%s0 + $0xb20] sm:$0xff]
  %v371 = vld [vmem:[%s0 + $0xb28] sm:$0xff]
  %v372 = vld [vmem:[%s0 + $0xb30] sm:$0xff]
  %v373 = vld [vmem:[%s0 + $0xb38] sm:$0xff]
  %v374 = vld [vmem:[%s0 + $0xb40] sm:$0xff]
  %v375 = vld [vmem:[%s0 + $0xb48] sm:$0xff]
  %v376 = vld [vmem:[%s0 + $0xb50] sm:$0xff]
  %v377 = vld [vmem:[%s0 + $0xb58] sm:$0xff]
  %v378 = vld [vmem:[%s0 + $0xb60] sm:$0xff]
  %v379 = vld [vmem:[%s0 + $0xb68] sm:$0xff]
  %v380 = vld [vmem:[%s0 + $0xb70] sm:$0xff]
  %v381 = vld [vmem:[%s0 + $0xb78] sm:$0xff]
  %v382 = vld [vmem:[%s0 + $0xb80] sm:$0xff]
  %v383 = vld [vmem:[%s0 + $0xb88] sm:$0xff]
  %v384 = vld [vmem:[%s0 + $0xb90] sm:$0xff]
  %v385 = vld [vmem:[%s0 + $0xb98] sm:$0xff]
  %v386 = vld [vmem:[%s0 + $0xba0] sm:$0xff]
  %v387 = vld [vmem:[%s0 + $0xba8] sm:$0xff]
  %v388 = vld [vmem:[%s0 + $0xbb0] sm:$0xff]
  %v389 = vld [vmem:[%s0 + $0xbb8] sm:$0xff]
  %v390 = vld [vmem:[%s0 + $0xbc0] sm:$0xff]
  %v391 = vld [vmem:[%s0 + $0xbc8] sm:$0xff]
  %v392 = vld [vmem:[%s0 + $0xbd0] sm:$0xff]
  %v393 = vld [vmem:[%s0 + $0xbd8] sm:$0xff]
  %v394 = vld [vmem:[%s0 + $0xbe0] sm:$0xff]
  %v395 = vld [vmem:[%s0 + $0xbe8] sm:$0xff]
  %v396 = vld [vmem:[%s0 + $0xbf0] sm:$0xff]
  %v397 = vld [vmem:[%s0 + $0xbf8] sm:$0xff]
  %v398 = vld [vmem:[%s0 + $0xc00] sm:$0xff]
  %v399 = vld [vmem:[%s0 + $0xc08] sm:$0xff]
  %v400 = vld [vmem:[%s0 + $0xc10] sm:$0xff]
  %v401 = vld [vmem:[%s0 + $0xc18] sm:$0xff]
  %v402 = vld [vmem:[%s0 + $0xc20] sm:$0xff]
  %v403 = vld [vmem:[%s0 + $0xc28] sm:$0xff]
  %v404 = vld [vmem:[%s0 + $0xc30] sm:$0xff]
  %v405 = vld [vmem:[%s0 + $0xc38] sm:$0xff]
  %v406 = vld [vmem:[%s0 + $0xc40] sm:$0xff]
  %v407 = vld [vmem:[%s0 + $0xc48] sm:$0xff]
  %v408 = vld [vmem:[%s0 + $0xc50] sm:$0xff]
  %v409 = vld [vmem:[%s0 + $0xc58] sm:$0xff]
  %v410 = vld [vmem:[%s0 + $0xc60] sm:$0xff]
  %v411 = vld [vmem:[%s0 + $0xc68] sm:$0xff]
  %v412 = vld [vmem:[%s0 + $0xc70] sm:$0xff]
  %v413 = vld [vmem:[%s0 + $0xc78] sm:$0xff]
  %v414 = vld [vmem:[%s0 + $0xc80] sm:$0xff]
  %v415 = vld [vmem:[%s0 + $0xc88] sm:$0xff]
  %v416 = vld [vmem:[%s0 + $0xc90] sm:$0xff]
  %v417 = vld [vmem:[%s0 + $0xc98] sm:$0xff]
  %v418 = vld [vmem:[%s0 + $0xca0] sm:$0xff]
  %v419 = vld [vmem:[%s0 + $0xca8] sm:$0xff]
  %v420 = vld [vmem:[%s0 + $0xcb0] sm:$0xff]
  %v421 = vld [vmem:[%s0 + $0xcb8] sm:$0xff]
  %v422 = vld [vmem:[%s0 + $0xcc0] sm:$0xff]
  %v423 = vld [vmem:[%s0 + $0xcc8] sm:$0xff]
  %v424 = vld [vmem:[%s0 + $0xcd0] sm:$0xff]
  %v425 = vld [vmem:[%s0 + $0xcd8] sm:$0xff]
  %v426 = vld [vmem:[%s0 + $0xce0] sm:$0xff]
  %v427 = vld [vmem:[%s0 + $0xce8] sm:$0xff]
  %v428 = vld [vmem:[%s0 + $0xcf0] sm:$0xff]
  %v429 = vld [vmem:[%s0 + $0xcf8] sm:$0xff]
  %v430 = vld [vmem:[%s0 + $0xd00] sm:$0xff]
  %v431 = vld [vmem:[%s0 + $0xd08] sm:$0xff]
  %v432 = vld [vmem:[%s0 + $0xd10] sm:$0xff]
  %v433 = vld [vmem:[%s0 + $0xd18] sm:$0xff]
  %v434 = vld [vmem:[%s0 + $0xd20] sm:$0xff]
  %v435 = vld [vmem:[%s0 + $0xd28] sm:$0xff]
  %v436 = vld [vmem:[%s0 + $0xd30] sm:$0xff]
  %v437 = vld [vmem:[%s0 + $0xd38] sm:$0xff]
  %v438 = vld [vmem:[%s0 + $0xd40] sm:$0xff]
  %v439 = vld [vmem:[%s0 + $0xd48] sm:$0xff]
  %v440 = vld [vmem:[%s0 + $0xd50] sm:$0xff]
  %v441 = vld [vmem:[%s0 + $0xd58] sm:$0xff]
  %v442 = vld [vmem:[%s0 + $0xd60] sm:$0xff]
  %v443 = vld [vmem:[%s0 + $0xd68] sm:$0xff]
  %v444 = vld [vmem:[%s0 + $0xd70] sm:$0xff]
  %v445 = vld [vmem:[%s0 + $0xd78] sm:$0xff]
  %v446 = vld [vmem:[%s0 + $0xd80] sm:$0xff]
  %v447 = vld [vmem:[%s0 + $0xd88] sm:$0xff]
  %v448 = vld [vmem:[%s0 + $0xd90] sm:$0xff]
  %v449 = vld [vmem:[%s0 + $0xd98] sm:$0xff]
  %v450 = vld [vmem:[%s0 + $0xda0] sm:$0xff]
  %v451 = vld [vmem:[%s0 + $0xda8] sm:$0xff]
  %v452 = vld [vmem:[%s0 + $0xdb0] sm:$0xff]
  %v453 = vld [vmem:[%s0 + $0xdb8] sm:$0xff]
  %v454 = vld [vmem:[%s0 + $0xdc0] sm:$0xff]
  %v455 = vld [vmem:[%s0 + $0xdc8] sm:$0xff]
  %v456 = vld [vmem:[%s0 + $0xdd0] sm:$0xff]
  %v457 = vld [vmem:[%s0 + $0xdd8] sm:$0xff]
  %v458 = vld [vmem:[%s0 + $0xde0] sm:$0xff]
  %v459 = vld [vmem:[%s0 + $0xde8] sm:$0xff]
  %v460 = vld [vmem:[%s0 + $0xdf0] sm:$0xff]
  %v461 = vld [vmem:[%s0 + $0xdf8] sm:$0xff]
  %v462 = vld [vmem:[%s0 + $0xe00] sm:$0xff]
  %v463 = vld [vmem:[%s0 + $0xe08] sm:$0xff]
  %v464 = vld [vmem:[%s0 + $0xe10] sm:$0xff]
  %v465 = vld [vmem:[%s0 + $0xe18] sm:$0xff]
  %v466 = vld [vmem:[%s0 + $0xe20] sm:$0xff]
  %v467 = vld [vmem:[%s0 + $0xe28] sm:$0xff]
  %v468 = vld [vmem:[%s0 + $0xe30] sm:$0xff]
  %v469 = vld [vmem:[%s0 + $0xe38] sm:$0xff]
  %v470 = vld [vmem:[%s0 + $0xe40] sm:$0xff]
  %v471 = vld [vmem:[%s0 + $0xe48] sm:$0xff]
  %v472 = vld [vmem:[%s0 + $0xe50] sm:$0xff]
  %v473 = vld [vmem:[%s0 + $0xe58] sm:$0xff]
  %v474 = vld [vmem:[%s0 + $0xe60] sm:$0xff]
  %v475 = vld [vmem:[%s0 + $0xe68] sm:$0xff]
  %v476 = vld [vmem:[%s0 + $0xe70] sm:$0xff]
  %v477 = vld [vmem:[%s0 + $0xe78] sm:$0xff]
  %v478 = vld [vmem:[%s0 + $0xe80] sm:$0xff]
  %v479 = vld [vmem:[%s0 + $0xe88] sm:$0xff]
  %v480 = vld [vmem:[%s0 + $0xe90] sm:$0xff]
  %v481 = vld [vmem:[%s0 + $0xe98] sm:$0xff]
  %v482 = vld [vmem:[%s0 + $0xea0] sm:$0xff]
  %v483 = vld [vmem:[%s0 + $0xea8] sm:$0xff]
  %v484 = vld [vmem:[%s0 + $0xeb0] sm:$0xff]
  %v485 = vld [vmem:[%s0 + $0xeb8] sm:$0xff]
  %v486 = vld [vmem:[%s0 + $0xec0] sm:$0xff]
  %v487 = vld [vmem:[%s0 + $0xec8] sm:$0xff]
  %v488 = vld [vmem:[%s0 + $0xed0] sm:$0xff]
  %v489 = vld [vmem:[%s0 + $0xed8] sm:$0xff]
  %v490 = vld [vmem:[%s0 + $0xee0] sm:$0xff]
  %v491 = vld [vmem:[%s0 + $0xee8] sm:$0xff]
  %v492 = vld [vmem:[%s0 + $0xef0] sm:$0xff]
  %v493 = vld [vmem:[%s0 + $0xef8] sm:$0xff]
  %v494 = vld [vmem:[%s0 + $0xf00] sm:$0xff]
  %v495 = vld [vmem:[%s0 + $0xf08] sm:$0xff]
  %v496 = vld [vmem:[%s0 + $0xf10] sm:$0xff]
  %v497 = vld [vmem:[%s0 + $0xf18] sm:$0xff]
  %v498 = vld [vmem:[%s0 + $0xf20] sm:$0xff]
  %v499 = vld [vmem:[%s0 + $0xf28] sm:$0xff]
  %v500 = vld [vmem:[%s0 + $0xf30] sm:$0xff]
  %v501 = vld [vmem:[%s0 + $0xf38] sm:$0xff]
  %v502 = vld [vmem:[%s0 + $0xf40] sm:$0xff]
  %v503 = vld [vmem:[%s0 + $0xf48] sm:$0xff]
  %v504 = vld [vmem:[%s0 + $0xf50] sm:$0xff]
  %v505 = vld [vmem:[%s0 + $0xf58] sm:$0xff]
  %v506 = vld [vmem:[%s0 + $0xf60] sm:$0xff]
  %v507 = vld [vmem:[%s0 + $0xf68] sm:$0xff]
  %v508 = vld [vmem:[%s0 + $0xf70] sm:$0xff]
  %v509 = vld [vmem:[%s0 + $0xf78] sm:$0xff]
  %v510 = vld [vmem:[%s0 + $0xf80] sm:$0xff]
  %v511 = vld [vmem:[%s0 + $0xf88] sm:$0xff]
  %v512 = vld [vmem:[%s0 + $0xf90] sm:$0xff]
  %v513 = vld [vmem:[%s0 + $0xf98] sm:$0xff]
  %v514 = vld [vmem:[%s0 + $0xfa0] sm:$0xff]
  %v515 = vld [vmem:[%s0 + $0xfa8] sm:$0xff]
  %v516 = vld [vmem:[%s0 + $0xfb0] sm:$0xff]
  %v517 = vld [vmem:[%s0 + $0xfb8] sm:$0xff]
  %v518 = vld [vmem:[%s0 + $0xfc0] sm:$0xff]
  %v519 = vld [vmem:[%s0 + $0xfc8] sm:$0xff]
  %v520 = vld [vmem:[%s0 + $0xfd0] sm:$0xff]
  %v521 = vld [vmem:[%s0 + $0xfd8] sm:$0xff]
  %v522 = vld [vmem:[%s0 + $0xfe0] sm:$0xff]
  %v523 = vld [vmem:[%s0 + $0xfe8] sm:$0xff]
  %v524 = vld [vmem:[%s0 + $0xff0] sm:$0xff]
  %v525 = vld [vmem:[%s0 + $0xff8] sm:$0xff]
  %v526 = vld [vmem:[%s1] sm:$0xff]
  %v527 = vld [vmem:[%s1 + $0x8] sm:$0xff]
  %v528 = vld [vmem:[%s1 + $0x10] sm:$0xff]
  %v529 = vld [vmem:[%s1 + $0x18] sm:$0xff]
  %v530 = vld [vmem:[%s1 + $0x20] sm:$0xff]
  %v531 = vld [vmem:[%s1 + $0x28] sm:$0xff]
  %v532 = vld [vmem:[%s1 + $0x30] sm:$0xff]
  %v533 = vld [vmem:[%s1 + $0x38] sm:$0xff]
  %v534 = vld [vmem:[%s1 + $0x40] sm:$0xff]
  %v535 = vld [vmem:[%s1 + $0x48] sm:$0xff]
  %v536 = vld [vmem:[%s1 + $0x50] sm:$0xff]
  %v537 = vld [vmem:[%s1 + $0x58] sm:$0xff]
  %v538 = vld [vmem:[%s1 + $0x60] sm:$0xff]
  %v539 = vld [vmem:[%s1 + $0x68] sm:$0xff]
  %v540 = vld [vmem:[%s1 + $0x70] sm:$0xff]
  %v541 = vld [vmem:[%s1 + $0x78] sm:$0xff]
  %v542 = vld [vmem:[%s1 + $0x80] sm:$0xff]
  %v543 = vld [vmem:[%s1 + $0x88] sm:$0xff]
  %v544 = vld [vmem:[%s1 + $0x90] sm:$0xff]
  %v545 = vld [vmem:[%s1 + $0x98] sm:$0xff]
  %v546 = vld [vmem:[%s1 + $0xa0] sm:$0xff]
  %v547 = vld [vmem:[%s1 + $0xa8] sm:$0xff]
  %v548 = vld [vmem:[%s1 + $0xb0] sm:$0xff]
  %v549 = vld [vmem:[%s1 + $0xb8] sm:$0xff]
  %v550 = vld [vmem:[%s1 + $0xc0] sm:$0xff]
  %v551 = vld [vmem:[%s1 + $0xc8] sm:$0xff]
  %v552 = vld [vmem:[%s1 + $0xd0] sm:$0xff]
  %v553 = vld [vmem:[%s1 + $0xd8] sm:$0xff]
  %v554 = vld [vmem:[%s1 + $0xe0] sm:$0xff]
  %v555 = vld [vmem:[%s1 + $0xe8] sm:$0xff]
  %v556 = vld [vmem:[%s1 + $0xf0] sm:$0xff]
  %v557 = vld [vmem:[%s1 + $0xf8] sm:$0xff]
  %v558 = vpack.c.bf16 %v16, %v14
  %v559 = vpack.c.bf16 %v17, %v15
  %v560 = vpack.c.bf16 %v20, %v18
  %v561 = vpack.c.bf16 %v21, %v19
  %v562 = vpack.c.bf16 %v24, %v22
  %v563 = vpack.c.bf16 %v25, %v23
  %v564 = vpack.c.bf16 %v28, %v26
  %v565 = vpack.c.bf16 %v29, %v27
  %v566 = vpack.c.bf16 %v32, %v30
  %v567 = vpack.c.bf16 %v33, %v31
  %v568 = vpack.c.bf16 %v36, %v34
  %v569 = vpack.c.bf16 %v37, %v35
  %v570 = vpack.c.bf16 %v40, %v38
  %v571 = vpack.c.bf16 %v41, %v39
  %v572 = vpack.c.bf16 %v44, %v42
  %v573 = vpack.c.bf16 %v45, %v43
  %v574 = vpack.c.bf16 %v48, %v46
  %v575 = vpack.c.bf16 %v49, %v47
  %v576 = vpack.c.bf16 %v52, %v50
  %v577 = vpack.c.bf16 %v53, %v51
  %v578 = vpack.c.bf16 %v56, %v54
  %v579 = vpack.c.bf16 %v57, %v55
  %v580 = vpack.c.bf16 %v60, %v58
  %v581 = vpack.c.bf16 %v61, %v59
  %v582 = vpack.c.bf16 %v64, %v62
  %v583 = vpack.c.bf16 %v65, %v63
  %v584 = vpack.c.bf16 %v68, %v66
  %v585 = vpack.c.bf16 %v69, %v67
  %v586 = vpack.c.bf16 %v72, %v70
  %v587 = vpack.c.bf16 %v73, %v71
  %v588 = vpack.c.bf16 %v76, %v74
  %v589 = vpack.c.bf16 %v77, %v75
  %v590 = vpack.c.bf16 %v80, %v78
  %v591 = vpack.c.bf16 %v81, %v79
  %v592 = vpack.c.bf16 %v84, %v82
  %v593 = vpack.c.bf16 %v85, %v83
  %v594 = vpack.c.bf16 %v88, %v86
  %v595 = vpack.c.bf16 %v89, %v87
  %v596 = vpack.c.bf16 %v92, %v90
  %v597 = vpack.c.bf16 %v93, %v91
  %v598 = vpack.c.bf16 %v96, %v94
  %v599 = vpack.c.bf16 %v97, %v95
  %v600 = vpack.c.bf16 %v100, %v98
  %v601 = vpack.c.bf16 %v101, %v99
  %v602 = vpack.c.bf16 %v104, %v102
  %v603 = vpack.c.bf16 %v105, %v103
  %v604 = vpack.c.bf16 %v108, %v106
  %v605 = vpack.c.bf16 %v109, %v107
  %v606 = vpack.c.bf16 %v112, %v110
  %v607 = vpack.c.bf16 %v113, %v111
  %v608 = vpack.c.bf16 %v116, %v114
  %v609 = vpack.c.bf16 %v117, %v115
  %v610 = vpack.c.bf16 %v120, %v118
  %v611 = vpack.c.bf16 %v121, %v119
  %v612 = vpack.c.bf16 %v124, %v122
  %v613 = vpack.c.bf16 %v125, %v123
  %v614 = vpack.c.bf16 %v128, %v126
  %v615 = vpack.c.bf16 %v129, %v127
  %v616 = vpack.c.bf16 %v132, %v130
  %v617 = vpack.c.bf16 %v133, %v131
  %v618 = vpack.c.bf16 %v136, %v134
  %v619 = vpack.c.bf16 %v137, %v135
  %v620 = vpack.c.bf16 %v140, %v138
  %v621 = vpack.c.bf16 %v141, %v139
  %v622 = vpack.c.bf16 %v144, %v142
  %v623 = vpack.c.bf16 %v145, %v143
  %v624 = vpack.c.bf16 %v148, %v146
  %v625 = vpack.c.bf16 %v149, %v147
  %v626 = vpack.c.bf16 %v152, %v150
  %v627 = vpack.c.bf16 %v153, %v151
  %v628 = vpack.c.bf16 %v156, %v154
  %v629 = vpack.c.bf16 %v157, %v155
  %v630 = vpack.c.bf16 %v160, %v158
  %v631 = vpack.c.bf16 %v161, %v159
  %v632 = vpack.c.bf16 %v164, %v162
  %v633 = vpack.c.bf16 %v165, %v163
  %v634 = vpack.c.bf16 %v168, %v166
  %v635 = vpack.c.bf16 %v169, %v167
  %v636 = vpack.c.bf16 %v172, %v170
  %v637 = vpack.c.bf16 %v173, %v171
  %v638 = vpack.c.bf16 %v176, %v174
  %v639 = vpack.c.bf16 %v177, %v175
  %v640 = vpack.c.bf16 %v180, %v178
  %v641 = vpack.c.bf16 %v181, %v179
  %v642 = vpack.c.bf16 %v184, %v182
  %v643 = vpack.c.bf16 %v185, %v183
  %v644 = vpack.c.bf16 %v188, %v186
  %v645 = vpack.c.bf16 %v189, %v187
  %v646 = vpack.c.bf16 %v192, %v190
  %v647 = vpack.c.bf16 %v193, %v191
  %v648 = vpack.c.bf16 %v196, %v194
  %v649 = vpack.c.bf16 %v197, %v195
  %v650 = vpack.c.bf16 %v200, %v198
  %v651 = vpack.c.bf16 %v201, %v199
  %v652 = vpack.c.bf16 %v204, %v202
  %v653 = vpack.c.bf16 %v205, %v203
  %v654 = vpack.c.bf16 %v208, %v206
  %v655 = vpack.c.bf16 %v209, %v207
  %v656 = vpack.c.bf16 %v212, %v210
  %v657 = vpack.c.bf16 %v213, %v211
  %v658 = vpack.c.bf16 %v216, %v214
  %v659 = vpack.c.bf16 %v217, %v215
  %v660 = vpack.c.bf16 %v220, %v218
  %v661 = vpack.c.bf16 %v221, %v219
  %v662 = vpack.c.bf16 %v224, %v222
  %v663 = vpack.c.bf16 %v225, %v223
  %v664 = vpack.c.bf16 %v228, %v226
  %v665 = vpack.c.bf16 %v229, %v227
  %v666 = vpack.c.bf16 %v232, %v230
  %v667 = vpack.c.bf16 %v233, %v231
  %v668 = vpack.c.bf16 %v236, %v234
  %v669 = vpack.c.bf16 %v237, %v235
  %v670 = vpack.c.bf16 %v240, %v238
  %v671 = vpack.c.bf16 %v241, %v239
  %v672 = vpack.c.bf16 %v244, %v242
  %v673 = vpack.c.bf16 %v245, %v243
  %v674 = vpack.c.bf16 %v248, %v246
  %v675 = vpack.c.bf16 %v249, %v247
  %v676 = vpack.c.bf16 %v252, %v250
  %v677 = vpack.c.bf16 %v253, %v251
  %v678 = vpack.c.bf16 %v256, %v254
  %v679 = vpack.c.bf16 %v257, %v255
  %v680 = vpack.c.bf16 %v260, %v258
  %v681 = vpack.c.bf16 %v261, %v259
  %v682 = vpack.c.bf16 %v264, %v262
  %v683 = vpack.c.bf16 %v265, %v263
  %v684 = vpack.c.bf16 %v268, %v266
  %v685 = vpack.c.bf16 %v269, %v267
  %v686 = vpack.c.bf16 %v272, %v270
  %v687 = vpack.c.bf16 %v273, %v271
  %v688 = vpack.c.bf16 %v276, %v274
  %v689 = vpack.c.bf16 %v277, %v275
  %v690 = vpack.c.bf16 %v280, %v278
  %v691 = vpack.c.bf16 %v281, %v279
  %v692 = vpack.c.bf16 %v284, %v282
  %v693 = vpack.c.bf16 %v285, %v283
  %v694 = vpack.c.bf16 %v288, %v286
  %v695 = vpack.c.bf16 %v289, %v287
  %v696 = vpack.c.bf16 %v292, %v290
  %v697 = vpack.c.bf16 %v293, %v291
  %v698 = vpack.c.bf16 %v296, %v294
  %v699 = vpack.c.bf16 %v297, %v295
  %v700 = vpack.c.bf16 %v300, %v298
  %v701 = vpack.c.bf16 %v301, %v299
  %v702 = vpack.c.bf16 %v304, %v302
  %v703 = vpack.c.bf16 %v305, %v303
  %v704 = vpack.c.bf16 %v308, %v306
  %v705 = vpack.c.bf16 %v309, %v307
  %v706 = vpack.c.bf16 %v312, %v310
  %v707 = vpack.c.bf16 %v313, %v311
  %v708 = vpack.c.bf16 %v316, %v314
  %v709 = vpack.c.bf16 %v317, %v315
  %v710 = vpack.c.bf16 %v320, %v318
  %v711 = vpack.c.bf16 %v321, %v319
  %v712 = vpack.c.bf16 %v324, %v322
  %v713 = vpack.c.bf16 %v325, %v323
  %v714 = vpack.c.bf16 %v328, %v326
  %v715 = vpack.c.bf16 %v329, %v327
  %v716 = vpack.c.bf16 %v332, %v330
  %v717 = vpack.c.bf16 %v333, %v331
  %v718 = vpack.c.bf16 %v336, %v334
  %v719 = vpack.c.bf16 %v337, %v335
  %v720 = vpack.c.bf16 %v340, %v338
  %v721 = vpack.c.bf16 %v341, %v339
  %v722 = vpack.c.bf16 %v344, %v342
  %v723 = vpack.c.bf16 %v345, %v343
  %v724 = vpack.c.bf16 %v348, %v346
  %v725 = vpack.c.bf16 %v349, %v347
  %v726 = vpack.c.bf16 %v352, %v350
  %v727 = vpack.c.bf16 %v353, %v351
  %v728 = vpack.c.bf16 %v356, %v354
  %v729 = vpack.c.bf16 %v357, %v355
  %v730 = vpack.c.bf16 %v360, %v358
  %v731 = vpack.c.bf16 %v361, %v359
  %v732 = vpack.c.bf16 %v364, %v362
  %v733 = vpack.c.bf16 %v365, %v363
  %v734 = vpack.c.bf16 %v368, %v366
  %v735 = vpack.c.bf16 %v369, %v367
  %v736 = vpack.c.bf16 %v372, %v370
  %v737 = vpack.c.bf16 %v373, %v371
  %v738 = vpack.c.bf16 %v376, %v374
  %v739 = vpack.c.bf16 %v377, %v375
  %v740 = vpack.c.bf16 %v380, %v378
  %v741 = vpack.c.bf16 %v381, %v379
  %v742 = vpack.c.bf16 %v384, %v382
  %v743 = vpack.c.bf16 %v385, %v383
  %v744 = vpack.c.bf16 %v388, %v386
  %v745 = vpack.c.bf16 %v389, %v387
  %v746 = vpack.c.bf16 %v392, %v390
  %v747 = vpack.c.bf16 %v393, %v391
  %v748 = vpack.c.bf16 %v396, %v394
  %v749 = vpack.c.bf16 %v397, %v395
  %v750 = vpack.c.bf16 %v400, %v398
  %v751 = vpack.c.bf16 %v401, %v399
  %v752 = vpack.c.bf16 %v404, %v402
  %v753 = vpack.c.bf16 %v405, %v403
  %v754 = vpack.c.bf16 %v408, %v406
  %v755 = vpack.c.bf16 %v409, %v407
  %v756 = vpack.c.bf16 %v412, %v410
  %v757 = vpack.c.bf16 %v413, %v411
  %v758 = vpack.c.bf16 %v416, %v414
  %v759 = vpack.c.bf16 %v417, %v415
  %v760 = vpack.c.bf16 %v420, %v418
  %v761 = vpack.c.bf16 %v421, %v419
  %v762 = vpack.c.bf16 %v424, %v422
  %v763 = vpack.c.bf16 %v425, %v423
  %v764 = vpack.c.bf16 %v428, %v426
  %v765 = vpack.c.bf16 %v429, %v427
  %v766 = vpack.c.bf16 %v432, %v430
  %v767 = vpack.c.bf16 %v433, %v431
  %v768 = vpack.c.bf16 %v436, %v434
  %v769 = vpack.c.bf16 %v437, %v435
  %v770 = vpack.c.bf16 %v440, %v438
  %v771 = vpack.c.bf16 %v441, %v439
  %v772 = vpack.c.bf16 %v444, %v442
  %v773 = vpack.c.bf16 %v445, %v443
  %v774 = vpack.c.bf16 %v448, %v446
  %v775 = vpack.c.bf16 %v449, %v447
  %v776 = vpack.c.bf16 %v452, %v450
  %v777 = vpack.c.bf16 %v453, %v451
  %v778 = vpack.c.bf16 %v456, %v454
  %v779 = vpack.c.bf16 %v457, %v455
  %v780 = vpack.c.bf16 %v460, %v458
  %v781 = vpack.c.bf16 %v461, %v459
  %v782 = vpack.c.bf16 %v464, %v462
  %v783 = vpack.c.bf16 %v465, %v463
  %v784 = vpack.c.bf16 %v468, %v466
  %v785 = vpack.c.bf16 %v469, %v467
  %v786 = vpack.c.bf16 %v472, %v470
  %v787 = vpack.c.bf16 %v473, %v471
  %v788 = vpack.c.bf16 %v476, %v474
  %v789 = vpack.c.bf16 %v477, %v475
  %v790 = vpack.c.bf16 %v480, %v478
  %v791 = vpack.c.bf16 %v481, %v479
  %v792 = vpack.c.bf16 %v484, %v482
  %v793 = vpack.c.bf16 %v485, %v483
  %v794 = vpack.c.bf16 %v488, %v486
  %v795 = vpack.c.bf16 %v489, %v487
  %v796 = vpack.c.bf16 %v492, %v490
  %v797 = vpack.c.bf16 %v493, %v491
  %v798 = vpack.c.bf16 %v496, %v494
  %v799 = vpack.c.bf16 %v497, %v495
  %v800 = vpack.c.bf16 %v500, %v498
  %v801 = vpack.c.bf16 %v501, %v499
  %v802 = vpack.c.bf16 %v504, %v502
  %v803 = vpack.c.bf16 %v505, %v503
  %v804 = vpack.c.bf16 %v508, %v506
  %v805 = vpack.c.bf16 %v509, %v507
  %v806 = vpack.c.bf16 %v512, %v510
  %v807 = vpack.c.bf16 %v513, %v511
  %v808 = vpack.c.bf16 %v516, %v514
  %v809 = vpack.c.bf16 %v517, %v515
  %v810 = vpack.c.bf16 %v520, %v518
  %v811 = vpack.c.bf16 %v521, %v519
  %v812 = vpack.c.bf16 %v524, %v522
  %v813 = vpack.c.bf16 %v525, %v523
  %v814 = vpack.c.bf16 %v527, %v526
  %v815 = vpack.c.bf16 %v529, %v528
  %v816 = vpack.c.bf16 %v531, %v530
  %v817 = vpack.c.bf16 %v533, %v532
  %v818 = vpack.c.bf16 %v535, %v534
  %v819 = vpack.c.bf16 %v537, %v536
  %v820 = vpack.c.bf16 %v539, %v538
  %v821 = vpack.c.bf16 %v541, %v540
  %v822 = vpack.c.bf16 %v543, %v542
  %v823 = vpack.c.bf16 %v545, %v544
  %v824 = vpack.c.bf16 %v547, %v546
  %v825 = vpack.c.bf16 %v549, %v548
  %v826 = vpack.c.bf16 %v551, %v550
  %v827 = vpack.c.bf16 %v553, %v552
  %v828 = vpack.c.bf16 %v555, %v554
  %v829 = vpack.c.bf16 %v557, %v556
  %v830 = vld [vmem:[%s2] sm:$0x1]
  %v832 = vperm.slane %v830, 0
  %834 = vmatpush.bf16.msra.mxu0 %v821
  %835 = vmatpush.bf16.msra.mxu0 %v820
  %836 = vmatpush.bf16.msra.mxu0 %v819
  %837 = vmatpush.bf16.msra.mxu0 %v818
  %838 = vmatpush.bf16.msra.mxu0 %v817
  %839 = vmatpush.bf16.msra.mxu0 %v816
  %840 = vmatpush.bf16.msra.mxu0 %v815
  %841 = vmatpush.bf16.msra.mxu0 %v814
  %842 = vmatmul.bf16.gmra.mxu0 %v558
  %v843 = vpop.f32.mrf.mxu0
  %v844 = vadd.f32 %v832, %v843
  %v845 = vpop.f32.mrf.mxu0
  %v846 = vadd.f32 %v832, %v845
  %847 = vmatmul.bf16.gmra.mxu0 %v560
  %v848 = vpop.f32.mrf.mxu0
  %v849 = vadd.f32 %v832, %v848
  %v850 = vpop.f32.mrf.mxu0
  %v851 = vadd.f32 %v832, %v850
  %852 = vmatmul.bf16.gmra.mxu0 %v562
  %v853 = vpop.f32.mrf.mxu0
  %v854 = vadd.f32 %v832, %v853
  %v855 = vpop.f32.mrf.mxu0
  %v856 = vadd.f32 %v832, %v855
  %857 = vmatmul.bf16.gmra.mxu0 %v564
  %v858 = vpop.f32.mrf.mxu0
  %v859 = vadd.f32 %v832, %v858
  %v860 = vpop.f32.mrf.mxu0
  %v861 = vadd.f32 %v832, %v860
  %862 = vmatmul.bf16.gmra.mxu0 %v566
  %v863 = vpop.f32.mrf.mxu0
  %v864 = vadd.f32 %v832, %v863
  %v865 = vpop.f32.mrf.mxu0
  %v866 = vadd.f32 %v832, %v865
  %867 = vmatmul.bf16.gmra.mxu0 %v568
  %v868 = vpop.f32.mrf.mxu0
  %v869 = vadd.f32 %v832, %v868
  %v870 = vpop.f32.mrf.mxu0
  %v871 = vadd.f32 %v832, %v870
  %872 = vmatmul.bf16.gmra.mxu0 %v570
  %v873 = vpop.f32.mrf.mxu0
  %v874 = vadd.f32 %v832, %v873
  %v875 = vpop.f32.mrf.mxu0
  %v876 = vadd.f32 %v832, %v875
  %877 = vmatmul.bf16.gmra.mxu0 %v572
  %v878 = vpop.f32.mrf.mxu0
  %v879 = vadd.f32 %v832, %v878
  %v880 = vpop.f32.mrf.mxu0
  %v881 = vadd.f32 %v832, %v880
  %882 = vmatmul.bf16.gmra.mxu0 %v574
  %v883 = vpop.f32.mrf.mxu0
  %v884 = vadd.f32 %v832, %v883
  %v885 = vpop.f32.mrf.mxu0
  %v886 = vadd.f32 %v832, %v885
  %887 = vmatmul.bf16.gmra.mxu0 %v576
  %v888 = vpop.f32.mrf.mxu0
  %v889 = vadd.f32 %v832, %v888
  %v890 = vpop.f32.mrf.mxu0
  %v891 = vadd.f32 %v832, %v890
  %892 = vmatmul.bf16.gmra.mxu0 %v578
  %v893 = vpop.f32.mrf.mxu0
  %v894 = vadd.f32 %v832, %v893
  %v895 = vpop.f32.mrf.mxu0
  %v896 = vadd.f32 %v832, %v895
  %897 = vmatmul.bf16.gmra.mxu0 %v580
  %v898 = vpop.f32.mrf.mxu0
  %v899 = vadd.f32 %v832, %v898
  %v900 = vpop.f32.mrf.mxu0
  %v901 = vadd.f32 %v832, %v900
  %902 = vmatmul.bf16.gmra.mxu0 %v582
  %v903 = vpop.f32.mrf.mxu0
  %v904 = vadd.f32 %v832, %v903
  %v905 = vpop.f32.mrf.mxu0
  %v906 = vadd.f32 %v832, %v905
  %907 = vmatmul.bf16.gmra.mxu0 %v584
  %v908 = vpop.f32.mrf.mxu0
  %v909 = vadd.f32 %v832, %v908
  %v910 = vpop.f32.mrf.mxu0
  %v911 = vadd.f32 %v832, %v910
  %912 = vmatmul.bf16.gmra.mxu0 %v586
  %v913 = vpop.f32.mrf.mxu0
  %v914 = vadd.f32 %v832, %v913
  %v915 = vpop.f32.mrf.mxu0
  %v916 = vadd.f32 %v832, %v915
  %917 = vmatmul.bf16.gmra.mxu0 %v588
  %v918 = vpop.f32.mrf.mxu0
  %v919 = vadd.f32 %v832, %v918
  %v920 = vpop.f32.mrf.mxu0
  %v921 = vadd.f32 %v832, %v920
  %922 = vmatmul.bf16.gmra.mxu0 %v590
  %v923 = vpop.f32.mrf.mxu0
  %v924 = vadd.f32 %v832, %v923
  %v925 = vpop.f32.mrf.mxu0
  %v926 = vadd.f32 %v832, %v925
  %927 = vmatmul.bf16.gmra.mxu0 %v592
  %v928 = vpop.f32.mrf.mxu0
  %v929 = vadd.f32 %v832, %v928
  %v930 = vpop.f32.mrf.mxu0
  %v931 = vadd.f32 %v832, %v930
  %932 = vmatmul.bf16.gmra.mxu0 %v594
  %v933 = vpop.f32.mrf.mxu0
  %v934 = vadd.f32 %v832, %v933
  %v935 = vpop.f32.mrf.mxu0
  %v936 = vadd.f32 %v832, %v935
  %937 = vmatmul.bf16.gmra.mxu0 %v596
  %v938 = vpop.f32.mrf.mxu0
  %v939 = vadd.f32 %v832, %v938
  %v940 = vpop.f32.mrf.mxu0
  %v941 = vadd.f32 %v832, %v940
  %942 = vmatmul.bf16.gmra.mxu0 %v598
  %v943 = vpop.f32.mrf.mxu0
  %v944 = vadd.f32 %v832, %v943
  %v945 = vpop.f32.mrf.mxu0
  %v946 = vadd.f32 %v832, %v945
  %947 = vmatmul.bf16.gmra.mxu0 %v600
  %v948 = vpop.f32.mrf.mxu0
  %v949 = vadd.f32 %v832, %v948
  %v950 = vpop.f32.mrf.mxu0
  %v951 = vadd.f32 %v832, %v950
  %952 = vmatmul.bf16.gmra.mxu0 %v602
  %v953 = vpop.f32.mrf.mxu0
  %v954 = vadd.f32 %v832, %v953
  %v955 = vpop.f32.mrf.mxu0
  %v956 = vadd.f32 %v832, %v955
  %957 = vmatmul.bf16.gmra.mxu0 %v604
  %v958 = vpop.f32.mrf.mxu0
  %v959 = vadd.f32 %v832, %v958
  %v960 = vpop.f32.mrf.mxu0
  %v961 = vadd.f32 %v832, %v960
  %962 = vmatmul.bf16.gmra.mxu0 %v606
  %v963 = vpop.f32.mrf.mxu0
  %v964 = vadd.f32 %v832, %v963
  %v965 = vpop.f32.mrf.mxu0
  %v966 = vadd.f32 %v832, %v965
  %967 = vmatmul.bf16.gmra.mxu0 %v608
  %v968 = vpop.f32.mrf.mxu0
  %v969 = vadd.f32 %v832, %v968
  %v970 = vpop.f32.mrf.mxu0
  %v971 = vadd.f32 %v832, %v970
  %972 = vmatmul.bf16.gmra.mxu0 %v610
  %v973 = vpop.f32.mrf.mxu0
  %v974 = vadd.f32 %v832, %v973
  %v975 = vpop.f32.mrf.mxu0
  %v976 = vadd.f32 %v832, %v975
  %977 = vmatmul.bf16.gmra.mxu0 %v612
  %v978 = vpop.f32.mrf.mxu0
  %v979 = vadd.f32 %v832, %v978
  %v980 = vpop.f32.mrf.mxu0
  %v981 = vadd.f32 %v832, %v980
  %982 = vmatmul.bf16.gmra.mxu0 %v614
  %v983 = vpop.f32.mrf.mxu0
  %v984 = vadd.f32 %v832, %v983
  %v985 = vpop.f32.mrf.mxu0
  %v986 = vadd.f32 %v832, %v985
  %987 = vmatmul.bf16.gmra.mxu0 %v616
  %v988 = vpop.f32.mrf.mxu0
  %v989 = vadd.f32 %v832, %v988
  %v990 = vpop.f32.mrf.mxu0
  %v991 = vadd.f32 %v832, %v990
  %992 = vmatmul.bf16.gmra.mxu0 %v618
  %v993 = vpop.f32.mrf.mxu0
  %v994 = vadd.f32 %v832, %v993
  %v995 = vpop.f32.mrf.mxu0
  %v996 = vadd.f32 %v832, %v995
  %997 = vmatmul.bf16.gmra.mxu0 %v620
  %v998 = vpop.f32.mrf.mxu0
  %v999 = vadd.f32 %v832, %v998
  %v1000 = vpop.f32.mrf.mxu0
  %v1001 = vadd.f32 %v832, %v1000
  %1002 = vmatmul.bf16.gmra.mxu0 %v622
  %v1003 = vpop.f32.mrf.mxu0
  %v1004 = vadd.f32 %v832, %v1003
  %v1005 = vpop.f32.mrf.mxu0
  %v1006 = vadd.f32 %v832, %v1005
  %1007 = vmatmul.bf16.gmra.mxu0 %v624
  %v1008 = vpop.f32.mrf.mxu0
  %v1009 = vadd.f32 %v832, %v1008
  %v1010 = vpop.f32.mrf.mxu0
  %v1011 = vadd.f32 %v832, %v1010
  %1012 = vmatmul.bf16.gmra.mxu0 %v626
  %v1013 = vpop.f32.mrf.mxu0
  %v1014 = vadd.f32 %v832, %v1013
  %v1015 = vpop.f32.mrf.mxu0
  %v1016 = vadd.f32 %v832, %v1015
  %1017 = vmatmul.bf16.gmra.mxu0 %v628
  %v1018 = vpop.f32.mrf.mxu0
  %v1019 = vadd.f32 %v832, %v1018
  %v1020 = vpop.f32.mrf.mxu0
  %v1021 = vadd.f32 %v832, %v1020
  %1022 = vmatmul.bf16.gmra.mxu0 %v630
  %v1023 = vpop.f32.mrf.mxu0
  %v1024 = vadd.f32 %v832, %v1023
  %v1025 = vpop.f32.mrf.mxu0
  %v1026 = vadd.f32 %v832, %v1025
  %1027 = vmatmul.bf16.gmra.mxu0 %v632
  %v1028 = vpop.f32.mrf.mxu0
  %v1029 = vadd.f32 %v832, %v1028
  %v1030 = vpop.f32.mrf.mxu0
  %v1031 = vadd.f32 %v832, %v1030
  %1032 = vmatmul.bf16.gmra.mxu0 %v634
  %v1033 = vpop.f32.mrf.mxu0
  %v1034 = vadd.f32 %v832, %v1033
  %v1035 = vpop.f32.mrf.mxu0
  %v1036 = vadd.f32 %v832, %v1035
  %1037 = vmatmul.bf16.gmra.mxu0 %v636
  %v1038 = vpop.f32.mrf.mxu0
  %v1039 = vadd.f32 %v832, %v1038
  %v1040 = vpop.f32.mrf.mxu0
  %v1041 = vadd.f32 %v832, %v1040
  %1042 = vmatmul.bf16.gmra.mxu0 %v638
  %v1043 = vpop.f32.mrf.mxu0
  %v1044 = vadd.f32 %v832, %v1043
  %v1045 = vpop.f32.mrf.mxu0
  %v1046 = vadd.f32 %v832, %v1045
  %1047 = vmatmul.bf16.gmra.mxu0 %v640
  %v1048 = vpop.f32.mrf.mxu0
  %v1049 = vadd.f32 %v832, %v1048
  %v1050 = vpop.f32.mrf.mxu0
  %v1051 = vadd.f32 %v832, %v1050
  %1052 = vmatmul.bf16.gmra.mxu0 %v642
  %v1053 = vpop.f32.mrf.mxu0
  %v1054 = vadd.f32 %v832, %v1053
  %v1055 = vpop.f32.mrf.mxu0
  %v1056 = vadd.f32 %v832, %v1055
  %1057 = vmatmul.bf16.gmra.mxu0 %v644
  %v1058 = vpop.f32.mrf.mxu0
  %v1059 = vadd.f32 %v832, %v1058
  %v1060 = vpop.f32.mrf.mxu0
  %v1061 = vadd.f32 %v832, %v1060
  %1062 = vmatmul.bf16.gmra.mxu0 %v646
  %v1063 = vpop.f32.mrf.mxu0
  %v1064 = vadd.f32 %v832, %v1063
  %v1065 = vpop.f32.mrf.mxu0
  %v1066 = vadd.f32 %v832, %v1065
  %1067 = vmatmul.bf16.gmra.mxu0 %v648
  %v1068 = vpop.f32.mrf.mxu0
  %v1069 = vadd.f32 %v832, %v1068
  %v1070 = vpop.f32.mrf.mxu0
  %v1071 = vadd.f32 %v832, %v1070
  %1072 = vmatmul.bf16.gmra.mxu0 %v650
  %v1073 = vpop.f32.mrf.mxu0
  %v1074 = vadd.f32 %v832, %v1073
  %v1075 = vpop.f32.mrf.mxu0
  %v1076 = vadd.f32 %v832, %v1075
  %1077 = vmatmul.bf16.gmra.mxu0 %v652
  %v1078 = vpop.f32.mrf.mxu0
  %v1079 = vadd.f32 %v832, %v1078
  %v1080 = vpop.f32.mrf.mxu0
  %v1081 = vadd.f32 %v832, %v1080
  %1082 = vmatmul.bf16.gmra.mxu0 %v654
  %v1083 = vpop.f32.mrf.mxu0
  %v1084 = vadd.f32 %v832, %v1083
  %v1085 = vpop.f32.mrf.mxu0
  %v1086 = vadd.f32 %v832, %v1085
  %1087 = vmatmul.bf16.gmra.mxu0 %v656
  %v1088 = vpop.f32.mrf.mxu0
  %v1089 = vadd.f32 %v832, %v1088
  %v1090 = vpop.f32.mrf.mxu0
  %v1091 = vadd.f32 %v832, %v1090
  %1092 = vmatmul.bf16.gmra.mxu0 %v658
  %v1093 = vpop.f32.mrf.mxu0
  %v1094 = vadd.f32 %v832, %v1093
  %v1095 = vpop.f32.mrf.mxu0
  %v1096 = vadd.f32 %v832, %v1095
  %1097 = vmatmul.bf16.gmra.mxu0 %v660
  %v1098 = vpop.f32.mrf.mxu0
  %v1099 = vadd.f32 %v832, %v1098
  %v1100 = vpop.f32.mrf.mxu0
  %v1101 = vadd.f32 %v832, %v1100
  %1102 = vmatmul.bf16.gmra.mxu0 %v662
  %v1103 = vpop.f32.mrf.mxu0
  %v1104 = vadd.f32 %v832, %v1103
  %v1105 = vpop.f32.mrf.mxu0
  %v1106 = vadd.f32 %v832, %v1105
  %1107 = vmatmul.bf16.gmra.mxu0 %v664
  %v1108 = vpop.f32.mrf.mxu0
  %v1109 = vadd.f32 %v832, %v1108
  %v1110 = vpop.f32.mrf.mxu0
  %v1111 = vadd.f32 %v832, %v1110
  %1112 = vmatmul.bf16.gmra.mxu0 %v666
  %v1113 = vpop.f32.mrf.mxu0
  %v1114 = vadd.f32 %v832, %v1113
  %v1115 = vpop.f32.mrf.mxu0
  %v1116 = vadd.f32 %v832, %v1115
  %1117 = vmatmul.bf16.gmra.mxu0 %v668
  %v1118 = vpop.f32.mrf.mxu0
  %v1119 = vadd.f32 %v832, %v1118
  %v1120 = vpop.f32.mrf.mxu0
  %v1121 = vadd.f32 %v832, %v1120
  %1122 = vmatmul.bf16.gmra.mxu0 %v670
  %v1123 = vpop.f32.mrf.mxu0
  %v1124 = vadd.f32 %v832, %v1123
  %v1125 = vpop.f32.mrf.mxu0
  %v1126 = vadd.f32 %v832, %v1125
  %1127 = vmatmul.bf16.gmra.mxu0 %v672
  %v1128 = vpop.f32.mrf.mxu0
  %v1129 = vadd.f32 %v832, %v1128
  %v1130 = vpop.f32.mrf.mxu0
  %v1131 = vadd.f32 %v832, %v1130
  %1132 = vmatmul.bf16.gmra.mxu0 %v674
  %v1133 = vpop.f32.mrf.mxu0
  %v1134 = vadd.f32 %v832, %v1133
  %v1135 = vpop.f32.mrf.mxu0
  %v1136 = vadd.f32 %v832, %v1135
  %1137 = vmatmul.bf16.gmra.mxu0 %v676
  %v1138 = vpop.f32.mrf.mxu0
  %v1139 = vadd.f32 %v832, %v1138
  %v1140 = vpop.f32.mrf.mxu0
  %v1141 = vadd.f32 %v832, %v1140
  %1142 = vmatmul.bf16.gmra.mxu0 %v678
  %v1143 = vpop.f32.mrf.mxu0
  %v1144 = vadd.f32 %v832, %v1143
  %v1145 = vpop.f32.mrf.mxu0
  %v1146 = vadd.f32 %v832, %v1145
  %1147 = vmatmul.bf16.gmra.mxu0 %v680
  %v1148 = vpop.f32.mrf.mxu0
  %v1149 = vadd.f32 %v832, %v1148
  %v1150 = vpop.f32.mrf.mxu0
  %v1151 = vadd.f32 %v832, %v1150
  %1152 = vmatmul.bf16.gmra.mxu0 %v682
  %v1153 = vpop.f32.mrf.mxu0
  %v1154 = vadd.f32 %v832, %v1153
  %v1155 = vpop.f32.mrf.mxu0
  %v1156 = vadd.f32 %v832, %v1155
  %1157 = vmatmul.bf16.gmra.mxu0 %v684
  %v1158 = vpop.f32.mrf.mxu0
  %v1159 = vadd.f32 %v832, %v1158
  %v1160 = vpop.f32.mrf.mxu0
  %v1161 = vadd.f32 %v832, %v1160
  %1162 = vmatmul.bf16.gmra.mxu0 %v686
  %v1163 = vpop.f32.mrf.mxu0
  %v1164 = vadd.f32 %v832, %v1163
  %v1165 = vpop.f32.mrf.mxu0
  %v1166 = vadd.f32 %v832, %v1165
  %1167 = vmatmul.bf16.gmra.mxu0 %v688
  %v1168 = vpop.f32.mrf.mxu0
  %v1169 = vadd.f32 %v832, %v1168
  %v1170 = vpop.f32.mrf.mxu0
  %v1171 = vadd.f32 %v832, %v1170
  %1172 = vmatmul.bf16.gmra.mxu0 %v690
  %v1173 = vpop.f32.mrf.mxu0
  %v1174 = vadd.f32 %v832, %v1173
  %v1175 = vpop.f32.mrf.mxu0
  %v1176 = vadd.f32 %v832, %v1175
  %1177 = vmatmul.bf16.gmra.mxu0 %v692
  %v1178 = vpop.f32.mrf.mxu0
  %v1179 = vadd.f32 %v832, %v1178
  %v1180 = vpop.f32.mrf.mxu0
  %v1181 = vadd.f32 %v832, %v1180
  %1182 = vmatmul.bf16.gmra.mxu0 %v694
  %v1183 = vpop.f32.mrf.mxu0
  %v1184 = vadd.f32 %v832, %v1183
  %v1185 = vpop.f32.mrf.mxu0
  %v1186 = vadd.f32 %v832, %v1185
  %1187 = vmatmul.bf16.gmra.mxu0 %v696
  %v1188 = vpop.f32.mrf.mxu0
  %v1189 = vadd.f32 %v832, %v1188
  %v1190 = vpop.f32.mrf.mxu0
  %v1191 = vadd.f32 %v832, %v1190
  %1192 = vmatmul.bf16.gmra.mxu0 %v698
  %v1193 = vpop.f32.mrf.mxu0
  %v1194 = vadd.f32 %v832, %v1193
  %v1195 = vpop.f32.mrf.mxu0
  %v1196 = vadd.f32 %v832, %v1195
  %1197 = vmatmul.bf16.gmra.mxu0 %v700
  %v1198 = vpop.f32.mrf.mxu0
  %v1199 = vadd.f32 %v832, %v1198
  %v1200 = vpop.f32.mrf.mxu0
  %v1201 = vadd.f32 %v832, %v1200
  %1202 = vmatmul.bf16.gmra.mxu0 %v702
  %v1203 = vpop.f32.mrf.mxu0
  %v1204 = vadd.f32 %v832, %v1203
  %v1205 = vpop.f32.mrf.mxu0
  %v1206 = vadd.f32 %v832, %v1205
  %1207 = vmatmul.bf16.gmra.mxu0 %v704
  %v1208 = vpop.f32.mrf.mxu0
  %v1209 = vadd.f32 %v832, %v1208
  %v1210 = vpop.f32.mrf.mxu0
  %v1211 = vadd.f32 %v832, %v1210
  %1212 = vmatmul.bf16.gmra.mxu0 %v706
  %v1213 = vpop.f32.mrf.mxu0
  %v1214 = vadd.f32 %v832, %v1213
  %v1215 = vpop.f32.mrf.mxu0
  %v1216 = vadd.f32 %v832, %v1215
  %1217 = vmatmul.bf16.gmra.mxu0 %v708
  %v1218 = vpop.f32.mrf.mxu0
  %v1219 = vadd.f32 %v832, %v1218
  %v1220 = vpop.f32.mrf.mxu0
  %v1221 = vadd.f32 %v832, %v1220
  %1222 = vmatmul.bf16.gmra.mxu0 %v710
  %v1223 = vpop.f32.mrf.mxu0
  %v1224 = vadd.f32 %v832, %v1223
  %v1225 = vpop.f32.mrf.mxu0
  %v1226 = vadd.f32 %v832, %v1225
  %1227 = vmatmul.bf16.gmra.mxu0 %v712
  %v1228 = vpop.f32.mrf.mxu0
  %v1229 = vadd.f32 %v832, %v1228
  %v1230 = vpop.f32.mrf.mxu0
  %v1231 = vadd.f32 %v832, %v1230
  %1232 = vmatmul.bf16.gmra.mxu0 %v714
  %v1233 = vpop.f32.mrf.mxu0
  %v1234 = vadd.f32 %v832, %v1233
  %v1235 = vpop.f32.mrf.mxu0
  %v1236 = vadd.f32 %v832, %v1235
  %1237 = vmatmul.bf16.gmra.mxu0 %v716
  %v1238 = vpop.f32.mrf.mxu0
  %v1239 = vadd.f32 %v832, %v1238
  %v1240 = vpop.f32.mrf.mxu0
  %v1241 = vadd.f32 %v832, %v1240
  %1242 = vmatmul.bf16.gmra.mxu0 %v718
  %v1243 = vpop.f32.mrf.mxu0
  %v1244 = vadd.f32 %v832, %v1243
  %v1245 = vpop.f32.mrf.mxu0
  %v1246 = vadd.f32 %v832, %v1245
  %1247 = vmatmul.bf16.gmra.mxu0 %v720
  %v1248 = vpop.f32.mrf.mxu0
  %v1249 = vadd.f32 %v832, %v1248
  %v1250 = vpop.f32.mrf.mxu0
  %v1251 = vadd.f32 %v832, %v1250
  %1252 = vmatmul.bf16.gmra.mxu0 %v722
  %v1253 = vpop.f32.mrf.mxu0
  %v1254 = vadd.f32 %v832, %v1253
  %v1255 = vpop.f32.mrf.mxu0
  %v1256 = vadd.f32 %v832, %v1255
  %1257 = vmatmul.bf16.gmra.mxu0 %v724
  %v1258 = vpop.f32.mrf.mxu0
  %v1259 = vadd.f32 %v832, %v1258
  %v1260 = vpop.f32.mrf.mxu0
  %v1261 = vadd.f32 %v832, %v1260
  %1262 = vmatmul.bf16.gmra.mxu0 %v726
  %v1263 = vpop.f32.mrf.mxu0
  %v1264 = vadd.f32 %v832, %v1263
  %v1265 = vpop.f32.mrf.mxu0
  %v1266 = vadd.f32 %v832, %v1265
  %1267 = vmatmul.bf16.gmra.mxu0 %v728
  %v1268 = vpop.f32.mrf.mxu0
  %v1269 = vadd.f32 %v832, %v1268
  %v1270 = vpop.f32.mrf.mxu0
  %v1271 = vadd.f32 %v832, %v1270
  %1272 = vmatmul.bf16.gmra.mxu0 %v730
  %v1273 = vpop.f32.mrf.mxu0
  %v1274 = vadd.f32 %v832, %v1273
  %v1275 = vpop.f32.mrf.mxu0
  %v1276 = vadd.f32 %v832, %v1275
  %1277 = vmatmul.bf16.gmra.mxu0 %v732
  %v1278 = vpop.f32.mrf.mxu0
  %v1279 = vadd.f32 %v832, %v1278
  %v1280 = vpop.f32.mrf.mxu0
  %v1281 = vadd.f32 %v832, %v1280
  %1282 = vmatmul.bf16.gmra.mxu0 %v734
  %v1283 = vpop.f32.mrf.mxu0
  %v1284 = vadd.f32 %v832, %v1283
  %v1285 = vpop.f32.mrf.mxu0
  %v1286 = vadd.f32 %v832, %v1285
  %1287 = vmatmul.bf16.gmra.mxu0 %v736
  %v1288 = vpop.f32.mrf.mxu0
  %v1289 = vadd.f32 %v832, %v1288
  %v1290 = vpop.f32.mrf.mxu0
  %v1291 = vadd.f32 %v832, %v1290
  %1292 = vmatmul.bf16.gmra.mxu0 %v738
  %v1293 = vpop.f32.mrf.mxu0
  %v1294 = vadd.f32 %v832, %v1293
  %v1295 = vpop.f32.mrf.mxu0
  %v1296 = vadd.f32 %v832, %v1295
  %1297 = vmatmul.bf16.gmra.mxu0 %v740
  %v1298 = vpop.f32.mrf.mxu0
  %v1299 = vadd.f32 %v832, %v1298
  %v1300 = vpop.f32.mrf.mxu0
  %v1301 = vadd.f32 %v832, %v1300
  %1302 = vmatmul.bf16.gmra.mxu0 %v742
  %v1303 = vpop.f32.mrf.mxu0
  %v1304 = vadd.f32 %v832, %v1303
  %v1305 = vpop.f32.mrf.mxu0
  %v1306 = vadd.f32 %v832, %v1305
  %1307 = vmatmul.bf16.gmra.mxu0 %v744
  %v1308 = vpop.f32.mrf.mxu0
  %v1309 = vadd.f32 %v832, %v1308
  %v1310 = vpop.f32.mrf.mxu0
  %v1311 = vadd.f32 %v832, %v1310
  %1312 = vmatmul.bf16.gmra.mxu0 %v746
  %v1313 = vpop.f32.mrf.mxu0
  %v1314 = vadd.f32 %v832, %v1313
  %v1315 = vpop.f32.mrf.mxu0
  %v1316 = vadd.f32 %v832, %v1315
  %1317 = vmatmul.bf16.gmra.mxu0 %v748
  %v1318 = vpop.f32.mrf.mxu0
  %v1319 = vadd.f32 %v832, %v1318
  %v1320 = vpop.f32.mrf.mxu0
  %v1321 = vadd.f32 %v832, %v1320
  %1322 = vmatmul.bf16.gmra.mxu0 %v750
  %v1323 = vpop.f32.mrf.mxu0
  %v1324 = vadd.f32 %v832, %v1323
  %v1325 = vpop.f32.mrf.mxu0
  %v1326 = vadd.f32 %v832, %v1325
  %1327 = vmatmul.bf16.gmra.mxu0 %v752
  %v1328 = vpop.f32.mrf.mxu0
  %v1329 = vadd.f32 %v832, %v1328
  %v1330 = vpop.f32.mrf.mxu0
  %v1331 = vadd.f32 %v832, %v1330
  %1332 = vmatmul.bf16.gmra.mxu0 %v754
  %v1333 = vpop.f32.mrf.mxu0
  %v1334 = vadd.f32 %v832, %v1333
  %v1335 = vpop.f32.mrf.mxu0
  %v1336 = vadd.f32 %v832, %v1335
  %1337 = vmatmul.bf16.gmra.mxu0 %v756
  %v1338 = vpop.f32.mrf.mxu0
  %v1339 = vadd.f32 %v832, %v1338
  %v1340 = vpop.f32.mrf.mxu0
  %v1341 = vadd.f32 %v832, %v1340
  %1342 = vmatmul.bf16.gmra.mxu0 %v758
  %v1343 = vpop.f32.mrf.mxu0
  %v1344 = vadd.f32 %v832, %v1343
  %v1345 = vpop.f32.mrf.mxu0
  %v1346 = vadd.f32 %v832, %v1345
  %1347 = vmatmul.bf16.gmra.mxu0 %v760
  %v1348 = vpop.f32.mrf.mxu0
  %v1349 = vadd.f32 %v832, %v1348
  %v1350 = vpop.f32.mrf.mxu0
  %v1351 = vadd.f32 %v832, %v1350
  %1352 = vmatmul.bf16.gmra.mxu0 %v762
  %v1353 = vpop.f32.mrf.mxu0
  %v1354 = vadd.f32 %v832, %v1353
  %v1355 = vpop.f32.mrf.mxu0
  %v1356 = vadd.f32 %v832, %v1355
  %1357 = vmatmul.bf16.gmra.mxu0 %v764
  %v1358 = vpop.f32.mrf.mxu0
  %v1359 = vadd.f32 %v832, %v1358
  %v1360 = vpop.f32.mrf.mxu0
  %v1361 = vadd.f32 %v832, %v1360
  %1362 = vmatmul.bf16.gmra.mxu0 %v766
  %v1363 = vpop.f32.mrf.mxu0
  %v1364 = vadd.f32 %v832, %v1363
  %v1365 = vpop.f32.mrf.mxu0
  %v1366 = vadd.f32 %v832, %v1365
  %1367 = vmatmul.bf16.gmra.mxu0 %v768
  %v1368 = vpop.f32.mrf.mxu0
  %v1369 = vadd.f32 %v832, %v1368
  %v1370 = vpop.f32.mrf.mxu0
  %v1371 = vadd.f32 %v832, %v1370
  %1372 = vmatmul.bf16.gmra.mxu0 %v770
  %v1373 = vpop.f32.mrf.mxu0
  %v1374 = vadd.f32 %v832, %v1373
  %v1375 = vpop.f32.mrf.mxu0
  %v1376 = vadd.f32 %v832, %v1375
  %1377 = vmatmul.bf16.gmra.mxu0 %v772
  %v1378 = vpop.f32.mrf.mxu0
  %v1379 = vadd.f32 %v832, %v1378
  %v1380 = vpop.f32.mrf.mxu0
  %v1381 = vadd.f32 %v832, %v1380
  %1382 = vmatmul.bf16.gmra.mxu0 %v774
  %v1383 = vpop.f32.mrf.mxu0
  %v1384 = vadd.f32 %v832, %v1383
  %v1385 = vpop.f32.mrf.mxu0
  %v1386 = vadd.f32 %v832, %v1385
  %1387 = vmatmul.bf16.gmra.mxu0 %v776
  %v1388 = vpop.f32.mrf.mxu0
  %v1389 = vadd.f32 %v832, %v1388
  %v1390 = vpop.f32.mrf.mxu0
  %v1391 = vadd.f32 %v832, %v1390
  %1392 = vmatmul.bf16.gmra.mxu0 %v778
  %v1393 = vpop.f32.mrf.mxu0
  %v1394 = vadd.f32 %v832, %v1393
  %v1395 = vpop.f32.mrf.mxu0
  %v1396 = vadd.f32 %v832, %v1395
  %1397 = vmatmul.bf16.gmra.mxu0 %v780
  %v1398 = vpop.f32.mrf.mxu0
  %v1399 = vadd.f32 %v832, %v1398
  %v1400 = vpop.f32.mrf.mxu0
  %v1401 = vadd.f32 %v832, %v1400
  %1402 = vmatmul.bf16.gmra.mxu0 %v782
  %v1403 = vpop.f32.mrf.mxu0
  %v1404 = vadd.f32 %v832, %v1403
  %v1405 = vpop.f32.mrf.mxu0
  %v1406 = vadd.f32 %v832, %v1405
  %1407 = vmatmul.bf16.gmra.mxu0 %v784
  %v1408 = vpop.f32.mrf.mxu0
  %v1409 = vadd.f32 %v832, %v1408
  %v1410 = vpop.f32.mrf.mxu0
  %v1411 = vadd.f32 %v832, %v1410
  %1412 = vmatmul.bf16.gmra.mxu0 %v786
  %v1413 = vpop.f32.mrf.mxu0
  %v1414 = vadd.f32 %v832, %v1413
  %v1415 = vpop.f32.mrf.mxu0
  %v1416 = vadd.f32 %v832, %v1415
  %1417 = vmatmul.bf16.gmra.mxu0 %v788
  %v1418 = vpop.f32.mrf.mxu0
  %v1419 = vadd.f32 %v832, %v1418
  %v1420 = vpop.f32.mrf.mxu0
  %v1421 = vadd.f32 %v832, %v1420
  %1422 = vmatmul.bf16.gmra.mxu0 %v790
  %v1423 = vpop.f32.mrf.mxu0
  %v1424 = vadd.f32 %v832, %v1423
  %v1425 = vpop.f32.mrf.mxu0
  %v1426 = vadd.f32 %v832, %v1425
  %1427 = vmatmul.bf16.gmra.mxu0 %v792
  %v1428 = vpop.f32.mrf.mxu0
  %v1429 = vadd.f32 %v832, %v1428
  %v1430 = vpop.f32.mrf.mxu0
  %v1431 = vadd.f32 %v832, %v1430
  %1432 = vmatmul.bf16.gmra.mxu0 %v794
  %v1433 = vpop.f32.mrf.mxu0
  %v1434 = vadd.f32 %v832, %v1433
  %v1435 = vpop.f32.mrf.mxu0
  %v1436 = vadd.f32 %v832, %v1435
  %1437 = vmatmul.bf16.gmra.mxu0 %v796
  %v1438 = vpop.f32.mrf.mxu0
  %v1439 = vadd.f32 %v832, %v1438
  %v1440 = vpop.f32.mrf.mxu0
  %v1441 = vadd.f32 %v832, %v1440
  %1442 = vmatmul.bf16.gmra.mxu0 %v798
  %v1443 = vpop.f32.mrf.mxu0
  %v1444 = vadd.f32 %v832, %v1443
  %v1445 = vpop.f32.mrf.mxu0
  %v1446 = vadd.f32 %v832, %v1445
  %1447 = vmatmul.bf16.gmra.mxu0 %v800
  %v1448 = vpop.f32.mrf.mxu0
  %v1449 = vadd.f32 %v832, %v1448
  %v1450 = vpop.f32.mrf.mxu0
  %v1451 = vadd.f32 %v832, %v1450
  %1452 = vmatmul.bf16.gmra.mxu0 %v802
  %v1453 = vpop.f32.mrf.mxu0
  %v1454 = vadd.f32 %v832, %v1453
  %v1455 = vpop.f32.mrf.mxu0
  %v1456 = vadd.f32 %v832, %v1455
  %1457 = vmatmul.bf16.gmra.mxu0 %v804
  %v1458 = vpop.f32.mrf.mxu0
  %v1459 = vadd.f32 %v832, %v1458
  %v1460 = vpop.f32.mrf.mxu0
  %v1461 = vadd.f32 %v832, %v1460
  %1462 = vmatmul.bf16.gmra.mxu0 %v806
  %v1463 = vpop.f32.mrf.mxu0
  %v1464 = vadd.f32 %v832, %v1463
  %v1465 = vpop.f32.mrf.mxu0
  %v1466 = vadd.f32 %v832, %v1465
  %1467 = vmatmul.bf16.gmra.mxu0 %v808
  %v1468 = vpop.f32.mrf.mxu0
  %v1469 = vadd.f32 %v832, %v1468
  %v1470 = vpop.f32.mrf.mxu0
  %v1471 = vadd.f32 %v832, %v1470
  %1472 = vmatmul.bf16.gmra.mxu0 %v810
  %v1473 = vpop.f32.mrf.mxu0
  %v1474 = vadd.f32 %v832, %v1473
  %v1475 = vpop.f32.mrf.mxu0
  %v1476 = vadd.f32 %v832, %v1475
  %1477 = vmatmul.bf16.gmra.mxu0 %v812
  %v1478 = vpop.f32.mrf.mxu0
  %v1479 = vadd.f32 %v832, %v1478
  %v1480 = vpop.f32.mrf.mxu0
  %v1481 = vadd.f32 %v832, %v1480
  %1482 = vdwg.mxu0
  %1483 = vmatpush.bf16.msra.mxu0 %v829
  %1484 = vmatpush.bf16.msra.mxu0 %v828
  %1485 = vmatpush.bf16.msra.mxu0 %v827
  %1486 = vmatpush.bf16.msra.mxu0 %v826
  %1487 = vmatpush.bf16.msra.mxu0 %v825
  %1488 = vmatpush.bf16.msra.mxu0 %v824
  %1489 = vmatpush.bf16.msra.mxu0 %v823
  %1490 = vmatpush.bf16.msra.mxu0 %v822
  %1491 = vmatmul.bf16.gmra.mxu0 %v559
  %v1492 = vpop.f32.mrf.mxu0
  %v1493 = vadd.f32 %v844, %v1492
  %v1494 = vpop.f32.mrf.mxu0
  %v1495 = vadd.f32 %v846, %v1494
  %1496 = vmatmul.bf16.gmra.mxu0 %v561
  %v1497 = vpop.f32.mrf.mxu0
  %v1498 = vadd.f32 %v849, %v1497
  %v1499 = vpop.f32.mrf.mxu0
  %v1500 = vadd.f32 %v851, %v1499
  %1501 = vmatmul.bf16.gmra.mxu0 %v563
  %v1502 = vpop.f32.mrf.mxu0
  %v1503 = vadd.f32 %v854, %v1502
  %v1504 = vpop.f32.mrf.mxu0
  %v1505 = vadd.f32 %v856, %v1504
  %1506 = vmatmul.bf16.gmra.mxu0 %v565
  %v1507 = vpop.f32.mrf.mxu0
  %v1508 = vadd.f32 %v859, %v1507
  %v1509 = vpop.f32.mrf.mxu0
  %v1510 = vadd.f32 %v861, %v1509
  %1511 = vmatmul.bf16.gmra.mxu0 %v567
  %v1512 = vpop.f32.mrf.mxu0
  %v1513 = vadd.f32 %v864, %v1512
  %v1514 = vpop.f32.mrf.mxu0
  %v1515 = vadd.f32 %v866, %v1514
  %1516 = vmatmul.bf16.gmra.mxu0 %v569
  %v1517 = vpop.f32.mrf.mxu0
  %v1518 = vadd.f32 %v869, %v1517
  %v1519 = vpop.f32.mrf.mxu0
  %v1520 = vadd.f32 %v871, %v1519
  %1521 = vmatmul.bf16.gmra.mxu0 %v571
  %v1522 = vpop.f32.mrf.mxu0
  %v1523 = vadd.f32 %v874, %v1522
  %v1524 = vpop.f32.mrf.mxu0
  %v1525 = vadd.f32 %v876, %v1524
  %1526 = vmatmul.bf16.gmra.mxu0 %v573
  %v1527 = vpop.f32.mrf.mxu0
  %v1528 = vadd.f32 %v879, %v1527
  %v1529 = vpop.f32.mrf.mxu0
  %v1530 = vadd.f32 %v881, %v1529
  %1531 = vmatmul.bf16.gmra.mxu0 %v575
  %v1532 = vpop.f32.mrf.mxu0
  %v1533 = vadd.f32 %v884, %v1532
  %v1534 = vpop.f32.mrf.mxu0
  %v1535 = vadd.f32 %v886, %v1534
  %1536 = vmatmul.bf16.gmra.mxu0 %v577
  %v1537 = vpop.f32.mrf.mxu0
  %v1538 = vadd.f32 %v889, %v1537
  %v1539 = vpop.f32.mrf.mxu0
  %v1540 = vadd.f32 %v891, %v1539
  %1541 = vmatmul.bf16.gmra.mxu0 %v579
  %v1542 = vpop.f32.mrf.mxu0
  %v1543 = vadd.f32 %v894, %v1542
  %v1544 = vpop.f32.mrf.mxu0
  %v1545 = vadd.f32 %v896, %v1544
  %1546 = vmatmul.bf16.gmra.mxu0 %v581
  %v1547 = vpop.f32.mrf.mxu0
  %v1548 = vadd.f32 %v899, %v1547
  %v1549 = vpop.f32.mrf.mxu0
  %v1550 = vadd.f32 %v901, %v1549
  %1551 = vmatmul.bf16.gmra.mxu0 %v583
  %v1552 = vpop.f32.mrf.mxu0
  %v1553 = vadd.f32 %v904, %v1552
  %v1554 = vpop.f32.mrf.mxu0
  %v1555 = vadd.f32 %v906, %v1554
  %1556 = vmatmul.bf16.gmra.mxu0 %v585
  %v1557 = vpop.f32.mrf.mxu0
  %v1558 = vadd.f32 %v909, %v1557
  %v1559 = vpop.f32.mrf.mxu0
  %v1560 = vadd.f32 %v911, %v1559
  %1561 = vmatmul.bf16.gmra.mxu0 %v587
  %v1562 = vpop.f32.mrf.mxu0
  %v1563 = vadd.f32 %v914, %v1562
  %v1564 = vpop.f32.mrf.mxu0
  %v1565 = vadd.f32 %v916, %v1564
  %1566 = vmatmul.bf16.gmra.mxu0 %v589
  %v1567 = vpop.f32.mrf.mxu0
  %v1568 = vadd.f32 %v919, %v1567
  %v1569 = vpop.f32.mrf.mxu0
  %v1570 = vadd.f32 %v921, %v1569
  %1571 = vmatmul.bf16.gmra.mxu0 %v591
  %v1572 = vpop.f32.mrf.mxu0
  %v1573 = vadd.f32 %v924, %v1572
  %v1574 = vpop.f32.mrf.mxu0
  %v1575 = vadd.f32 %v926, %v1574
  %1576 = vmatmul.bf16.gmra.mxu0 %v593
  %v1577 = vpop.f32.mrf.mxu0
  %v1578 = vadd.f32 %v929, %v1577
  %v1579 = vpop.f32.mrf.mxu0
  %v1580 = vadd.f32 %v931, %v1579
  %1581 = vmatmul.bf16.gmra.mxu0 %v595
  %v1582 = vpop.f32.mrf.mxu0
  %v1583 = vadd.f32 %v934, %v1582
  %v1584 = vpop.f32.mrf.mxu0
  %v1585 = vadd.f32 %v936, %v1584
  %1586 = vmatmul.bf16.gmra.mxu0 %v597
  %v1587 = vpop.f32.mrf.mxu0
  %v1588 = vadd.f32 %v939, %v1587
  %v1589 = vpop.f32.mrf.mxu0
  %v1590 = vadd.f32 %v941, %v1589
  %1591 = vmatmul.bf16.gmra.mxu0 %v599
  %v1592 = vpop.f32.mrf.mxu0
  %v1593 = vadd.f32 %v944, %v1592
  %v1594 = vpop.f32.mrf.mxu0
  %v1595 = vadd.f32 %v946, %v1594
  %1596 = vmatmul.bf16.gmra.mxu0 %v601
  %v1597 = vpop.f32.mrf.mxu0
  %v1598 = vadd.f32 %v949, %v1597
  %v1599 = vpop.f32.mrf.mxu0
  %v1600 = vadd.f32 %v951, %v1599
  %1601 = vmatmul.bf16.gmra.mxu0 %v603
  %v1602 = vpop.f32.mrf.mxu0
  %v1603 = vadd.f32 %v954, %v1602
  %v1604 = vpop.f32.mrf.mxu0
  %v1605 = vadd.f32 %v956, %v1604
  %1606 = vmatmul.bf16.gmra.mxu0 %v605
  %v1607 = vpop.f32.mrf.mxu0
  %v1608 = vadd.f32 %v959, %v1607
  %v1609 = vpop.f32.mrf.mxu0
  %v1610 = vadd.f32 %v961, %v1609
  %1611 = vmatmul.bf16.gmra.mxu0 %v607
  %v1612 = vpop.f32.mrf.mxu0
  %v1613 = vadd.f32 %v964, %v1612
  %v1614 = vpop.f32.mrf.mxu0
  %v1615 = vadd.f32 %v966, %v1614
  %1616 = vmatmul.bf16.gmra.mxu0 %v609
  %v1617 = vpop.f32.mrf.mxu0
  %v1618 = vadd.f32 %v969, %v1617
  %v1619 = vpop.f32.mrf.mxu0
  %v1620 = vadd.f32 %v971, %v1619
  %1621 = vmatmul.bf16.gmra.mxu0 %v611
  %v1622 = vpop.f32.mrf.mxu0
  %v1623 = vadd.f32 %v974, %v1622
  %v1624 = vpop.f32.mrf.mxu0
  %v1625 = vadd.f32 %v976, %v1624
  %1626 = vmatmul.bf16.gmra.mxu0 %v613
  %v1627 = vpop.f32.mrf.mxu0
  %v1628 = vadd.f32 %v979, %v1627
  %v1629 = vpop.f32.mrf.mxu0
  %v1630 = vadd.f32 %v981, %v1629
  %1631 = vmatmul.bf16.gmra.mxu0 %v615
  %v1632 = vpop.f32.mrf.mxu0
  %v1633 = vadd.f32 %v984, %v1632
  %v1634 = vpop.f32.mrf.mxu0
  %v1635 = vadd.f32 %v986, %v1634
  %1636 = vmatmul.bf16.gmra.mxu0 %v617
  %v1637 = vpop.f32.mrf.mxu0
  %v1638 = vadd.f32 %v989, %v1637
  %v1639 = vpop.f32.mrf.mxu0
  %v1640 = vadd.f32 %v991, %v1639
  %1641 = vmatmul.bf16.gmra.mxu0 %v619
  %v1642 = vpop.f32.mrf.mxu0
  %v1643 = vadd.f32 %v994, %v1642
  %v1644 = vpop.f32.mrf.mxu0
  %v1645 = vadd.f32 %v996, %v1644
  %1646 = vmatmul.bf16.gmra.mxu0 %v621
  %v1647 = vpop.f32.mrf.mxu0
  %v1648 = vadd.f32 %v999, %v1647
  %v1649 = vpop.f32.mrf.mxu0
  %v1650 = vadd.f32 %v1001, %v1649
  %1651 = vmatmul.bf16.gmra.mxu0 %v623
  %v1652 = vpop.f32.mrf.mxu0
  %v1653 = vadd.f32 %v1004, %v1652
  %v1654 = vpop.f32.mrf.mxu0
  %v1655 = vadd.f32 %v1006, %v1654
  %1656 = vmatmul.bf16.gmra.mxu0 %v625
  %v1657 = vpop.f32.mrf.mxu0
  %v1658 = vadd.f32 %v1009, %v1657
  %v1659 = vpop.f32.mrf.mxu0
  %v1660 = vadd.f32 %v1011, %v1659
  %1661 = vmatmul.bf16.gmra.mxu0 %v627
  %v1662 = vpop.f32.mrf.mxu0
  %v1663 = vadd.f32 %v1014, %v1662
  %v1664 = vpop.f32.mrf.mxu0
  %v1665 = vadd.f32 %v1016, %v1664
  %1666 = vmatmul.bf16.gmra.mxu0 %v629
  %v1667 = vpop.f32.mrf.mxu0
  %v1668 = vadd.f32 %v1019, %v1667
  %v1669 = vpop.f32.mrf.mxu0
  %v1670 = vadd.f32 %v1021, %v1669
  %1671 = vmatmul.bf16.gmra.mxu0 %v631
  %v1672 = vpop.f32.mrf.mxu0
  %v1673 = vadd.f32 %v1024, %v1672
  %v1674 = vpop.f32.mrf.mxu0
  %v1675 = vadd.f32 %v1026, %v1674
  %1676 = vmatmul.bf16.gmra.mxu0 %v633
  %v1677 = vpop.f32.mrf.mxu0
  %v1678 = vadd.f32 %v1029, %v1677
  %v1679 = vpop.f32.mrf.mxu0
  %v1680 = vadd.f32 %v1031, %v1679
  %1681 = vmatmul.bf16.gmra.mxu0 %v635
  %v1682 = vpop.f32.mrf.mxu0
  %v1683 = vadd.f32 %v1034, %v1682
  %v1684 = vpop.f32.mrf.mxu0
  %v1685 = vadd.f32 %v1036, %v1684
  %1686 = vmatmul.bf16.gmra.mxu0 %v637
  %v1687 = vpop.f32.mrf.mxu0
  %v1688 = vadd.f32 %v1039, %v1687
  %v1689 = vpop.f32.mrf.mxu0
  %v1690 = vadd.f32 %v1041, %v1689
  %1691 = vmatmul.bf16.gmra.mxu0 %v639
  %v1692 = vpop.f32.mrf.mxu0
  %v1693 = vadd.f32 %v1044, %v1692
  %v1694 = vpop.f32.mrf.mxu0
  %v1695 = vadd.f32 %v1046, %v1694
  %1696 = vmatmul.bf16.gmra.mxu0 %v641
  %v1697 = vpop.f32.mrf.mxu0
  %v1698 = vadd.f32 %v1049, %v1697
  %v1699 = vpop.f32.mrf.mxu0
  %v1700 = vadd.f32 %v1051, %v1699
  %1701 = vmatmul.bf16.gmra.mxu0 %v643
  %v1702 = vpop.f32.mrf.mxu0
  %v1703 = vadd.f32 %v1054, %v1702
  %v1704 = vpop.f32.mrf.mxu0
  %v1705 = vadd.f32 %v1056, %v1704
  %1706 = vmatmul.bf16.gmra.mxu0 %v645
  %v1707 = vpop.f32.mrf.mxu0
  %v1708 = vadd.f32 %v1059, %v1707
  %v1709 = vpop.f32.mrf.mxu0
  %v1710 = vadd.f32 %v1061, %v1709
  %1711 = vmatmul.bf16.gmra.mxu0 %v647
  %v1712 = vpop.f32.mrf.mxu0
  %v1713 = vadd.f32 %v1064, %v1712
  %v1714 = vpop.f32.mrf.mxu0
  %v1715 = vadd.f32 %v1066, %v1714
  %1716 = vmatmul.bf16.gmra.mxu0 %v649
  %v1717 = vpop.f32.mrf.mxu0
  %v1718 = vadd.f32 %v1069, %v1717
  %v1719 = vpop.f32.mrf.mxu0
  %v1720 = vadd.f32 %v1071, %v1719
  %1721 = vmatmul.bf16.gmra.mxu0 %v651
  %v1722 = vpop.f32.mrf.mxu0
  %v1723 = vadd.f32 %v1074, %v1722
  %v1724 = vpop.f32.mrf.mxu0
  %v1725 = vadd.f32 %v1076, %v1724
  %1726 = vmatmul.bf16.gmra.mxu0 %v653
  %v1727 = vpop.f32.mrf.mxu0
  %v1728 = vadd.f32 %v1079, %v1727
  %v1729 = vpop.f32.mrf.mxu0
  %v1730 = vadd.f32 %v1081, %v1729
  %1731 = vmatmul.bf16.gmra.mxu0 %v655
  %v1732 = vpop.f32.mrf.mxu0
  %v1733 = vadd.f32 %v1084, %v1732
  %v1734 = vpop.f32.mrf.mxu0
  %v1735 = vadd.f32 %v1086, %v1734
  %1736 = vmatmul.bf16.gmra.mxu0 %v657
  %v1737 = vpop.f32.mrf.mxu0
  %v1738 = vadd.f32 %v1089, %v1737
  %v1739 = vpop.f32.mrf.mxu0
  %v1740 = vadd.f32 %v1091, %v1739
  %1741 = vmatmul.bf16.gmra.mxu0 %v659
  %v1742 = vpop.f32.mrf.mxu0
  %v1743 = vadd.f32 %v1094, %v1742
  %v1744 = vpop.f32.mrf.mxu0
  %v1745 = vadd.f32 %v1096, %v1744
  %1746 = vmatmul.bf16.gmra.mxu0 %v661
  %v1747 = vpop.f32.mrf.mxu0
  %v1748 = vadd.f32 %v1099, %v1747
  %v1749 = vpop.f32.mrf.mxu0
  %v1750 = vadd.f32 %v1101, %v1749
  %1751 = vmatmul.bf16.gmra.mxu0 %v663
  %v1752 = vpop.f32.mrf.mxu0
  %v1753 = vadd.f32 %v1104, %v1752
  %v1754 = vpop.f32.mrf.mxu0
  %v1755 = vadd.f32 %v1106, %v1754
  %1756 = vmatmul.bf16.gmra.mxu0 %v665
  %v1757 = vpop.f32.mrf.mxu0
  %v1758 = vadd.f32 %v1109, %v1757
  %v1759 = vpop.f32.mrf.mxu0
  %v1760 = vadd.f32 %v1111, %v1759
  %1761 = vmatmul.bf16.gmra.mxu0 %v667
  %v1762 = vpop.f32.mrf.mxu0
  %v1763 = vadd.f32 %v1114, %v1762
  %v1764 = vpop.f32.mrf.mxu0
  %v1765 = vadd.f32 %v1116, %v1764
  %1766 = vmatmul.bf16.gmra.mxu0 %v669
  %v1767 = vpop.f32.mrf.mxu0
  %v1768 = vadd.f32 %v1119, %v1767
  %v1769 = vpop.f32.mrf.mxu0
  %v1770 = vadd.f32 %v1121, %v1769
  %1771 = vmatmul.bf16.gmra.mxu0 %v671
  %v1772 = vpop.f32.mrf.mxu0
  %v1773 = vadd.f32 %v1124, %v1772
  %v1774 = vpop.f32.mrf.mxu0
  %v1775 = vadd.f32 %v1126, %v1774
  %1776 = vmatmul.bf16.gmra.mxu0 %v673
  %v1777 = vpop.f32.mrf.mxu0
  %v1778 = vadd.f32 %v1129, %v1777
  %v1779 = vpop.f32.mrf.mxu0
  %v1780 = vadd.f32 %v1131, %v1779
  %1781 = vmatmul.bf16.gmra.mxu0 %v675
  %v1782 = vpop.f32.mrf.mxu0
  %v1783 = vadd.f32 %v1134, %v1782
  %v1784 = vpop.f32.mrf.mxu0
  %v1785 = vadd.f32 %v1136, %v1784
  %1786 = vmatmul.bf16.gmra.mxu0 %v677
  %v1787 = vpop.f32.mrf.mxu0
  %v1788 = vadd.f32 %v1139, %v1787
  %v1789 = vpop.f32.mrf.mxu0
  %v1790 = vadd.f32 %v1141, %v1789
  %1791 = vmatmul.bf16.gmra.mxu0 %v679
  %v1792 = vpop.f32.mrf.mxu0
  %v1793 = vadd.f32 %v1144, %v1792
  %v1794 = vpop.f32.mrf.mxu0
  %v1795 = vadd.f32 %v1146, %v1794
  %1796 = vmatmul.bf16.gmra.mxu0 %v681
  %v1797 = vpop.f32.mrf.mxu0
  %v1798 = vadd.f32 %v1149, %v1797
  %v1799 = vpop.f32.mrf.mxu0
  %v1800 = vadd.f32 %v1151, %v1799
  %1801 = vmatmul.bf16.gmra.mxu0 %v683
  %v1802 = vpop.f32.mrf.mxu0
  %v1803 = vadd.f32 %v1154, %v1802
  %v1804 = vpop.f32.mrf.mxu0
  %v1805 = vadd.f32 %v1156, %v1804
  %1806 = vmatmul.bf16.gmra.mxu0 %v685
  %v1807 = vpop.f32.mrf.mxu0
  %v1808 = vadd.f32 %v1159, %v1807
  %v1809 = vpop.f32.mrf.mxu0
  %v1810 = vadd.f32 %v1161, %v1809
  %1811 = vmatmul.bf16.gmra.mxu0 %v687
  %v1812 = vpop.f32.mrf.mxu0
  %v1813 = vadd.f32 %v1164, %v1812
  %v1814 = vpop.f32.mrf.mxu0
  %v1815 = vadd.f32 %v1166, %v1814
  %1816 = vmatmul.bf16.gmra.mxu0 %v689
  %v1817 = vpop.f32.mrf.mxu0
  %v1818 = vadd.f32 %v1169, %v1817
  %v1819 = vpop.f32.mrf.mxu0
  %v1820 = vadd.f32 %v1171, %v1819
  %1821 = vmatmul.bf16.gmra.mxu0 %v691
  %v1822 = vpop.f32.mrf.mxu0
  %v1823 = vadd.f32 %v1174, %v1822
  %v1824 = vpop.f32.mrf.mxu0
  %v1825 = vadd.f32 %v1176, %v1824
  %1826 = vmatmul.bf16.gmra.mxu0 %v693
  %v1827 = vpop.f32.mrf.mxu0
  %v1828 = vadd.f32 %v1179, %v1827
  %v1829 = vpop.f32.mrf.mxu0
  %v1830 = vadd.f32 %v1181, %v1829
  %1831 = vmatmul.bf16.gmra.mxu0 %v695
  %v1832 = vpop.f32.mrf.mxu0
  %v1833 = vadd.f32 %v1184, %v1832
  %v1834 = vpop.f32.mrf.mxu0
  %v1835 = vadd.f32 %v1186, %v1834
  %1836 = vmatmul.bf16.gmra.mxu0 %v697
  %v1837 = vpop.f32.mrf.mxu0
  %v1838 = vadd.f32 %v1189, %v1837
  %v1839 = vpop.f32.mrf.mxu0
  %v1840 = vadd.f32 %v1191, %v1839
  %1841 = vmatmul.bf16.gmra.mxu0 %v699
  %v1842 = vpop.f32.mrf.mxu0
  %v1843 = vadd.f32 %v1194, %v1842
  %v1844 = vpop.f32.mrf.mxu0
  %v1845 = vadd.f32 %v1196, %v1844
  %1846 = vmatmul.bf16.gmra.mxu0 %v701
  %v1847 = vpop.f32.mrf.mxu0
  %v1848 = vadd.f32 %v1199, %v1847
  %v1849 = vpop.f32.mrf.mxu0
  %v1850 = vadd.f32 %v1201, %v1849
  %1851 = vmatmul.bf16.gmra.mxu0 %v703
  %v1852 = vpop.f32.mrf.mxu0
  %v1853 = vadd.f32 %v1204, %v1852
  %v1854 = vpop.f32.mrf.mxu0
  %v1855 = vadd.f32 %v1206, %v1854
  %1856 = vmatmul.bf16.gmra.mxu0 %v705
  %v1857 = vpop.f32.mrf.mxu0
  %v1858 = vadd.f32 %v1209, %v1857
  %v1859 = vpop.f32.mrf.mxu0
  %v1860 = vadd.f32 %v1211, %v1859
  %1861 = vmatmul.bf16.gmra.mxu0 %v707
  %v1862 = vpop.f32.mrf.mxu0
  %v1863 = vadd.f32 %v1214, %v1862
  %v1864 = vpop.f32.mrf.mxu0
  %v1865 = vadd.f32 %v1216, %v1864
  %1866 = vmatmul.bf16.gmra.mxu0 %v709
  %v1867 = vpop.f32.mrf.mxu0
  %v1868 = vadd.f32 %v1219, %v1867
  %v1869 = vpop.f32.mrf.mxu0
  %v1870 = vadd.f32 %v1221, %v1869
  %1871 = vmatmul.bf16.gmra.mxu0 %v711
  %v1872 = vpop.f32.mrf.mxu0
  %v1873 = vadd.f32 %v1224, %v1872
  %v1874 = vpop.f32.mrf.mxu0
  %v1875 = vadd.f32 %v1226, %v1874
  %1876 = vmatmul.bf16.gmra.mxu0 %v713
  %v1877 = vpop.f32.mrf.mxu0
  %v1878 = vadd.f32 %v1229, %v1877
  %v1879 = vpop.f32.mrf.mxu0
  %v1880 = vadd.f32 %v1231, %v1879
  %1881 = vmatmul.bf16.gmra.mxu0 %v715
  %v1882 = vpop.f32.mrf.mxu0
  %v1883 = vadd.f32 %v1234, %v1882
  %v1884 = vpop.f32.mrf.mxu0
  %v1885 = vadd.f32 %v1236, %v1884
  %1886 = vmatmul.bf16.gmra.mxu0 %v717
  %v1887 = vpop.f32.mrf.mxu0
  %v1888 = vadd.f32 %v1239, %v1887
  %v1889 = vpop.f32.mrf.mxu0
  %v1890 = vadd.f32 %v1241, %v1889
  %1891 = vmatmul.bf16.gmra.mxu0 %v719
  %v1892 = vpop.f32.mrf.mxu0
  %v1893 = vadd.f32 %v1244, %v1892
  %v1894 = vpop.f32.mrf.mxu0
  %v1895 = vadd.f32 %v1246, %v1894
  %1896 = vmatmul.bf16.gmra.mxu0 %v721
  %v1897 = vpop.f32.mrf.mxu0
  %v1898 = vadd.f32 %v1249, %v1897
  %v1899 = vpop.f32.mrf.mxu0
  %v1900 = vadd.f32 %v1251, %v1899
  %1901 = vmatmul.bf16.gmra.mxu0 %v723
  %v1902 = vpop.f32.mrf.mxu0
  %v1903 = vadd.f32 %v1254, %v1902
  %v1904 = vpop.f32.mrf.mxu0
  %v1905 = vadd.f32 %v1256, %v1904
  %1906 = vmatmul.bf16.gmra.mxu0 %v725
  %v1907 = vpop.f32.mrf.mxu0
  %v1908 = vadd.f32 %v1259, %v1907
  %v1909 = vpop.f32.mrf.mxu0
  %v1910 = vadd.f32 %v1261, %v1909
  %1911 = vmatmul.bf16.gmra.mxu0 %v727
  %v1912 = vpop.f32.mrf.mxu0
  %v1913 = vadd.f32 %v1264, %v1912
  %v1914 = vpop.f32.mrf.mxu0
  %v1915 = vadd.f32 %v1266, %v1914
  %1916 = vmatmul.bf16.gmra.mxu0 %v729
  %v1917 = vpop.f32.mrf.mxu0
  %v1918 = vadd.f32 %v1269, %v1917
  %v1919 = vpop.f32.mrf.mxu0
  %v1920 = vadd.f32 %v1271, %v1919
  %1921 = vmatmul.bf16.gmra.mxu0 %v731
  %v1922 = vpop.f32.mrf.mxu0
  %v1923 = vadd.f32 %v1274, %v1922
  %v1924 = vpop.f32.mrf.mxu0
  %v1925 = vadd.f32 %v1276, %v1924
  %1926 = vmatmul.bf16.gmra.mxu0 %v733
  %v1927 = vpop.f32.mrf.mxu0
  %v1928 = vadd.f32 %v1279, %v1927
  %v1929 = vpop.f32.mrf.mxu0
  %v1930 = vadd.f32 %v1281, %v1929
  %1931 = vmatmul.bf16.gmra.mxu0 %v735
  %v1932 = vpop.f32.mrf.mxu0
  %v1933 = vadd.f32 %v1284, %v1932
  %v1934 = vpop.f32.mrf.mxu0
  %v1935 = vadd.f32 %v1286, %v1934
  %1936 = vmatmul.bf16.gmra.mxu0 %v737
  %v1937 = vpop.f32.mrf.mxu0
  %v1938 = vadd.f32 %v1289, %v1937
  %v1939 = vpop.f32.mrf.mxu0
  %v1940 = vadd.f32 %v1291, %v1939
  %1941 = vmatmul.bf16.gmra.mxu0 %v739
  %v1942 = vpop.f32.mrf.mxu0
  %v1943 = vadd.f32 %v1294, %v1942
  %v1944 = vpop.f32.mrf.mxu0
  %v1945 = vadd.f32 %v1296, %v1944
  %1946 = vmatmul.bf16.gmra.mxu0 %v741
  %v1947 = vpop.f32.mrf.mxu0
  %v1948 = vadd.f32 %v1299, %v1947
  %v1949 = vpop.f32.mrf.mxu0
  %v1950 = vadd.f32 %v1301, %v1949
  %1951 = vmatmul.bf16.gmra.mxu0 %v743
  %v1952 = vpop.f32.mrf.mxu0
  %v1953 = vadd.f32 %v1304, %v1952
  %v1954 = vpop.f32.mrf.mxu0
  %v1955 = vadd.f32 %v1306, %v1954
  %1956 = vmatmul.bf16.gmra.mxu0 %v745
  %v1957 = vpop.f32.mrf.mxu0
  %v1958 = vadd.f32 %v1309, %v1957
  %v1959 = vpop.f32.mrf.mxu0
  %v1960 = vadd.f32 %v1311, %v1959
  %1961 = vmatmul.bf16.gmra.mxu0 %v747
  %v1962 = vpop.f32.mrf.mxu0
  %v1963 = vadd.f32 %v1314, %v1962
  %v1964 = vpop.f32.mrf.mxu0
  %v1965 = vadd.f32 %v1316, %v1964
  %1966 = vmatmul.bf16.gmra.mxu0 %v749
  %v1967 = vpop.f32.mrf.mxu0
  %v1968 = vadd.f32 %v1319, %v1967
  %v1969 = vpop.f32.mrf.mxu0
  %v1970 = vadd.f32 %v1321, %v1969
  %1971 = vmatmul.bf16.gmra.mxu0 %v751
  %v1972 = vpop.f32.mrf.mxu0
  %v1973 = vadd.f32 %v1324, %v1972
  %v1974 = vpop.f32.mrf.mxu0
  %v1975 = vadd.f32 %v1326, %v1974
  %1976 = vmatmul.bf16.gmra.mxu0 %v753
  %v1977 = vpop.f32.mrf.mxu0
  %v1978 = vadd.f32 %v1329, %v1977
  %v1979 = vpop.f32.mrf.mxu0
  %v1980 = vadd.f32 %v1331, %v1979
  %1981 = vmatmul.bf16.gmra.mxu0 %v755
  %v1982 = vpop.f32.mrf.mxu0
  %v1983 = vadd.f32 %v1334, %v1982
  %v1984 = vpop.f32.mrf.mxu0
  %v1985 = vadd.f32 %v1336, %v1984
  %1986 = vmatmul.bf16.gmra.mxu0 %v757
  %v1987 = vpop.f32.mrf.mxu0
  %v1988 = vadd.f32 %v1339, %v1987
  %v1989 = vpop.f32.mrf.mxu0
  %v1990 = vadd.f32 %v1341, %v1989
  %1991 = vmatmul.bf16.gmra.mxu0 %v759
  %v1992 = vpop.f32.mrf.mxu0
  %v1993 = vadd.f32 %v1344, %v1992
  %v1994 = vpop.f32.mrf.mxu0
  %v1995 = vadd.f32 %v1346, %v1994
  %1996 = vmatmul.bf16.gmra.mxu0 %v761
  %v1997 = vpop.f32.mrf.mxu0
  %v1998 = vadd.f32 %v1349, %v1997
  %v1999 = vpop.f32.mrf.mxu0
  %v2000 = vadd.f32 %v1351, %v1999
  %2001 = vmatmul.bf16.gmra.mxu0 %v763
  %v2002 = vpop.f32.mrf.mxu0
  %v2003 = vadd.f32 %v1354, %v2002
  %v2004 = vpop.f32.mrf.mxu0
  %v2005 = vadd.f32 %v1356, %v2004
  %2006 = vmatmul.bf16.gmra.mxu0 %v765
  %v2007 = vpop.f32.mrf.mxu0
  %v2008 = vadd.f32 %v1359, %v2007
  %v2009 = vpop.f32.mrf.mxu0
  %v2010 = vadd.f32 %v1361, %v2009
  %2011 = vmatmul.bf16.gmra.mxu0 %v767
  %v2012 = vpop.f32.mrf.mxu0
  %v2013 = vadd.f32 %v1364, %v2012
  %v2014 = vpop.f32.mrf.mxu0
  %v2015 = vadd.f32 %v1366, %v2014
  %2016 = vmatmul.bf16.gmra.mxu0 %v769
  %v2017 = vpop.f32.mrf.mxu0
  %v2018 = vadd.f32 %v1369, %v2017
  %v2019 = vpop.f32.mrf.mxu0
  %v2020 = vadd.f32 %v1371, %v2019
  %2021 = vmatmul.bf16.gmra.mxu0 %v771
  %v2022 = vpop.f32.mrf.mxu0
  %v2023 = vadd.f32 %v1374, %v2022
  %v2024 = vpop.f32.mrf.mxu0
  %v2025 = vadd.f32 %v1376, %v2024
  %2026 = vmatmul.bf16.gmra.mxu0 %v773
  %v2027 = vpop.f32.mrf.mxu0
  %v2028 = vadd.f32 %v1379, %v2027
  %v2029 = vpop.f32.mrf.mxu0
  %v2030 = vadd.f32 %v1381, %v2029
  %2031 = vmatmul.bf16.gmra.mxu0 %v775
  %v2032 = vpop.f32.mrf.mxu0
  %v2033 = vadd.f32 %v1384, %v2032
  %v2034 = vpop.f32.mrf.mxu0
  %v2035 = vadd.f32 %v1386, %v2034
  %2036 = vmatmul.bf16.gmra.mxu0 %v777
  %v2037 = vpop.f32.mrf.mxu0
  %v2038 = vadd.f32 %v1389, %v2037
  %v2039 = vpop.f32.mrf.mxu0
  %v2040 = vadd.f32 %v1391, %v2039
  %2041 = vmatmul.bf16.gmra.mxu0 %v779
  %v2042 = vpop.f32.mrf.mxu0
  %v2043 = vadd.f32 %v1394, %v2042
  %v2044 = vpop.f32.mrf.mxu0
  %v2045 = vadd.f32 %v1396, %v2044
  %2046 = vmatmul.bf16.gmra.mxu0 %v781
  %v2047 = vpop.f32.mrf.mxu0
  %v2048 = vadd.f32 %v1399, %v2047
  %v2049 = vpop.f32.mrf.mxu0
  %v2050 = vadd.f32 %v1401, %v2049
  %2051 = vmatmul.bf16.gmra.mxu0 %v783
  %v2052 = vpop.f32.mrf.mxu0
  %v2053 = vadd.f32 %v1404, %v2052
  %v2054 = vpop.f32.mrf.mxu0
  %v2055 = vadd.f32 %v1406, %v2054
  %2056 = vmatmul.bf16.gmra.mxu0 %v785
  %v2057 = vpop.f32.mrf.mxu0
  %v2058 = vadd.f32 %v1409, %v2057
  %v2059 = vpop.f32.mrf.mxu0
  %v2060 = vadd.f32 %v1411, %v2059
  %2061 = vmatmul.bf16.gmra.mxu0 %v787
  %v2062 = vpop.f32.mrf.mxu0
  %v2063 = vadd.f32 %v1414, %v2062
  %v2064 = vpop.f32.mrf.mxu0
  %v2065 = vadd.f32 %v1416, %v2064
  %2066 = vmatmul.bf16.gmra.mxu0 %v789
  %v2067 = vpop.f32.mrf.mxu0
  %v2068 = vadd.f32 %v1419, %v2067
  %v2069 = vpop.f32.mrf.mxu0
  %v2070 = vadd.f32 %v1421, %v2069
  %2071 = vmatmul.bf16.gmra.mxu0 %v791
  %v2072 = vpop.f32.mrf.mxu0
  %v2073 = vadd.f32 %v1424, %v2072
  %v2074 = vpop.f32.mrf.mxu0
  %v2075 = vadd.f32 %v1426, %v2074
  %2076 = vmatmul.bf16.gmra.mxu0 %v793
  %v2077 = vpop.f32.mrf.mxu0
  %v2078 = vadd.f32 %v1429, %v2077
  %v2079 = vpop.f32.mrf.mxu0
  %v2080 = vadd.f32 %v1431, %v2079
  %2081 = vmatmul.bf16.gmra.mxu0 %v795
  %v2082 = vpop.f32.mrf.mxu0
  %v2083 = vadd.f32 %v1434, %v2082
  %v2084 = vpop.f32.mrf.mxu0
  %v2085 = vadd.f32 %v1436, %v2084
  %2086 = vmatmul.bf16.gmra.mxu0 %v797
  %v2087 = vpop.f32.mrf.mxu0
  %v2088 = vadd.f32 %v1439, %v2087
  %v2089 = vpop.f32.mrf.mxu0
  %v2090 = vadd.f32 %v1441, %v2089
  %2091 = vmatmul.bf16.gmra.mxu0 %v799
  %v2092 = vpop.f32.mrf.mxu0
  %v2093 = vadd.f32 %v1444, %v2092
  %v2094 = vpop.f32.mrf.mxu0
  %v2095 = vadd.f32 %v1446, %v2094
  %2096 = vmatmul.bf16.gmra.mxu0 %v801
  %v2097 = vpop.f32.mrf.mxu0
  %v2098 = vadd.f32 %v1449, %v2097
  %v2099 = vpop.f32.mrf.mxu0
  %v2100 = vadd.f32 %v1451, %v2099
  %2101 = vmatmul.bf16.gmra.mxu0 %v803
  %v2102 = vpop.f32.mrf.mxu0
  %v2103 = vadd.f32 %v1454, %v2102
  %v2104 = vpop.f32.mrf.mxu0
  %v2105 = vadd.f32 %v1456, %v2104
  %2106 = vmatmul.bf16.gmra.mxu0 %v805
  %v2107 = vpop.f32.mrf.mxu0
  %v2108 = vadd.f32 %v1459, %v2107
  %v2109 = vpop.f32.mrf.mxu0
  %v2110 = vadd.f32 %v1461, %v2109
  %2111 = vmatmul.bf16.gmra.mxu0 %v807
  %v2112 = vpop.f32.mrf.mxu0
  %v2113 = vadd.f32 %v1464, %v2112
  %v2114 = vpop.f32.mrf.mxu0
  %v2115 = vadd.f32 %v1466, %v2114
  %2116 = vmatmul.bf16.gmra.mxu0 %v809
  %v2117 = vpop.f32.mrf.mxu0
  %v2118 = vadd.f32 %v1469, %v2117
  %v2119 = vpop.f32.mrf.mxu0
  %v2120 = vadd.f32 %v1471, %v2119
  %2121 = vmatmul.bf16.gmra.mxu0 %v811
  %v2122 = vpop.f32.mrf.mxu0
  %v2123 = vadd.f32 %v1474, %v2122
  %v2124 = vpop.f32.mrf.mxu0
  %v2125 = vadd.f32 %v1476, %v2124
  %2126 = vmatmul.bf16.gmra.mxu0 %v813
  %v2127 = vpop.f32.mrf.mxu0
  %v2128 = vadd.f32 %v1479, %v2127
  %v2129 = vpop.f32.mrf.mxu0
  %v2130 = vadd.f32 %v1481, %v2129
  %2131 = vdwg.mxu0
  %v2132 = vtanh.pop %v1493
  %v2133 = vtanh.pop %v1495
  %v2134 = vtanh.pop %v1498
  %v2135 = vtanh.pop %v1500
  %v2136 = vtanh.pop %v1503
  %v2137 = vtanh.pop %v1505
  %v2138 = vtanh.pop %v1508
  %v2139 = vtanh.pop %v1510
  %v2140 = vtanh.pop %v1513
  %v2141 = vtanh.pop %v1515
  %v2142 = vtanh.pop %v1518
  %v2143 = vtanh.pop %v1520
  %v2144 = vtanh.pop %v1523
  %v2145 = vtanh.pop %v1525
  %v2146 = vtanh.pop %v1528
  %v2147 = vtanh.pop %v1530
  %v2148 = vtanh.pop %v1533
  %v2149 = vtanh.pop %v1535
  %v2150 = vtanh.pop %v1538
  %v2151 = vtanh.pop %v1540
  %v2152 = vtanh.pop %v1543
  %v2153 = vtanh.pop %v1545
  %v2154 = vtanh.pop %v1548
  %v2155 = vtanh.pop %v1550
  %v2156 = vtanh.pop %v1553
  %v2157 = vtanh.pop %v1555
  %v2158 = vtanh.pop %v1558
  %v2159 = vtanh.pop %v1560
  %v2160 = vtanh.pop %v1563
  %v2161 = vtanh.pop %v1565
  %v2162 = vtanh.pop %v1568
  %v2163 = vtanh.pop %v1570
  %v2164 = vtanh.pop %v1573
  %v2165 = vtanh.pop %v1575
  %v2166 = vtanh.pop %v1578
  %v2167 = vtanh.pop %v1580
  %v2168 = vtanh.pop %v1583
  %v2169 = vtanh.pop %v1585
  %v2170 = vtanh.pop %v1588
  %v2171 = vtanh.pop %v1590
  %v2172 = vtanh.pop %v1593
  %v2173 = vtanh.pop %v1595
  %v2174 = vtanh.pop %v1598
  %v2175 = vtanh.pop %v1600
  %v2176 = vtanh.pop %v1603
  %v2177 = vtanh.pop %v1605
  %v2178 = vtanh.pop %v1608
  %v2179 = vtanh.pop %v1610
  %v2180 = vtanh.pop %v1613
  %v2181 = vtanh.pop %v1615
  %v2182 = vtanh.pop %v1618
  %v2183 = vtanh.pop %v1620
  %v2184 = vtanh.pop %v1623
  %v2185 = vtanh.pop %v1625
  %v2186 = vtanh.pop %v1628
  %v2187 = vtanh.pop %v1630
  %v2188 = vtanh.pop %v1633
  %v2189 = vtanh.pop %v1635
  %v2190 = vtanh.pop %v1638
  %v2191 = vtanh.pop %v1640
  %v2192 = vtanh.pop %v1643
  %v2193 = vtanh.pop %v1645
  %v2194 = vtanh.pop %v1648
  %v2195 = vtanh.pop %v1650
  %v2196 = vtanh.pop %v1653
  %v2197 = vtanh.pop %v1655
  %v2198 = vtanh.pop %v1658
  %v2199 = vtanh.pop %v1660
  %v2200 = vtanh.pop %v1663
  %v2201 = vtanh.pop %v1665
  %v2202 = vtanh.pop %v1668
  %v2203 = vtanh.pop %v1670
  %v2204 = vtanh.pop %v1673
  %v2205 = vtanh.pop %v1675
  %v2206 = vtanh.pop %v1678
  %v2207 = vtanh.pop %v1680
  %v2208 = vtanh.pop %v1683
  %v2209 = vtanh.pop %v1685
  %v2210 = vtanh.pop %v1688
  %v2211 = vtanh.pop %v1690
  %v2212 = vtanh.pop %v1693
  %v2213 = vtanh.pop %v1695
  %v2214 = vtanh.pop %v1698
  %v2215 = vtanh.pop %v1700
  %v2216 = vtanh.pop %v1703
  %v2217 = vtanh.pop %v1705
  %v2218 = vtanh.pop %v1708
  %v2219 = vtanh.pop %v1710
  %v2220 = vtanh.pop %v1713
  %v2221 = vtanh.pop %v1715
  %v2222 = vtanh.pop %v1718
  %v2223 = vtanh.pop %v1720
  %v2224 = vtanh.pop %v1723
  %v2225 = vtanh.pop %v1725
  %v2226 = vtanh.pop %v1728
  %v2227 = vtanh.pop %v1730
  %v2228 = vtanh.pop %v1733
  %v2229 = vtanh.pop %v1735
  %v2230 = vtanh.pop %v1738
  %v2231 = vtanh.pop %v1740
  %v2232 = vtanh.pop %v1743
  %v2233 = vtanh.pop %v1745
  %v2234 = vtanh.pop %v1748
  %v2235 = vtanh.pop %v1750
  %v2236 = vtanh.pop %v1753
  %v2237 = vtanh.pop %v1755
  %v2238 = vtanh.pop %v1758
  %v2239 = vtanh.pop %v1760
  %v2240 = vtanh.pop %v1763
  %v2241 = vtanh.pop %v1765
  %v2242 = vtanh.pop %v1768
  %v2243 = vtanh.pop %v1770
  %v2244 = vtanh.pop %v1773
  %v2245 = vtanh.pop %v1775
  %v2246 = vtanh.pop %v1778
  %v2247 = vtanh.pop %v1780
  %v2248 = vtanh.pop %v1783
  %v2249 = vtanh.pop %v1785
  %v2250 = vtanh.pop %v1788
  %v2251 = vtanh.pop %v1790
  %v2252 = vtanh.pop %v1793
  %v2253 = vtanh.pop %v1795
  %v2254 = vtanh.pop %v1798
  %v2255 = vtanh.pop %v1800
  %v2256 = vtanh.pop %v1803
  %v2257 = vtanh.pop %v1805
  %v2258 = vtanh.pop %v1808
  %v2259 = vtanh.pop %v1810
  %v2260 = vtanh.pop %v1813
  %v2261 = vtanh.pop %v1815
  %v2262 = vtanh.pop %v1818
  %v2263 = vtanh.pop %v1820
  %v2264 = vtanh.pop %v1823
  %v2265 = vtanh.pop %v1825
  %v2266 = vtanh.pop %v1828
  %v2267 = vtanh.pop %v1830
  %v2268 = vtanh.pop %v1833
  %v2269 = vtanh.pop %v1835
  %v2270 = vtanh.pop %v1838
  %v2271 = vtanh.pop %v1840
  %v2272 = vtanh.pop %v1843
  %v2273 = vtanh.pop %v1845
  %v2274 = vtanh.pop %v1848
  %v2275 = vtanh.pop %v1850
  %v2276 = vtanh.pop %v1853
  %v2277 = vtanh.pop %v1855
  %v2278 = vtanh.pop %v1858
  %v2279 = vtanh.pop %v1860
  %v2280 = vtanh.pop %v1863
  %v2281 = vtanh.pop %v1865
  %v2282 = vtanh.pop %v1868
  %v2283 = vtanh.pop %v1870
  %v2284 = vtanh.pop %v1873
  %v2285 = vtanh.pop %v1875
  %v2286 = vtanh.pop %v1878
  %v2287 = vtanh.pop %v1880
  %v2288 = vtanh.pop %v1883
  %v2289 = vtanh.pop %v1885
  %v2290 = vtanh.pop %v1888
  %v2291 = vtanh.pop %v1890
  %v2292 = vtanh.pop %v1893
  %v2293 = vtanh.pop %v1895
  %v2294 = vtanh.pop %v1898
  %v2295 = vtanh.pop %v1900
  %v2296 = vtanh.pop %v1903
  %v2297 = vtanh.pop %v1905
  %v2298 = vtanh.pop %v1908
  %v2299 = vtanh.pop %v1910
  %v2300 = vtanh.pop %v1913
  %v2301 = vtanh.pop %v1915
  %v2302 = vtanh.pop %v1918
  %v2303 = vtanh.pop %v1920
  %v2304 = vtanh.pop %v1923
  %v2305 = vtanh.pop %v1925
  %v2306 = vtanh.pop %v1928
  %v2307 = vtanh.pop %v1930
  %v2308 = vtanh.pop %v1933
  %v2309 = vtanh.pop %v1935
  %v2310 = vtanh.pop %v1938
  %v2311 = vtanh.pop %v1940
  %v2312 = vtanh.pop %v1943
  %v2313 = vtanh.pop %v1945
  %v2314 = vtanh.pop %v1948
  %v2315 = vtanh.pop %v1950
  %v2316 = vtanh.pop %v1953
  %v2317 = vtanh.pop %v1955
  %v2318 = vtanh.pop %v1958
  %v2319 = vtanh.pop %v1960
  %v2320 = vtanh.pop %v1963
  %v2321 = vtanh.pop %v1965
  %v2322 = vtanh.pop %v1968
  %v2323 = vtanh.pop %v1970
  %v2324 = vtanh.pop %v1973
  %v2325 = vtanh.pop %v1975
  %v2326 = vtanh.pop %v1978
  %v2327 = vtanh.pop %v1980
  %v2328 = vtanh.pop %v1983
  %v2329 = vtanh.pop %v1985
  %v2330 = vtanh.pop %v1988
  %v2331 = vtanh.pop %v1990
  %v2332 = vtanh.pop %v1993
  %v2333 = vtanh.pop %v1995
  %v2334 = vtanh.pop %v1998
  %v2335 = vtanh.pop %v2000
  %v2336 = vtanh.pop %v2003
  %v2337 = vtanh.pop %v2005
  %v2338 = vtanh.pop %v2008
  %v2339 = vtanh.pop %v2010
  %v2340 = vtanh.pop %v2013
  %v2341 = vtanh.pop %v2015
  %v2342 = vtanh.pop %v2018
  %v2343 = vtanh.pop %v2020
  %v2344 = vtanh.pop %v2023
  %v2345 = vtanh.pop %v2025
  %v2346 = vtanh.pop %v2028
  %v2347 = vtanh.pop %v2030
  %v2348 = vtanh.pop %v2033
  %v2349 = vtanh.pop %v2035
  %v2350 = vtanh.pop %v2038
  %v2351 = vtanh.pop %v2040
  %v2352 = vtanh.pop %v2043
  %v2353 = vtanh.pop %v2045
  %v2354 = vtanh.pop %v2048
  %v2355 = vtanh.pop %v2050
  %v2356 = vtanh.pop %v2053
  %v2357 = vtanh.pop %v2055
  %v2358 = vtanh.pop %v2058
  %v2359 = vtanh.pop %v2060
  %v2360 = vtanh.pop %v2063
  %v2361 = vtanh.pop %v2065
  %v2362 = vtanh.pop %v2068
  %v2363 = vtanh.pop %v2070
  %v2364 = vtanh.pop %v2073
  %v2365 = vtanh.pop %v2075
  %v2366 = vtanh.pop %v2078
  %v2367 = vtanh.pop %v2080
  %v2368 = vtanh.pop %v2083
  %v2369 = vtanh.pop %v2085
  %v2370 = vtanh.pop %v2088
  %v2371 = vtanh.pop %v2090
  %v2372 = vtanh.pop %v2093
  %v2373 = vtanh.pop %v2095
  %v2374 = vtanh.pop %v2098
  %v2375 = vtanh.pop %v2100
  %v2376 = vtanh.pop %v2103
  %v2377 = vtanh.pop %v2105
  %v2378 = vtanh.pop %v2108
  %v2379 = vtanh.pop %v2110
  %v2380 = vtanh.pop %v2113
  %v2381 = vtanh.pop %v2115
  %v2382 = vtanh.pop %v2118
  %v2383 = vtanh.pop %v2120
  %v2384 = vtanh.pop %v2123
  %v2385 = vtanh.pop %v2125
  %v2386 = vtanh.pop %v2128
  %v2387 = vtanh.pop %v2130
  %vm2388 = vcmask 23552
  %2389 = vst.msk [vmem:[%s3] sm:$0xff] %vm2388, %v2132
  %2390 = vst.msk [vmem:[%s3 + $0x8] sm:$0xff] %vm2388, %v2133
  %2391 = vst.msk [vmem:[%s3 + $0x10] sm:$0xff] %vm2388, %v2134
  %2392 = vst.msk [vmem:[%s3 + $0x18] sm:$0xff] %vm2388, %v2135
  %2393 = vst.msk [vmem:[%s3 + $0x20] sm:$0xff] %vm2388, %v2136
  %2394 = vst.msk [vmem:[%s3 + $0x28] sm:$0xff] %vm2388, %v2137
  %2395 = vst.msk [vmem:[%s3 + $0x30] sm:$0xff] %vm2388, %v2138
  %2396 = vst.msk [vmem:[%s3 + $0x38] sm:$0xff] %vm2388, %v2139
  %2397 = vst.msk [vmem:[%s3 + $0x40] sm:$0xff] %vm2388, %v2140
  %2398 = vst.msk [vmem:[%s3 + $0x48] sm:$0xff] %vm2388, %v2141
  %2399 = vst.msk [vmem:[%s3 + $0x50] sm:$0xff] %vm2388, %v2142
  %2400 = vst.msk [vmem:[%s3 + $0x58] sm:$0xff] %vm2388, %v2143
  %2401 = vst.msk [vmem:[%s3 + $0x60] sm:$0xff] %vm2388, %v2144
  %2402 = vst.msk [vmem:[%s3 + $0x68] sm:$0xff] %vm2388, %v2145
  %2403 = vst.msk [vmem:[%s3 + $0x70] sm:$0xff] %vm2388, %v2146
  %2404 = vst.msk [vmem:[%s3 + $0x78] sm:$0xff] %vm2388, %v2147
  %2405 = vst.msk [vmem:[%s3 + $0x80] sm:$0xff] %vm2388, %v2148
  %2406 = vst.msk [vmem:[%s3 + $0x88] sm:$0xff] %vm2388, %v2149
  %2407 = vst.msk [vmem:[%s3 + $0x90] sm:$0xff] %vm2388, %v2150
  %2408 = vst.msk [vmem:[%s3 + $0x98] sm:$0xff] %vm2388, %v2151
  %2409 = vst.msk [vmem:[%s3 + $0xa0] sm:$0xff] %vm2388, %v2152
  %2410 = vst.msk [vmem:[%s3 + $0xa8] sm:$0xff] %vm2388, %v2153
  %2411 = vst.msk [vmem:[%s3 + $0xb0] sm:$0xff] %vm2388, %v2154
  %2412 = vst.msk [vmem:[%s3 + $0xb8] sm:$0xff] %vm2388, %v2155
  %2413 = vst.msk [vmem:[%s3 + $0xc0] sm:$0xff] %vm2388, %v2156
  %2414 = vst.msk [vmem:[%s3 + $0xc8] sm:$0xff] %vm2388, %v2157
  %2415 = vst.msk [vmem:[%s3 + $0xd0] sm:$0xff] %vm2388, %v2158
  %2416 = vst.msk [vmem:[%s3 + $0xd8] sm:$0xff] %vm2388, %v2159
  %2417 = vst.msk [vmem:[%s3 + $0xe0] sm:$0xff] %vm2388, %v2160
  %2418 = vst.msk [vmem:[%s3 + $0xe8] sm:$0xff] %vm2388, %v2161
  %2419 = vst.msk [vmem:[%s3 + $0xf0] sm:$0xff] %vm2388, %v2162
  %2420 = vst.msk [vmem:[%s3 + $0xf8] sm:$0xff] %vm2388, %v2163
  %2421 = vst.msk [vmem:[%s3 + $0x100] sm:$0xff] %vm2388, %v2164
  %2422 = vst.msk [vmem:[%s3 + $0x108] sm:$0xff] %vm2388, %v2165
  %2423 = vst.msk [vmem:[%s3 + $0x110] sm:$0xff] %vm2388, %v2166
  %2424 = vst.msk [vmem:[%s3 + $0x118] sm:$0xff] %vm2388, %v2167
  %2425 = vst.msk [vmem:[%s3 + $0x120] sm:$0xff] %vm2388, %v2168
  %2426 = vst.msk [vmem:[%s3 + $0x128] sm:$0xff] %vm2388, %v2169
  %2427 = vst.msk [vmem:[%s3 + $0x130] sm:$0xff] %vm2388, %v2170
  %2428 = vst.msk [vmem:[%s3 + $0x138] sm:$0xff] %vm2388, %v2171
  %2429 = vst.msk [vmem:[%s3 + $0x140] sm:$0xff] %vm2388, %v2172
  %2430 = vst.msk [vmem:[%s3 + $0x148] sm:$0xff] %vm2388, %v2173
  %2431 = vst.msk [vmem:[%s3 + $0x150] sm:$0xff] %vm2388, %v2174
  %2432 = vst.msk [vmem:[%s3 + $0x158] sm:$0xff] %vm2388, %v2175
  %2433 = vst.msk [vmem:[%s3 + $0x160] sm:$0xff] %vm2388, %v2176
  %2434 = vst.msk [vmem:[%s3 + $0x168] sm:$0xff] %vm2388, %v2177
  %2435 = vst.msk [vmem:[%s3 + $0x170] sm:$0xff] %vm2388, %v2178
  %2436 = vst.msk [vmem:[%s3 + $0x178] sm:$0xff] %vm2388, %v2179
  %2437 = vst.msk [vmem:[%s3 + $0x180] sm:$0xff] %vm2388, %v2180
  %2438 = vst.msk [vmem:[%s3 + $0x188] sm:$0xff] %vm2388, %v2181
  %2439 = vst.msk [vmem:[%s3 + $0x190] sm:$0xff] %vm2388, %v2182
  %2440 = vst.msk [vmem:[%s3 + $0x198] sm:$0xff] %vm2388, %v2183
  %2441 = vst.msk [vmem:[%s3 + $0x1a0] sm:$0xff] %vm2388, %v2184
  %2442 = vst.msk [vmem:[%s3 + $0x1a8] sm:$0xff] %vm2388, %v2185
  %2443 = vst.msk [vmem:[%s3 + $0x1b0] sm:$0xff] %vm2388, %v2186
  %2444 = vst.msk [vmem:[%s3 + $0x1b8] sm:$0xff] %vm2388, %v2187
  %2445 = vst.msk [vmem:[%s3 + $0x1c0] sm:$0xff] %vm2388, %v2188
  %2446 = vst.msk [vmem:[%s3 + $0x1c8] sm:$0xff] %vm2388, %v2189
  %2447 = vst.msk [vmem:[%s3 + $0x1d0] sm:$0xff] %vm2388, %v2190
  %2448 = vst.msk [vmem:[%s3 + $0x1d8] sm:$0xff] %vm2388, %v2191
  %2449 = vst.msk [vmem:[%s3 + $0x1e0] sm:$0xff] %vm2388, %v2192
  %2450 = vst.msk [vmem:[%s3 + $0x1e8] sm:$0xff] %vm2388, %v2193
  %2451 = vst.msk [vmem:[%s3 + $0x1f0] sm:$0xff] %vm2388, %v2194
  %2452 = vst.msk [vmem:[%s3 + $0x1f8] sm:$0xff] %vm2388, %v2195
  %2453 = vst.msk [vmem:[%s3 + $0x200] sm:$0xff] %vm2388, %v2196
  %2454 = vst.msk [vmem:[%s3 + $0x208] sm:$0xff] %vm2388, %v2197
  %2455 = vst.msk [vmem:[%s3 + $0x210] sm:$0xff] %vm2388, %v2198
  %2456 = vst.msk [vmem:[%s3 + $0x218] sm:$0xff] %vm2388, %v2199
  %2457 = vst.msk [vmem:[%s3 + $0x220] sm:$0xff] %vm2388, %v2200
  %2458 = vst.msk [vmem:[%s3 + $0x228] sm:$0xff] %vm2388, %v2201
  %2459 = vst.msk [vmem:[%s3 + $0x230] sm:$0xff] %vm2388, %v2202
  %2460 = vst.msk [vmem:[%s3 + $0x238] sm:$0xff] %vm2388, %v2203
  %2461 = vst.msk [vmem:[%s3 + $0x240] sm:$0xff] %vm2388, %v2204
  %2462 = vst.msk [vmem:[%s3 + $0x248] sm:$0xff] %vm2388, %v2205
  %2463 = vst.msk [vmem:[%s3 + $0x250] sm:$0xff] %vm2388, %v2206
  %2464 = vst.msk [vmem:[%s3 + $0x258] sm:$0xff] %vm2388, %v2207
  %2465 = vst.msk [vmem:[%s3 + $0x260] sm:$0xff] %vm2388, %v2208
  %2466 = vst.msk [vmem:[%s3 + $0x268] sm:$0xff] %vm2388, %v2209
  %2467 = vst.msk [vmem:[%s3 + $0x270] sm:$0xff] %vm2388, %v2210
  %2468 = vst.msk [vmem:[%s3 + $0x278] sm:$0xff] %vm2388, %v2211
  %2469 = vst.msk [vmem:[%s3 + $0x280] sm:$0xff] %vm2388, %v2212
  %2470 = vst.msk [vmem:[%s3 + $0x288] sm:$0xff] %vm2388, %v2213
  %2471 = vst.msk [vmem:[%s3 + $0x290] sm:$0xff] %vm2388, %v2214
  %2472 = vst.msk [vmem:[%s3 + $0x298] sm:$0xff] %vm2388, %v2215
  %2473 = vst.msk [vmem:[%s3 + $0x2a0] sm:$0xff] %vm2388, %v2216
  %2474 = vst.msk [vmem:[%s3 + $0x2a8] sm:$0xff] %vm2388, %v2217
  %2475 = vst.msk [vmem:[%s3 + $0x2b0] sm:$0xff] %vm2388, %v2218
  %2476 = vst.msk [vmem:[%s3 + $0x2b8] sm:$0xff] %vm2388, %v2219
  %2477 = vst.msk [vmem:[%s3 + $0x2c0] sm:$0xff] %vm2388, %v2220
  %2478 = vst.msk [vmem:[%s3 + $0x2c8] sm:$0xff] %vm2388, %v2221
  %2479 = vst.msk [vmem:[%s3 + $0x2d0] sm:$0xff] %vm2388, %v2222
  %2480 = vst.msk [vmem:[%s3 + $0x2d8] sm:$0xff] %vm2388, %v2223
  %2481 = vst.msk [vmem:[%s3 + $0x2e0] sm:$0xff] %vm2388, %v2224
  %2482 = vst.msk [vmem:[%s3 + $0x2e8] sm:$0xff] %vm2388, %v2225
  %2483 = vst.msk [vmem:[%s3 + $0x2f0] sm:$0xff] %vm2388, %v2226
  %2484 = vst.msk [vmem:[%s3 + $0x2f8] sm:$0xff] %vm2388, %v2227
  %2485 = vst.msk [vmem:[%s3 + $0x300] sm:$0xff] %vm2388, %v2228
  %2486 = vst.msk [vmem:[%s3 + $0x308] sm:$0xff] %vm2388, %v2229
  %2487 = vst.msk [vmem:[%s3 + $0x310] sm:$0xff] %vm2388, %v2230
  %2488 = vst.msk [vmem:[%s3 + $0x318] sm:$0xff] %vm2388, %v2231
  %2489 = vst.msk [vmem:[%s3 + $0x320] sm:$0xff] %vm2388, %v2232
  %2490 = vst.msk [vmem:[%s3 + $0x328] sm:$0xff] %vm2388, %v2233
  %2491 = vst.msk [vmem:[%s3 + $0x330] sm:$0xff] %vm2388, %v2234
  %2492 = vst.msk [vmem:[%s3 + $0x338] sm:$0xff] %vm2388, %v2235
  %2493 = vst.msk [vmem:[%s3 + $0x340] sm:$0xff] %vm2388, %v2236
  %2494 = vst.msk [vmem:[%s3 + $0x348] sm:$0xff] %vm2388, %v2237
  %2495 = vst.msk [vmem:[%s3 + $0x350] sm:$0xff] %vm2388, %v2238
  %2496 = vst.msk [vmem:[%s3 + $0x358] sm:$0xff] %vm2388, %v2239
  %2497 = vst.msk [vmem:[%s3 + $0x360] sm:$0xff] %vm2388, %v2240
  %2498 = vst.msk [vmem:[%s3 + $0x368] sm:$0xff] %vm2388, %v2241
  %2499 = vst.msk [vmem:[%s3 + $0x370] sm:$0xff] %vm2388, %v2242
  %2500 = vst.msk [vmem:[%s3 + $0x378] sm:$0xff] %vm2388, %v2243
  %2501 = vst.msk [vmem:[%s3 + $0x380] sm:$0xff] %vm2388, %v2244
  %2502 = vst.msk [vmem:[%s3 + $0x388] sm:$0xff] %vm2388, %v2245
  %2503 = vst.msk [vmem:[%s3 + $0x390] sm:$0xff] %vm2388, %v2246
  %2504 = vst.msk [vmem:[%s3 + $0x398] sm:$0xff] %vm2388, %v2247
  %2505 = vst.msk [vmem:[%s3 + $0x3a0] sm:$0xff] %vm2388, %v2248
  %2506 = vst.msk [vmem:[%s3 + $0x3a8] sm:$0xff] %vm2388, %v2249
  %2507 = vst.msk [vmem:[%s3 + $0x3b0] sm:$0xff] %vm2388, %v2250
  %2508 = vst.msk [vmem:[%s3 + $0x3b8] sm:$0xff] %vm2388, %v2251
  %2509 = vst.msk [vmem:[%s3 + $0x3c0] sm:$0xff] %vm2388, %v2252
  %2510 = vst.msk [vmem:[%s3 + $0x3c8] sm:$0xff] %vm2388, %v2253
  %2511 = vst.msk [vmem:[%s3 + $0x3d0] sm:$0xff] %vm2388, %v2254
  %2512 = vst.msk [vmem:[%s3 + $0x3d8] sm:$0xff] %vm2388, %v2255
  %2513 = vst.msk [vmem:[%s3 + $0x3e0] sm:$0xff] %vm2388, %v2256
  %2514 = vst.msk [vmem:[%s3 + $0x3e8] sm:$0xff] %vm2388, %v2257
  %2515 = vst.msk [vmem:[%s3 + $0x3f0] sm:$0xff] %vm2388, %v2258
  %2516 = vst.msk [vmem:[%s3 + $0x3f8] sm:$0xff] %vm2388, %v2259
  %2517 = vst.msk [vmem:[%s3 + $0x400] sm:$0xff] %vm2388, %v2260
  %2518 = vst.msk [vmem:[%s3 + $0x408] sm:$0xff] %vm2388, %v2261
  %2519 = vst.msk [vmem:[%s3 + $0x410] sm:$0xff] %vm2388, %v2262
  %2520 = vst.msk [vmem:[%s3 + $0x418] sm:$0xff] %vm2388, %v2263
  %2521 = vst.msk [vmem:[%s3 + $0x420] sm:$0xff] %vm2388, %v2264
  %2522 = vst.msk [vmem:[%s3 + $0x428] sm:$0xff] %vm2388, %v2265
  %2523 = vst.msk [vmem:[%s3 + $0x430] sm:$0xff] %vm2388, %v2266
  %2524 = vst.msk [vmem:[%s3 + $0x438] sm:$0xff] %vm2388, %v2267
  %2525 = vst.msk [vmem:[%s3 + $0x440] sm:$0xff] %vm2388, %v2268
  %2526 = vst.msk [vmem:[%s3 + $0x448] sm:$0xff] %vm2388, %v2269
  %2527 = vst.msk [vmem:[%s3 + $0x450] sm:$0xff] %vm2388, %v2270
  %2528 = vst.msk [vmem:[%s3 + $0x458] sm:$0xff] %vm2388, %v2271
  %2529 = vst.msk [vmem:[%s3 + $0x460] sm:$0xff] %vm2388, %v2272
  %2530 = vst.msk [vmem:[%s3 + $0x468] sm:$0xff] %vm2388, %v2273
  %2531 = vst.msk [vmem:[%s3 + $0x470] sm:$0xff] %vm2388, %v2274
  %2532 = vst.msk [vmem:[%s3 + $0x478] sm:$0xff] %vm2388, %v2275
  %2533 = vst.msk [vmem:[%s3 + $0x480] sm:$0xff] %vm2388, %v2276
  %2534 = vst.msk [vmem:[%s3 + $0x488] sm:$0xff] %vm2388, %v2277
  %2535 = vst.msk [vmem:[%s3 + $0x490] sm:$0xff] %vm2388, %v2278
  %2536 = vst.msk [vmem:[%s3 + $0x498] sm:$0xff] %vm2388, %v2279
  %2537 = vst.msk [vmem:[%s3 + $0x4a0] sm:$0xff] %vm2388, %v2280
  %2538 = vst.msk [vmem:[%s3 + $0x4a8] sm:$0xff] %vm2388, %v2281
  %2539 = vst.msk [vmem:[%s3 + $0x4b0] sm:$0xff] %vm2388, %v2282
  %2540 = vst.msk [vmem:[%s3 + $0x4b8] sm:$0xff] %vm2388, %v2283
  %2541 = vst.msk [vmem:[%s3 + $0x4c0] sm:$0xff] %vm2388, %v2284
  %2542 = vst.msk [vmem:[%s3 + $0x4c8] sm:$0xff] %vm2388, %v2285
  %2543 = vst.msk [vmem:[%s3 + $0x4d0] sm:$0xff] %vm2388, %v2286
  %2544 = vst.msk [vmem:[%s3 + $0x4d8] sm:$0xff] %vm2388, %v2287
  %2545 = vst.msk [vmem:[%s3 + $0x4e0] sm:$0xff] %vm2388, %v2288
  %2546 = vst.msk [vmem:[%s3 + $0x4e8] sm:$0xff] %vm2388, %v2289
  %2547 = vst.msk [vmem:[%s3 + $0x4f0] sm:$0xff] %vm2388, %v2290
  %2548 = vst.msk [vmem:[%s3 + $0x4f8] sm:$0xff] %vm2388, %v2291
  %2549 = vst.msk [vmem:[%s3 + $0x500] sm:$0xff] %vm2388, %v2292
  %2550 = vst.msk [vmem:[%s3 + $0x508] sm:$0xff] %vm2388, %v2293
  %2551 = vst.msk [vmem:[%s3 + $0x510] sm:$0xff] %vm2388, %v2294
  %2552 = vst.msk [vmem:[%s3 + $0x518] sm:$0xff] %vm2388, %v2295
  %2553 = vst.msk [vmem:[%s3 + $0x520] sm:$0xff] %vm2388, %v2296
  %2554 = vst.msk [vmem:[%s3 + $0x528] sm:$0xff] %vm2388, %v2297
  %2555 = vst.msk [vmem:[%s3 + $0x530] sm:$0xff] %vm2388, %v2298
  %2556 = vst.msk [vmem:[%s3 + $0x538] sm:$0xff] %vm2388, %v2299
  %2557 = vst.msk [vmem:[%s3 + $0x540] sm:$0xff] %vm2388, %v2300
  %2558 = vst.msk [vmem:[%s3 + $0x548] sm:$0xff] %vm2388, %v2301
  %2559 = vst.msk [vmem:[%s3 + $0x550] sm:$0xff] %vm2388, %v2302
  %2560 = vst.msk [vmem:[%s3 + $0x558] sm:$0xff] %vm2388, %v2303
  %2561 = vst.msk [vmem:[%s3 + $0x560] sm:$0xff] %vm2388, %v2304
  %2562 = vst.msk [vmem:[%s3 + $0x568] sm:$0xff] %vm2388, %v2305
  %2563 = vst.msk [vmem:[%s3 + $0x570] sm:$0xff] %vm2388, %v2306
  %2564 = vst.msk [vmem:[%s3 + $0x578] sm:$0xff] %vm2388, %v2307
  %2565 = vst.msk [vmem:[%s3 + $0x580] sm:$0xff] %vm2388, %v2308
  %2566 = vst.msk [vmem:[%s3 + $0x588] sm:$0xff] %vm2388, %v2309
  %2567 = vst.msk [vmem:[%s3 + $0x590] sm:$0xff] %vm2388, %v2310
  %2568 = vst.msk [vmem:[%s3 + $0x598] sm:$0xff] %vm2388, %v2311
  %2569 = vst.msk [vmem:[%s3 + $0x5a0] sm:$0xff] %vm2388, %v2312
  %2570 = vst.msk [vmem:[%s3 + $0x5a8] sm:$0xff] %vm2388, %v2313
  %2571 = vst.msk [vmem:[%s3 + $0x5b0] sm:$0xff] %vm2388, %v2314
  %2572 = vst.msk [vmem:[%s3 + $0x5b8] sm:$0xff] %vm2388, %v2315
  %2573 = vst.msk [vmem:[%s3 + $0x5c0] sm:$0xff] %vm2388, %v2316
  %2574 = vst.msk [vmem:[%s3 + $0x5c8] sm:$0xff] %vm2388, %v2317
  %2575 = vst.msk [vmem:[%s3 + $0x5d0] sm:$0xff] %vm2388, %v2318
  %2576 = vst.msk [vmem:[%s3 + $0x5d8] sm:$0xff] %vm2388, %v2319
  %2577 = vst.msk [vmem:[%s3 + $0x5e0] sm:$0xff] %vm2388, %v2320
  %2578 = vst.msk [vmem:[%s3 + $0x5e8] sm:$0xff] %vm2388, %v2321
  %2579 = vst.msk [vmem:[%s3 + $0x5f0] sm:$0xff] %vm2388, %v2322
  %2580 = vst.msk [vmem:[%s3 + $0x5f8] sm:$0xff] %vm2388, %v2323
  %2581 = vst.msk [vmem:[%s3 + $0x600] sm:$0xff] %vm2388, %v2324
  %2582 = vst.msk [vmem:[%s3 + $0x608] sm:$0xff] %vm2388, %v2325
  %2583 = vst.msk [vmem:[%s3 + $0x610] sm:$0xff] %vm2388, %v2326
  %2584 = vst.msk [vmem:[%s3 + $0x618] sm:$0xff] %vm2388, %v2327
  %2585 = vst.msk [vmem:[%s3 + $0x620] sm:$0xff] %vm2388, %v2328
  %2586 = vst.msk [vmem:[%s3 + $0x628] sm:$0xff] %vm2388, %v2329
  %2587 = vst.msk [vmem:[%s3 + $0x630] sm:$0xff] %vm2388, %v2330
  %2588 = vst.msk [vmem:[%s3 + $0x638] sm:$0xff] %vm2388, %v2331
  %2589 = vst.msk [vmem:[%s3 + $0x640] sm:$0xff] %vm2388, %v2332
  %2590 = vst.msk [vmem:[%s3 + $0x648] sm:$0xff] %vm2388, %v2333
  %2591 = vst.msk [vmem:[%s3 + $0x650] sm:$0xff] %vm2388, %v2334
  %2592 = vst.msk [vmem:[%s3 + $0x658] sm:$0xff] %vm2388, %v2335
  %2593 = vst.msk [vmem:[%s3 + $0x660] sm:$0xff] %vm2388, %v2336
  %2594 = vst.msk [vmem:[%s3 + $0x668] sm:$0xff] %vm2388, %v2337
  %2595 = vst.msk [vmem:[%s3 + $0x670] sm:$0xff] %vm2388, %v2338
  %2596 = vst.msk [vmem:[%s3 + $0x678] sm:$0xff] %vm2388, %v2339
  %2597 = vst.msk [vmem:[%s3 + $0x680] sm:$0xff] %vm2388, %v2340
  %2598 = vst.msk [vmem:[%s3 + $0x688] sm:$0xff] %vm2388, %v2341
  %2599 = vst.msk [vmem:[%s3 + $0x690] sm:$0xff] %vm2388, %v2342
  %2600 = vst.msk [vmem:[%s3 + $0x698] sm:$0xff] %vm2388, %v2343
  %2601 = vst.msk [vmem:[%s3 + $0x6a0] sm:$0xff] %vm2388, %v2344
  %2602 = vst.msk [vmem:[%s3 + $0x6a8] sm:$0xff] %vm2388, %v2345
  %2603 = vst.msk [vmem:[%s3 + $0x6b0] sm:$0xff] %vm2388, %v2346
  %2604 = vst.msk [vmem:[%s3 + $0x6b8] sm:$0xff] %vm2388, %v2347
  %2605 = vst.msk [vmem:[%s3 + $0x6c0] sm:$0xff] %vm2388, %v2348
  %2606 = vst.msk [vmem:[%s3 + $0x6c8] sm:$0xff] %vm2388, %v2349
  %2607 = vst.msk [vmem:[%s3 + $0x6d0] sm:$0xff] %vm2388, %v2350
  %2608 = vst.msk [vmem:[%s3 + $0x6d8] sm:$0xff] %vm2388, %v2351
  %2609 = vst.msk [vmem:[%s3 + $0x6e0] sm:$0xff] %vm2388, %v2352
  %2610 = vst.msk [vmem:[%s3 + $0x6e8] sm:$0xff] %vm2388, %v2353
  %2611 = vst.msk [vmem:[%s3 + $0x6f0] sm:$0xff] %vm2388, %v2354
  %2612 = vst.msk [vmem:[%s3 + $0x6f8] sm:$0xff] %vm2388, %v2355
  %2613 = vst.msk [vmem:[%s3 + $0x700] sm:$0xff] %vm2388, %v2356
  %2614 = vst.msk [vmem:[%s3 + $0x708] sm:$0xff] %vm2388, %v2357
  %2615 = vst.msk [vmem:[%s3 + $0x710] sm:$0xff] %vm2388, %v2358
  %2616 = vst.msk [vmem:[%s3 + $0x718] sm:$0xff] %vm2388, %v2359
  %2617 = vst.msk [vmem:[%s3 + $0x720] sm:$0xff] %vm2388, %v2360
  %2618 = vst.msk [vmem:[%s3 + $0x728] sm:$0xff] %vm2388, %v2361
  %2619 = vst.msk [vmem:[%s3 + $0x730] sm:$0xff] %vm2388, %v2362
  %2620 = vst.msk [vmem:[%s3 + $0x738] sm:$0xff] %vm2388, %v2363
  %2621 = vst.msk [vmem:[%s3 + $0x740] sm:$0xff] %vm2388, %v2364
  %2622 = vst.msk [vmem:[%s3 + $0x748] sm:$0xff] %vm2388, %v2365
  %2623 = vst.msk [vmem:[%s3 + $0x750] sm:$0xff] %vm2388, %v2366
  %2624 = vst.msk [vmem:[%s3 + $0x758] sm:$0xff] %vm2388, %v2367
  %2625 = vst.msk [vmem:[%s3 + $0x760] sm:$0xff] %vm2388, %v2368
  %2626 = vst.msk [vmem:[%s3 + $0x768] sm:$0xff] %vm2388, %v2369
  %2627 = vst.msk [vmem:[%s3 + $0x770] sm:$0xff] %vm2388, %v2370
  %2628 = vst.msk [vmem:[%s3 + $0x778] sm:$0xff] %vm2388, %v2371
  %2629 = vst.msk [vmem:[%s3 + $0x780] sm:$0xff] %vm2388, %v2372
  %2630 = vst.msk [vmem:[%s3 + $0x788] sm:$0xff] %vm2388, %v2373
  %2631 = vst.msk [vmem:[%s3 + $0x790] sm:$0xff] %vm2388, %v2374
  %2632 = vst.msk [vmem:[%s3 + $0x798] sm:$0xff] %vm2388, %v2375
  %2633 = vst.msk [vmem:[%s3 + $0x7a0] sm:$0xff] %vm2388, %v2376
  %2634 = vst.msk [vmem:[%s3 + $0x7a8] sm:$0xff] %vm2388, %v2377
  %2635 = vst.msk [vmem:[%s3 + $0x7b0] sm:$0xff] %vm2388, %v2378
  %2636 = vst.msk [vmem:[%s3 + $0x7b8] sm:$0xff] %vm2388, %v2379
  %2637 = vst.msk [vmem:[%s3 + $0x7c0] sm:$0xff] %vm2388, %v2380
  %2638 = vst.msk [vmem:[%s3 + $0x7c8] sm:$0xff] %vm2388, %v2381
  %2639 = vst.msk [vmem:[%s3 + $0x7d0] sm:$0xff] %vm2388, %v2382
  %2640 = vst.msk [vmem:[%s3 + $0x7d8] sm:$0xff] %vm2388, %v2383
  %2641 = vst.msk [vmem:[%s3 + $0x7e0] sm:$0xff] %vm2388, %v2384
  %2642 = vst.msk [vmem:[%s3 + $0x7e8] sm:$0xff] %vm2388, %v2385
  %2643 = vst.msk [vmem:[%s3 + $0x7f0] sm:$0xff] %vm2388, %v2386
  %2644 = vst.msk [vmem:[%s3 + $0x7f8] sm:$0xff] %vm2388, %v2387
  // Predicated region
  $region14: #{glo_forward.7} parent=0 // pred_check
    _
  $region15: #{glo_forward.7} parent=0 // pred_check_branch
    %2646 = sbr.rel (0) target = $region17
  $region16: #{glo_forward.7} parent=0 // pred_region
    _
  $region17: #{glo_forward.7} parent=0 // pred_fallthru
    _
  // Predicated region
  $region18: #{glo_forward.7} parent=0 // pred_check
    _
  $region19: #{glo_forward.7} parent=0 // pred_check_branch
    %2648 = sbr.rel (0) target = $region21
  $region20: #{glo_forward.7} parent=0 // pred_region
    _
  $region21: #{glo_forward.7} parent=0 // pred_fallthru
    _

</llo_original>
